<compile_context>
chip_gen: v5e
topology: v5e:2x2
jax: 0.10.0
libtpu: 0.0.40
codegen_flags: <defaults>
</compile_context>

<pallas_src>
import jax
import jax.numpy as jnp
import numpy as np
from jax.experimental import pallas as pl
from jax.experimental.pallas import tpu as pltpu

EPS = 1e-5
LANE = 128


def _conv_stats_kernel(xpad_ref, w_ref, y_ref, psum_ref, pssq_ref, col_ref):
    # xpad_ref: (1, H+2, W+2, Cp) bf16   spatially zero-padded input (one image)
    # w_ref   : (9*Cp, Cp)        bf16   tap-major folded conv weights
    # y_ref   : (1, H, W, Cp)     f32    conv output
    # psum_ref: (1, 1, Cp)        f32    per-image sum over H,W      (for BN mean)
    # pssq_ref: (1, 1, Cp)        f32    per-image sum of squares    (for BN var)
    # col_ref : (H*W, 9*Cp)       bf16   im2col scratch
    _, H, W, Cp = y_ref.shape
    M = H * W
    for k in range(9):
        dy, dx = k // 3, k % 3
        col_ref[:, k * Cp:(k + 1) * Cp] = (
            xpad_ref[:, dy:dy + H, dx:dx + W, :].reshape(M, Cp))
    acc = jnp.dot(col_ref[...], w_ref[...], preferred_element_type=jnp.float32)
    y_ref[...] = acc.reshape(1, H, W, Cp)
    psum_ref[...] = jnp.sum(acc, axis=0, keepdims=True).reshape(1, 1, Cp)
    pssq_ref[...] = jnp.sum(acc * acc, axis=0, keepdims=True).reshape(1, 1, Cp)


def _bn_relu_conv_stats_kernel(scale_ref, shift_ref, y1_ref, w_ref,
                               y2_ref, psum_ref, pssq_ref, hpad_ref, col_ref):
    # scale/shift: (1, Cp) f32  precomputed bn1 scale = g*rsqrt(var+eps), shift = b-mean*scale
    # y1_ref     : (1, H, W, Cp) f32   conv1 output (one image)
    # w_ref      : (9*Cp, Cp)    bf16  folded conv2 weights
    # y2_ref     : (1, H, W, Cp) f32   conv2 output
    # hpad_ref   : (1, H+2, W+2, Cp) bf16 scratch (padded bn1+relu activations)
    # col_ref    : (H*W, 9*Cp)  bf16 scratch
    _, H, W, Cp = y1_ref.shape
    M = H * W
    scale = scale_ref[...].reshape(1, 1, 1, Cp)
    shift = shift_ref[...].reshape(1, 1, 1, Cp)
    h = jnp.maximum(y1_ref[...] * scale + shift, 0.0).astype(jnp.bfloat16)

    # Zero only the 1-pixel halo; interior is fully overwritten below.
    zero_row = jnp.zeros((1, 1, W + 2, Cp), jnp.bfloat16)
    zero_col = jnp.zeros((1, H, 1, Cp), jnp.bfloat16)
    hpad_ref[:, 0:1, :, :] = zero_row
    hpad_ref[:, H + 1:H + 2, :, :] = zero_row
    hpad_ref[:, 1:H + 1, 0:1, :] = zero_col
    hpad_ref[:, 1:H + 1, W + 1:W + 2, :] = zero_col
    hpad_ref[:, 1:H + 1, 1:W + 1, :] = h

    for k in range(9):
        dy, dx = k // 3, k % 3
        col_ref[:, k * Cp:(k + 1) * Cp] = (
            hpad_ref[:, dy:dy + H, dx:dx + W, :].reshape(M, Cp))
    acc = jnp.dot(col_ref[...], w_ref[...], preferred_element_type=jnp.float32)
    y2_ref[...] = acc.reshape(1, H, W, Cp)
    psum_ref[...] = jnp.sum(acc, axis=0, keepdims=True).reshape(1, 1, Cp)
    pssq_ref[...] = jnp.sum(acc * acc, axis=0, keepdims=True).reshape(1, 1, Cp)


def _bn_residual_kernel(scale_ref, shift_ref, y2_ref, xpad_ref, out_ref):
    # bn2-apply + identity residual; residual taken from interior of the padded input
    # (no separate residual tensor / DMA).
    _, H, W, Cp = out_ref.shape
    scale = scale_ref[...].reshape(1, 1, 1, Cp)
    shift = shift_ref[...].reshape(1, 1, 1, Cp)
    resid = xpad_ref[:, 1:H + 1, 1:W + 1, :].astype(jnp.float32)
    out_ref[...] = y2_ref[...] * scale + shift + resid


def _round_up(x, m):
    return (x + m - 1) // m * m


@jax.jit
def basic_block_pallas(x_nchw, w1_oihw, g1, b1, w2_oihw, g2, b2):
    """BasicBlock forward. x_nchw: (N, C, H, W) float32 (PyTorch layout)."""
    N, C, H, W = x_nchw.shape
    Cout = w1_oihw.shape[0]
    assert C == Cout, "stride=1 / downsample=None requires in_channels == out_channels"
    Cp = _round_up(C, LANE)           # lane-dense channel width
    M_img = H * W
    M_tot = N * M_img

    # NCHW -> NHWC, pad channels to Cp and spatial by 1; bf16 for the MXU operands.
    x_nhwc = jnp.transpose(x_nchw, (0, 2, 3, 1)).astype(jnp.float32)
    x_pad = jnp.pad(x_nhwc, ((0, 0), (1, 1), (1, 1), (0, Cp - C))).astype(jnp.bfloat16)

    # (Cout, Cin, 3, 3) -> tap-major (9, Cin, Cout) -> zero-pad channels -> (9*Cp, Cp).
    def prep_w(w):
        wt = jnp.transpose(w, (2, 3, 1, 0)).reshape(9, C, C)
        wt = jnp.pad(wt, ((0, 0), (0, Cp - C), (0, Cp - C)))
        return wt.reshape(9 * Cp, Cp).astype(jnp.bfloat16)

    w1 = prep_w(w1_oihw)
    w2 = prep_w(w2_oihw)
    # gamma/beta padded with ZEROS so padded channels stay exactly zero through BN.
    pad_vec = lambda v: jnp.pad(v.astype(jnp.float32), (0, Cp - C)).reshape(1, Cp)
    g1p, b1p, g2p, b2p = pad_vec(g1), pad_vec(b1), pad_vec(g2), pad_vec(b2)

    params = pltpu.CompilerParams(dimension_semantics=("parallel",),
                                  vmem_limit_bytes=32 * 1024 * 1024)
    conv_flops = 2 * M_tot * (9 * Cp) * Cp

    # ---- phase 1: conv1 + per-image BN1 sums (grid over batch) ---------------
    y1, ps1, qs1 = pl.pallas_call(
        _conv_stats_kernel,
        out_shape=(jax.ShapeDtypeStruct((N, H, W, Cp), jnp.float32),
                   jax.ShapeDtypeStruct((N, 1, Cp), jnp.float32),
                   jax.ShapeDtypeStruct((N, 1, Cp), jnp.float32)),
        grid=(N,),
        in_specs=[pl.BlockSpec((1, H + 2, W + 2, Cp), lambda n: (n, 0, 0, 0)),
                  pl.BlockSpec((9 * Cp, Cp), lambda n: (0, 0))],
        out_specs=(pl.BlockSpec((1, H, W, Cp), lambda n: (n, 0, 0, 0)),
                   pl.BlockSpec((1, 1, Cp), lambda n: (n, 0, 0)),
                   pl.BlockSpec((1, 1, Cp), lambda n: (n, 0, 0))),
        scratch_shapes=[pltpu.VMEM((M_img, 9 * Cp), jnp.bfloat16)],
        compiler_params=params,
        cost_estimate=pl.CostEstimate(
            flops=conv_flops, transcendentals=0,
            bytes_accessed=(2 * N * (H + 2) * (W + 2) * Cp
                            + 2 * 9 * Cp * Cp + 4 * M_tot * Cp)),
    )(x_pad, w1)

    # Tiny cross-image reduction + BN scale/shift math (global over N,H,W — required
    # for BN correctness when the conv work is tiled over the batch).
    def bn_scale_shift(psum, pssq, gamma, beta):
        total = jnp.sum(psum, axis=0)              # (1, Cp)
        total_sq = jnp.sum(pssq, axis=0)           # (1, Cp)
        mean = total / M_tot
        var = jnp.maximum(total_sq / M_tot - mean * mean, 0.0)
        scale = gamma * jax.lax.rsqrt(var + EPS)
        shift = beta - mean * scale
        return scale, shift

    s1, t1 = bn_scale_shift(ps1, qs1, g1p, b1p)

    # ---- phase 2: bn1-apply + relu + conv2 + per-image BN2 sums ---------------
    y2, ps2, qs2 = pl.pallas_call(
        _bn_relu_conv_stats_kernel,
        out_shape=(jax.ShapeDtypeStruct((N, H, W, Cp), jnp.float32),
                   jax.ShapeDtypeStruct((N, 1, Cp), jnp.float32),
                   jax.ShapeDtypeStruct((N, 1, Cp), jnp.float32)),
        grid=(N,),
        in_specs=[pl.BlockSpec((1, Cp), lambda n: (0, 0)),
                  pl.BlockSpec((1, Cp), lambda n: (0, 0)),
                  pl.BlockSpec((1, H, W, Cp), lambda n: (n, 0, 0, 0)),
                  pl.BlockSpec((9 * Cp, Cp), lambda n: (0, 0))],
        out_specs=(pl.BlockSpec((1, H, W, Cp), lambda n: (n, 0, 0, 0)),
                   pl.BlockSpec((1, 1, Cp), lambda n: (n, 0, 0)),
                   pl.BlockSpec((1, 1, Cp), lambda n: (n, 0, 0))),
        scratch_shapes=[pltpu.VMEM((1, H + 2, W + 2, Cp), jnp.bfloat16),
                        pltpu.VMEM((M_img, 9 * Cp), jnp.bfloat16)],
        compiler_params=params,
        cost_estimate=pl.CostEstimate(
            flops=conv_flops, transcendentals=0,
            bytes_accessed=8 * M_tot * Cp + 2 * 9 * Cp * Cp),
    )(s1, t1, y1, w2)

    s2, t2 = bn_scale_shift(ps2, qs2, g2p, b2p)

    # ---- phase 3: bn2-apply + identity residual -------------------------------
    out_nhwc = pl.pallas_call(
        _bn_residual_kernel,
        out_shape=jax.ShapeDtypeStruct((N, H, W, Cp), jnp.float32),
        grid=(N,),
        in_specs=[pl.BlockSpec((1, Cp), lambda n: (0, 0)),
                  pl.BlockSpec((1, Cp), lambda n: (0, 0)),
                  pl.BlockSpec((1, H, W, Cp), lambda n: (n, 0, 0, 0)),
                  pl.BlockSpec((1, H + 2, W + 2, Cp), lambda n: (n, 0, 0, 0))],
        out_specs=pl.BlockSpec((1, H, W, Cp), lambda n: (n, 0, 0, 0)),
        compiler_params=params,
        cost_estimate=pl.CostEstimate(
            flops=3 * M_tot * Cp, transcendentals=0,
            bytes_accessed=10 * M_tot * Cp),
    )(s2, t2, y2, x_pad)

    # Strip channel padding, NHWC -> NCHW (PyTorch output layout).
    return jnp.transpose(out_nhwc[:, :, :, :C], (0, 3, 1, 2))


def basic_block_reference(x, w1, g1, b1, w2, g2, b2):
    """Pure-JAX NCHW f32 reference mirroring the PyTorch module (training-mode BN)."""
    def conv(a, w):
        return jax.lax.conv_general_dilated(
            a, w, window_strides=(1, 1), padding=((1, 1), (1, 1)),
            dimension_numbers=('NCHW', 'OIHW', 'NCHW'))

    def bn(a, g, b):
        mean = jnp.mean(a, axis=(0, 2, 3), keepdims=True)
        var = jnp.mean((a - mean) ** 2, axis=(0, 2, 3), keepdims=True)
        return ((a - mean) * jax.lax.rsqrt(var + EPS)
                * g.reshape(1, -1, 1, 1) + b.reshape(1, -1, 1, 1))

    out = jnp.maximum(bn(conv(x, w1), g1, b1), 0.0)
    out = bn(conv(out, w2), g2, b2)
    return out + x


if __name__ == "__main__":
    # Small shapes consistent with the module: batch=2, channels=4, spatial=16.
    N, C, H, W = 2, 4, 16, 16

    key = jax.random.PRNGKey(0)
    k_x, k_w1, k_w2, k_g1, k_b1, k_g2, k_b2 = jax.random.split(key, 7)

    x = jax.random.normal(k_x, (N, C, H, W), dtype=jnp.float32)
    # Deterministic synthetic parameters (PyTorch weight layout OIHW).
    w1 = 0.1 * jax.random.normal(k_w1, (C, C, 3, 3), dtype=jnp.float32)
    w2 = 0.1 * jax.random.normal(k_w2, (C, C, 3, 3), dtype=jnp.float32)
    g1 = 1.0 + 0.05 * jax.random.normal(k_g1, (C,), dtype=jnp.float32)
    b1 = 0.05 * jax.random.normal(k_b1, (C,), dtype=jnp.float32)
    g2 = 1.0 + 0.05 * jax.random.normal(k_g2, (C,), dtype=jnp.float32)
    b2 = 0.05 * jax.random.normal(k_b2, (C,), dtype=jnp.float32)

    out = jax.block_until_ready(basic_block_pallas(x, w1, g1, b1, w2, g2, b2))
    ref = jax.block_until_ready(basic_block_reference(x, w1, g1, b1, w2, g2, b2))

    # bf16 MXU operands (per perf review) => relaxed tolerance vs the f32 reference.
    np.testing.assert_allclose(np.asarray(out), np.asarray(ref), rtol=5e-2, atol=5e-2)

    print("KERNEL_OK")
</pallas_src>

<mosaic_0001>
module attributes {stable_mosaic.version = 11 : i64} {
  func.func @_bn_residual_kernel(%arg0: i32, %arg1: memref<1x128xf32, #tpu.memory_space<vmem>>, %arg2: memref<1x128xf32, #tpu.memory_space<vmem>>, %arg3: memref<1x16x16x128xf32, #tpu.memory_space<vmem>>, %arg4: memref<1x18x18x128xbf16, #tpu.memory_space<vmem>>, %arg5: memref<1x16x16x128xf32, #tpu.memory_space<vmem>>) attributes {dimension_semantics = [#tpu.dimension_semantics<parallel>], iteration_bounds = array<i64: 2>, scalar_prefetch = 0 : i64, scratch_operands = 0 : i64, tpu.core_type = #tpu.core_type<tc>, window_params = [{pipeline_mode = #tpu.pipeline_mode<synchronous>, transform_indices = @transform_0, window_bounds = array<i64: 1, 128>}, {pipeline_mode = #tpu.pipeline_mode<synchronous>, transform_indices = @transform_1, window_bounds = array<i64: 1, 128>}, {transform_indices = @transform_2, window_bounds = array<i64: 1, 16, 16, 128>}, {transform_indices = @transform_3, window_bounds = array<i64: 1, 18, 18, 128>}, {transform_indices = @transform_4, window_bounds = array<i64: 1, 16, 16, 128>}]} {
    %c0 = arith.constant 0 : index
    %c0_0 = arith.constant 0 : index
    %0 = vector.load %arg1[%c0, %c0_0] : memref<1x128xf32, #tpu.memory_space<vmem>>, vector<1x128xf32>
    %1 = vector.shape_cast %0 : vector<1x128xf32> to vector<1x1x1x128xf32>
    %c0_1 = arith.constant 0 : index
    %c0_2 = arith.constant 0 : index
    %2 = vector.load %arg2[%c0_1, %c0_2] : memref<1x128xf32, #tpu.memory_space<vmem>>, vector<1x128xf32>
    %3 = vector.shape_cast %2 : vector<1x128xf32> to vector<1x1x1x128xf32>
    %c0_3 = arith.constant 0 : index
    %c1 = arith.constant 1 : index
    %c1_4 = arith.constant 1 : index
    %c0_5 = arith.constant 0 : index
    %4 = vector.load %arg4[%c0_3, %c1, %c1_4, %c0_5] : memref<1x18x18x128xbf16, #tpu.memory_space<vmem>>, vector<1x16x16x128xbf16>
    %5 = arith.extf %4 : vector<1x16x16x128xbf16> to vector<1x16x16x128xf32>
    %c0_6 = arith.constant 0 : index
    %c0_7 = arith.constant 0 : index
    %c0_8 = arith.constant 0 : index
    %c0_9 = arith.constant 0 : index
    %6 = vector.load %arg3[%c0_6, %c0_7, %c0_8, %c0_9] : memref<1x16x16x128xf32, #tpu.memory_space<vmem>>, vector<1x16x16x128xf32>
    %7 = vector.broadcast %1 : vector<1x1x1x128xf32> to vector<1x16x16x128xf32>
    %8 = arith.mulf %6, %7 : vector<1x16x16x128xf32>
    %9 = vector.broadcast %3 : vector<1x1x1x128xf32> to vector<1x16x16x128xf32>
    %10 = arith.addf %8, %9 : vector<1x16x16x128xf32>
    %11 = arith.addf %10, %5 : vector<1x16x16x128xf32>
    %c0_10 = arith.constant 0 : index
    %c0_11 = arith.constant 0 : index
    %c0_12 = arith.constant 0 : index
    %c0_13 = arith.constant 0 : index
    %12 = vector.load %arg5[%c0_10, %c0_11, %c0_12, %c0_13] : memref<1x16x16x128xf32, #tpu.memory_space<vmem>>, vector<1x16x16x128xf32>
    tpu.vector_store %arg5[%c0_10, %c0_11, %c0_12, %c0_13], %11 {strides = array<i32>} : memref<1x16x16x128xf32, #tpu.memory_space<vmem>>, vector<1x16x16x128xf32>,
    return
  }
  func.func @transform_0(%arg0: i32) -> (i32, i32) {
    %c0_i32 = arith.constant 0 : i32
    %c0_i32_0 = arith.constant 0 : i32
    %c0_i32_1 = arith.constant 0 : i32
    return %c0_i32, %c0_i32_0 : i32, i32
  }
  func.func @transform_1(%arg0: i32) -> (i32, i32) {
    %c0_i32 = arith.constant 0 : i32
    %c0_i32_0 = arith.constant 0 : i32
    %c0_i32_1 = arith.constant 0 : i32
    return %c0_i32, %c0_i32_0 : i32, i32
  }
  func.func @transform_2(%arg0: i32) -> (i32, i32, i32, i32) {
    %c0_i32 = arith.constant 0 : i32
    %c0_i32_0 = arith.constant 0 : i32
    %c0_i32_1 = arith.constant 0 : i32
    %c0_i32_2 = arith.constant 0 : i32
    return %arg0, %c0_i32, %c0_i32_0, %c0_i32_1 : i32, i32, i32, i32
  }
  func.func @transform_3(%arg0: i32) -> (i32, i32, i32, i32) {
    %c0_i32 = arith.constant 0 : i32
    %c0_i32_0 = arith.constant 0 : i32
    %c0_i32_1 = arith.constant 0 : i32
    %c0_i32_2 = arith.constant 0 : i32
    return %arg0, %c0_i32, %c0_i32_0, %c0_i32_1 : i32, i32, i32, i32
  }
  func.func @transform_4(%arg0: i32) -> (i32, i32, i32, i32) {
    %c0_i32 = arith.constant 0 : i32
    %c0_i32_0 = arith.constant 0 : i32
    %c0_i32_1 = arith.constant 0 : i32
    %c0_i32_2 = arith.constant 0 : i32
    return %arg0, %c0_i32, %c0_i32_0, %c0_i32_1 : i32, i32, i32, i32
  }
}

module attributes {stable_mosaic.version = 11 : i64} {
  func.func @_bn_relu_conv_stats_kernel(%arg0: i32, %arg1: memref<1x128xf32, #tpu.memory_space<vmem>>, %arg2: memref<1x128xf32, #tpu.memory_space<vmem>>, %arg3: memref<1x16x16x128xf32, #tpu.memory_space<vmem>>, %arg4: memref<1152x128xbf16, #tpu.memory_space<vmem>>, %arg5: memref<1x16x16x128xf32, #tpu.memory_space<vmem>>, %arg6: memref<1x1x128xf32, #tpu.memory_space<vmem>>, %arg7: memref<1x1x128xf32, #tpu.memory_space<vmem>>, %arg8: memref<1x18x18x128xbf16, #tpu.memory_space<vmem>>, %arg9: memref<256x1152xbf16, #tpu.memory_space<vmem>>) attributes {dimension_semantics = [#tpu.dimension_semantics<parallel>], iteration_bounds = array<i64: 2>, scalar_prefetch = 0 : i64, scratch_operands = 2 : i64, tpu.core_type = #tpu.core_type<tc>, window_params = [{pipeline_mode = #tpu.pipeline_mode<synchronous>, transform_indices = @transform_0, window_bounds = array<i64: 1, 128>}, {pipeline_mode = #tpu.pipeline_mode<synchronous>, transform_indices = @transform_1, window_bounds = array<i64: 1, 128>}, {transform_indices = @transform_2, window_bounds = array<i64: 1, 16, 16, 128>}, {pipeline_mode = #tpu.pipeline_mode<synchronous>, transform_indices = @transform_3, window_bounds = array<i64: 1152, 128>}, {transform_indices = @transform_4, window_bounds = array<i64: 1, 16, 16, 128>}, {transform_indices = @transform_5, window_bounds = array<i64: 1, 1, 128>}, {transform_indices = @transform_6, window_bounds = array<i64: 1, 1, 128>}]} {
    %c0 = arith.constant 0 : index
    %c0_0 = arith.constant 0 : index
    %0 = vector.load %arg1[%c0, %c0_0] : memref<1x128xf32, #tpu.memory_space<vmem>>, vector<1x128xf32>
    %1 = vector.shape_cast %0 : vector<1x128xf32> to vector<1x1x1x128xf32>
    %c0_1 = arith.constant 0 : index
    %c0_2 = arith.constant 0 : index
    %2 = vector.load %arg2[%c0_1, %c0_2] : memref<1x128xf32, #tpu.memory_space<vmem>>, vector<1x128xf32>
    %3 = vector.shape_cast %2 : vector<1x128xf32> to vector<1x1x1x128xf32>
    %c0_3 = arith.constant 0 : index
    %c0_4 = arith.constant 0 : index
    %c0_5 = arith.constant 0 : index
    %c0_6 = arith.constant 0 : index
    %4 = vector.load %arg3[%c0_3, %c0_4, %c0_5, %c0_6] : memref<1x16x16x128xf32, #tpu.memory_space<vmem>>, vector<1x16x16x128xf32>
    %5 = vector.broadcast %1 : vector<1x1x1x128xf32> to vector<1x16x16x128xf32>
    %6 = arith.mulf %4, %5 : vector<1x16x16x128xf32>
    %7 = vector.broadcast %3 : vector<1x1x1x128xf32> to vector<1x16x16x128xf32>
    %8 = arith.addf %6, %7 : vector<1x16x16x128xf32>
    %cst = arith.constant 0.000000e+00 : f32
    %9 = vector.broadcast %cst : f32 to vector<1x16x16x128xf32>
    %10 = arith.maximumf %8, %9 : vector<1x16x16x128xf32>
    %11 = arith.truncf %10 : vector<1x16x16x128xf32> to vector<1x16x16x128xbf16>
    %cst_7 = arith.constant 0.000000e+00 : bf16
    %12 = vector.broadcast %cst_7 : bf16 to vector<1x1x18x128xbf16>
    %cst_8 = arith.constant 0.000000e+00 : bf16
    %13 = vector.broadcast %cst_8 : bf16 to vector<1x16x1x128xbf16>
    %c0_9 = arith.constant 0 : index
    %c0_10 = arith.constant 0 : index
    %c0_11 = arith.constant 0 : index
    %c0_12 = arith.constant 0 : index
    %14 = vector.load %arg8[%c0_9, %c0_10, %c0_11, %c0_12] : memref<1x18x18x128xbf16, #tpu.memory_space<vmem>>, vector<1x1x18x128xbf16>
    tpu.vector_store %arg8[%c0_9, %c0_10, %c0_11, %c0_12], %12 {strides = array<i32>} : memref<1x18x18x128xbf16, #tpu.memory_space<vmem>>, vector<1x1x18x128xbf16>,
    %c0_13 = arith.constant 0 : index
    %c17 = arith.constant 17 : index
    %c0_14 = arith.constant 0 : index
    %c0_15 = arith.constant 0 : index
    %15 = vector.load %arg8[%c0_13, %c17, %c0_14, %c0_15] : memref<1x18x18x128xbf16, #tpu.memory_space<vmem>>, vector<1x1x18x128xbf16>
    tpu.vector_store %arg8[%c0_13, %c17, %c0_14, %c0_15], %12 {strides = array<i32>} : memref<1x18x18x128xbf16, #tpu.memory_space<vmem>>, vector<1x1x18x128xbf16>,
    %c0_16 = arith.constant 0 : index
    %c1 = arith.constant 1 : index
    %c0_17 = arith.constant 0 : index
    %c0_18 = arith.constant 0 : index
    %16 = vector.load %arg8[%c0_16, %c1, %c0_17, %c0_18] : memref<1x18x18x128xbf16, #tpu.memory_space<vmem>>, vector<1x16x1x128xbf16>
    tpu.vector_store %arg8[%c0_16, %c1, %c0_17, %c0_18], %13 {strides = array<i32>} : memref<1x18x18x128xbf16, #tpu.memory_space<vmem>>, vector<1x16x1x128xbf16>,
    %c0_19 = arith.constant 0 : index
    %c1_20 = arith.constant 1 : index
    %c17_21 = arith.constant 17 : index
    %c0_22 = arith.constant 0 : index
    %17 = vector.load %arg8[%c0_19, %c1_20, %c17_21, %c0_22] : memref<1x18x18x128xbf16, #tpu.memory_space<vmem>>, vector<1x16x1x128xbf16>
    tpu.vector_store %arg8[%c0_19, %c1_20, %c17_21, %c0_22], %13 {strides = array<i32>} : memref<1x18x18x128xbf16, #tpu.memory_space<vmem>>, vector<1x16x1x128xbf16>,
    %c0_23 = arith.constant 0 : index
    %c1_24 = arith.constant 1 : index
    %c1_25 = arith.constant 1 : index
    %c0_26 = arith.constant 0 : index
    %18 = vector.load %arg8[%c0_23, %c1_24, %c1_25, %c0_26] : memref<1x18x18x128xbf16, #tpu.memory_space<vmem>>, vector<1x16x16x128xbf16>
    tpu.vector_store %arg8[%c0_23, %c1_24, %c1_25, %c0_26], %11 {strides = array<i32>} : memref<1x18x18x128xbf16, #tpu.memory_space<vmem>>, vector<1x16x16x128xbf16>,
    %c0_27 = arith.constant 0 : index
    %c0_28 = arith.constant 0 : index
    %c0_29 = arith.constant 0 : index
    %c0_30 = arith.constant 0 : index
    %19 = vector.load %arg8[%c0_27, %c0_28, %c0_29, %c0_30] : memref<1x18x18x128xbf16, #tpu.memory_space<vmem>>, vector<1x16x16x128xbf16>
    %20 = vector.shape_cast %19 : vector<1x16x16x128xbf16> to vector<256x128xbf16>
    %c0_31 = arith.constant 0 : index
    %c0_32 = arith.constant 0 : index
    %21 = vector.load %arg9[%c0_31, %c0_32] : memref<256x1152xbf16, #tpu.memory_space<vmem>>, vector<256x128xbf16>
    tpu.vector_store %arg9[%c0_31, %c0_32], %20 {strides = array<i32>} : memref<256x1152xbf16, #tpu.memory_space<vmem>>, vector<256x128xbf16>,
    %c0_33 = arith.constant 0 : index
    %c0_34 = arith.constant 0 : index
    %c1_35 = arith.constant 1 : index
    %c0_36 = arith.constant 0 : index
    %22 = vector.load %arg8[%c0_33, %c0_34, %c1_35, %c0_36] : memref<1x18x18x128xbf16, #tpu.memory_space<vmem>>, vector<1x16x16x128xbf16>
    %23 = vector.shape_cast %22 : vector<1x16x16x128xbf16> to vector<256x128xbf16>
    %c0_37 = arith.constant 0 : index
    %c128 = arith.constant 128 : index
    %24 = vector.load %arg9[%c0_37, %c128] : memref<256x1152xbf16, #tpu.memory_space<vmem>>, vector<256x128xbf16>
    tpu.vector_store %arg9[%c0_37, %c128], %23 {strides = array<i32>} : memref<256x1152xbf16, #tpu.memory_space<vmem>>, vector<256x128xbf16>,
    %c0_38 = arith.constant 0 : index
    %c0_39 = arith.constant 0 : index
    %c2 = arith.constant 2 : index
    %c0_40 = arith.constant 0 : index
    %25 = vector.load %arg8[%c0_38, %c0_39, %c2, %c0_40] : memref<1x18x18x128xbf16, #tpu.memory_space<vmem>>, vector<1x16x16x128xbf16>
    %26 = vector.shape_cast %25 : vector<1x16x16x128xbf16> to vector<256x128xbf16>
    %c0_41 = arith.constant 0 : index
    %c256 = arith.constant 256 : index
    %27 = vector.load %arg9[%c0_41, %c256] : memref<256x1152xbf16, #tpu.memory_space<vmem>>, vector<256x128xbf16>
    tpu.vector_store %arg9[%c0_41, %c256], %26 {strides = array<i32>} : memref<256x1152xbf16, #tpu.memory_space<vmem>>, vector<256x128xbf16>,
    %c0_42 = arith.constant 0 : index
    %c1_43 = arith.constant 1 : index
    %c0_44 = arith.constant 0 : index
    %c0_45 = arith.constant 0 : index
    %28 = vector.load %arg8[%c0_42, %c1_43, %c0_44, %c0_45] : memref<1x18x18x128xbf16, #tpu.memory_space<vmem>>, vector<1x16x16x128xbf16>
    %29 = vector.shape_cast %28 : vector<1x16x16x128xbf16> to vector<256x128xbf16>
    %c0_46 = arith.constant 0 : index
    %c384 = arith.constant 384 : index
    %30 = vector.load %arg9[%c0_46, %c384] : memref<256x1152xbf16, #tpu.memory_space<vmem>>, vector<256x128xbf16>
    tpu.vector_store %arg9[%c0_46, %c384], %29 {strides = array<i32>} : memref<256x1152xbf16, #tpu.memory_space<vmem>>, vector<256x128xbf16>,
    %c0_47 = arith.constant 0 : index
    %c1_48 = arith.constant 1 : index
    %c1_49 = arith.constant 1 : index
    %c0_50 = arith.constant 0 : index
    %31 = vector.load %arg8[%c0_47, %c1_48, %c1_49, %c0_50] : memref<1x18x18x128xbf16, #tpu.memory_space<vmem>>, vector<1x16x16x128xbf16>
    %32 = vector.shape_cast %31 : vector<1x16x16x128xbf16> to vector<256x128xbf16>
    %c0_51 = arith.constant 0 : index
    %c512 = arith.constant 512 : index
    %33 = vector.load %arg9[%c0_51, %c512] : memref<256x1152xbf16, #tpu.memory_space<vmem>>, vector<256x128xbf16>
    tpu.vector_store %arg9[%c0_51, %c512], %32 {strides = array<i32>} : memref<256x1152xbf16, #tpu.memory_space<vmem>>, vector<256x128xbf16>,
    %c0_52 = arith.constant 0 : index
    %c1_53 = arith.constant 1 : index
    %c2_54 = arith.constant 2 : index
    %c0_55 = arith.constant 0 : index
    %34 = vector.load %arg8[%c0_52, %c1_53, %c2_54, %c0_55] : memref<1x18x18x128xbf16, #tpu.memory_space<vmem>>, vector<1x16x16x128xbf16>
    %35 = vector.shape_cast %34 : vector<1x16x16x128xbf16> to vector<256x128xbf16>
    %c0_56 = arith.constant 0 : index
    %c640 = arith.constant 640 : index
    %36 = vector.load %arg9[%c0_56, %c640] : memref<256x1152xbf16, #tpu.memory_space<vmem>>, vector<256x128xbf16>
    tpu.vector_store %arg9[%c0_56, %c640], %35 {strides = array<i32>} : memref<256x1152xbf16, #tpu.memory_space<vmem>>, vector<256x128xbf16>,
    %c0_57 = arith.constant 0 : index
    %c2_58 = arith.constant 2 : index
    %c0_59 = arith.constant 0 : index
    %c0_60 = arith.constant 0 : index
    %37 = vector.load %arg8[%c0_57, %c2_58, %c0_59, %c0_60] : memref<1x18x18x128xbf16, #tpu.memory_space<vmem>>, vector<1x16x16x128xbf16>
    %38 = vector.shape_cast %37 : vector<1x16x16x128xbf16> to vector<256x128xbf16>
    %c0_61 = arith.constant 0 : index
    %c768 = arith.constant 768 : index
    %39 = vector.load %arg9[%c0_61, %c768] : memref<256x1152xbf16, #tpu.memory_space<vmem>>, vector<256x128xbf16>
    tpu.vector_store %arg9[%c0_61, %c768], %38 {strides = array<i32>} : memref<256x1152xbf16, #tpu.memory_space<vmem>>, vector<256x128xbf16>,
    %c0_62 = arith.constant 0 : index
    %c2_63 = arith.constant 2 : index
    %c1_64 = arith.constant 1 : index
    %c0_65 = arith.constant 0 : index
    %40 = vector.load %arg8[%c0_62, %c2_63, %c1_64, %c0_65] : memref<1x18x18x128xbf16, #tpu.memory_space<vmem>>, vector<1x16x16x128xbf16>
    %41 = vector.shape_cast %40 : vector<1x16x16x128xbf16> to vector<256x128xbf16>
    %c0_66 = arith.constant 0 : index
    %c896 = arith.constant 896 : index
    %42 = vector.load %arg9[%c0_66, %c896] : memref<256x1152xbf16, #tpu.memory_space<vmem>>, vector<256x128xbf16>
    tpu.vector_store %arg9[%c0_66, %c896], %41 {strides = array<i32>} : memref<256x1152xbf16, #tpu.memory_space<vmem>>, vector<256x128xbf16>,
    %c0_67 = arith.constant 0 : index
    %c2_68 = arith.constant 2 : index
    %c2_69 = arith.constant 2 : index
    %c0_70 = arith.constant 0 : index
    %43 = vector.load %arg8[%c0_67, %c2_68, %c2_69, %c0_70] : memref<1x18x18x128xbf16, #tpu.memory_space<vmem>>, vector<1x16x16x128xbf16>
    %44 = vector.shape_cast %43 : vector<1x16x16x128xbf16> to vector<256x128xbf16>
    %c0_71 = arith.constant 0 : index
    %c1024 = arith.constant 1024 : index
    %45 = vector.load %arg9[%c0_71, %c1024] : memref<256x1152xbf16, #tpu.memory_space<vmem>>, vector<256x128xbf16>
    tpu.vector_store %arg9[%c0_71, %c1024], %44 {strides = array<i32>} : memref<256x1152xbf16, #tpu.memory_space<vmem>>, vector<256x128xbf16>,
    %c0_72 = arith.constant 0 : index
    %c0_73 = arith.constant 0 : index
    %46 = vector.load %arg9[%c0_72, %c0_73] : memref<256x1152xbf16, #tpu.memory_space<vmem>>, vector<256x1152xbf16>
    %c0_74 = arith.constant 0 : index
    %c0_75 = arith.constant 0 : index
    %47 = vector.load %arg4[%c0_74, %c0_75] : memref<1152x128xbf16, #tpu.memory_space<vmem>>, vector<1152x128xbf16>
    %cst_76 = arith.constant dense<0.000000e+00> : vector<256x128xf32>
    %48 = tpu.matmul %46, %47, %cst_76 {dimension_numbers = #tpu.dot_dimension_numbers<[1], [0], [0], [1], [0, 0, 1, 1], [], []>} : vector<256x1152xbf16>, vector<1152x128xbf16>, vector<256x128xf32> -> vector<256x128xf32>
    %49 = vector.shape_cast %48 : vector<256x128xf32> to vector<1x16x16x128xf32>
    %c0_77 = arith.constant 0 : index
    %c0_78 = arith.constant 0 : index
    %c0_79 = arith.constant 0 : index
    %c0_80 = arith.constant 0 : index
    %50 = vector.load %arg5[%c0_77, %c0_78, %c0_79, %c0_80] : memref<1x16x16x128xf32, #tpu.memory_space<vmem>>, vector<1x16x16x128xf32>
    tpu.vector_store %arg5[%c0_77, %c0_78, %c0_79, %c0_80], %49 {strides = array<i32>} : memref<1x16x16x128xf32, #tpu.memory_space<vmem>>, vector<1x16x16x128xf32>,
    %cst_81 = arith.constant dense<0.000000e+00> : vector<128xf32>
    %51 = vector.multi_reduction <add>, %48, %cst_81 [0] : vector<256x128xf32> to vector<128xf32>
    %52 = vector.shape_cast %51 : vector<128xf32> to vector<1x128xf32>
    %53 = vector.shape_cast %52 : vector<1x128xf32> to vector<1x1x128xf32>
    %c0_82 = arith.constant 0 : index
    %c0_83 = arith.constant 0 : index
    %c0_84 = arith.constant 0 : index
    %54 = vector.load %arg6[%c0_82, %c0_83, %c0_84] : memref<1x1x128xf32, #tpu.memory_space<vmem>>, vector<1x1x128xf32>
    tpu.vector_store %arg6[%c0_82, %c0_83, %c0_84], %53 {strides = array<i32>} : memref<1x1x128xf32, #tpu.memory_space<vmem>>, vector<1x1x128xf32>,
    %55 = arith.mulf %48, %48 : vector<256x128xf32>
    %cst_85 = arith.constant dense<0.000000e+00> : vector<128xf32>
    %56 = vector.multi_reduction <add>, %55, %cst_85 [0] : vector<256x128xf32> to vector<128xf32>
    %57 = vector.shape_cast %56 : vector<128xf32> to vector<1x128xf32>
    %58 = vector.shape_cast %57 : vector<1x128xf32> to vector<1x1x128xf32>
    %c0_86 = arith.constant 0 : index
    %c0_87 = arith.constant 0 : index
    %c0_88 = arith.constant 0 : index
    %59 = vector.load %arg7[%c0_86, %c0_87, %c0_88] : memref<1x1x128xf32, #tpu.memory_space<vmem>>, vector<1x1x128xf32>
    tpu.vector_store %arg7[%c0_86, %c0_87, %c0_88], %58 {strides = array<i32>} : memref<1x1x128xf32, #tpu.memory_space<vmem>>, vector<1x1x128xf32>,
    return
  }
  func.func @transform_0(%arg0: i32) -> (i32, i32) {
    %c0_i32 = arith.constant 0 : i32
    %c0_i32_0 = arith.constant 0 : i32
    %c0_i32_1 = arith.constant 0 : i32
    return %c0_i32, %c0_i32_0 : i32, i32
  }
  func.func @transform_1(%arg0: i32) -> (i32, i32) {
    %c0_i32 = arith.constant 0 : i32
    %c0_i32_0 = arith.constant 0 : i32
    %c0_i32_1 = arith.constant 0 : i32
    return %c0_i32, %c0_i32_0 : i32, i32
  }
  func.func @transform_2(%arg0: i32) -> (i32, i32, i32, i32) {
    %c0_i32 = arith.constant 0 : i32
    %c0_i32_0 = arith.constant 0 : i32
    %c0_i32_1 = arith.constant 0 : i32
    %c0_i32_2 = arith.constant 0 : i32
    return %arg0, %c0_i32, %c0_i32_0, %c0_i32_1 : i32, i32, i32, i32
  }
  func.func @transform_3(%arg0: i32) -> (i32, i32) {
    %c0_i32 = arith.constant 0 : i32
    %c0_i32_0 = arith.constant 0 : i32
    %c0_i32_1 = arith.constant 0 : i32
    return %c0_i32, %c0_i32_0 : i32, i32
  }
  func.func @transform_4(%arg0: i32) -> (i32, i32, i32, i32) {
    %c0_i32 = arith.constant 0 : i32
    %c0_i32_0 = arith.constant 0 : i32
    %c0_i32_1 = arith.constant 0 : i32
    %c0_i32_2 = arith.constant 0 : i32
    return %arg0, %c0_i32, %c0_i32_0, %c0_i32_1 : i32, i32, i32, i32
  }
  func.func @transform_5(%arg0: i32) -> (i32, i32, i32) {
    %c0_i32 = arith.constant 0 : i32
    %c0_i32_0 = arith.constant 0 : i32
    %c0_i32_1 = arith.constant 0 : i32
    return %arg0, %c0_i32, %c0_i32_0 : i32, i32, i32
  }
  func.func @transform_6(%arg0: i32) -> (i32, i32, i32) {
    %c0_i32 = arith.constant 0 : i32
    %c0_i32_0 = arith.constant 0 : i32
    %c0_i32_1 = arith.constant 0 : i32
    return %arg0, %c0_i32, %c0_i32_0 : i32, i32, i32
  }
}

module attributes {stable_mosaic.version = 11 : i64} {
  func.func @_conv_stats_kernel(%arg0: i32, %arg1: memref<1x18x18x128xbf16, #tpu.memory_space<vmem>>, %arg2: memref<1152x128xbf16, #tpu.memory_space<vmem>>, %arg3: memref<1x16x16x128xf32, #tpu.memory_space<vmem>>, %arg4: memref<1x1x128xf32, #tpu.memory_space<vmem>>, %arg5: memref<1x1x128xf32, #tpu.memory_space<vmem>>, %arg6: memref<256x1152xbf16, #tpu.memory_space<vmem>>) attributes {dimension_semantics = [#tpu.dimension_semantics<parallel>], iteration_bounds = array<i64: 2>, scalar_prefetch = 0 : i64, scratch_operands = 1 : i64, tpu.core_type = #tpu.core_type<tc>, window_params = [{transform_indices = @transform_0, window_bounds = array<i64: 1, 18, 18, 128>}, {pipeline_mode = #tpu.pipeline_mode<synchronous>, transform_indices = @transform_1, window_bounds = array<i64: 1152, 128>}, {transform_indices = @transform_2, window_bounds = array<i64: 1, 16, 16, 128>}, {transform_indices = @transform_3, window_bounds = array<i64: 1, 1, 128>}, {transform_indices = @transform_4, window_bounds = array<i64: 1, 1, 128>}]} {
    %c0 = arith.constant 0 : index
    %c0_0 = arith.constant 0 : index
    %c0_1 = arith.constant 0 : index
    %c0_2 = arith.constant 0 : index
    %0 = vector.load %arg1[%c0, %c0_0, %c0_1, %c0_2] : memref<1x18x18x128xbf16, #tpu.memory_space<vmem>>, vector<1x16x16x128xbf16>
    %1 = vector.shape_cast %0 : vector<1x16x16x128xbf16> to vector<256x128xbf16>
    %c0_3 = arith.constant 0 : index
    %c0_4 = arith.constant 0 : index
    %2 = vector.load %arg6[%c0_3, %c0_4] : memref<256x1152xbf16, #tpu.memory_space<vmem>>, vector<256x128xbf16>
    tpu.vector_store %arg6[%c0_3, %c0_4], %1 {strides = array<i32>} : memref<256x1152xbf16, #tpu.memory_space<vmem>>, vector<256x128xbf16>,
    %c0_5 = arith.constant 0 : index
    %c0_6 = arith.constant 0 : index
    %c1 = arith.constant 1 : index
    %c0_7 = arith.constant 0 : index
    %3 = vector.load %arg1[%c0_5, %c0_6, %c1, %c0_7] : memref<1x18x18x128xbf16, #tpu.memory_space<vmem>>, vector<1x16x16x128xbf16>
    %4 = vector.shape_cast %3 : vector<1x16x16x128xbf16> to vector<256x128xbf16>
    %c0_8 = arith.constant 0 : index
    %c128 = arith.constant 128 : index
    %5 = vector.load %arg6[%c0_8, %c128] : memref<256x1152xbf16, #tpu.memory_space<vmem>>, vector<256x128xbf16>
    tpu.vector_store %arg6[%c0_8, %c128], %4 {strides = array<i32>} : memref<256x1152xbf16, #tpu.memory_space<vmem>>, vector<256x128xbf16>,
    %c0_9 = arith.constant 0 : index
    %c0_10 = arith.constant 0 : index
    %c2 = arith.constant 2 : index
    %c0_11 = arith.constant 0 : index
    %6 = vector.load %arg1[%c0_9, %c0_10, %c2, %c0_11] : memref<1x18x18x128xbf16, #tpu.memory_space<vmem>>, vector<1x16x16x128xbf16>
    %7 = vector.shape_cast %6 : vector<1x16x16x128xbf16> to vector<256x128xbf16>
    %c0_12 = arith.constant 0 : index
    %c256 = arith.constant 256 : index
    %8 = vector.load %arg6[%c0_12, %c256] : memref<256x1152xbf16, #tpu.memory_space<vmem>>, vector<256x128xbf16>
    tpu.vector_store %arg6[%c0_12, %c256], %7 {strides = array<i32>} : memref<256x1152xbf16, #tpu.memory_space<vmem>>, vector<256x128xbf16>,
    %c0_13 = arith.constant 0 : index
    %c1_14 = arith.constant 1 : index
    %c0_15 = arith.constant 0 : index
    %c0_16 = arith.constant 0 : index
    %9 = vector.load %arg1[%c0_13, %c1_14, %c0_15, %c0_16] : memref<1x18x18x128xbf16, #tpu.memory_space<vmem>>, vector<1x16x16x128xbf16>
    %10 = vector.shape_cast %9 : vector<1x16x16x128xbf16> to vector<256x128xbf16>
    %c0_17 = arith.constant 0 : index
    %c384 = arith.constant 384 : index
    %11 = vector.load %arg6[%c0_17, %c384] : memref<256x1152xbf16, #tpu.memory_space<vmem>>, vector<256x128xbf16>
    tpu.vector_store %arg6[%c0_17, %c384], %10 {strides = array<i32>} : memref<256x1152xbf16, #tpu.memory_space<vmem>>, vector<256x128xbf16>,
    %c0_18 = arith.constant 0 : index
    %c1_19 = arith.constant 1 : index
    %c1_20 = arith.constant 1 : index
    %c0_21 = arith.constant 0 : index
    %12 = vector.load %arg1[%c0_18, %c1_19, %c1_20, %c0_21] : memref<1x18x18x128xbf16, #tpu.memory_space<vmem>>, vector<1x16x16x128xbf16>
    %13 = vector.shape_cast %12 : vector<1x16x16x128xbf16> to vector<256x128xbf16>
    %c0_22 = arith.constant 0 : index
    %c512 = arith.constant 512 : index
    %14 = vector.load %arg6[%c0_22, %c512] : memref<256x1152xbf16, #tpu.memory_space<vmem>>, vector<256x128xbf16>
    tpu.vector_store %arg6[%c0_22, %c512], %13 {strides = array<i32>} : memref<256x1152xbf16, #tpu.memory_space<vmem>>, vector<256x128xbf16>,
    %c0_23 = arith.constant 0 : index
    %c1_24 = arith.constant 1 : index
    %c2_25 = arith.constant 2 : index
    %c0_26 = arith.constant 0 : index
    %15 = vector.load %arg1[%c0_23, %c1_24, %c2_25, %c0_26] : memref<1x18x18x128xbf16, #tpu.memory_space<vmem>>, vector<1x16x16x128xbf16>
    %16 = vector.shape_cast %15 : vector<1x16x16x128xbf16> to vector<256x128xbf16>
    %c0_27 = arith.constant 0 : index
    %c640 = arith.constant 640 : index
    %17 = vector.load %arg6[%c0_27, %c640] : memref<256x1152xbf16, #tpu.memory_space<vmem>>, vector<256x128xbf16>
    tpu.vector_store %arg6[%c0_27, %c640], %16 {strides = array<i32>} : memref<256x1152xbf16, #tpu.memory_space<vmem>>, vector<256x128xbf16>,
    %c0_28 = arith.constant 0 : index
    %c2_29 = arith.constant 2 : index
    %c0_30 = arith.constant 0 : index
    %c0_31 = arith.constant 0 : index
    %18 = vector.load %arg1[%c0_28, %c2_29, %c0_30, %c0_31] : memref<1x18x18x128xbf16, #tpu.memory_space<vmem>>, vector<1x16x16x128xbf16>
    %19 = vector.shape_cast %18 : vector<1x16x16x128xbf16> to vector<256x128xbf16>
    %c0_32 = arith.constant 0 : index
    %c768 = arith.constant 768 : index
    %20 = vector.load %arg6[%c0_32, %c768] : memref<256x1152xbf16, #tpu.memory_space<vmem>>, vector<256x128xbf16>
    tpu.vector_store %arg6[%c0_32, %c768], %19 {strides = array<i32>} : memref<256x1152xbf16, #tpu.memory_space<vmem>>, vector<256x128xbf16>,
    %c0_33 = arith.constant 0 : index
    %c2_34 = arith.constant 2 : index
    %c1_35 = arith.constant 1 : index
    %c0_36 = arith.constant 0 : index
    %21 = vector.load %arg1[%c0_33, %c2_34, %c1_35, %c0_36] : memref<1x18x18x128xbf16, #tpu.memory_space<vmem>>, vector<1x16x16x128xbf16>
    %22 = vector.shape_cast %21 : vector<1x16x16x128xbf16> to vector<256x128xbf16>
    %c0_37 = arith.constant 0 : index
    %c896 = arith.constant 896 : index
    %23 = vector.load %arg6[%c0_37, %c896] : memref<256x1152xbf16, #tpu.memory_space<vmem>>, vector<256x128xbf16>
    tpu.vector_store %arg6[%c0_37, %c896], %22 {strides = array<i32>} : memref<256x1152xbf16, #tpu.memory_space<vmem>>, vector<256x128xbf16>,
    %c0_38 = arith.constant 0 : index
    %c2_39 = arith.constant 2 : index
    %c2_40 = arith.constant 2 : index
    %c0_41 = arith.constant 0 : index
    %24 = vector.load %arg1[%c0_38, %c2_39, %c2_40, %c0_41] : memref<1x18x18x128xbf16, #tpu.memory_space<vmem>>, vector<1x16x16x128xbf16>
    %25 = vector.shape_cast %24 : vector<1x16x16x128xbf16> to vector<256x128xbf16>
    %c0_42 = arith.constant 0 : index
    %c1024 = arith.constant 1024 : index
    %26 = vector.load %arg6[%c0_42, %c1024] : memref<256x1152xbf16, #tpu.memory_space<vmem>>, vector<256x128xbf16>
    tpu.vector_store %arg6[%c0_42, %c1024], %25 {strides = array<i32>} : memref<256x1152xbf16, #tpu.memory_space<vmem>>, vector<256x128xbf16>,
    %c0_43 = arith.constant 0 : index
    %c0_44 = arith.constant 0 : index
    %27 = vector.load %arg6[%c0_43, %c0_44] : memref<256x1152xbf16, #tpu.memory_space<vmem>>, vector<256x1152xbf16>
    %c0_45 = arith.constant 0 : index
    %c0_46 = arith.constant 0 : index
    %28 = vector.load %arg2[%c0_45, %c0_46] : memref<1152x128xbf16, #tpu.memory_space<vmem>>, vector<1152x128xbf16>
    %cst = arith.constant dense<0.000000e+00> : vector<256x128xf32>
    %29 = tpu.matmul %27, %28, %cst {dimension_numbers = #tpu.dot_dimension_numbers<[1], [0], [0], [1], [0, 0, 1, 1], [], []>} : vector<256x1152xbf16>, vector<1152x128xbf16>, vector<256x128xf32> -> vector<256x128xf32>
    %30 = vector.shape_cast %29 : vector<256x128xf32> to vector<1x16x16x128xf32>
    %c0_47 = arith.constant 0 : index
    %c0_48 = arith.constant 0 : index
    %c0_49 = arith.constant 0 : index
    %c0_50 = arith.constant 0 : index
    %31 = vector.load %arg3[%c0_47, %c0_48, %c0_49, %c0_50] : memref<1x16x16x128xf32, #tpu.memory_space<vmem>>, vector<1x16x16x128xf32>
    tpu.vector_store %arg3[%c0_47, %c0_48, %c0_49, %c0_50], %30 {strides = array<i32>} : memref<1x16x16x128xf32, #tpu.memory_space<vmem>>, vector<1x16x16x128xf32>,
    %cst_51 = arith.constant dense<0.000000e+00> : vector<128xf32>
    %32 = vector.multi_reduction <add>, %29, %cst_51 [0] : vector<256x128xf32> to vector<128xf32>
    %33 = vector.shape_cast %32 : vector<128xf32> to vector<1x128xf32>
    %34 = vector.shape_cast %33 : vector<1x128xf32> to vector<1x1x128xf32>
    %c0_52 = arith.constant 0 : index
    %c0_53 = arith.constant 0 : index
    %c0_54 = arith.constant 0 : index
    %35 = vector.load %arg4[%c0_52, %c0_53, %c0_54] : memref<1x1x128xf32, #tpu.memory_space<vmem>>, vector<1x1x128xf32>
    tpu.vector_store %arg4[%c0_52, %c0_53, %c0_54], %34 {strides = array<i32>} : memref<1x1x128xf32, #tpu.memory_space<vmem>>, vector<1x1x128xf32>,
    %36 = arith.mulf %29, %29 : vector<256x128xf32>
    %cst_55 = arith.constant dense<0.000000e+00> : vector<128xf32>
    %37 = vector.multi_reduction <add>, %36, %cst_55 [0] : vector<256x128xf32> to vector<128xf32>
    %38 = vector.shape_cast %37 : vector<128xf32> to vector<1x128xf32>
    %39 = vector.shape_cast %38 : vector<1x128xf32> to vector<1x1x128xf32>
    %c0_56 = arith.constant 0 : index
    %c0_57 = arith.constant 0 : index
    %c0_58 = arith.constant 0 : index
    %40 = vector.load %arg5[%c0_56, %c0_57, %c0_58] : memref<1x1x128xf32, #tpu.memory_space<vmem>>, vector<1x1x128xf32>
    tpu.vector_store %arg5[%c0_56, %c0_57, %c0_58], %39 {strides = array<i32>} : memref<1x1x128xf32, #tpu.memory_space<vmem>>, vector<1x1x128xf32>,
    return
  }
  func.func @transform_0(%arg0: i32) -> (i32, i32, i32, i32) {
    %c0_i32 = arith.constant 0 : i32
    %c0_i32_0 = arith.constant 0 : i32
    %c0_i32_1 = arith.constant 0 : i32
    %c0_i32_2 = arith.constant 0 : i32
    return %arg0, %c0_i32, %c0_i32_0, %c0_i32_1 : i32, i32, i32, i32
  }
  func.func @transform_1(%arg0: i32) -> (i32, i32) {
    %c0_i32 = arith.constant 0 : i32
    %c0_i32_0 = arith.constant 0 : i32
    %c0_i32_1 = arith.constant 0 : i32
    return %c0_i32, %c0_i32_0 : i32, i32
  }
  func.func @transform_2(%arg0: i32) -> (i32, i32, i32, i32) {
    %c0_i32 = arith.constant 0 : i32
    %c0_i32_0 = arith.constant 0 : i32
    %c0_i32_1 = arith.constant 0 : i32
    %c0_i32_2 = arith.constant 0 : i32
    return %arg0, %c0_i32, %c0_i32_0, %c0_i32_1 : i32, i32, i32, i32
  }
  func.func @transform_3(%arg0: i32) -> (i32, i32, i32) {
    %c0_i32 = arith.constant 0 : i32
    %c0_i32_0 = arith.constant 0 : i32
    %c0_i32_1 = arith.constant 0 : i32
    return %arg0, %c0_i32, %c0_i32_0 : i32, i32, i32
  }
  func.func @transform_4(%arg0: i32) -> (i32, i32, i32) {
    %c0_i32 = arith.constant 0 : i32
    %c0_i32_0 = arith.constant 0 : i32
    %c0_i32_1 = arith.constant 0 : i32
    return %arg0, %c0_i32, %c0_i32_0 : i32, i32, i32
  }
}

</mosaic_0001>

<llo_original>
// kernel: basic_block_pallas.5
$region0: #{basic_block_pallas.5}
  #allocation0 [shape = 'u32[]', space=smem, size = 0x4, offset = 0x4, fixed_abs, tag = 'smem constant byte address 0x4 - core index']
  #allocation1 [shape = 'u32[72,128]{1,0:T(1,128)}', space=vmem, size = 0x9000, scoped, tag = 'internal scratch']
  %s0 = inlined_call_operand.vmem [shape: f32[1,128], index: 0, kind: input, shape index: {}]
  %s1 = inlined_call_operand.vmem [shape: f32[1,128], index: 1, kind: input, shape index: {}]
  %s2 = inlined_call_operand.vmem [shape: f32[2,16,16,128], index: 2, kind: input, shape index: {}]
  %s3 = inlined_call_operand.vmem [shape: bf16[2,18,18,128], index: 3, kind: input, shape index: {}]
  %s4 = inlined_call_operand.vmem [shape: f32[2,16,16,128], index: 4, kind: output, shape index: {}]
  %s5 = sld [smem:[#allocation0]]
  $region49: #{basic_block_pallas.5} parent=0
    _
  %s7 = ssub.s32 1, %s5
  %s8 = scalar_select 0, %s7, %s5
  loop: start=0, step=1, limit=4
  $region2: #{basic_block_pallas.5} parent=0 // loop_pre_header
    _
  $region3: #{basic_block_pallas.5} parent=0 // loop_header
    %s10 = sphi 0, %s14
    %p11 = scmp.ge.s32.totalorder %s10, 4
    %s18 = sphi 0, %s18
    %s20 = sphi 0, %s18
    %s21 = sphi 0, %s20
    %s35 = sphi 0, %s21
    %s39 = sphi 0, %s39
    %s41 = sphi 0, %s39
    %s42 = sphi 0, %s41
    %s56 = sphi 0, %s42
    %s62 = sphi 0, %s64
    %s65 = sphi 0, %s62
    %s66 = sphi 0, %s65
    %s82 = sphi 0, %s66
    %s88 = sphi 0, %s90
    %s91 = sphi 0, %s88
    %s92 = sphi 0, %s91
    %s108 = sphi 0, %s92
    %s114 = sphi 0, %s116
    %s117 = sphi 0, %s114
    %s118 = sphi 0, %s117
    %s134 = sphi 0, %s118
  $region4: #{basic_block_pallas.5} parent=0 // loop_header_branch
    %13 = sbr.rel (%p11) target = $region8
  $region5: #{basic_block_pallas.5} parent=0 // loop_body
    %s15 = ssub.s32 %s10, 1
    %s16 = ssub.s32 %s10, 2
    %s17 = sadd.s32 %s10, 1
    %s19 = sadd.s32 %s18, 1
    %p22 = scmp.eq.s32.totalorder %s10, 1
    %p23 = scmp.ne.s32.totalorder %s18, %s20
    %p24 = scmp.eq.s32.totalorder %s10, 0
    %p25 = por %p23, %p24
    %p26 = scmp.ne.s32.totalorder %s18, %s20
    %p27 = scmp.eq.s32.totalorder %s15, 1
    %p28 = por %p26, %p27
    %p29 = scmp.ne.s32.totalorder %s20, %s21
    %p30 = scmp.eq.s32.totalorder %s15, 0
    %p31 = por %p29, %p30
    %p32 = scmp.ne.s32.totalorder %s20, %s21
    %p33 = scmp.eq.s32.totalorder %s16, 1
    %p34 = por %p32, %p33
    %p36 = scmp.ne.s32.totalorder %s21, %s35
    %p37 = scmp.eq.s32.totalorder %s16, 0
    %p38 = por %p36, %p37
    %s40 = sadd.s32 %s39, 1
    %p43 = scmp.eq.s32.totalorder %s10, 1
    %p44 = scmp.ne.s32.totalorder %s39, %s41
    %p45 = scmp.eq.s32.totalorder %s10, 0
    %p46 = por %p44, %p45
    %p47 = scmp.ne.s32.totalorder %s39, %s41
    %p48 = scmp.eq.s32.totalorder %s15, 1
    %p49 = por %p47, %p48
    %p50 = scmp.ne.s32.totalorder %s41, %s42
    %p51 = scmp.eq.s32.totalorder %s15, 0
    %p52 = por %p50, %p51
    %p53 = scmp.ne.s32.totalorder %s41, %s42
    %p54 = scmp.eq.s32.totalorder %s16, 1
    %p55 = por %p53, %p54
    %p57 = scmp.ne.s32.totalorder %s42, %s56
    %p58 = scmp.eq.s32.totalorder %s16, 0
    %p59 = por %p57, %p58
    %s60 = ssub.s32 %s10, %s17
    %p61 = scmp.eq.s32.totalorder %s60, 0
    %s63 = sadd.s32 %s62, 1
    %s64 = scalar_select %p61, %s62, %s63
    %p67 = pneg %p61
    %p68 = scmp.eq.s32.totalorder %s10, 1
    %p69 = por %p67, %p68
    %p70 = scmp.ne.s32.totalorder %s62, %s65
    %p71 = scmp.eq.s32.totalorder %s10, 0
    %p72 = por %p70, %p71
    %p73 = scmp.ne.s32.totalorder %s62, %s65
    %p74 = scmp.eq.s32.totalorder %s15, 1
    %p75 = por %p73, %p74
    %p76 = scmp.ne.s32.totalorder %s65, %s66
    %p77 = scmp.eq.s32.totalorder %s15, 0
    %p78 = por %p76, %p77
    %p79 = scmp.ne.s32.totalorder %s65, %s66
    %p80 = scmp.eq.s32.totalorder %s16, 1
    %p81 = por %p79, %p80
    %p83 = scmp.ne.s32.totalorder %s66, %s82
    %p84 = scmp.eq.s32.totalorder %s16, 0
    %p85 = por %p83, %p84
    %s86 = ssub.s32 %s10, %s17
    %p87 = scmp.eq.s32.totalorder %s86, 0
    %s89 = sadd.s32 %s88, 1
    %s90 = scalar_select %p87, %s88, %s89
    %p93 = pneg %p87
    %p94 = scmp.eq.s32.totalorder %s10, 1
    %p95 = por %p93, %p94
    %p96 = scmp.ne.s32.totalorder %s88, %s91
    %p97 = scmp.eq.s32.totalorder %s10, 0
    %p98 = por %p96, %p97
    %p99 = scmp.ne.s32.totalorder %s88, %s91
    %p100 = scmp.eq.s32.totalorder %s15, 1
    %p101 = por %p99, %p100
    %p102 = scmp.ne.s32.totalorder %s91, %s92
    %p103 = scmp.eq.s32.totalorder %s15, 0
    %p104 = por %p102, %p103
    %p105 = scmp.ne.s32.totalorder %s91, %s92
    %p106 = scmp.eq.s32.totalorder %s16, 1
    %p107 = por %p105, %p106
    %p109 = scmp.ne.s32.totalorder %s92, %s108
    %p110 = scmp.eq.s32.totalorder %s16, 0
    %p111 = por %p109, %p110
    %s112 = ssub.s32 %s10, %s17
    %p113 = scmp.eq.s32.totalorder %s112, 0
    %s115 = sadd.s32 %s114, 1
    %s116 = scalar_select %p113, %s114, %s115
    %p119 = pneg %p113
    %p120 = scmp.eq.s32.totalorder %s10, 1
    %p121 = por %p119, %p120
    %p122 = scmp.ne.s32.totalorder %s114, %s117
    %p123 = scmp.eq.s32.totalorder %s10, 0
    %p124 = por %p122, %p123
    %p125 = scmp.ne.s32.totalorder %s114, %s117
    %p126 = scmp.eq.s32.totalorder %s15, 1
    %p127 = por %p125, %p126
    %p128 = scmp.ne.s32.totalorder %s117, %s118
    %p129 = scmp.eq.s32.totalorder %s15, 0
    %p130 = por %p128, %p129
    %p131 = scmp.ne.s32.totalorder %s117, %s118
    %p132 = scmp.eq.s32.totalorder %s16, 1
    %p133 = por %p131, %p132
    %p135 = scmp.ne.s32.totalorder %s118, %s134
    %p136 = scmp.eq.s32.totalorder %s16, 0
    %p137 = por %p135, %p136
    %p138 = scmp.le.s32.totalorder 1, %s10
    %p139 = scmp.lt.s32.totalorder %s10, 3
    %p140 = pnand %p138, %p139
    %p141 = pneg %p140
    // Predicated region
    $region9: #{basic_block_pallas.5} parent=5 // pred_check
      _
    $region10: #{basic_block_pallas.5} parent=5 // pred_check_branch
      %143 = sbr.rel (%p140) target = $region12
    $region11: #{basic_block_pallas.5} parent=5 // pred_region
      %s144 = ssub.s32 %s10, 1
      // Predicated region
      $region13: #{basic_block_pallas.5} parent=11 // pred_check
        %p145 = pneg %p31
      $region14: #{basic_block_pallas.5} parent=11 // pred_check_branch
        %147 = sbr.rel (%p145) target = $region16
      $region15: #{basic_block_pallas.5} parent=11 // pred_region
        _
      $region16: #{basic_block_pallas.5} parent=11 // pred_fallthru
        _
      // Predicated region
      $region17: #{basic_block_pallas.5} parent=11 // pred_check
        %p148 = pneg %p52
      $region18: #{basic_block_pallas.5} parent=11 // pred_check_branch
        %150 = sbr.rel (%p148) target = $region20
      $region19: #{basic_block_pallas.5} parent=11 // pred_region
        _
      $region20: #{basic_block_pallas.5} parent=11 // pred_fallthru
        _
    $region12: #{basic_block_pallas.5} parent=5 // pred_fallthru
      _
    %p151 = scmp.lt.s32.totalorder %s10, 2
    // Predicated region
    $region21: #{basic_block_pallas.5} parent=5 // pred_check
      %p152 = pneg %p151
    $region22: #{basic_block_pallas.5} parent=5 // pred_check_branch
      %154 = sbr.rel (%p152) target = $region24
    $region23: #{basic_block_pallas.5} parent=5 // pred_region
      // Predicated region
      $region25: #{basic_block_pallas.5} parent=23 // pred_check
        %p155 = pneg %p72
      $region26: #{basic_block_pallas.5} parent=23 // pred_check_branch
        %157 = sbr.rel (%p155) target = $region28
      $region27: #{basic_block_pallas.5} parent=23 // pred_region
        %p158 = scmp.lt.s32.totalorder %s10, 1
        %s159 = scalar_select %p158, %s10, 1
        %s160 = smul.addr %s159, 32
        %s161 = smul.addr %s160, 8
        %s162 = scalar_lea.vmem %s2, %s161
      $region28: #{basic_block_pallas.5} parent=23 // pred_fallthru
        _
      // Predicated region
      $region29: #{basic_block_pallas.5} parent=23 // pred_check
        %p163 = pneg %p98
      $region30: #{basic_block_pallas.5} parent=23 // pred_check_branch
        %165 = sbr.rel (%p163) target = $region32
      $region31: #{basic_block_pallas.5} parent=23 // pred_region
        %p166 = scmp.lt.s32.totalorder %s10, 1
        %s167 = scalar_select %p166, %s10, 1
        %s168 = smul.addr %s167, 54
        %s169 = smul.addr %s168, 4
        %s170 = scalar_lea.vmem %s3, %s169
      $region32: #{basic_block_pallas.5} parent=23 // pred_fallthru
        _
    $region24: #{basic_block_pallas.5} parent=5 // pred_fallthru
      _
    %p171 = scmp.le.s32.totalorder 1, %s10
    %p172 = scmp.lt.s32.totalorder %s10, 3
    %p173 = pnand %p171, %p172
    %p174 = pneg %p173
    // Predicated region
    $region33: #{basic_block_pallas.5} parent=5 // pred_check
      _
    $region34: #{basic_block_pallas.5} parent=5 // pred_check_branch
      %176 = sbr.rel (%p173) target = $region36
    $region35: #{basic_block_pallas.5} parent=5 // pred_region
      %s177 = ssub.s32 %s10, 1
      %p178 = pneg %p31
      %p179 = pneg %p28
      %p180 = pneg %p52
      %p181 = pneg %p49
      %p182 = scmp.lt.s32.totalorder %s15, 1
      %s183 = scalar_select %p182, %s15, 1
      %s184 = smul.addr %s183, 32
      %s185 = smul.addr %s184, 8
      %s186 = scalar_lea.vmem %s2, %s185
      %p187 = pneg %p78
      %p188 = pneg %p75
      %p189 = scmp.lt.s32.totalorder %s15, 1
      %s190 = scalar_select %p189, %s15, 1
      %s191 = smul.addr %s190, 54
      %s192 = smul.addr %s191, 4
      %s193 = scalar_lea.vmem %s3, %s192
      %p194 = pneg %p104
      %p195 = pneg %p101
      %p196 = pneg %p130
      %p197 = pneg %p127
      %p198 = scmp.lt.s32.totalorder %s15, 1
      %s199 = scalar_select %p198, %s15, 1
      %s200 = smul.addr %s199, 32
      %s201 = smul.addr %s200, 8
      %s202 = scalar_lea.vmem %s4, %s201
      %p203 = scmp.lt.s32.totalorder %s15, 1
      %s204 = scalar_select %p203, %s15, 1
      %s205 = smul.addr %s204, 32
      %s206 = smul.addr %s205, 8
      %s207 = scalar_lea.vmem %s2, %s206
      %p208 = scmp.lt.s32.totalorder %s15, 1
      %s209 = scalar_select %p208, %s15, 1
      %s210 = smul.addr %s209, 54
      %s211 = smul.addr %s210, 4
      %s212 = scalar_lea.vmem %s3, %s211
      %p213 = scmp.lt.s32.totalorder %s15, 1
      %s214 = scalar_select %p213, %s15, 1
      %s215 = smul.addr %s214, 32
      %s216 = smul.addr %s215, 8
      %s217 = scalar_lea.vmem %s4, %s216
      %v218 = vld [vmem:[%s0] sm:$0x1]
      %v219 = vld [vmem:[%s1] sm:$0x1]
      %s220 = scalar_lea.vmem %s212, 12
      %v221 = vld [vmem:[%s220] sm:$0xf]
      %v222 = vld [vmem:[%s220 + $0x4] sm:$0xf]
      %v223 = vld [vmem:[%s220 + $0x8] sm:$0x1]
      %v224 = vld [vmem:[%s220 + $0xc] sm:$0xf]
      %v225 = vld [vmem:[%s220 + $0x10] sm:$0xf]
      %v226 = vld [vmem:[%s220 + $0x14] sm:$0x1]
      %v227 = vld [vmem:[%s220 + $0x18] sm:$0xf]
      %v228 = vld [vmem:[%s220 + $0x1c] sm:$0xf]
      %v229 = vld [vmem:[%s220 + $0x20] sm:$0x1]
      %v230 = vld [vmem:[%s220 + $0x24] sm:$0xf]
      %v231 = vld [vmem:[%s220 + $0x28] sm:$0xf]
      %v232 = vld [vmem:[%s220 + $0x2c] sm:$0x1]
      %v233 = vld [vmem:[%s220 + $0x30] sm:$0xf]
      %v234 = vld [vmem:[%s220 + $0x34] sm:$0xf]
      %v235 = vld [vmem:[%s220 + $0x38] sm:$0x1]
      %v236 = vld [vmem:[%s220 + $0x3c] sm:$0xf]
      %v237 = vld [vmem:[%s220 + $0x40] sm:$0xf]
      %v238 = vld [vmem:[%s220 + $0x44] sm:$0x1]
      %v239 = vld [vmem:[%s220 + $0x48] sm:$0xf]
      %v240 = vld [vmem:[%s220 + $0x4c] sm:$0xf]
      %v241 = vld [vmem:[%s220 + $0x50] sm:$0x1]
      %v242 = vld [vmem:[%s220 + $0x54] sm:$0xf]
      %v243 = vld [vmem:[%s220 + $0x58] sm:$0xf]
      %v244 = vld [vmem:[%s220 + $0x5c] sm:$0x1]
      %v245 = vld [vmem:[%s220 + $0x60] sm:$0xf]
      %v246 = vld [vmem:[%s220 + $0x64] sm:$0xf]
      %v247 = vld [vmem:[%s220 + $0x68] sm:$0x1]
      %v248 = vld [vmem:[%s220 + $0x6c] sm:$0xf]
      %v249 = vld [vmem:[%s220 + $0x70] sm:$0xf]
      %v250 = vld [vmem:[%s220 + $0x74] sm:$0x1]
      %v251 = vld [vmem:[%s220 + $0x78] sm:$0xf]
      %v252 = vld [vmem:[%s220 + $0x7c] sm:$0xf]
      %v253 = vld [vmem:[%s220 + $0x80] sm:$0x1]
      %v254 = vld [vmem:[%s220 + $0x84] sm:$0xf]
      %v255 = vld [vmem:[%s220 + $0x88] sm:$0xf]
      %v256 = vld [vmem:[%s220 + $0x8c] sm:$0x1]
      %v257 = vld [vmem:[%s220 + $0x90] sm:$0xf]
      %v258 = vld [vmem:[%s220 + $0x94] sm:$0xf]
      %v259 = vld [vmem:[%s220 + $0x98] sm:$0x1]
      %v260 = vld [vmem:[%s220 + $0x9c] sm:$0xf]
      %v261 = vld [vmem:[%s220 + $0xa0] sm:$0xf]
      %v262 = vld [vmem:[%s220 + $0xa4] sm:$0x1]
      %v263 = vld [vmem:[%s220 + $0xa8] sm:$0xf]
      %v264 = vld [vmem:[%s220 + $0xac] sm:$0xf]
      %v265 = vld [vmem:[%s220 + $0xb0] sm:$0x1]
      %v266 = vld [vmem:[%s220 + $0xb4] sm:$0xf]
      %v267 = vld [vmem:[%s220 + $0xb8] sm:$0xf]
      %v268 = vld [vmem:[%s220 + $0xbc] sm:$0x1]
      %v269 = vunpack.c.l.bf16 %v221
      %v270 = vunpack.c.l.bf16 %v222
      %v271 = vunpack.c.l.bf16 %v223
      %v272 = vunpack.c.l.bf16 %v224
      %v273 = vunpack.c.l.bf16 %v225
      %v274 = vunpack.c.l.bf16 %v226
      %v275 = vunpack.c.l.bf16 %v227
      %v276 = vunpack.c.l.bf16 %v228
      %v277 = vunpack.c.l.bf16 %v229
      %v278 = vunpack.c.l.bf16 %v230
      %v279 = vunpack.c.l.bf16 %v231
      %v280 = vunpack.c.l.bf16 %v232
      %v281 = vunpack.c.l.bf16 %v233
      %v282 = vunpack.c.l.bf16 %v234
      %v283 = vunpack.c.l.bf16 %v235
      %v284 = vunpack.c.l.bf16 %v236
      %v285 = vunpack.c.l.bf16 %v237
      %v286 = vunpack.c.l.bf16 %v238
      %v287 = vunpack.c.l.bf16 %v239
      %v288 = vunpack.c.l.bf16 %v240
      %v289 = vunpack.c.l.bf16 %v241
      %v290 = vunpack.c.l.bf16 %v242
      %v291 = vunpack.c.l.bf16 %v243
      %v292 = vunpack.c.l.bf16 %v244
      %v293 = vunpack.c.l.bf16 %v245
      %v294 = vunpack.c.l.bf16 %v246
      %v295 = vunpack.c.l.bf16 %v247
      %v296 = vunpack.c.l.bf16 %v248
      %v297 = vunpack.c.l.bf16 %v249
      %v298 = vunpack.c.l.bf16 %v250
      %v299 = vunpack.c.l.bf16 %v251
      %v300 = vunpack.c.l.bf16 %v252
      %v301 = vunpack.c.l.bf16 %v253
      %v302 = vunpack.c.l.bf16 %v254
      %v303 = vunpack.c.l.bf16 %v255
      %v304 = vunpack.c.l.bf16 %v256
      %v305 = vunpack.c.l.bf16 %v257
      %v306 = vunpack.c.l.bf16 %v258
      %v307 = vunpack.c.l.bf16 %v259
      %v308 = vunpack.c.l.bf16 %v260
      %v309 = vunpack.c.l.bf16 %v261
      %v310 = vunpack.c.l.bf16 %v262
      %v311 = vunpack.c.l.bf16 %v263
      %v312 = vunpack.c.l.bf16 %v264
      %v313 = vunpack.c.l.bf16 %v265
      %v314 = vunpack.c.l.bf16 %v266
      %v315 = vunpack.c.l.bf16 %v267
      %v316 = vunpack.c.l.bf16 %v268
      %v317 = vld [vmem:[%s207] sm:$0xff]
      %v318 = vld [vmem:[%s207 + $0x8] sm:$0xff]
      %v319 = vld [vmem:[%s207 + $0x10] sm:$0xff]
      %v320 = vld [vmem:[%s207 + $0x18] sm:$0xff]
      %v321 = vld [vmem:[%s207 + $0x20] sm:$0xff]
      %v322 = vld [vmem:[%s207 + $0x28] sm:$0xff]
      %v323 = vld [vmem:[%s207 + $0x30] sm:$0xff]
      %v324 = vld [vmem:[%s207 + $0x38] sm:$0xff]
      %v325 = vld [vmem:[%s207 + $0x40] sm:$0xff]
      %v326 = vld [vmem:[%s207 + $0x48] sm:$0xff]
      %v327 = vld [vmem:[%s207 + $0x50] sm:$0xff]
      %v328 = vld [vmem:[%s207 + $0x58] sm:$0xff]
      %v329 = vld [vmem:[%s207 + $0x60] sm:$0xff]
      %v330 = vld [vmem:[%s207 + $0x68] sm:$0xff]
      %v331 = vld [vmem:[%s207 + $0x70] sm:$0xff]
      %v332 = vld [vmem:[%s207 + $0x78] sm:$0xff]
      %v333 = vld [vmem:[%s207 + $0x80] sm:$0xff]
      %v334 = vld [vmem:[%s207 + $0x88] sm:$0xff]
      %v335 = vld [vmem:[%s207 + $0x90] sm:$0xff]
      %v336 = vld [vmem:[%s207 + $0x98] sm:$0xff]
      %v337 = vld [vmem:[%s207 + $0xa0] sm:$0xff]
      %v338 = vld [vmem:[%s207 + $0xa8] sm:$0xff]
      %v339 = vld [vmem:[%s207 + $0xb0] sm:$0xff]
      %v340 = vld [vmem:[%s207 + $0xb8] sm:$0xff]
      %v341 = vld [vmem:[%s207 + $0xc0] sm:$0xff]
      %v342 = vld [vmem:[%s207 + $0xc8] sm:$0xff]
      %v343 = vld [vmem:[%s207 + $0xd0] sm:$0xff]
      %v344 = vld [vmem:[%s207 + $0xd8] sm:$0xff]
      %v345 = vld [vmem:[%s207 + $0xe0] sm:$0xff]
      %v346 = vld [vmem:[%s207 + $0xe8] sm:$0xff]
      %v347 = vld [vmem:[%s207 + $0xf0] sm:$0xff]
      %v348 = vld [vmem:[%s207 + $0xf8] sm:$0xff]
      %v350 = vperm.slane %v218, 0
      %v352 = vmul.f32 %v317, %v350
      %v353 = vmul.f32 %v318, %v350
      %v354 = vmul.f32 %v319, %v350
      %v355 = vmul.f32 %v320, %v350
      %v356 = vmul.f32 %v321, %v350
      %v357 = vmul.f32 %v322, %v350
      %v358 = vmul.f32 %v323, %v350
      %v359 = vmul.f32 %v324, %v350
      %v360 = vmul.f32 %v325, %v350
      %v361 = vmul.f32 %v326, %v350
      %v362 = vmul.f32 %v327, %v350
      %v363 = vmul.f32 %v328, %v350
      %v364 = vmul.f32 %v329, %v350
      %v365 = vmul.f32 %v330, %v350
      %v366 = vmul.f32 %v331, %v350
      %v367 = vmul.f32 %v332, %v350
      %v368 = vmul.f32 %v333, %v350
      %v369 = vmul.f32 %v334, %v350
      %v370 = vmul.f32 %v335, %v350
      %v371 = vmul.f32 %v336, %v350
      %v372 = vmul.f32 %v337, %v350
      %v373 = vmul.f32 %v338, %v350
      %v374 = vmul.f32 %v339, %v350
      %v375 = vmul.f32 %v340, %v350
      %v376 = vmul.f32 %v341, %v350
      %v377 = vmul.f32 %v342, %v350
      %v378 = vmul.f32 %v343, %v350
      %v379 = vmul.f32 %v344, %v350
      %v380 = vmul.f32 %v345, %v350
      %v381 = vmul.f32 %v346, %v350
      %v382 = vmul.f32 %v347, %v350
      %v383 = vmul.f32 %v348, %v350
      %v385 = vperm.slane %v219, 0
      %v387 = vadd.f32 %v352, %v385
      %v388 = vadd.f32 %v353, %v385
      %v389 = vadd.f32 %v354, %v385
      %v390 = vadd.f32 %v355, %v385
      %v391 = vadd.f32 %v356, %v385
      %v392 = vadd.f32 %v357, %v385
      %v393 = vadd.f32 %v358, %v385
      %v394 = vadd.f32 %v359, %v385
      %v395 = vadd.f32 %v360, %v385
      %v396 = vadd.f32 %v361, %v385
      %v397 = vadd.f32 %v362, %v385
      %v398 = vadd.f32 %v363, %v385
      %v399 = vadd.f32 %v364, %v385
      %v400 = vadd.f32 %v365, %v385
      %v401 = vadd.f32 %v366, %v385
      %v402 = vadd.f32 %v367, %v385
      %v403 = vadd.f32 %v368, %v385
      %v404 = vadd.f32 %v369, %v385
      %v405 = vadd.f32 %v370, %v385
      %v406 = vadd.f32 %v371, %v385
      %v407 = vadd.f32 %v372, %v385
      %v408 = vadd.f32 %v373, %v385
      %v409 = vadd.f32 %v374, %v385
      %v410 = vadd.f32 %v375, %v385
      %v411 = vadd.f32 %v376, %v385
      %v412 = vadd.f32 %v377, %v385
      %v413 = vadd.f32 %v378, %v385
      %v414 = vadd.f32 %v379, %v385
      %v415 = vadd.f32 %v380, %v385
      %v416 = vadd.f32 %v381, %v385
      %v417 = vadd.f32 %v382, %v385
      %v418 = vadd.f32 %v383, %v385
      %vm467 = vcmask 1046528
      %v468 = vrot.slane %v269, 1
      %v469 = vrot.slane %v270, 1
      %v470 = vsel %vm467, %v468, %v469
      %v471 = vrot.slane %v271, 1
      %v472 = vsel %vm467, %v469, %v471
      %v473 = vrot.slane %v272, 1
      %v474 = vrot.slane %v273, 1
      %v475 = vsel %vm467, %v473, %v474
      %v476 = vrot.slane %v274, 1
      %v477 = vsel %vm467, %v474, %v476
      %v478 = vrot.slane %v275, 1
      %v479 = vrot.slane %v276, 1
      %v480 = vsel %vm467, %v478, %v479
      %v481 = vrot.slane %v277, 1
      %v482 = vsel %vm467, %v479, %v481
      %v483 = vrot.slane %v278, 1
      %v484 = vrot.slane %v279, 1
      %v485 = vsel %vm467, %v483, %v484
      %v486 = vrot.slane %v280, 1
      %v487 = vsel %vm467, %v484, %v486
      %v488 = vrot.slane %v281, 1
      %v489 = vrot.slane %v282, 1
      %v490 = vsel %vm467, %v488, %v489
      %v491 = vrot.slane %v283, 1
      %v492 = vsel %vm467, %v489, %v491
      %v493 = vrot.slane %v284, 1
      %v494 = vrot.slane %v285, 1
      %v495 = vsel %vm467, %v493, %v494
      %v496 = vrot.slane %v286, 1
      %v497 = vsel %vm467, %v494, %v496
      %v498 = vrot.slane %v287, 1
      %v499 = vrot.slane %v288, 1
      %v500 = vsel %vm467, %v498, %v499
      %v501 = vrot.slane %v289, 1
      %v502 = vsel %vm467, %v499, %v501
      %v503 = vrot.slane %v290, 1
      %v504 = vrot.slane %v291, 1
      %v505 = vsel %vm467, %v503, %v504
      %v506 = vrot.slane %v292, 1
      %v507 = vsel %vm467, %v504, %v506
      %v508 = vrot.slane %v293, 1
      %v509 = vrot.slane %v294, 1
      %v510 = vsel %vm467, %v508, %v509
      %v511 = vrot.slane %v295, 1
      %v512 = vsel %vm467, %v509, %v511
      %v513 = vrot.slane %v296, 1
      %v514 = vrot.slane %v297, 1
      %v515 = vsel %vm467, %v513, %v514
      %v516 = vrot.slane %v298, 1
      %v517 = vsel %vm467, %v514, %v516
      %v518 = vrot.slane %v299, 1
      %v519 = vrot.slane %v300, 1
      %v520 = vsel %vm467, %v518, %v519
      %v521 = vrot.slane %v301, 1
      %v522 = vsel %vm467, %v519, %v521
      %v523 = vrot.slane %v302, 1
      %v524 = vrot.slane %v303, 1
      %v525 = vsel %vm467, %v523, %v524
      %v526 = vrot.slane %v304, 1
      %v527 = vsel %vm467, %v524, %v526
      %v528 = vrot.slane %v305, 1
      %v529 = vrot.slane %v306, 1
      %v530 = vsel %vm467, %v528, %v529
      %v531 = vrot.slane %v307, 1
      %v532 = vsel %vm467, %v529, %v531
      %v533 = vrot.slane %v308, 1
      %v534 = vrot.slane %v309, 1
      %v535 = vsel %vm467, %v533, %v534
      %v536 = vrot.slane %v310, 1
      %v537 = vsel %vm467, %v534, %v536
      %v538 = vrot.slane %v311, 1
      %v539 = vrot.slane %v312, 1
      %v540 = vsel %vm467, %v538, %v539
      %v541 = vrot.slane %v313, 1
      %v542 = vsel %vm467, %v539, %v541
      %v543 = vrot.slane %v314, 1
      %v544 = vrot.slane %v315, 1
      %v545 = vsel %vm467, %v543, %v544
      %v546 = vrot.slane %v316, 1
      %v547 = vsel %vm467, %v544, %v546
      %v580 = vadd.f32 %v387, %v470
      %v581 = vadd.f32 %v388, %v472
      %v582 = vadd.f32 %v389, %v475
      %v583 = vadd.f32 %v390, %v477
      %v584 = vadd.f32 %v391, %v480
      %v585 = vadd.f32 %v392, %v482
      %v586 = vadd.f32 %v393, %v485
      %v587 = vadd.f32 %v394, %v487
      %v588 = vadd.f32 %v395, %v490
      %v589 = vadd.f32 %v396, %v492
      %v590 = vadd.f32 %v397, %v495
      %v591 = vadd.f32 %v398, %v497
      %v592 = vadd.f32 %v399, %v500
      %v593 = vadd.f32 %v400, %v502
      %v594 = vadd.f32 %v401, %v505
      %v595 = vadd.f32 %v402, %v507
      %v596 = vadd.f32 %v403, %v510
      %v597 = vadd.f32 %v404, %v512
      %v598 = vadd.f32 %v405, %v515
      %v599 = vadd.f32 %v406, %v517
      %v600 = vadd.f32 %v407, %v520
      %v601 = vadd.f32 %v408, %v522
      %v602 = vadd.f32 %v409, %v525
      %v603 = vadd.f32 %v410, %v527
      %v604 = vadd.f32 %v411, %v530
      %v605 = vadd.f32 %v412, %v532
      %v606 = vadd.f32 %v413, %v535
      %v607 = vadd.f32 %v414, %v537
      %v608 = vadd.f32 %v415, %v540
      %v609 = vadd.f32 %v416, %v542
      %v610 = vadd.f32 %v417, %v545
      %v611 = vadd.f32 %v418, %v547
      %612 = vst [vmem:[%s217] sm:$0xff] %v580
      %613 = vst [vmem:[%s217 + $0x8] sm:$0xff] %v581
      %614 = vst [vmem:[%s217 + $0x10] sm:$0xff] %v582
      %615 = vst [vmem:[%s217 + $0x18] sm:$0xff] %v583
      %616 = vst [vmem:[%s217 + $0x20] sm:$0xff] %v584
      %617 = vst [vmem:[%s217 + $0x28] sm:$0xff] %v585
      %618 = vst [vmem:[%s217 + $0x30] sm:$0xff] %v586
      %619 = vst [vmem:[%s217 + $0x38] sm:$0xff] %v587
      %620 = vst [vmem:[%s217 + $0x40] sm:$0xff] %v588
      %621 = vst [vmem:[%s217 + $0x48] sm:$0xff] %v589
      %622 = vst [vmem:[%s217 + $0x50] sm:$0xff] %v590
      %623 = vst [vmem:[%s217 + $0x58] sm:$0xff] %v591
      %624 = vst [vmem:[%s217 + $0x60] sm:$0xff] %v592
      %625 = vst [vmem:[%s217 + $0x68] sm:$0xff] %v593
      %626 = vst [vmem:[%s217 + $0x70] sm:$0xff] %v594
      %627 = vst [vmem:[%s217 + $0x78] sm:$0xff] %v595
      %628 = vst [vmem:[%s217 + $0x80] sm:$0xff] %v596
      %629 = vst [vmem:[%s217 + $0x88] sm:$0xff] %v597
      %630 = vst [vmem:[%s217 + $0x90] sm:$0xff] %v598
      %631 = vst [vmem:[%s217 + $0x98] sm:$0xff] %v599
      %632 = vst [vmem:[%s217 + $0xa0] sm:$0xff] %v600
      %633 = vst [vmem:[%s217 + $0xa8] sm:$0xff] %v601
      %634 = vst [vmem:[%s217 + $0xb0] sm:$0xff] %v602
      %635 = vst [vmem:[%s217 + $0xb8] sm:$0xff] %v603
      %636 = vst [vmem:[%s217 + $0xc0] sm:$0xff] %v604
      %637 = vst [vmem:[%s217 + $0xc8] sm:$0xff] %v605
      %638 = vst [vmem:[%s217 + $0xd0] sm:$0xff] %v606
      %639 = vst [vmem:[%s217 + $0xd8] sm:$0xff] %v607
      %640 = vst [vmem:[%s217 + $0xe0] sm:$0xff] %v608
      %641 = vst [vmem:[%s217 + $0xe8] sm:$0xff] %v609
      %642 = vst [vmem:[%s217 + $0xf0] sm:$0xff] %v610
      %643 = vst [vmem:[%s217 + $0xf8] sm:$0xff] %v611
      %p644 = scmp.lt.s32.totalorder %s15, 1
      %s645 = scalar_select %p644, %s15, 1
      %s646 = smul.addr %s645, 32
      %s647 = smul.addr %s646, 8
      %s648 = scalar_lea.vmem %s4, %s647
      // Predicated region
      $region37: #{basic_block_pallas.5} parent=35 // pred_check
        %p649 = pneg %p127
      $region38: #{basic_block_pallas.5} parent=35 // pred_check_branch
        %651 = sbr.rel (%p649) target = $region40
      $region39: #{basic_block_pallas.5} parent=35 // pred_region
        _
      $region40: #{basic_block_pallas.5} parent=35 // pred_fallthru
        _
    $region36: #{basic_block_pallas.5} parent=5 // pred_fallthru
      _
    %p652 = scmp.le.s32.totalorder 2, %s10
    // Predicated region
    $region41: #{basic_block_pallas.5} parent=5 // pred_check
      %p653 = pneg %p652
    $region42: #{basic_block_pallas.5} parent=5 // pred_check_branch
      %655 = sbr.rel (%p653) target = $region44
    $region43: #{basic_block_pallas.5} parent=5 // pred_region
      %s656 = ssub.s32 %s10, 2
      // Predicated region
      $region45: #{basic_block_pallas.5} parent=43 // pred_check
        %p657 = pneg %p133
      $region46: #{basic_block_pallas.5} parent=43 // pred_check_branch
        %659 = sbr.rel (%p657) target = $region48
      $region47: #{basic_block_pallas.5} parent=43 // pred_region
        %p660 = scmp.lt.s32.totalorder %s16, 1
        %s661 = scalar_select %p660, %s16, 1
        %s662 = smul.addr %s661, 32
        %s663 = smul.addr %s662, 8
        %s664 = scalar_lea.vmem %s4, %s663
      $region48: #{basic_block_pallas.5} parent=43 // pred_fallthru
        _
    $region44: #{basic_block_pallas.5} parent=5 // pred_fallthru
      _
  $region6: #{basic_block_pallas.5} parent=0 // loop_footer
    %s14 = sadd.s32 1, %s10
  $region7: #{basic_block_pallas.5} parent=0 // loop_footer_branch
    %9 = sbr.rel target = $region3
  $region8: #{basic_block_pallas.5} parent=0 // loop_exit
    _

// kernel: basic_block_pallas.3
$region0: #{basic_block_pallas.3}
  #allocation0 [shape = 'u32[]', space=smem, size = 0x4, offset = 0x4, fixed_abs, tag = 'smem constant byte address 0x4 - core index']
  #allocation1 [shape = 'u32[72,128]{1,0:T(1,128)}', space=vmem, size = 0x9000, scoped, tag = 'internal scratch']
  #allocation2 [shape = 'bf16[256,1152]{1,0:T(8,128)(2,1)}', space=vmem, size = 0x90000, scoped, tag = 'scratch operand']
  %s0 = inlined_call_operand.vmem [shape: bf16[2,18,18,128], index: 0, kind: input, shape index: {}]
  %s1 = inlined_call_operand.vmem [shape: bf16[1152,128], index: 1, kind: input, shape index: {}]
  %s2 = inlined_call_operand.vmem [shape: f32[2,16,16,128], index: 2, kind: output, shape index: {0}]
  %s3 = inlined_call_operand.vmem [shape: f32[2,1,128], index: 3, kind: output, shape index: {1}]
  %s4 = inlined_call_operand.vmem [shape: f32[2,1,128], index: 4, kind: output, shape index: {2}]
  %5 = xla_tuple %s2, %s3, %s4
  %s6 = sld [smem:[#allocation0]]
  $region57: #{basic_block_pallas.3} parent=0
    _
  %s8 = ssub.s32 1, %s6
  %s9 = scalar_select 0, %s8, %s6
  loop: start=0, step=1, limit=4
  $region2: #{basic_block_pallas.3} parent=0 // loop_pre_header
    _
  $region3: #{basic_block_pallas.3} parent=0 // loop_header
    %s11 = sphi 0, %s15
    %p12 = scmp.ge.s32.totalorder %s11, 4
    %s21 = sphi 0, %s23
    %s24 = sphi 0, %s21
    %s25 = sphi 0, %s24
    %s41 = sphi 0, %s25
    %s45 = sphi 0, %s45
    %s47 = sphi 0, %s45
    %s48 = sphi 0, %s47
    %s62 = sphi 0, %s48
    %s68 = sphi 0, %s70
    %s71 = sphi 0, %s68
    %s72 = sphi 0, %s71
    %s88 = sphi 0, %s72
    %s94 = sphi 0, %s96
    %s97 = sphi 0, %s94
    %s98 = sphi 0, %s97
    %s114 = sphi 0, %s98
    %s120 = sphi 0, %s122
    %s123 = sphi 0, %s120
    %s124 = sphi 0, %s123
    %s140 = sphi 0, %s124
  $region4: #{basic_block_pallas.3} parent=0 // loop_header_branch
    %14 = sbr.rel (%p12) target = $region8
  $region5: #{basic_block_pallas.3} parent=0 // loop_body
    %s16 = ssub.s32 %s11, 1
    %s17 = ssub.s32 %s11, 2
    %s18 = sadd.s32 %s11, 1
    %s19 = ssub.s32 %s11, %s18
    %p20 = scmp.eq.s32.totalorder %s19, 0
    %s22 = sadd.s32 %s21, 1
    %s23 = scalar_select %p20, %s21, %s22
    %p26 = pneg %p20
    %p27 = scmp.eq.s32.totalorder %s11, 1
    %p28 = por %p26, %p27
    %p29 = scmp.ne.s32.totalorder %s21, %s24
    %p30 = scmp.eq.s32.totalorder %s11, 0
    %p31 = por %p29, %p30
    %p32 = scmp.ne.s32.totalorder %s21, %s24
    %p33 = scmp.eq.s32.totalorder %s16, 1
    %p34 = por %p32, %p33
    %p35 = scmp.ne.s32.totalorder %s24, %s25
    %p36 = scmp.eq.s32.totalorder %s16, 0
    %p37 = por %p35, %p36
    %p38 = scmp.ne.s32.totalorder %s24, %s25
    %p39 = scmp.eq.s32.totalorder %s17, 1
    %p40 = por %p38, %p39
    %p42 = scmp.ne.s32.totalorder %s25, %s41
    %p43 = scmp.eq.s32.totalorder %s17, 0
    %p44 = por %p42, %p43
    %s46 = sadd.s32 %s45, 1
    %p49 = scmp.eq.s32.totalorder %s11, 1
    %p50 = scmp.ne.s32.totalorder %s45, %s47
    %p51 = scmp.eq.s32.totalorder %s11, 0
    %p52 = por %p50, %p51
    %p53 = scmp.ne.s32.totalorder %s45, %s47
    %p54 = scmp.eq.s32.totalorder %s16, 1
    %p55 = por %p53, %p54
    %p56 = scmp.ne.s32.totalorder %s47, %s48
    %p57 = scmp.eq.s32.totalorder %s16, 0
    %p58 = por %p56, %p57
    %p59 = scmp.ne.s32.totalorder %s47, %s48
    %p60 = scmp.eq.s32.totalorder %s17, 1
    %p61 = por %p59, %p60
    %p63 = scmp.ne.s32.totalorder %s48, %s62
    %p64 = scmp.eq.s32.totalorder %s17, 0
    %p65 = por %p63, %p64
    %s66 = ssub.s32 %s11, %s18
    %p67 = scmp.eq.s32.totalorder %s66, 0
    %s69 = sadd.s32 %s68, 1
    %s70 = scalar_select %p67, %s68, %s69
    %p73 = pneg %p67
    %p74 = scmp.eq.s32.totalorder %s11, 1
    %p75 = por %p73, %p74
    %p76 = scmp.ne.s32.totalorder %s68, %s71
    %p77 = scmp.eq.s32.totalorder %s11, 0
    %p78 = por %p76, %p77
    %p79 = scmp.ne.s32.totalorder %s68, %s71
    %p80 = scmp.eq.s32.totalorder %s16, 1
    %p81 = por %p79, %p80
    %p82 = scmp.ne.s32.totalorder %s71, %s72
    %p83 = scmp.eq.s32.totalorder %s16, 0
    %p84 = por %p82, %p83
    %p85 = scmp.ne.s32.totalorder %s71, %s72
    %p86 = scmp.eq.s32.totalorder %s17, 1
    %p87 = por %p85, %p86
    %p89 = scmp.ne.s32.totalorder %s72, %s88
    %p90 = scmp.eq.s32.totalorder %s17, 0
    %p91 = por %p89, %p90
    %s92 = ssub.s32 %s11, %s18
    %p93 = scmp.eq.s32.totalorder %s92, 0
    %s95 = sadd.s32 %s94, 1
    %s96 = scalar_select %p93, %s94, %s95
    %p99 = pneg %p93
    %p100 = scmp.eq.s32.totalorder %s11, 1
    %p101 = por %p99, %p100
    %p102 = scmp.ne.s32.totalorder %s94, %s97
    %p103 = scmp.eq.s32.totalorder %s11, 0
    %p104 = por %p102, %p103
    %p105 = scmp.ne.s32.totalorder %s94, %s97
    %p106 = scmp.eq.s32.totalorder %s16, 1
    %p107 = por %p105, %p106
    %p108 = scmp.ne.s32.totalorder %s97, %s98
    %p109 = scmp.eq.s32.totalorder %s16, 0
    %p110 = por %p108, %p109
    %p111 = scmp.ne.s32.totalorder %s97, %s98
    %p112 = scmp.eq.s32.totalorder %s17, 1
    %p113 = por %p111, %p112
    %p115 = scmp.ne.s32.totalorder %s98, %s114
    %p116 = scmp.eq.s32.totalorder %s17, 0
    %p117 = por %p115, %p116
    %s118 = ssub.s32 %s11, %s18
    %p119 = scmp.eq.s32.totalorder %s118, 0
    %s121 = sadd.s32 %s120, 1
    %s122 = scalar_select %p119, %s120, %s121
    %p125 = pneg %p119
    %p126 = scmp.eq.s32.totalorder %s11, 1
    %p127 = por %p125, %p126
    %p128 = scmp.ne.s32.totalorder %s120, %s123
    %p129 = scmp.eq.s32.totalorder %s11, 0
    %p130 = por %p128, %p129
    %p131 = scmp.ne.s32.totalorder %s120, %s123
    %p132 = scmp.eq.s32.totalorder %s16, 1
    %p133 = por %p131, %p132
    %p134 = scmp.ne.s32.totalorder %s123, %s124
    %p135 = scmp.eq.s32.totalorder %s16, 0
    %p136 = por %p134, %p135
    %p137 = scmp.ne.s32.totalorder %s123, %s124
    %p138 = scmp.eq.s32.totalorder %s17, 1
    %p139 = por %p137, %p138
    %p141 = scmp.ne.s32.totalorder %s124, %s140
    %p142 = scmp.eq.s32.totalorder %s17, 0
    %p143 = por %p141, %p142
    %p144 = scmp.le.s32.totalorder 1, %s11
    %p145 = scmp.lt.s32.totalorder %s11, 3
    %p146 = pnand %p144, %p145
    %p147 = pneg %p146
    // Predicated region
    $region9: #{basic_block_pallas.3} parent=5 // pred_check
      _
    $region10: #{basic_block_pallas.3} parent=5 // pred_check_branch
      %149 = sbr.rel (%p146) target = $region12
    $region11: #{basic_block_pallas.3} parent=5 // pred_region
      %s150 = ssub.s32 %s11, 1
      // Predicated region
      $region13: #{basic_block_pallas.3} parent=11 // pred_check
        %p151 = pneg %p58
      $region14: #{basic_block_pallas.3} parent=11 // pred_check_branch
        %153 = sbr.rel (%p151) target = $region16
      $region15: #{basic_block_pallas.3} parent=11 // pred_region
        _
      $region16: #{basic_block_pallas.3} parent=11 // pred_fallthru
        _
    $region12: #{basic_block_pallas.3} parent=5 // pred_fallthru
      _
    %p154 = scmp.lt.s32.totalorder %s11, 2
    // Predicated region
    $region17: #{basic_block_pallas.3} parent=5 // pred_check
      %p155 = pneg %p154
    $region18: #{basic_block_pallas.3} parent=5 // pred_check_branch
      %157 = sbr.rel (%p155) target = $region20
    $region19: #{basic_block_pallas.3} parent=5 // pred_region
      // Predicated region
      $region21: #{basic_block_pallas.3} parent=19 // pred_check
        %p158 = pneg %p31
      $region22: #{basic_block_pallas.3} parent=19 // pred_check_branch
        %160 = sbr.rel (%p158) target = $region24
      $region23: #{basic_block_pallas.3} parent=19 // pred_region
        %p161 = scmp.lt.s32.totalorder %s11, 1
        %s162 = scalar_select %p161, %s11, 1
        %s163 = smul.addr %s162, 54
        %s164 = smul.addr %s163, 4
        %s165 = scalar_lea.vmem %s0, %s164
      $region24: #{basic_block_pallas.3} parent=19 // pred_fallthru
        _
    $region20: #{basic_block_pallas.3} parent=5 // pred_fallthru
      _
    %p166 = scmp.le.s32.totalorder 1, %s11
    %p167 = scmp.lt.s32.totalorder %s11, 3
    %p168 = pnand %p166, %p167
    %p169 = pneg %p168
    // Predicated region
    $region25: #{basic_block_pallas.3} parent=5 // pred_check
      _
    $region26: #{basic_block_pallas.3} parent=5 // pred_check_branch
      %171 = sbr.rel (%p168) target = $region28
    $region27: #{basic_block_pallas.3} parent=5 // pred_region
      %s172 = ssub.s32 %s11, 1
      %p173 = scmp.lt.s32.totalorder %s16, 1
      %s174 = scalar_select %p173, %s16, 1
      %s175 = smul.addr %s174, 54
      %s176 = smul.addr %s175, 4
      %s177 = scalar_lea.vmem %s0, %s176
      %p178 = pneg %p37
      %p179 = pneg %p34
      %p180 = pneg %p58
      %p181 = pneg %p55
      %p182 = pneg %p84
      %p183 = pneg %p81
      %p184 = scmp.lt.s32.totalorder %s16, 1
      %s185 = scalar_select %p184, %s16, 1
      %s186 = smul.addr %s185, 32
      %s187 = smul.addr %s186, 8
      %s188 = scalar_lea.vmem %s2, %s187
      %p189 = pneg %p110
      %p190 = pneg %p107
      %p191 = scmp.lt.s32.totalorder %s16, 1
      %s192 = scalar_select %p191, %s16, 1
      %s193 = scalar_lea.vmem %s3, %s192
      %p194 = pneg %p136
      %p195 = pneg %p133
      %p196 = scmp.lt.s32.totalorder %s16, 1
      %s197 = scalar_select %p196, %s16, 1
      %s198 = scalar_lea.vmem %s4, %s197
      %p199 = scmp.lt.s32.totalorder %s16, 1
      %s200 = scalar_select %p199, %s16, 1
      %s201 = smul.addr %s200, 54
      %s202 = smul.addr %s201, 4
      %s203 = scalar_lea.vmem %s0, %s202
      %p204 = scmp.lt.s32.totalorder %s16, 1
      %s205 = scalar_select %p204, %s16, 1
      %s206 = smul.addr %s205, 32
      %s207 = smul.addr %s206, 8
      %s208 = scalar_lea.vmem %s2, %s207
      %p209 = scmp.lt.s32.totalorder %s16, 1
      %s210 = scalar_select %p209, %s16, 1
      %s211 = scalar_lea.vmem %s3, %s210
      %p212 = scmp.lt.s32.totalorder %s16, 1
      %s213 = scalar_select %p212, %s16, 1
      %s214 = scalar_lea.vmem %s4, %s213
      %v215 = vld [vmem:[%s203] sm:$0xf]
      %v216 = vld [vmem:[%s203 + $0x4] sm:$0xf]
      %v217 = vld [vmem:[%s203 + $0xc] sm:$0xf]
      %v218 = vld [vmem:[%s203 + $0x10] sm:$0xf]
      %v219 = vld [vmem:[%s203 + $0x18] sm:$0xf]
      %v220 = vld [vmem:[%s203 + $0x1c] sm:$0xf]
      %v221 = vld [vmem:[%s203 + $0x24] sm:$0xf]
      %v222 = vld [vmem:[%s203 + $0x28] sm:$0xf]
      %v223 = vld [vmem:[%s203 + $0x30] sm:$0xf]
      %v224 = vld [vmem:[%s203 + $0x34] sm:$0xf]
      %v225 = vld [vmem:[%s203 + $0x3c] sm:$0xf]
      %v226 = vld [vmem:[%s203 + $0x40] sm:$0xf]
      %v227 = vld [vmem:[%s203 + $0x48] sm:$0xf]
      %v228 = vld [vmem:[%s203 + $0x4c] sm:$0xf]
      %v229 = vld [vmem:[%s203 + $0x54] sm:$0xf]
      %v230 = vld [vmem:[%s203 + $0x58] sm:$0xf]
      %v231 = vld [vmem:[%s203 + $0x60] sm:$0xf]
      %v232 = vld [vmem:[%s203 + $0x64] sm:$0xf]
      %v233 = vld [vmem:[%s203 + $0x6c] sm:$0xf]
      %v234 = vld [vmem:[%s203 + $0x70] sm:$0xf]
      %v235 = vld [vmem:[%s203 + $0x78] sm:$0xf]
      %v236 = vld [vmem:[%s203 + $0x7c] sm:$0xf]
      %v237 = vld [vmem:[%s203 + $0x84] sm:$0xf]
      %v238 = vld [vmem:[%s203 + $0x88] sm:$0xf]
      %v239 = vld [vmem:[%s203 + $0x90] sm:$0xf]
      %v240 = vld [vmem:[%s203 + $0x94] sm:$0xf]
      %v241 = vld [vmem:[%s203 + $0x9c] sm:$0xf]
      %v242 = vld [vmem:[%s203 + $0xa0] sm:$0xf]
      %v243 = vld [vmem:[%s203 + $0xa8] sm:$0xf]
      %v244 = vld [vmem:[%s203 + $0xac] sm:$0xf]
      %v245 = vld [vmem:[%s203 + $0xb4] sm:$0xf]
      %v246 = vld [vmem:[%s203 + $0xb8] sm:$0xf]
      %247 = vst [vmem:[#allocation2] sm:$0xf] %v215
      %248 = vst [vmem:[#allocation2 + $0x24] sm:$0xf] %v216
      %249 = vst [vmem:[#allocation2 + $0x48] sm:$0xf] %v217
      %250 = vst [vmem:[#allocation2 + $0x6c] sm:$0xf] %v218
      %251 = vst [vmem:[#allocation2 + $0x90] sm:$0xf] %v219
      %252 = vst [vmem:[#allocation2 + $0xb4] sm:$0xf] %v220
      %253 = vst [vmem:[#allocation2 + $0xd8] sm:$0xf] %v221
      %254 = vst [vmem:[#allocation2 + $0xfc] sm:$0xf] %v222
      %255 = vst [vmem:[#allocation2 + $0x120] sm:$0xf] %v223
      %256 = vst [vmem:[#allocation2 + $0x144] sm:$0xf] %v224
      %257 = vst [vmem:[#allocation2 + $0x168] sm:$0xf] %v225
      %258 = vst [vmem:[#allocation2 + $0x18c] sm:$0xf] %v226
      %259 = vst [vmem:[#allocation2 + $0x1b0] sm:$0xf] %v227
      %260 = vst [vmem:[#allocation2 + $0x1d4] sm:$0xf] %v228
      %261 = vst [vmem:[#allocation2 + $0x1f8] sm:$0xf] %v229
      %262 = vst [vmem:[#allocation2 + $0x21c] sm:$0xf] %v230
      %263 = vst [vmem:[#allocation2 + $0x240] sm:$0xf] %v231
      %264 = vst [vmem:[#allocation2 + $0x264] sm:$0xf] %v232
      %265 = vst [vmem:[#allocation2 + $0x288] sm:$0xf] %v233
      %266 = vst [vmem:[#allocation2 + $0x2ac] sm:$0xf] %v234
      %267 = vst [vmem:[#allocation2 + $0x2d0] sm:$0xf] %v235
      %268 = vst [vmem:[#allocation2 + $0x2f4] sm:$0xf] %v236
      %269 = vst [vmem:[#allocation2 + $0x318] sm:$0xf] %v237
      %270 = vst [vmem:[#allocation2 + $0x33c] sm:$0xf] %v238
      %271 = vst [vmem:[#allocation2 + $0x360] sm:$0xf] %v239
      %272 = vst [vmem:[#allocation2 + $0x384] sm:$0xf] %v240
      %273 = vst [vmem:[#allocation2 + $0x3a8] sm:$0xf] %v241
      %274 = vst [vmem:[#allocation2 + $0x3cc] sm:$0xf] %v242
      %275 = vst [vmem:[#allocation2 + $0x3f0] sm:$0xf] %v243
      %276 = vst [vmem:[#allocation2 + $0x414] sm:$0xf] %v244
      %277 = vst [vmem:[#allocation2 + $0x438] sm:$0xf] %v245
      %278 = vst [vmem:[#allocation2 + $0x45c] sm:$0xf] %v246
      %v279 = vld [vmem:[%s203] sm:$0xf]
      %v280 = vld [vmem:[%s203 + $0x4] sm:$0xf]
      %v281 = vld [vmem:[%s203 + $0x8] sm:$0x1]
      %v282 = vld [vmem:[%s203 + $0xc] sm:$0xf]
      %v283 = vld [vmem:[%s203 + $0x10] sm:$0xf]
      %v284 = vld [vmem:[%s203 + $0x14] sm:$0x1]
      %v285 = vld [vmem:[%s203 + $0x18] sm:$0xf]
      %v286 = vld [vmem:[%s203 + $0x1c] sm:$0xf]
      %v287 = vld [vmem:[%s203 + $0x20] sm:$0x1]
      %v288 = vld [vmem:[%s203 + $0x24] sm:$0xf]
      %v289 = vld [vmem:[%s203 + $0x28] sm:$0xf]
      %v290 = vld [vmem:[%s203 + $0x2c] sm:$0x1]
      %v291 = vld [vmem:[%s203 + $0x30] sm:$0xf]
      %v292 = vld [vmem:[%s203 + $0x34] sm:$0xf]
      %v293 = vld [vmem:[%s203 + $0x38] sm:$0x1]
      %v294 = vld [vmem:[%s203 + $0x3c] sm:$0xf]
      %v295 = vld [vmem:[%s203 + $0x40] sm:$0xf]
      %v296 = vld [vmem:[%s203 + $0x44] sm:$0x1]
      %v297 = vld [vmem:[%s203 + $0x48] sm:$0xf]
      %v298 = vld [vmem:[%s203 + $0x4c] sm:$0xf]
      %v299 = vld [vmem:[%s203 + $0x50] sm:$0x1]
      %v300 = vld [vmem:[%s203 + $0x54] sm:$0xf]
      %v301 = vld [vmem:[%s203 + $0x58] sm:$0xf]
      %v302 = vld [vmem:[%s203 + $0x5c] sm:$0x1]
      %v303 = vld [vmem:[%s203 + $0x60] sm:$0xf]
      %v304 = vld [vmem:[%s203 + $0x64] sm:$0xf]
      %v305 = vld [vmem:[%s203 + $0x68] sm:$0x1]
      %v306 = vld [vmem:[%s203 + $0x6c] sm:$0xf]
      %v307 = vld [vmem:[%s203 + $0x70] sm:$0xf]
      %v308 = vld [vmem:[%s203 + $0x74] sm:$0x1]
      %v309 = vld [vmem:[%s203 + $0x78] sm:$0xf]
      %v310 = vld [vmem:[%s203 + $0x7c] sm:$0xf]
      %v311 = vld [vmem:[%s203 + $0x80] sm:$0x1]
      %v312 = vld [vmem:[%s203 + $0x84] sm:$0xf]
      %v313 = vld [vmem:[%s203 + $0x88] sm:$0xf]
      %v314 = vld [vmem:[%s203 + $0x8c] sm:$0x1]
      %v315 = vld [vmem:[%s203 + $0x90] sm:$0xf]
      %v316 = vld [vmem:[%s203 + $0x94] sm:$0xf]
      %v317 = vld [vmem:[%s203 + $0x98] sm:$0x1]
      %v318 = vld [vmem:[%s203 + $0x9c] sm:$0xf]
      %v319 = vld [vmem:[%s203 + $0xa0] sm:$0xf]
      %v320 = vld [vmem:[%s203 + $0xa4] sm:$0x1]
      %v321 = vld [vmem:[%s203 + $0xa8] sm:$0xf]
      %v322 = vld [vmem:[%s203 + $0xac] sm:$0xf]
      %v323 = vld [vmem:[%s203 + $0xb0] sm:$0x1]
      %v324 = vld [vmem:[%s203 + $0xb4] sm:$0xf]
      %v325 = vld [vmem:[%s203 + $0xb8] sm:$0xf]
      %v326 = vld [vmem:[%s203 + $0xbc] sm:$0x1]
      %vm327 = vsmask.f32 3328
      %vm328 = vsmask.f32 7440
      %vm329 = vmor %vm327, %vm328
      %v331 = vshrl.u32 %v279, 16
      %v333 = vrot.slane %v331, 4
      %v334 = vshll.u32 %v279, 16
      %v336 = vrot.slane %v334, 5
      %v337 = vor.u32 %v333, %v336
      %v338 = vrot.slane %v337, 4
      %v340 = vshll.u32 %v280, 16
      %v342 = vrot.slane %v340, 5
      %v343 = vsel %vm329, %v338, %v342
      %v344 = vshrl.u32 %v280, 16
      %v346 = vrot.slane %v344, 4
      %v347 = vor.u32 %v346, %v342
      %v348 = vrot.slane %v347, 4
      %v350 = vshll.u32 %v281, 16
      %v352 = vrot.slane %v350, 5
      %v353 = vsel %vm329, %v348, %v352
      %v355 = vshrl.u32 %v282, 16
      %v357 = vrot.slane %v355, 4
      %v358 = vshll.u32 %v282, 16
      %v360 = vrot.slane %v358, 5
      %v361 = vor.u32 %v357, %v360
      %v362 = vrot.slane %v361, 4
      %v364 = vshll.u32 %v283, 16
      %v366 = vrot.slane %v364, 5
      %v367 = vsel %vm329, %v362, %v366
      %v368 = vshrl.u32 %v283, 16
      %v370 = vrot.slane %v368, 4
      %v371 = vor.u32 %v370, %v366
      %v372 = vrot.slane %v371, 4
      %v374 = vshll.u32 %v284, 16
      %v376 = vrot.slane %v374, 5
      %v377 = vsel %vm329, %v372, %v376
      %v379 = vshrl.u32 %v285, 16
      %v381 = vrot.slane %v379, 4
      %v382 = vshll.u32 %v285, 16
      %v384 = vrot.slane %v382, 5
      %v385 = vor.u32 %v381, %v384
      %v386 = vrot.slane %v385, 4
      %v388 = vshll.u32 %v286, 16
      %v390 = vrot.slane %v388, 5
      %v391 = vsel %vm329, %v386, %v390
      %v392 = vshrl.u32 %v286, 16
      %v394 = vrot.slane %v392, 4
      %v395 = vor.u32 %v394, %v390
      %v396 = vrot.slane %v395, 4
      %v398 = vshll.u32 %v287, 16
      %v400 = vrot.slane %v398, 5
      %v401 = vsel %vm329, %v396, %v400
      %v403 = vshrl.u32 %v288, 16
      %v405 = vrot.slane %v403, 4
      %v406 = vshll.u32 %v288, 16
      %v408 = vrot.slane %v406, 5
      %v409 = vor.u32 %v405, %v408
      %v410 = vrot.slane %v409, 4
      %v412 = vshll.u32 %v289, 16
      %v414 = vrot.slane %v412, 5
      %v415 = vsel %vm329, %v410, %v414
      %v416 = vshrl.u32 %v289, 16
      %v418 = vrot.slane %v416, 4
      %v419 = vor.u32 %v418, %v414
      %v420 = vrot.slane %v419, 4
      %v422 = vshll.u32 %v290, 16
      %v424 = vrot.slane %v422, 5
      %v425 = vsel %vm329, %v420, %v424
      %v427 = vshrl.u32 %v291, 16
      %v429 = vrot.slane %v427, 4
      %v430 = vshll.u32 %v291, 16
      %v432 = vrot.slane %v430, 5
      %v433 = vor.u32 %v429, %v432
      %v434 = vrot.slane %v433, 4
      %v436 = vshll.u32 %v292, 16
      %v438 = vrot.slane %v436, 5
      %v439 = vsel %vm329, %v434, %v438
      %v440 = vshrl.u32 %v292, 16
      %v442 = vrot.slane %v440, 4
      %v443 = vor.u32 %v442, %v438
      %v444 = vrot.slane %v443, 4
      %v446 = vshll.u32 %v293, 16
      %v448 = vrot.slane %v446, 5
      %v449 = vsel %vm329, %v444, %v448
      %v451 = vshrl.u32 %v294, 16
      %v453 = vrot.slane %v451, 4
      %v454 = vshll.u32 %v294, 16
      %v456 = vrot.slane %v454, 5
      %v457 = vor.u32 %v453, %v456
      %v458 = vrot.slane %v457, 4
      %v460 = vshll.u32 %v295, 16
      %v462 = vrot.slane %v460, 5
      %v463 = vsel %vm329, %v458, %v462
      %v464 = vshrl.u32 %v295, 16
      %v466 = vrot.slane %v464, 4
      %v467 = vor.u32 %v466, %v462
      %v468 = vrot.slane %v467, 4
      %v470 = vshll.u32 %v296, 16
      %v472 = vrot.slane %v470, 5
      %v473 = vsel %vm329, %v468, %v472
      %v475 = vshrl.u32 %v297, 16
      %v477 = vrot.slane %v475, 4
      %v478 = vshll.u32 %v297, 16
      %v480 = vrot.slane %v478, 5
      %v481 = vor.u32 %v477, %v480
      %v482 = vrot.slane %v481, 4
      %v484 = vshll.u32 %v298, 16
      %v486 = vrot.slane %v484, 5
      %v487 = vsel %vm329, %v482, %v486
      %v488 = vshrl.u32 %v298, 16
      %v490 = vrot.slane %v488, 4
      %v491 = vor.u32 %v490, %v486
      %v492 = vrot.slane %v491, 4
      %v494 = vshll.u32 %v299, 16
      %v496 = vrot.slane %v494, 5
      %v497 = vsel %vm329, %v492, %v496
      %v499 = vshrl.u32 %v300, 16
      %v501 = vrot.slane %v499, 4
      %v502 = vshll.u32 %v300, 16
      %v504 = vrot.slane %v502, 5
      %v505 = vor.u32 %v501, %v504
      %v506 = vrot.slane %v505, 4
      %v508 = vshll.u32 %v301, 16
      %v510 = vrot.slane %v508, 5
      %v511 = vsel %vm329, %v506, %v510
      %v512 = vshrl.u32 %v301, 16
      %v514 = vrot.slane %v512, 4
      %v515 = vor.u32 %v514, %v510
      %v516 = vrot.slane %v515, 4
      %v518 = vshll.u32 %v302, 16
      %v520 = vrot.slane %v518, 5
      %v521 = vsel %vm329, %v516, %v520
      %v523 = vshrl.u32 %v303, 16
      %v525 = vrot.slane %v523, 4
      %v526 = vshll.u32 %v303, 16
      %v528 = vrot.slane %v526, 5
      %v529 = vor.u32 %v525, %v528
      %v530 = vrot.slane %v529, 4
      %v532 = vshll.u32 %v304, 16
      %v534 = vrot.slane %v532, 5
      %v535 = vsel %vm329, %v530, %v534
      %v536 = vshrl.u32 %v304, 16
      %v538 = vrot.slane %v536, 4
      %v539 = vor.u32 %v538, %v534
      %v540 = vrot.slane %v539, 4
      %v542 = vshll.u32 %v305, 16
      %v544 = vrot.slane %v542, 5
      %v545 = vsel %vm329, %v540, %v544
      %v547 = vshrl.u32 %v306, 16
      %v549 = vrot.slane %v547, 4
      %v550 = vshll.u32 %v306, 16
      %v552 = vrot.slane %v550, 5
      %v553 = vor.u32 %v549, %v552
      %v554 = vrot.slane %v553, 4
      %v556 = vshll.u32 %v307, 16
      %v558 = vrot.slane %v556, 5
      %v559 = vsel %vm329, %v554, %v558
      %v560 = vshrl.u32 %v307, 16
      %v562 = vrot.slane %v560, 4
      %v563 = vor.u32 %v562, %v558
      %v564 = vrot.slane %v563, 4
      %v566 = vshll.u32 %v308, 16
      %v568 = vrot.slane %v566, 5
      %v569 = vsel %vm329, %v564, %v568
      %v571 = vshrl.u32 %v309, 16
      %v573 = vrot.slane %v571, 4
      %v574 = vshll.u32 %v309, 16
      %v576 = vrot.slane %v574, 5
      %v577 = vor.u32 %v573, %v576
      %v578 = vrot.slane %v577, 4
      %v580 = vshll.u32 %v310, 16
      %v582 = vrot.slane %v580, 5
      %v583 = vsel %vm329, %v578, %v582
      %v584 = vshrl.u32 %v310, 16
      %v586 = vrot.slane %v584, 4
      %v587 = vor.u32 %v586, %v582
      %v588 = vrot.slane %v587, 4
      %v590 = vshll.u32 %v311, 16
      %v592 = vrot.slane %v590, 5
      %v593 = vsel %vm329, %v588, %v592
      %v595 = vshrl.u32 %v312, 16
      %v597 = vrot.slane %v595, 4
      %v598 = vshll.u32 %v312, 16
      %v600 = vrot.slane %v598, 5
      %v601 = vor.u32 %v597, %v600
      %v602 = vrot.slane %v601, 4
      %v604 = vshll.u32 %v313, 16
      %v606 = vrot.slane %v604, 5
      %v607 = vsel %vm329, %v602, %v606
      %v608 = vshrl.u32 %v313, 16
      %v610 = vrot.slane %v608, 4
      %v611 = vor.u32 %v610, %v606
      %v612 = vrot.slane %v611, 4
      %v614 = vshll.u32 %v314, 16
      %v616 = vrot.slane %v614, 5
      %v617 = vsel %vm329, %v612, %v616
      %v619 = vshrl.u32 %v315, 16
      %v621 = vrot.slane %v619, 4
      %v622 = vshll.u32 %v315, 16
      %v624 = vrot.slane %v622, 5
      %v625 = vor.u32 %v621, %v624
      %v626 = vrot.slane %v625, 4
      %v628 = vshll.u32 %v316, 16
      %v630 = vrot.slane %v628, 5
      %v631 = vsel %vm329, %v626, %v630
      %v632 = vshrl.u32 %v316, 16
      %v634 = vrot.slane %v632, 4
      %v635 = vor.u32 %v634, %v630
      %v636 = vrot.slane %v635, 4
      %v638 = vshll.u32 %v317, 16
      %v640 = vrot.slane %v638, 5
      %v641 = vsel %vm329, %v636, %v640
      %v643 = vshrl.u32 %v318, 16
      %v645 = vrot.slane %v643, 4
      %v646 = vshll.u32 %v318, 16
      %v648 = vrot.slane %v646, 5
      %v649 = vor.u32 %v645, %v648
      %v650 = vrot.slane %v649, 4
      %v652 = vshll.u32 %v319, 16
      %v654 = vrot.slane %v652, 5
      %v655 = vsel %vm329, %v650, %v654
      %v656 = vshrl.u32 %v319, 16
      %v658 = vrot.slane %v656, 4
      %v659 = vor.u32 %v658, %v654
      %v660 = vrot.slane %v659, 4
      %v662 = vshll.u32 %v320, 16
      %v664 = vrot.slane %v662, 5
      %v665 = vsel %vm329, %v660, %v664
      %v667 = vshrl.u32 %v321, 16
      %v669 = vrot.slane %v667, 4
      %v670 = vshll.u32 %v321, 16
      %v672 = vrot.slane %v670, 5
      %v673 = vor.u32 %v669, %v672
      %v674 = vrot.slane %v673, 4
      %v676 = vshll.u32 %v322, 16
      %v678 = vrot.slane %v676, 5
      %v679 = vsel %vm329, %v674, %v678
      %v680 = vshrl.u32 %v322, 16
      %v682 = vrot.slane %v680, 4
      %v683 = vor.u32 %v682, %v678
      %v684 = vrot.slane %v683, 4
      %v686 = vshll.u32 %v323, 16
      %v688 = vrot.slane %v686, 5
      %v689 = vsel %vm329, %v684, %v688
      %v691 = vshrl.u32 %v324, 16
      %v693 = vrot.slane %v691, 4
      %v694 = vshll.u32 %v324, 16
      %v696 = vrot.slane %v694, 5
      %v697 = vor.u32 %v693, %v696
      %v698 = vrot.slane %v697, 4
      %v700 = vshll.u32 %v325, 16
      %v702 = vrot.slane %v700, 5
      %v703 = vsel %vm329, %v698, %v702
      %v704 = vshrl.u32 %v325, 16
      %v706 = vrot.slane %v704, 4
      %v707 = vor.u32 %v706, %v702
      %v708 = vrot.slane %v707, 4
      %v710 = vshll.u32 %v326, 16
      %v712 = vrot.slane %v710, 5
      %v713 = vsel %vm329, %v708, %v712
      %746 = vst [vmem:[#allocation2 + $0x4] sm:$0xf] %v343
      %747 = vst [vmem:[#allocation2 + $0x28] sm:$0xf] %v353
      %748 = vst [vmem:[#allocation2 + $0x4c] sm:$0xf] %v367
      %749 = vst [vmem:[#allocation2 + $0x70] sm:$0xf] %v377
      %750 = vst [vmem:[#allocation2 + $0x94] sm:$0xf] %v391
      %751 = vst [vmem:[#allocation2 + $0xb8] sm:$0xf] %v401
      %752 = vst [vmem:[#allocation2 + $0xdc] sm:$0xf] %v415
      %753 = vst [vmem:[#allocation2 + $0x100] sm:$0xf] %v425
      %754 = vst [vmem:[#allocation2 + $0x124] sm:$0xf] %v439
      %755 = vst [vmem:[#allocation2 + $0x148] sm:$0xf] %v449
      %756 = vst [vmem:[#allocation2 + $0x16c] sm:$0xf] %v463
      %757 = vst [vmem:[#allocation2 + $0x190] sm:$0xf] %v473
      %758 = vst [vmem:[#allocation2 + $0x1b4] sm:$0xf] %v487
      %759 = vst [vmem:[#allocation2 + $0x1d8] sm:$0xf] %v497
      %760 = vst [vmem:[#allocation2 + $0x1fc] sm:$0xf] %v511
      %761 = vst [vmem:[#allocation2 + $0x220] sm:$0xf] %v521
      %762 = vst [vmem:[#allocation2 + $0x244] sm:$0xf] %v535
      %763 = vst [vmem:[#allocation2 + $0x268] sm:$0xf] %v545
      %764 = vst [vmem:[#allocation2 + $0x28c] sm:$0xf] %v559
      %765 = vst [vmem:[#allocation2 + $0x2b0] sm:$0xf] %v569
      %766 = vst [vmem:[#allocation2 + $0x2d4] sm:$0xf] %v583
      %767 = vst [vmem:[#allocation2 + $0x2f8] sm:$0xf] %v593
      %768 = vst [vmem:[#allocation2 + $0x31c] sm:$0xf] %v607
      %769 = vst [vmem:[#allocation2 + $0x340] sm:$0xf] %v617
      %770 = vst [vmem:[#allocation2 + $0x364] sm:$0xf] %v631
      %771 = vst [vmem:[#allocation2 + $0x388] sm:$0xf] %v641
      %772 = vst [vmem:[#allocation2 + $0x3ac] sm:$0xf] %v655
      %773 = vst [vmem:[#allocation2 + $0x3d0] sm:$0xf] %v665
      %774 = vst [vmem:[#allocation2 + $0x3f4] sm:$0xf] %v679
      %775 = vst [vmem:[#allocation2 + $0x418] sm:$0xf] %v689
      %776 = vst [vmem:[#allocation2 + $0x43c] sm:$0xf] %v703
      %777 = vst [vmem:[#allocation2 + $0x460] sm:$0xf] %v713
      %v778 = vld [vmem:[%s203] sm:$0xe]
      %v779 = vld [vmem:[%s203 + $0x4] sm:$0xf]
      %v780 = vld [vmem:[%s203 + $0x8] sm:$0x1]
      %v781 = vld [vmem:[%s203 + $0xc] sm:$0xe]
      %v782 = vld [vmem:[%s203 + $0x10] sm:$0xf]
      %v783 = vld [vmem:[%s203 + $0x14] sm:$0x1]
      %v784 = vld [vmem:[%s203 + $0x18] sm:$0xe]
      %v785 = vld [vmem:[%s203 + $0x1c] sm:$0xf]
      %v786 = vld [vmem:[%s203 + $0x20] sm:$0x1]
      %v787 = vld [vmem:[%s203 + $0x24] sm:$0xe]
      %v788 = vld [vmem:[%s203 + $0x28] sm:$0xf]
      %v789 = vld [vmem:[%s203 + $0x2c] sm:$0x1]
      %v790 = vld [vmem:[%s203 + $0x30] sm:$0xe]
      %v791 = vld [vmem:[%s203 + $0x34] sm:$0xf]
      %v792 = vld [vmem:[%s203 + $0x38] sm:$0x1]
      %v793 = vld [vmem:[%s203 + $0x3c] sm:$0xe]
      %v794 = vld [vmem:[%s203 + $0x40] sm:$0xf]
      %v795 = vld [vmem:[%s203 + $0x44] sm:$0x1]
      %v796 = vld [vmem:[%s203 + $0x48] sm:$0xe]
      %v797 = vld [vmem:[%s203 + $0x4c] sm:$0xf]
      %v798 = vld [vmem:[%s203 + $0x50] sm:$0x1]
      %v799 = vld [vmem:[%s203 + $0x54] sm:$0xe]
      %v800 = vld [vmem:[%s203 + $0x58] sm:$0xf]
      %v801 = vld [vmem:[%s203 + $0x5c] sm:$0x1]
      %v802 = vld [vmem:[%s203 + $0x60] sm:$0xe]
      %v803 = vld [vmem:[%s203 + $0x64] sm:$0xf]
      %v804 = vld [vmem:[%s203 + $0x68] sm:$0x1]
      %v805 = vld [vmem:[%s203 + $0x6c] sm:$0xe]
      %v806 = vld [vmem:[%s203 + $0x70] sm:$0xf]
      %v807 = vld [vmem:[%s203 + $0x74] sm:$0x1]
      %v808 = vld [vmem:[%s203 + $0x78] sm:$0xe]
      %v809 = vld [vmem:[%s203 + $0x7c] sm:$0xf]
      %v810 = vld [vmem:[%s203 + $0x80] sm:$0x1]
      %v811 = vld [vmem:[%s203 + $0x84] sm:$0xe]
      %v812 = vld [vmem:[%s203 + $0x88] sm:$0xf]
      %v813 = vld [vmem:[%s203 + $0x8c] sm:$0x1]
      %v814 = vld [vmem:[%s203 + $0x90] sm:$0xe]
      %v815 = vld [vmem:[%s203 + $0x94] sm:$0xf]
      %v816 = vld [vmem:[%s203 + $0x98] sm:$0x1]
      %v817 = vld [vmem:[%s203 + $0x9c] sm:$0xe]
      %v818 = vld [vmem:[%s203 + $0xa0] sm:$0xf]
      %v819 = vld [vmem:[%s203 + $0xa4] sm:$0x1]
      %v820 = vld [vmem:[%s203 + $0xa8] sm:$0xe]
      %v821 = vld [vmem:[%s203 + $0xac] sm:$0xf]
      %v822 = vld [vmem:[%s203 + $0xb0] sm:$0x1]
      %v823 = vld [vmem:[%s203 + $0xb4] sm:$0xe]
      %v824 = vld [vmem:[%s203 + $0xb8] sm:$0xf]
      %v825 = vld [vmem:[%s203 + $0xbc] sm:$0x1]
      %vm874 = vcmask 1042432
      %vm875 = vcmask 1046532
      %vm876 = vmor %vm874, %vm875
      %v877 = vrot.slane %v778, 5
      %v878 = vrot.slane %v877, 4
      %v879 = vrot.slane %v779, 5
      %v880 = vsel %vm876, %v878, %v879
      %v881 = vrot.slane %v879, 4
      %v882 = vrot.slane %v780, 5
      %v883 = vsel %vm876, %v881, %v882
      %v884 = vrot.slane %v781, 5
      %v885 = vrot.slane %v884, 4
      %v886 = vrot.slane %v782, 5
      %v887 = vsel %vm876, %v885, %v886
      %v888 = vrot.slane %v886, 4
      %v889 = vrot.slane %v783, 5
      %v890 = vsel %vm876, %v888, %v889
      %v891 = vrot.slane %v784, 5
      %v892 = vrot.slane %v891, 4
      %v893 = vrot.slane %v785, 5
      %v894 = vsel %vm876, %v892, %v893
      %v895 = vrot.slane %v893, 4
      %v896 = vrot.slane %v786, 5
      %v897 = vsel %vm876, %v895, %v896
      %v898 = vrot.slane %v787, 5
      %v899 = vrot.slane %v898, 4
      %v900 = vrot.slane %v788, 5
      %v901 = vsel %vm876, %v899, %v900
      %v902 = vrot.slane %v900, 4
      %v903 = vrot.slane %v789, 5
      %v904 = vsel %vm876, %v902, %v903
      %v905 = vrot.slane %v790, 5
      %v906 = vrot.slane %v905, 4
      %v907 = vrot.slane %v791, 5
      %v908 = vsel %vm876, %v906, %v907
      %v909 = vrot.slane %v907, 4
      %v910 = vrot.slane %v792, 5
      %v911 = vsel %vm876, %v909, %v910
      %v912 = vrot.slane %v793, 5
      %v913 = vrot.slane %v912, 4
      %v914 = vrot.slane %v794, 5
      %v915 = vsel %vm876, %v913, %v914
      %v916 = vrot.slane %v914, 4
      %v917 = vrot.slane %v795, 5
      %v918 = vsel %vm876, %v916, %v917
      %v919 = vrot.slane %v796, 5
      %v920 = vrot.slane %v919, 4
      %v921 = vrot.slane %v797, 5
      %v922 = vsel %vm876, %v920, %v921
      %v923 = vrot.slane %v921, 4
      %v924 = vrot.slane %v798, 5
      %v925 = vsel %vm876, %v923, %v924
      %v926 = vrot.slane %v799, 5
      %v927 = vrot.slane %v926, 4
      %v928 = vrot.slane %v800, 5
      %v929 = vsel %vm876, %v927, %v928
      %v930 = vrot.slane %v928, 4
      %v931 = vrot.slane %v801, 5
      %v932 = vsel %vm876, %v930, %v931
      %v933 = vrot.slane %v802, 5
      %v934 = vrot.slane %v933, 4
      %v935 = vrot.slane %v803, 5
      %v936 = vsel %vm876, %v934, %v935
      %v937 = vrot.slane %v935, 4
      %v938 = vrot.slane %v804, 5
      %v939 = vsel %vm876, %v937, %v938
      %v940 = vrot.slane %v805, 5
      %v941 = vrot.slane %v940, 4
      %v942 = vrot.slane %v806, 5
      %v943 = vsel %vm876, %v941, %v942
      %v944 = vrot.slane %v942, 4
      %v945 = vrot.slane %v807, 5
      %v946 = vsel %vm876, %v944, %v945
      %v947 = vrot.slane %v808, 5
      %v948 = vrot.slane %v947, 4
      %v949 = vrot.slane %v809, 5
      %v950 = vsel %vm876, %v948, %v949
      %v951 = vrot.slane %v949, 4
      %v952 = vrot.slane %v810, 5
      %v953 = vsel %vm876, %v951, %v952
      %v954 = vrot.slane %v811, 5
      %v955 = vrot.slane %v954, 4
      %v956 = vrot.slane %v812, 5
      %v957 = vsel %vm876, %v955, %v956
      %v958 = vrot.slane %v956, 4
      %v959 = vrot.slane %v813, 5
      %v960 = vsel %vm876, %v958, %v959
      %v961 = vrot.slane %v814, 5
      %v962 = vrot.slane %v961, 4
      %v963 = vrot.slane %v815, 5
      %v964 = vsel %vm876, %v962, %v963
      %v965 = vrot.slane %v963, 4
      %v966 = vrot.slane %v816, 5
      %v967 = vsel %vm876, %v965, %v966
      %v968 = vrot.slane %v817, 5
      %v969 = vrot.slane %v968, 4
      %v970 = vrot.slane %v818, 5
      %v971 = vsel %vm876, %v969, %v970
      %v972 = vrot.slane %v970, 4
      %v973 = vrot.slane %v819, 5
      %v974 = vsel %vm876, %v972, %v973
      %v975 = vrot.slane %v820, 5
      %v976 = vrot.slane %v975, 4
      %v977 = vrot.slane %v821, 5
      %v978 = vsel %vm876, %v976, %v977
      %v979 = vrot.slane %v977, 4
      %v980 = vrot.slane %v822, 5
      %v981 = vsel %vm876, %v979, %v980
      %v982 = vrot.slane %v823, 5
      %v983 = vrot.slane %v982, 4
      %v984 = vrot.slane %v824, 5
      %v985 = vsel %vm876, %v983, %v984
      %v986 = vrot.slane %v984, 4
      %v987 = vrot.slane %v825, 5
      %v988 = vsel %vm876, %v986, %v987
      %1021 = vst [vmem:[#allocation2 + $0x8] sm:$0xf] %v880
      %1022 = vst [vmem:[#allocation2 + $0x2c] sm:$0xf] %v883
      %1023 = vst [vmem:[#allocation2 + $0x50] sm:$0xf] %v887
      %1024 = vst [vmem:[#allocation2 + $0x74] sm:$0xf] %v890
      %1025 = vst [vmem:[#allocation2 + $0x98] sm:$0xf] %v894
      %1026 = vst [vmem:[#allocation2 + $0xbc] sm:$0xf] %v897
      %1027 = vst [vmem:[#allocation2 + $0xe0] sm:$0xf] %v901
      %1028 = vst [vmem:[#allocation2 + $0x104] sm:$0xf] %v904
      %1029 = vst [vmem:[#allocation2 + $0x128] sm:$0xf] %v908
      %1030 = vst [vmem:[#allocation2 + $0x14c] sm:$0xf] %v911
      %1031 = vst [vmem:[#allocation2 + $0x170] sm:$0xf] %v915
      %1032 = vst [vmem:[#allocation2 + $0x194] sm:$0xf] %v918
      %1033 = vst [vmem:[#allocation2 + $0x1b8] sm:$0xf] %v922
      %1034 = vst [vmem:[#allocation2 + $0x1dc] sm:$0xf] %v925
      %1035 = vst [vmem:[#allocation2 + $0x200] sm:$0xf] %v929
      %1036 = vst [vmem:[#allocation2 + $0x224] sm:$0xf] %v932
      %1037 = vst [vmem:[#allocation2 + $0x248] sm:$0xf] %v936
      %1038 = vst [vmem:[#allocation2 + $0x26c] sm:$0xf] %v939
      %1039 = vst [vmem:[#allocation2 + $0x290] sm:$0xf] %v943
      %1040 = vst [vmem:[#allocation2 + $0x2b4] sm:$0xf] %v946
      %1041 = vst [vmem:[#allocation2 + $0x2d8] sm:$0xf] %v950
      %1042 = vst [vmem:[#allocation2 + $0x2fc] sm:$0xf] %v953
      %1043 = vst [vmem:[#allocation2 + $0x320] sm:$0xf] %v957
      %1044 = vst [vmem:[#allocation2 + $0x344] sm:$0xf] %v960
      %1045 = vst [vmem:[#allocation2 + $0x368] sm:$0xf] %v964
      %1046 = vst [vmem:[#allocation2 + $0x38c] sm:$0xf] %v967
      %1047 = vst [vmem:[#allocation2 + $0x3b0] sm:$0xf] %v971
      %1048 = vst [vmem:[#allocation2 + $0x3d4] sm:$0xf] %v974
      %1049 = vst [vmem:[#allocation2 + $0x3f8] sm:$0xf] %v978
      %1050 = vst [vmem:[#allocation2 + $0x41c] sm:$0xf] %v981
      %1051 = vst [vmem:[#allocation2 + $0x440] sm:$0xf] %v985
      %1052 = vst [vmem:[#allocation2 + $0x464] sm:$0xf] %v988
      %s1053 = scalar_lea.vmem %s203, 12
      %v1054 = vld [vmem:[%s1053] sm:$0xf]
      %v1055 = vld [vmem:[%s1053 + $0x4] sm:$0xf]
      %v1056 = vld [vmem:[%s1053 + $0xc] sm:$0xf]
      %v1057 = vld [vmem:[%s1053 + $0x10] sm:$0xf]
      %v1058 = vld [vmem:[%s1053 + $0x18] sm:$0xf]
      %v1059 = vld [vmem:[%s1053 + $0x1c] sm:$0xf]
      %v1060 = vld [vmem:[%s1053 + $0x24] sm:$0xf]
      %v1061 = vld [vmem:[%s1053 + $0x28] sm:$0xf]
      %v1062 = vld [vmem:[%s1053 + $0x30] sm:$0xf]
      %v1063 = vld [vmem:[%s1053 + $0x34] sm:$0xf]
      %v1064 = vld [vmem:[%s1053 + $0x3c] sm:$0xf]
      %v1065 = vld [vmem:[%s1053 + $0x40] sm:$0xf]
      %v1066 = vld [vmem:[%s1053 + $0x48] sm:$0xf]
      %v1067 = vld [vmem:[%s1053 + $0x4c] sm:$0xf]
      %v1068 = vld [vmem:[%s1053 + $0x54] sm:$0xf]
      %v1069 = vld [vmem:[%s1053 + $0x58] sm:$0xf]
      %v1070 = vld [vmem:[%s1053 + $0x60] sm:$0xf]
      %v1071 = vld [vmem:[%s1053 + $0x64] sm:$0xf]
      %v1072 = vld [vmem:[%s1053 + $0x6c] sm:$0xf]
      %v1073 = vld [vmem:[%s1053 + $0x70] sm:$0xf]
      %v1074 = vld [vmem:[%s1053 + $0x78] sm:$0xf]
      %v1075 = vld [vmem:[%s1053 + $0x7c] sm:$0xf]
      %v1076 = vld [vmem:[%s1053 + $0x84] sm:$0xf]
      %v1077 = vld [vmem:[%s1053 + $0x88] sm:$0xf]
      %v1078 = vld [vmem:[%s1053 + $0x90] sm:$0xf]
      %v1079 = vld [vmem:[%s1053 + $0x94] sm:$0xf]
      %v1080 = vld [vmem:[%s1053 + $0x9c] sm:$0xf]
      %v1081 = vld [vmem:[%s1053 + $0xa0] sm:$0xf]
      %v1082 = vld [vmem:[%s1053 + $0xa8] sm:$0xf]
      %v1083 = vld [vmem:[%s1053 + $0xac] sm:$0xf]
      %v1084 = vld [vmem:[%s1053 + $0xb4] sm:$0xf]
      %v1085 = vld [vmem:[%s1053 + $0xb8] sm:$0xf]
      %1086 = vst [vmem:[#allocation2 + $0xc] sm:$0xf] %v1054
      %1087 = vst [vmem:[#allocation2 + $0x30] sm:$0xf] %v1055
      %1088 = vst [vmem:[#allocation2 + $0x54] sm:$0xf] %v1056
      %1089 = vst [vmem:[#allocation2 + $0x78] sm:$0xf] %v1057
      %1090 = vst [vmem:[#allocation2 + $0x9c] sm:$0xf] %v1058
      %1091 = vst [vmem:[#allocation2 + $0xc0] sm:$0xf] %v1059
      %1092 = vst [vmem:[#allocation2 + $0xe4] sm:$0xf] %v1060
      %1093 = vst [vmem:[#allocation2 + $0x108] sm:$0xf] %v1061
      %1094 = vst [vmem:[#allocation2 + $0x12c] sm:$0xf] %v1062
      %1095 = vst [vmem:[#allocation2 + $0x150] sm:$0xf] %v1063
      %1096 = vst [vmem:[#allocation2 + $0x174] sm:$0xf] %v1064
      %1097 = vst [vmem:[#allocation2 + $0x198] sm:$0xf] %v1065
      %1098 = vst [vmem:[#allocation2 + $0x1bc] sm:$0xf] %v1066
      %1099 = vst [vmem:[#allocation2 + $0x1e0] sm:$0xf] %v1067
      %1100 = vst [vmem:[#allocation2 + $0x204] sm:$0xf] %v1068
      %1101 = vst [vmem:[#allocation2 + $0x228] sm:$0xf] %v1069
      %1102 = vst [vmem:[#allocation2 + $0x24c] sm:$0xf] %v1070
      %1103 = vst [vmem:[#allocation2 + $0x270] sm:$0xf] %v1071
      %1104 = vst [vmem:[#allocation2 + $0x294] sm:$0xf] %v1072
      %1105 = vst [vmem:[#allocation2 + $0x2b8] sm:$0xf] %v1073
      %1106 = vst [vmem:[#allocation2 + $0x2dc] sm:$0xf] %v1074
      %1107 = vst [vmem:[#allocation2 + $0x300] sm:$0xf] %v1075
      %1108 = vst [vmem:[#allocation2 + $0x324] sm:$0xf] %v1076
      %1109 = vst [vmem:[#allocation2 + $0x348] sm:$0xf] %v1077
      %1110 = vst [vmem:[#allocation2 + $0x36c] sm:$0xf] %v1078
      %1111 = vst [vmem:[#allocation2 + $0x390] sm:$0xf] %v1079
      %1112 = vst [vmem:[#allocation2 + $0x3b4] sm:$0xf] %v1080
      %1113 = vst [vmem:[#allocation2 + $0x3d8] sm:$0xf] %v1081
      %1114 = vst [vmem:[#allocation2 + $0x3fc] sm:$0xf] %v1082
      %1115 = vst [vmem:[#allocation2 + $0x420] sm:$0xf] %v1083
      %1116 = vst [vmem:[#allocation2 + $0x444] sm:$0xf] %v1084
      %1117 = vst [vmem:[#allocation2 + $0x468] sm:$0xf] %v1085
      %v1118 = vld [vmem:[%s1053] sm:$0xf]
      %v1119 = vld [vmem:[%s1053 + $0x4] sm:$0xf]
      %v1120 = vld [vmem:[%s1053 + $0x8] sm:$0x1]
      %v1121 = vld [vmem:[%s1053 + $0xc] sm:$0xf]
      %v1122 = vld [vmem:[%s1053 + $0x10] sm:$0xf]
      %v1123 = vld [vmem:[%s1053 + $0x14] sm:$0x1]
      %v1124 = vld [vmem:[%s1053 + $0x18] sm:$0xf]
      %v1125 = vld [vmem:[%s1053 + $0x1c] sm:$0xf]
      %v1126 = vld [vmem:[%s1053 + $0x20] sm:$0x1]
      %v1127 = vld [vmem:[%s1053 + $0x24] sm:$0xf]
      %v1128 = vld [vmem:[%s1053 + $0x28] sm:$0xf]
      %v1129 = vld [vmem:[%s1053 + $0x2c] sm:$0x1]
      %v1130 = vld [vmem:[%s1053 + $0x30] sm:$0xf]
      %v1131 = vld [vmem:[%s1053 + $0x34] sm:$0xf]
      %v1132 = vld [vmem:[%s1053 + $0x38] sm:$0x1]
      %v1133 = vld [vmem:[%s1053 + $0x3c] sm:$0xf]
      %v1134 = vld [vmem:[%s1053 + $0x40] sm:$0xf]
      %v1135 = vld [vmem:[%s1053 + $0x44] sm:$0x1]
      %v1136 = vld [vmem:[%s1053 + $0x48] sm:$0xf]
      %v1137 = vld [vmem:[%s1053 + $0x4c] sm:$0xf]
      %v1138 = vld [vmem:[%s1053 + $0x50] sm:$0x1]
      %v1139 = vld [vmem:[%s1053 + $0x54] sm:$0xf]
      %v1140 = vld [vmem:[%s1053 + $0x58] sm:$0xf]
      %v1141 = vld [vmem:[%s1053 + $0x5c] sm:$0x1]
      %v1142 = vld [vmem:[%s1053 + $0x60] sm:$0xf]
      %v1143 = vld [vmem:[%s1053 + $0x64] sm:$0xf]
      %v1144 = vld [vmem:[%s1053 + $0x68] sm:$0x1]
      %v1145 = vld [vmem:[%s1053 + $0x6c] sm:$0xf]
      %v1146 = vld [vmem:[%s1053 + $0x70] sm:$0xf]
      %v1147 = vld [vmem:[%s1053 + $0x74] sm:$0x1]
      %v1148 = vld [vmem:[%s1053 + $0x78] sm:$0xf]
      %v1149 = vld [vmem:[%s1053 + $0x7c] sm:$0xf]
      %v1150 = vld [vmem:[%s1053 + $0x80] sm:$0x1]
      %v1151 = vld [vmem:[%s1053 + $0x84] sm:$0xf]
      %v1152 = vld [vmem:[%s1053 + $0x88] sm:$0xf]
      %v1153 = vld [vmem:[%s1053 + $0x8c] sm:$0x1]
      %v1154 = vld [vmem:[%s1053 + $0x90] sm:$0xf]
      %v1155 = vld [vmem:[%s1053 + $0x94] sm:$0xf]
      %v1156 = vld [vmem:[%s1053 + $0x98] sm:$0x1]
      %v1157 = vld [vmem:[%s1053 + $0x9c] sm:$0xf]
      %v1158 = vld [vmem:[%s1053 + $0xa0] sm:$0xf]
      %v1159 = vld [vmem:[%s1053 + $0xa4] sm:$0x1]
      %v1160 = vld [vmem:[%s1053 + $0xa8] sm:$0xf]
      %v1161 = vld [vmem:[%s1053 + $0xac] sm:$0xf]
      %v1162 = vld [vmem:[%s1053 + $0xb0] sm:$0x1]
      %v1163 = vld [vmem:[%s1053 + $0xb4] sm:$0xf]
      %v1164 = vld [vmem:[%s1053 + $0xb8] sm:$0xf]
      %v1165 = vld [vmem:[%s1053 + $0xbc] sm:$0x1]
      %v1167 = vshrl.u32 %v1118, 16
      %v1169 = vrot.slane %v1167, 4
      %v1170 = vshll.u32 %v1118, 16
      %v1172 = vrot.slane %v1170, 5
      %v1173 = vor.u32 %v1169, %v1172
      %v1174 = vrot.slane %v1173, 4
      %v1176 = vshll.u32 %v1119, 16
      %v1178 = vrot.slane %v1176, 5
      %v1179 = vsel %vm329, %v1174, %v1178
      %v1180 = vshrl.u32 %v1119, 16
      %v1182 = vrot.slane %v1180, 4
      %v1183 = vor.u32 %v1182, %v1178
      %v1184 = vrot.slane %v1183, 4
      %v1186 = vshll.u32 %v1120, 16
      %v1188 = vrot.slane %v1186, 5
      %v1189 = vsel %vm329, %v1184, %v1188
      %v1191 = vshrl.u32 %v1121, 16
      %v1193 = vrot.slane %v1191, 4
      %v1194 = vshll.u32 %v1121, 16
      %v1196 = vrot.slane %v1194, 5
      %v1197 = vor.u32 %v1193, %v1196
      %v1198 = vrot.slane %v1197, 4
      %v1200 = vshll.u32 %v1122, 16
      %v1202 = vrot.slane %v1200, 5
      %v1203 = vsel %vm329, %v1198, %v1202
      %v1204 = vshrl.u32 %v1122, 16
      %v1206 = vrot.slane %v1204, 4
      %v1207 = vor.u32 %v1206, %v1202
      %v1208 = vrot.slane %v1207, 4
      %v1210 = vshll.u32 %v1123, 16
      %v1212 = vrot.slane %v1210, 5
      %v1213 = vsel %vm329, %v1208, %v1212
      %v1215 = vshrl.u32 %v1124, 16
      %v1217 = vrot.slane %v1215, 4
      %v1218 = vshll.u32 %v1124, 16
      %v1220 = vrot.slane %v1218, 5
      %v1221 = vor.u32 %v1217, %v1220
      %v1222 = vrot.slane %v1221, 4
      %v1224 = vshll.u32 %v1125, 16
      %v1226 = vrot.slane %v1224, 5
      %v1227 = vsel %vm329, %v1222, %v1226
      %v1228 = vshrl.u32 %v1125, 16
      %v1230 = vrot.slane %v1228, 4
      %v1231 = vor.u32 %v1230, %v1226
      %v1232 = vrot.slane %v1231, 4
      %v1234 = vshll.u32 %v1126, 16
      %v1236 = vrot.slane %v1234, 5
      %v1237 = vsel %vm329, %v1232, %v1236
      %v1239 = vshrl.u32 %v1127, 16
      %v1241 = vrot.slane %v1239, 4
      %v1242 = vshll.u32 %v1127, 16
      %v1244 = vrot.slane %v1242, 5
      %v1245 = vor.u32 %v1241, %v1244
      %v1246 = vrot.slane %v1245, 4
      %v1248 = vshll.u32 %v1128, 16
      %v1250 = vrot.slane %v1248, 5
      %v1251 = vsel %vm329, %v1246, %v1250
      %v1252 = vshrl.u32 %v1128, 16
      %v1254 = vrot.slane %v1252, 4
      %v1255 = vor.u32 %v1254, %v1250
      %v1256 = vrot.slane %v1255, 4
      %v1258 = vshll.u32 %v1129, 16
      %v1260 = vrot.slane %v1258, 5
      %v1261 = vsel %vm329, %v1256, %v1260
      %v1263 = vshrl.u32 %v1130, 16
      %v1265 = vrot.slane %v1263, 4
      %v1266 = vshll.u32 %v1130, 16
      %v1268 = vrot.slane %v1266, 5
      %v1269 = vor.u32 %v1265, %v1268
      %v1270 = vrot.slane %v1269, 4
      %v1272 = vshll.u32 %v1131, 16
      %v1274 = vrot.slane %v1272, 5
      %v1275 = vsel %vm329, %v1270, %v1274
      %v1276 = vshrl.u32 %v1131, 16
      %v1278 = vrot.slane %v1276, 4
      %v1279 = vor.u32 %v1278, %v1274
      %v1280 = vrot.slane %v1279, 4
      %v1282 = vshll.u32 %v1132, 16
      %v1284 = vrot.slane %v1282, 5
      %v1285 = vsel %vm329, %v1280, %v1284
      %v1287 = vshrl.u32 %v1133, 16
      %v1289 = vrot.slane %v1287, 4
      %v1290 = vshll.u32 %v1133, 16
      %v1292 = vrot.slane %v1290, 5
      %v1293 = vor.u32 %v1289, %v1292
      %v1294 = vrot.slane %v1293, 4
      %v1296 = vshll.u32 %v1134, 16
      %v1298 = vrot.slane %v1296, 5
      %v1299 = vsel %vm329, %v1294, %v1298
      %v1300 = vshrl.u32 %v1134, 16
      %v1302 = vrot.slane %v1300, 4
      %v1303 = vor.u32 %v1302, %v1298
      %v1304 = vrot.slane %v1303, 4
      %v1306 = vshll.u32 %v1135, 16
      %v1308 = vrot.slane %v1306, 5
      %v1309 = vsel %vm329, %v1304, %v1308
      %v1311 = vshrl.u32 %v1136, 16
      %v1313 = vrot.slane %v1311, 4
      %v1314 = vshll.u32 %v1136, 16
      %v1316 = vrot.slane %v1314, 5
      %v1317 = vor.u32 %v1313, %v1316
      %v1318 = vrot.slane %v1317, 4
      %v1320 = vshll.u32 %v1137, 16
      %v1322 = vrot.slane %v1320, 5
      %v1323 = vsel %vm329, %v1318, %v1322
      %v1324 = vshrl.u32 %v1137, 16
      %v1326 = vrot.slane %v1324, 4
      %v1327 = vor.u32 %v1326, %v1322
      %v1328 = vrot.slane %v1327, 4
      %v1330 = vshll.u32 %v1138, 16
      %v1332 = vrot.slane %v1330, 5
      %v1333 = vsel %vm329, %v1328, %v1332
      %v1335 = vshrl.u32 %v1139, 16
      %v1337 = vrot.slane %v1335, 4
      %v1338 = vshll.u32 %v1139, 16
      %v1340 = vrot.slane %v1338, 5
      %v1341 = vor.u32 %v1337, %v1340
      %v1342 = vrot.slane %v1341, 4
      %v1344 = vshll.u32 %v1140, 16
      %v1346 = vrot.slane %v1344, 5
      %v1347 = vsel %vm329, %v1342, %v1346
      %v1348 = vshrl.u32 %v1140, 16
      %v1350 = vrot.slane %v1348, 4
      %v1351 = vor.u32 %v1350, %v1346
      %v1352 = vrot.slane %v1351, 4
      %v1354 = vshll.u32 %v1141, 16
      %v1356 = vrot.slane %v1354, 5
      %v1357 = vsel %vm329, %v1352, %v1356
      %v1359 = vshrl.u32 %v1142, 16
      %v1361 = vrot.slane %v1359, 4
      %v1362 = vshll.u32 %v1142, 16
      %v1364 = vrot.slane %v1362, 5
      %v1365 = vor.u32 %v1361, %v1364
      %v1366 = vrot.slane %v1365, 4
      %v1368 = vshll.u32 %v1143, 16
      %v1370 = vrot.slane %v1368, 5
      %v1371 = vsel %vm329, %v1366, %v1370
      %v1372 = vshrl.u32 %v1143, 16
      %v1374 = vrot.slane %v1372, 4
      %v1375 = vor.u32 %v1374, %v1370
      %v1376 = vrot.slane %v1375, 4
      %v1378 = vshll.u32 %v1144, 16
      %v1380 = vrot.slane %v1378, 5
      %v1381 = vsel %vm329, %v1376, %v1380
      %v1383 = vshrl.u32 %v1145, 16
      %v1385 = vrot.slane %v1383, 4
      %v1386 = vshll.u32 %v1145, 16
      %v1388 = vrot.slane %v1386, 5
      %v1389 = vor.u32 %v1385, %v1388
      %v1390 = vrot.slane %v1389, 4
      %v1392 = vshll.u32 %v1146, 16
      %v1394 = vrot.slane %v1392, 5
      %v1395 = vsel %vm329, %v1390, %v1394
      %v1396 = vshrl.u32 %v1146, 16
      %v1398 = vrot.slane %v1396, 4
      %v1399 = vor.u32 %v1398, %v1394
      %v1400 = vrot.slane %v1399, 4
      %v1402 = vshll.u32 %v1147, 16
      %v1404 = vrot.slane %v1402, 5
      %v1405 = vsel %vm329, %v1400, %v1404
      %v1407 = vshrl.u32 %v1148, 16
      %v1409 = vrot.slane %v1407, 4
      %v1410 = vshll.u32 %v1148, 16
      %v1412 = vrot.slane %v1410, 5
      %v1413 = vor.u32 %v1409, %v1412
      %v1414 = vrot.slane %v1413, 4
      %v1416 = vshll.u32 %v1149, 16
      %v1418 = vrot.slane %v1416, 5
      %v1419 = vsel %vm329, %v1414, %v1418
      %v1420 = vshrl.u32 %v1149, 16
      %v1422 = vrot.slane %v1420, 4
      %v1423 = vor.u32 %v1422, %v1418
      %v1424 = vrot.slane %v1423, 4
      %v1426 = vshll.u32 %v1150, 16
      %v1428 = vrot.slane %v1426, 5
      %v1429 = vsel %vm329, %v1424, %v1428
      %v1431 = vshrl.u32 %v1151, 16
      %v1433 = vrot.slane %v1431, 4
      %v1434 = vshll.u32 %v1151, 16
      %v1436 = vrot.slane %v1434, 5
      %v1437 = vor.u32 %v1433, %v1436
      %v1438 = vrot.slane %v1437, 4
      %v1440 = vshll.u32 %v1152, 16
      %v1442 = vrot.slane %v1440, 5
      %v1443 = vsel %vm329, %v1438, %v1442
      %v1444 = vshrl.u32 %v1152, 16
      %v1446 = vrot.slane %v1444, 4
      %v1447 = vor.u32 %v1446, %v1442
      %v1448 = vrot.slane %v1447, 4
      %v1450 = vshll.u32 %v1153, 16
      %v1452 = vrot.slane %v1450, 5
      %v1453 = vsel %vm329, %v1448, %v1452
      %v1455 = vshrl.u32 %v1154, 16
      %v1457 = vrot.slane %v1455, 4
      %v1458 = vshll.u32 %v1154, 16
      %v1460 = vrot.slane %v1458, 5
      %v1461 = vor.u32 %v1457, %v1460
      %v1462 = vrot.slane %v1461, 4
      %v1464 = vshll.u32 %v1155, 16
      %v1466 = vrot.slane %v1464, 5
      %v1467 = vsel %vm329, %v1462, %v1466
      %v1468 = vshrl.u32 %v1155, 16
      %v1470 = vrot.slane %v1468, 4
      %v1471 = vor.u32 %v1470, %v1466
      %v1472 = vrot.slane %v1471, 4
      %v1474 = vshll.u32 %v1156, 16
      %v1476 = vrot.slane %v1474, 5
      %v1477 = vsel %vm329, %v1472, %v1476
      %v1479 = vshrl.u32 %v1157, 16
      %v1481 = vrot.slane %v1479, 4
      %v1482 = vshll.u32 %v1157, 16
      %v1484 = vrot.slane %v1482, 5
      %v1485 = vor.u32 %v1481, %v1484
      %v1486 = vrot.slane %v1485, 4
      %v1488 = vshll.u32 %v1158, 16
      %v1490 = vrot.slane %v1488, 5
      %v1491 = vsel %vm329, %v1486, %v1490
      %v1492 = vshrl.u32 %v1158, 16
      %v1494 = vrot.slane %v1492, 4
      %v1495 = vor.u32 %v1494, %v1490
      %v1496 = vrot.slane %v1495, 4
      %v1498 = vshll.u32 %v1159, 16
      %v1500 = vrot.slane %v1498, 5
      %v1501 = vsel %vm329, %v1496, %v1500
      %v1503 = vshrl.u32 %v1160, 16
      %v1505 = vrot.slane %v1503, 4
      %v1506 = vshll.u32 %v1160, 16
      %v1508 = vrot.slane %v1506, 5
      %v1509 = vor.u32 %v1505, %v1508
      %v1510 = vrot.slane %v1509, 4
      %v1512 = vshll.u32 %v1161, 16
      %v1514 = vrot.slane %v1512, 5
      %v1515 = vsel %vm329, %v1510, %v1514
      %v1516 = vshrl.u32 %v1161, 16
      %v1518 = vrot.slane %v1516, 4
      %v1519 = vor.u32 %v1518, %v1514
      %v1520 = vrot.slane %v1519, 4
      %v1522 = vshll.u32 %v1162, 16
      %v1524 = vrot.slane %v1522, 5
      %v1525 = vsel %vm329, %v1520, %v1524
      %v1527 = vshrl.u32 %v1163, 16
      %v1529 = vrot.slane %v1527, 4
      %v1530 = vshll.u32 %v1163, 16
      %v1532 = vrot.slane %v1530, 5
      %v1533 = vor.u32 %v1529, %v1532
      %v1534 = vrot.slane %v1533, 4
      %v1536 = vshll.u32 %v1164, 16
      %v1538 = vrot.slane %v1536, 5
      %v1539 = vsel %vm329, %v1534, %v1538
      %v1540 = vshrl.u32 %v1164, 16
      %v1542 = vrot.slane %v1540, 4
      %v1543 = vor.u32 %v1542, %v1538
      %v1544 = vrot.slane %v1543, 4
      %v1546 = vshll.u32 %v1165, 16
      %v1548 = vrot.slane %v1546, 5
      %v1549 = vsel %vm329, %v1544, %v1548
      %1582 = vst [vmem:[#allocation2 + $0x10] sm:$0xf] %v1179
      %1583 = vst [vmem:[#allocation2 + $0x34] sm:$0xf] %v1189
      %1584 = vst [vmem:[#allocation2 + $0x58] sm:$0xf] %v1203
      %1585 = vst [vmem:[#allocation2 + $0x7c] sm:$0xf] %v1213
      %1586 = vst [vmem:[#allocation2 + $0xa0] sm:$0xf] %v1227
      %1587 = vst [vmem:[#allocation2 + $0xc4] sm:$0xf] %v1237
      %1588 = vst [vmem:[#allocation2 + $0xe8] sm:$0xf] %v1251
      %1589 = vst [vmem:[#allocation2 + $0x10c] sm:$0xf] %v1261
      %1590 = vst [vmem:[#allocation2 + $0x130] sm:$0xf] %v1275
      %1591 = vst [vmem:[#allocation2 + $0x154] sm:$0xf] %v1285
      %1592 = vst [vmem:[#allocation2 + $0x178] sm:$0xf] %v1299
      %1593 = vst [vmem:[#allocation2 + $0x19c] sm:$0xf] %v1309
      %1594 = vst [vmem:[#allocation2 + $0x1c0] sm:$0xf] %v1323
      %1595 = vst [vmem:[#allocation2 + $0x1e4] sm:$0xf] %v1333
      %1596 = vst [vmem:[#allocation2 + $0x208] sm:$0xf] %v1347
      %1597 = vst [vmem:[#allocation2 + $0x22c] sm:$0xf] %v1357
      %1598 = vst [vmem:[#allocation2 + $0x250] sm:$0xf] %v1371
      %1599 = vst [vmem:[#allocation2 + $0x274] sm:$0xf] %v1381
      %1600 = vst [vmem:[#allocation2 + $0x298] sm:$0xf] %v1395
      %1601 = vst [vmem:[#allocation2 + $0x2bc] sm:$0xf] %v1405
      %1602 = vst [vmem:[#allocation2 + $0x2e0] sm:$0xf] %v1419
      %1603 = vst [vmem:[#allocation2 + $0x304] sm:$0xf] %v1429
      %1604 = vst [vmem:[#allocation2 + $0x328] sm:$0xf] %v1443
      %1605 = vst [vmem:[#allocation2 + $0x34c] sm:$0xf] %v1453
      %1606 = vst [vmem:[#allocation2 + $0x370] sm:$0xf] %v1467
      %1607 = vst [vmem:[#allocation2 + $0x394] sm:$0xf] %v1477
      %1608 = vst [vmem:[#allocation2 + $0x3b8] sm:$0xf] %v1491
      %1609 = vst [vmem:[#allocation2 + $0x3dc] sm:$0xf] %v1501
      %1610 = vst [vmem:[#allocation2 + $0x400] sm:$0xf] %v1515
      %1611 = vst [vmem:[#allocation2 + $0x424] sm:$0xf] %v1525
      %1612 = vst [vmem:[#allocation2 + $0x448] sm:$0xf] %v1539
      %1613 = vst [vmem:[#allocation2 + $0x46c] sm:$0xf] %v1549
      %v1614 = vld [vmem:[%s1053] sm:$0xe]
      %v1615 = vld [vmem:[%s1053 + $0x4] sm:$0xf]
      %v1616 = vld [vmem:[%s1053 + $0x8] sm:$0x1]
      %v1617 = vld [vmem:[%s1053 + $0xc] sm:$0xe]
      %v1618 = vld [vmem:[%s1053 + $0x10] sm:$0xf]
      %v1619 = vld [vmem:[%s1053 + $0x14] sm:$0x1]
      %v1620 = vld [vmem:[%s1053 + $0x18] sm:$0xe]
      %v1621 = vld [vmem:[%s1053 + $0x1c] sm:$0xf]
      %v1622 = vld [vmem:[%s1053 + $0x20] sm:$0x1]
      %v1623 = vld [vmem:[%s1053 + $0x24] sm:$0xe]
      %v1624 = vld [vmem:[%s1053 + $0x28] sm:$0xf]
      %v1625 = vld [vmem:[%s1053 + $0x2c] sm:$0x1]
      %v1626 = vld [vmem:[%s1053 + $0x30] sm:$0xe]
      %v1627 = vld [vmem:[%s1053 + $0x34] sm:$0xf]
      %v1628 = vld [vmem:[%s1053 + $0x38] sm:$0x1]
      %v1629 = vld [vmem:[%s1053 + $0x3c] sm:$0xe]
      %v1630 = vld [vmem:[%s1053 + $0x40] sm:$0xf]
      %v1631 = vld [vmem:[%s1053 + $0x44] sm:$0x1]
      %v1632 = vld [vmem:[%s1053 + $0x48] sm:$0xe]
      %v1633 = vld [vmem:[%s1053 + $0x4c] sm:$0xf]
      %v1634 = vld [vmem:[%s1053 + $0x50] sm:$0x1]
      %v1635 = vld [vmem:[%s1053 + $0x54] sm:$0xe]
      %v1636 = vld [vmem:[%s1053 + $0x58] sm:$0xf]
      %v1637 = vld [vmem:[%s1053 + $0x5c] sm:$0x1]
      %v1638 = vld [vmem:[%s1053 + $0x60] sm:$0xe]
      %v1639 = vld [vmem:[%s1053 + $0x64] sm:$0xf]
      %v1640 = vld [vmem:[%s1053 + $0x68] sm:$0x1]
      %v1641 = vld [vmem:[%s1053 + $0x6c] sm:$0xe]
      %v1642 = vld [vmem:[%s1053 + $0x70] sm:$0xf]
      %v1643 = vld [vmem:[%s1053 + $0x74] sm:$0x1]
      %v1644 = vld [vmem:[%s1053 + $0x78] sm:$0xe]
      %v1645 = vld [vmem:[%s1053 + $0x7c] sm:$0xf]
      %v1646 = vld [vmem:[%s1053 + $0x80] sm:$0x1]
      %v1647 = vld [vmem:[%s1053 + $0x84] sm:$0xe]
      %v1648 = vld [vmem:[%s1053 + $0x88] sm:$0xf]
      %v1649 = vld [vmem:[%s1053 + $0x8c] sm:$0x1]
      %v1650 = vld [vmem:[%s1053 + $0x90] sm:$0xe]
      %v1651 = vld [vmem:[%s1053 + $0x94] sm:$0xf]
      %v1652 = vld [vmem:[%s1053 + $0x98] sm:$0x1]
      %v1653 = vld [vmem:[%s1053 + $0x9c] sm:$0xe]
      %v1654 = vld [vmem:[%s1053 + $0xa0] sm:$0xf]
      %v1655 = vld [vmem:[%s1053 + $0xa4] sm:$0x1]
      %v1656 = vld [vmem:[%s1053 + $0xa8] sm:$0xe]
      %v1657 = vld [vmem:[%s1053 + $0xac] sm:$0xf]
      %v1658 = vld [vmem:[%s1053 + $0xb0] sm:$0x1]
      %v1659 = vld [vmem:[%s1053 + $0xb4] sm:$0xe]
      %v1660 = vld [vmem:[%s1053 + $0xb8] sm:$0xf]
      %v1661 = vld [vmem:[%s1053 + $0xbc] sm:$0x1]
      %v1710 = vrot.slane %v1614, 5
      %v1711 = vrot.slane %v1710, 4
      %v1712 = vrot.slane %v1615, 5
      %v1713 = vsel %vm876, %v1711, %v1712
      %v1714 = vrot.slane %v1712, 4
      %v1715 = vrot.slane %v1616, 5
      %v1716 = vsel %vm876, %v1714, %v1715
      %v1717 = vrot.slane %v1617, 5
      %v1718 = vrot.slane %v1717, 4
      %v1719 = vrot.slane %v1618, 5
      %v1720 = vsel %vm876, %v1718, %v1719
      %v1721 = vrot.slane %v1719, 4
      %v1722 = vrot.slane %v1619, 5
      %v1723 = vsel %vm876, %v1721, %v1722
      %v1724 = vrot.slane %v1620, 5
      %v1725 = vrot.slane %v1724, 4
      %v1726 = vrot.slane %v1621, 5
      %v1727 = vsel %vm876, %v1725, %v1726
      %v1728 = vrot.slane %v1726, 4
      %v1729 = vrot.slane %v1622, 5
      %v1730 = vsel %vm876, %v1728, %v1729
      %v1731 = vrot.slane %v1623, 5
      %v1732 = vrot.slane %v1731, 4
      %v1733 = vrot.slane %v1624, 5
      %v1734 = vsel %vm876, %v1732, %v1733
      %v1735 = vrot.slane %v1733, 4
      %v1736 = vrot.slane %v1625, 5
      %v1737 = vsel %vm876, %v1735, %v1736
      %v1738 = vrot.slane %v1626, 5
      %v1739 = vrot.slane %v1738, 4
      %v1740 = vrot.slane %v1627, 5
      %v1741 = vsel %vm876, %v1739, %v1740
      %v1742 = vrot.slane %v1740, 4
      %v1743 = vrot.slane %v1628, 5
      %v1744 = vsel %vm876, %v1742, %v1743
      %v1745 = vrot.slane %v1629, 5
      %v1746 = vrot.slane %v1745, 4
      %v1747 = vrot.slane %v1630, 5
      %v1748 = vsel %vm876, %v1746, %v1747
      %v1749 = vrot.slane %v1747, 4
      %v1750 = vrot.slane %v1631, 5
      %v1751 = vsel %vm876, %v1749, %v1750
      %v1752 = vrot.slane %v1632, 5
      %v1753 = vrot.slane %v1752, 4
      %v1754 = vrot.slane %v1633, 5
      %v1755 = vsel %vm876, %v1753, %v1754
      %v1756 = vrot.slane %v1754, 4
      %v1757 = vrot.slane %v1634, 5
      %v1758 = vsel %vm876, %v1756, %v1757
      %v1759 = vrot.slane %v1635, 5
      %v1760 = vrot.slane %v1759, 4
      %v1761 = vrot.slane %v1636, 5
      %v1762 = vsel %vm876, %v1760, %v1761
      %v1763 = vrot.slane %v1761, 4
      %v1764 = vrot.slane %v1637, 5
      %v1765 = vsel %vm876, %v1763, %v1764
      %v1766 = vrot.slane %v1638, 5
      %v1767 = vrot.slane %v1766, 4
      %v1768 = vrot.slane %v1639, 5
      %v1769 = vsel %vm876, %v1767, %v1768
      %v1770 = vrot.slane %v1768, 4
      %v1771 = vrot.slane %v1640, 5
      %v1772 = vsel %vm876, %v1770, %v1771
      %v1773 = vrot.slane %v1641, 5
      %v1774 = vrot.slane %v1773, 4
      %v1775 = vrot.slane %v1642, 5
      %v1776 = vsel %vm876, %v1774, %v1775
      %v1777 = vrot.slane %v1775, 4
      %v1778 = vrot.slane %v1643, 5
      %v1779 = vsel %vm876, %v1777, %v1778
      %v1780 = vrot.slane %v1644, 5
      %v1781 = vrot.slane %v1780, 4
      %v1782 = vrot.slane %v1645, 5
      %v1783 = vsel %vm876, %v1781, %v1782
      %v1784 = vrot.slane %v1782, 4
      %v1785 = vrot.slane %v1646, 5
      %v1786 = vsel %vm876, %v1784, %v1785
      %v1787 = vrot.slane %v1647, 5
      %v1788 = vrot.slane %v1787, 4
      %v1789 = vrot.slane %v1648, 5
      %v1790 = vsel %vm876, %v1788, %v1789
      %v1791 = vrot.slane %v1789, 4
      %v1792 = vrot.slane %v1649, 5
      %v1793 = vsel %vm876, %v1791, %v1792
      %v1794 = vrot.slane %v1650, 5
      %v1795 = vrot.slane %v1794, 4
      %v1796 = vrot.slane %v1651, 5
      %v1797 = vsel %vm876, %v1795, %v1796
      %v1798 = vrot.slane %v1796, 4
      %v1799 = vrot.slane %v1652, 5
      %v1800 = vsel %vm876, %v1798, %v1799
      %v1801 = vrot.slane %v1653, 5
      %v1802 = vrot.slane %v1801, 4
      %v1803 = vrot.slane %v1654, 5
      %v1804 = vsel %vm876, %v1802, %v1803
      %v1805 = vrot.slane %v1803, 4
      %v1806 = vrot.slane %v1655, 5
      %v1807 = vsel %vm876, %v1805, %v1806
      %v1808 = vrot.slane %v1656, 5
      %v1809 = vrot.slane %v1808, 4
      %v1810 = vrot.slane %v1657, 5
      %v1811 = vsel %vm876, %v1809, %v1810
      %v1812 = vrot.slane %v1810, 4
      %v1813 = vrot.slane %v1658, 5
      %v1814 = vsel %vm876, %v1812, %v1813
      %v1815 = vrot.slane %v1659, 5
      %v1816 = vrot.slane %v1815, 4
      %v1817 = vrot.slane %v1660, 5
      %v1818 = vsel %vm876, %v1816, %v1817
      %v1819 = vrot.slane %v1817, 4
      %v1820 = vrot.slane %v1661, 5
      %v1821 = vsel %vm876, %v1819, %v1820
      %1854 = vst [vmem:[#allocation2 + $0x14] sm:$0xf] %v1713
      %1855 = vst [vmem:[#allocation2 + $0x38] sm:$0xf] %v1716
      %1856 = vst [vmem:[#allocation2 + $0x5c] sm:$0xf] %v1720
      %1857 = vst [vmem:[#allocation2 + $0x80] sm:$0xf] %v1723
      %1858 = vst [vmem:[#allocation2 + $0xa4] sm:$0xf] %v1727
      %1859 = vst [vmem:[#allocation2 + $0xc8] sm:$0xf] %v1730
      %1860 = vst [vmem:[#allocation2 + $0xec] sm:$0xf] %v1734
      %1861 = vst [vmem:[#allocation2 + $0x110] sm:$0xf] %v1737
      %1862 = vst [vmem:[#allocation2 + $0x134] sm:$0xf] %v1741
      %1863 = vst [vmem:[#allocation2 + $0x158] sm:$0xf] %v1744
      %1864 = vst [vmem:[#allocation2 + $0x17c] sm:$0xf] %v1748
      %1865 = vst [vmem:[#allocation2 + $0x1a0] sm:$0xf] %v1751
      %1866 = vst [vmem:[#allocation2 + $0x1c4] sm:$0xf] %v1755
      %1867 = vst [vmem:[#allocation2 + $0x1e8] sm:$0xf] %v1758
      %1868 = vst [vmem:[#allocation2 + $0x20c] sm:$0xf] %v1762
      %1869 = vst [vmem:[#allocation2 + $0x230] sm:$0xf] %v1765
      %1870 = vst [vmem:[#allocation2 + $0x254] sm:$0xf] %v1769
      %1871 = vst [vmem:[#allocation2 + $0x278] sm:$0xf] %v1772
      %1872 = vst [vmem:[#allocation2 + $0x29c] sm:$0xf] %v1776
      %1873 = vst [vmem:[#allocation2 + $0x2c0] sm:$0xf] %v1779
      %1874 = vst [vmem:[#allocation2 + $0x2e4] sm:$0xf] %v1783
      %1875 = vst [vmem:[#allocation2 + $0x308] sm:$0xf] %v1786
      %1876 = vst [vmem:[#allocation2 + $0x32c] sm:$0xf] %v1790
      %1877 = vst [vmem:[#allocation2 + $0x350] sm:$0xf] %v1793
      %1878 = vst [vmem:[#allocation2 + $0x374] sm:$0xf] %v1797
      %1879 = vst [vmem:[#allocation2 + $0x398] sm:$0xf] %v1800
      %1880 = vst [vmem:[#allocation2 + $0x3bc] sm:$0xf] %v1804
      %1881 = vst [vmem:[#allocation2 + $0x3e0] sm:$0xf] %v1807
      %1882 = vst [vmem:[#allocation2 + $0x404] sm:$0xf] %v1811
      %1883 = vst [vmem:[#allocation2 + $0x428] sm:$0xf] %v1814
      %1884 = vst [vmem:[#allocation2 + $0x44c] sm:$0xf] %v1818
      %1885 = vst [vmem:[#allocation2 + $0x470] sm:$0xf] %v1821
      %s1886 = scalar_lea.vmem %s203, 24
      %v1887 = vld [vmem:[%s1886] sm:$0xf]
      %v1888 = vld [vmem:[%s1886 + $0x4] sm:$0xf]
      %v1889 = vld [vmem:[%s1886 + $0xc] sm:$0xf]
      %v1890 = vld [vmem:[%s1886 + $0x10] sm:$0xf]
      %v1891 = vld [vmem:[%s1886 + $0x18] sm:$0xf]
      %v1892 = vld [vmem:[%s1886 + $0x1c] sm:$0xf]
      %v1893 = vld [vmem:[%s1886 + $0x24] sm:$0xf]
      %v1894 = vld [vmem:[%s1886 + $0x28] sm:$0xf]
      %v1895 = vld [vmem:[%s1886 + $0x30] sm:$0xf]
      %v1896 = vld [vmem:[%s1886 + $0x34] sm:$0xf]
      %v1897 = vld [vmem:[%s1886 + $0x3c] sm:$0xf]
      %v1898 = vld [vmem:[%s1886 + $0x40] sm:$0xf]
      %v1899 = vld [vmem:[%s1886 + $0x48] sm:$0xf]
      %v1900 = vld [vmem:[%s1886 + $0x4c] sm:$0xf]
      %v1901 = vld [vmem:[%s1886 + $0x54] sm:$0xf]
      %v1902 = vld [vmem:[%s1886 + $0x58] sm:$0xf]
      %v1903 = vld [vmem:[%s1886 + $0x60] sm:$0xf]
      %v1904 = vld [vmem:[%s1886 + $0x64] sm:$0xf]
      %v1905 = vld [vmem:[%s1886 + $0x6c] sm:$0xf]
      %v1906 = vld [vmem:[%s1886 + $0x70] sm:$0xf]
      %v1907 = vld [vmem:[%s1886 + $0x78] sm:$0xf]
      %v1908 = vld [vmem:[%s1886 + $0x7c] sm:$0xf]
      %v1909 = vld [vmem:[%s1886 + $0x84] sm:$0xf]
      %v1910 = vld [vmem:[%s1886 + $0x88] sm:$0xf]
      %v1911 = vld [vmem:[%s1886 + $0x90] sm:$0xf]
      %v1912 = vld [vmem:[%s1886 + $0x94] sm:$0xf]
      %v1913 = vld [vmem:[%s1886 + $0x9c] sm:$0xf]
      %v1914 = vld [vmem:[%s1886 + $0xa0] sm:$0xf]
      %v1915 = vld [vmem:[%s1886 + $0xa8] sm:$0xf]
      %v1916 = vld [vmem:[%s1886 + $0xac] sm:$0xf]
      %v1917 = vld [vmem:[%s1886 + $0xb4] sm:$0xf]
      %v1918 = vld [vmem:[%s1886 + $0xb8] sm:$0xf]
      %1919 = vst [vmem:[#allocation2 + $0x18] sm:$0xf] %v1887
      %1920 = vst [vmem:[#allocation2 + $0x3c] sm:$0xf] %v1888
      %1921 = vst [vmem:[#allocation2 + $0x60] sm:$0xf] %v1889
      %1922 = vst [vmem:[#allocation2 + $0x84] sm:$0xf] %v1890
      %1923 = vst [vmem:[#allocation2 + $0xa8] sm:$0xf] %v1891
      %1924 = vst [vmem:[#allocation2 + $0xcc] sm:$0xf] %v1892
      %1925 = vst [vmem:[#allocation2 + $0xf0] sm:$0xf] %v1893
      %1926 = vst [vmem:[#allocation2 + $0x114] sm:$0xf] %v1894
      %1927 = vst [vmem:[#allocation2 + $0x138] sm:$0xf] %v1895
      %1928 = vst [vmem:[#allocation2 + $0x15c] sm:$0xf] %v1896
      %1929 = vst [vmem:[#allocation2 + $0x180] sm:$0xf] %v1897
      %1930 = vst [vmem:[#allocation2 + $0x1a4] sm:$0xf] %v1898
      %1931 = vst [vmem:[#allocation2 + $0x1c8] sm:$0xf] %v1899
      %1932 = vst [vmem:[#allocation2 + $0x1ec] sm:$0xf] %v1900
      %1933 = vst [vmem:[#allocation2 + $0x210] sm:$0xf] %v1901
      %1934 = vst [vmem:[#allocation2 + $0x234] sm:$0xf] %v1902
      %1935 = vst [vmem:[#allocation2 + $0x258] sm:$0xf] %v1903
      %1936 = vst [vmem:[#allocation2 + $0x27c] sm:$0xf] %v1904
      %1937 = vst [vmem:[#allocation2 + $0x2a0] sm:$0xf] %v1905
      %1938 = vst [vmem:[#allocation2 + $0x2c4] sm:$0xf] %v1906
      %1939 = vst [vmem:[#allocation2 + $0x2e8] sm:$0xf] %v1907
      %1940 = vst [vmem:[#allocation2 + $0x30c] sm:$0xf] %v1908
      %1941 = vst [vmem:[#allocation2 + $0x330] sm:$0xf] %v1909
      %1942 = vst [vmem:[#allocation2 + $0x354] sm:$0xf] %v1910
      %1943 = vst [vmem:[#allocation2 + $0x378] sm:$0xf] %v1911
      %1944 = vst [vmem:[#allocation2 + $0x39c] sm:$0xf] %v1912
      %1945 = vst [vmem:[#allocation2 + $0x3c0] sm:$0xf] %v1913
      %1946 = vst [vmem:[#allocation2 + $0x3e4] sm:$0xf] %v1914
      %1947 = vst [vmem:[#allocation2 + $0x408] sm:$0xf] %v1915
      %1948 = vst [vmem:[#allocation2 + $0x42c] sm:$0xf] %v1916
      %1949 = vst [vmem:[#allocation2 + $0x450] sm:$0xf] %v1917
      %1950 = vst [vmem:[#allocation2 + $0x474] sm:$0xf] %v1918
      %v1951 = vld [vmem:[%s1886] sm:$0xf]
      %v1952 = vld [vmem:[%s1886 + $0x4] sm:$0xf]
      %v1953 = vld [vmem:[%s1886 + $0x8] sm:$0x1]
      %v1954 = vld [vmem:[%s1886 + $0xc] sm:$0xf]
      %v1955 = vld [vmem:[%s1886 + $0x10] sm:$0xf]
      %v1956 = vld [vmem:[%s1886 + $0x14] sm:$0x1]
      %v1957 = vld [vmem:[%s1886 + $0x18] sm:$0xf]
      %v1958 = vld [vmem:[%s1886 + $0x1c] sm:$0xf]
      %v1959 = vld [vmem:[%s1886 + $0x20] sm:$0x1]
      %v1960 = vld [vmem:[%s1886 + $0x24] sm:$0xf]
      %v1961 = vld [vmem:[%s1886 + $0x28] sm:$0xf]
      %v1962 = vld [vmem:[%s1886 + $0x2c] sm:$0x1]
      %v1963 = vld [vmem:[%s1886 + $0x30] sm:$0xf]
      %v1964 = vld [vmem:[%s1886 + $0x34] sm:$0xf]
      %v1965 = vld [vmem:[%s1886 + $0x38] sm:$0x1]
      %v1966 = vld [vmem:[%s1886 + $0x3c] sm:$0xf]
      %v1967 = vld [vmem:[%s1886 + $0x40] sm:$0xf]
      %v1968 = vld [vmem:[%s1886 + $0x44] sm:$0x1]
      %v1969 = vld [vmem:[%s1886 + $0x48] sm:$0xf]
      %v1970 = vld [vmem:[%s1886 + $0x4c] sm:$0xf]
      %v1971 = vld [vmem:[%s1886 + $0x50] sm:$0x1]
      %v1972 = vld [vmem:[%s1886 + $0x54] sm:$0xf]
      %v1973 = vld [vmem:[%s1886 + $0x58] sm:$0xf]
      %v1974 = vld [vmem:[%s1886 + $0x5c] sm:$0x1]
      %v1975 = vld [vmem:[%s1886 + $0x60] sm:$0xf]
      %v1976 = vld [vmem:[%s1886 + $0x64] sm:$0xf]
      %v1977 = vld [vmem:[%s1886 + $0x68] sm:$0x1]
      %v1978 = vld [vmem:[%s1886 + $0x6c] sm:$0xf]
      %v1979 = vld [vmem:[%s1886 + $0x70] sm:$0xf]
      %v1980 = vld [vmem:[%s1886 + $0x74] sm:$0x1]
      %v1981 = vld [vmem:[%s1886 + $0x78] sm:$0xf]
      %v1982 = vld [vmem:[%s1886 + $0x7c] sm:$0xf]
      %v1983 = vld [vmem:[%s1886 + $0x80] sm:$0x1]
      %v1984 = vld [vmem:[%s1886 + $0x84] sm:$0xf]
      %v1985 = vld [vmem:[%s1886 + $0x88] sm:$0xf]
      %v1986 = vld [vmem:[%s1886 + $0x8c] sm:$0x1]
      %v1987 = vld [vmem:[%s1886 + $0x90] sm:$0xf]
      %v1988 = vld [vmem:[%s1886 + $0x94] sm:$0xf]
      %v1989 = vld [vmem:[%s1886 + $0x98] sm:$0x1]
      %v1990 = vld [vmem:[%s1886 + $0x9c] sm:$0xf]
      %v1991 = vld [vmem:[%s1886 + $0xa0] sm:$0xf]
      %v1992 = vld [vmem:[%s1886 + $0xa4] sm:$0x1]
      %v1993 = vld [vmem:[%s1886 + $0xa8] sm:$0xf]
      %v1994 = vld [vmem:[%s1886 + $0xac] sm:$0xf]
      %v1995 = vld [vmem:[%s1886 + $0xb0] sm:$0x1]
      %v1996 = vld [vmem:[%s1886 + $0xb4] sm:$0xf]
      %v1997 = vld [vmem:[%s1886 + $0xb8] sm:$0xf]
      %v1998 = vld [vmem:[%s1886 + $0xbc] sm:$0x1]
      %v2000 = vshrl.u32 %v1951, 16
      %v2002 = vrot.slane %v2000, 4
      %v2003 = vshll.u32 %v1951, 16
      %v2005 = vrot.slane %v2003, 5
      %v2006 = vor.u32 %v2002, %v2005
      %v2007 = vrot.slane %v2006, 4
      %v2009 = vshll.u32 %v1952, 16
      %v2011 = vrot.slane %v2009, 5
      %v2012 = vsel %vm329, %v2007, %v2011
      %v2013 = vshrl.u32 %v1952, 16
      %v2015 = vrot.slane %v2013, 4
      %v2016 = vor.u32 %v2015, %v2011
      %v2017 = vrot.slane %v2016, 4
      %v2019 = vshll.u32 %v1953, 16
      %v2021 = vrot.slane %v2019, 5
      %v2022 = vsel %vm329, %v2017, %v2021
      %v2024 = vshrl.u32 %v1954, 16
      %v2026 = vrot.slane %v2024, 4
      %v2027 = vshll.u32 %v1954, 16
      %v2029 = vrot.slane %v2027, 5
      %v2030 = vor.u32 %v2026, %v2029
      %v2031 = vrot.slane %v2030, 4
      %v2033 = vshll.u32 %v1955, 16
      %v2035 = vrot.slane %v2033, 5
      %v2036 = vsel %vm329, %v2031, %v2035
      %v2037 = vshrl.u32 %v1955, 16
      %v2039 = vrot.slane %v2037, 4
      %v2040 = vor.u32 %v2039, %v2035
      %v2041 = vrot.slane %v2040, 4
      %v2043 = vshll.u32 %v1956, 16
      %v2045 = vrot.slane %v2043, 5
      %v2046 = vsel %vm329, %v2041, %v2045
      %v2048 = vshrl.u32 %v1957, 16
      %v2050 = vrot.slane %v2048, 4
      %v2051 = vshll.u32 %v1957, 16
      %v2053 = vrot.slane %v2051, 5
      %v2054 = vor.u32 %v2050, %v2053
      %v2055 = vrot.slane %v2054, 4
      %v2057 = vshll.u32 %v1958, 16
      %v2059 = vrot.slane %v2057, 5
      %v2060 = vsel %vm329, %v2055, %v2059
      %v2061 = vshrl.u32 %v1958, 16
      %v2063 = vrot.slane %v2061, 4
      %v2064 = vor.u32 %v2063, %v2059
      %v2065 = vrot.slane %v2064, 4
      %v2067 = vshll.u32 %v1959, 16
      %v2069 = vrot.slane %v2067, 5
      %v2070 = vsel %vm329, %v2065, %v2069
      %v2072 = vshrl.u32 %v1960, 16
      %v2074 = vrot.slane %v2072, 4
      %v2075 = vshll.u32 %v1960, 16
      %v2077 = vrot.slane %v2075, 5
      %v2078 = vor.u32 %v2074, %v2077
      %v2079 = vrot.slane %v2078, 4
      %v2081 = vshll.u32 %v1961, 16
      %v2083 = vrot.slane %v2081, 5
      %v2084 = vsel %vm329, %v2079, %v2083
      %v2085 = vshrl.u32 %v1961, 16
      %v2087 = vrot.slane %v2085, 4
      %v2088 = vor.u32 %v2087, %v2083
      %v2089 = vrot.slane %v2088, 4
      %v2091 = vshll.u32 %v1962, 16
      %v2093 = vrot.slane %v2091, 5
      %v2094 = vsel %vm329, %v2089, %v2093
      %v2096 = vshrl.u32 %v1963, 16
      %v2098 = vrot.slane %v2096, 4
      %v2099 = vshll.u32 %v1963, 16
      %v2101 = vrot.slane %v2099, 5
      %v2102 = vor.u32 %v2098, %v2101
      %v2103 = vrot.slane %v2102, 4
      %v2105 = vshll.u32 %v1964, 16
      %v2107 = vrot.slane %v2105, 5
      %v2108 = vsel %vm329, %v2103, %v2107
      %v2109 = vshrl.u32 %v1964, 16
      %v2111 = vrot.slane %v2109, 4
      %v2112 = vor.u32 %v2111, %v2107
      %v2113 = vrot.slane %v2112, 4
      %v2115 = vshll.u32 %v1965, 16
      %v2117 = vrot.slane %v2115, 5
      %v2118 = vsel %vm329, %v2113, %v2117
      %v2120 = vshrl.u32 %v1966, 16
      %v2122 = vrot.slane %v2120, 4
      %v2123 = vshll.u32 %v1966, 16
      %v2125 = vrot.slane %v2123, 5
      %v2126 = vor.u32 %v2122, %v2125
      %v2127 = vrot.slane %v2126, 4
      %v2129 = vshll.u32 %v1967, 16
      %v2131 = vrot.slane %v2129, 5
      %v2132 = vsel %vm329, %v2127, %v2131
      %v2133 = vshrl.u32 %v1967, 16
      %v2135 = vrot.slane %v2133, 4
      %v2136 = vor.u32 %v2135, %v2131
      %v2137 = vrot.slane %v2136, 4
      %v2139 = vshll.u32 %v1968, 16
      %v2141 = vrot.slane %v2139, 5
      %v2142 = vsel %vm329, %v2137, %v2141
      %v2144 = vshrl.u32 %v1969, 16
      %v2146 = vrot.slane %v2144, 4
      %v2147 = vshll.u32 %v1969, 16
      %v2149 = vrot.slane %v2147, 5
      %v2150 = vor.u32 %v2146, %v2149
      %v2151 = vrot.slane %v2150, 4
      %v2153 = vshll.u32 %v1970, 16
      %v2155 = vrot.slane %v2153, 5
      %v2156 = vsel %vm329, %v2151, %v2155
      %v2157 = vshrl.u32 %v1970, 16
      %v2159 = vrot.slane %v2157, 4
      %v2160 = vor.u32 %v2159, %v2155
      %v2161 = vrot.slane %v2160, 4
      %v2163 = vshll.u32 %v1971, 16
      %v2165 = vrot.slane %v2163, 5
      %v2166 = vsel %vm329, %v2161, %v2165
      %v2168 = vshrl.u32 %v1972, 16
      %v2170 = vrot.slane %v2168, 4
      %v2171 = vshll.u32 %v1972, 16
      %v2173 = vrot.slane %v2171, 5
      %v2174 = vor.u32 %v2170, %v2173
      %v2175 = vrot.slane %v2174, 4
      %v2177 = vshll.u32 %v1973, 16
      %v2179 = vrot.slane %v2177, 5
      %v2180 = vsel %vm329, %v2175, %v2179
      %v2181 = vshrl.u32 %v1973, 16
      %v2183 = vrot.slane %v2181, 4
      %v2184 = vor.u32 %v2183, %v2179
      %v2185 = vrot.slane %v2184, 4
      %v2187 = vshll.u32 %v1974, 16
      %v2189 = vrot.slane %v2187, 5
      %v2190 = vsel %vm329, %v2185, %v2189
      %v2192 = vshrl.u32 %v1975, 16
      %v2194 = vrot.slane %v2192, 4
      %v2195 = vshll.u32 %v1975, 16
      %v2197 = vrot.slane %v2195, 5
      %v2198 = vor.u32 %v2194, %v2197
      %v2199 = vrot.slane %v2198, 4
      %v2201 = vshll.u32 %v1976, 16
      %v2203 = vrot.slane %v2201, 5
      %v2204 = vsel %vm329, %v2199, %v2203
      %v2205 = vshrl.u32 %v1976, 16
      %v2207 = vrot.slane %v2205, 4
      %v2208 = vor.u32 %v2207, %v2203
      %v2209 = vrot.slane %v2208, 4
      %v2211 = vshll.u32 %v1977, 16
      %v2213 = vrot.slane %v2211, 5
      %v2214 = vsel %vm329, %v2209, %v2213
      %v2216 = vshrl.u32 %v1978, 16
      %v2218 = vrot.slane %v2216, 4
      %v2219 = vshll.u32 %v1978, 16
      %v2221 = vrot.slane %v2219, 5
      %v2222 = vor.u32 %v2218, %v2221
      %v2223 = vrot.slane %v2222, 4
      %v2225 = vshll.u32 %v1979, 16
      %v2227 = vrot.slane %v2225, 5
      %v2228 = vsel %vm329, %v2223, %v2227
      %v2229 = vshrl.u32 %v1979, 16
      %v2231 = vrot.slane %v2229, 4
      %v2232 = vor.u32 %v2231, %v2227
      %v2233 = vrot.slane %v2232, 4
      %v2235 = vshll.u32 %v1980, 16
      %v2237 = vrot.slane %v2235, 5
      %v2238 = vsel %vm329, %v2233, %v2237
      %v2240 = vshrl.u32 %v1981, 16
      %v2242 = vrot.slane %v2240, 4
      %v2243 = vshll.u32 %v1981, 16
      %v2245 = vrot.slane %v2243, 5
      %v2246 = vor.u32 %v2242, %v2245
      %v2247 = vrot.slane %v2246, 4
      %v2249 = vshll.u32 %v1982, 16
      %v2251 = vrot.slane %v2249, 5
      %v2252 = vsel %vm329, %v2247, %v2251
      %v2253 = vshrl.u32 %v1982, 16
      %v2255 = vrot.slane %v2253, 4
      %v2256 = vor.u32 %v2255, %v2251
      %v2257 = vrot.slane %v2256, 4
      %v2259 = vshll.u32 %v1983, 16
      %v2261 = vrot.slane %v2259, 5
      %v2262 = vsel %vm329, %v2257, %v2261
      %v2264 = vshrl.u32 %v1984, 16
      %v2266 = vrot.slane %v2264, 4
      %v2267 = vshll.u32 %v1984, 16
      %v2269 = vrot.slane %v2267, 5
      %v2270 = vor.u32 %v2266, %v2269
      %v2271 = vrot.slane %v2270, 4
      %v2273 = vshll.u32 %v1985, 16
      %v2275 = vrot.slane %v2273, 5
      %v2276 = vsel %vm329, %v2271, %v2275
      %v2277 = vshrl.u32 %v1985, 16
      %v2279 = vrot.slane %v2277, 4
      %v2280 = vor.u32 %v2279, %v2275
      %v2281 = vrot.slane %v2280, 4
      %v2283 = vshll.u32 %v1986, 16
      %v2285 = vrot.slane %v2283, 5
      %v2286 = vsel %vm329, %v2281, %v2285
      %v2288 = vshrl.u32 %v1987, 16
      %v2290 = vrot.slane %v2288, 4
      %v2291 = vshll.u32 %v1987, 16
      %v2293 = vrot.slane %v2291, 5
      %v2294 = vor.u32 %v2290, %v2293
      %v2295 = vrot.slane %v2294, 4
      %v2297 = vshll.u32 %v1988, 16
      %v2299 = vrot.slane %v2297, 5
      %v2300 = vsel %vm329, %v2295, %v2299
      %v2301 = vshrl.u32 %v1988, 16
      %v2303 = vrot.slane %v2301, 4
      %v2304 = vor.u32 %v2303, %v2299
      %v2305 = vrot.slane %v2304, 4
      %v2307 = vshll.u32 %v1989, 16
      %v2309 = vrot.slane %v2307, 5
      %v2310 = vsel %vm329, %v2305, %v2309
      %v2312 = vshrl.u32 %v1990, 16
      %v2314 = vrot.slane %v2312, 4
      %v2315 = vshll.u32 %v1990, 16
      %v2317 = vrot.slane %v2315, 5
      %v2318 = vor.u32 %v2314, %v2317
      %v2319 = vrot.slane %v2318, 4
      %v2321 = vshll.u32 %v1991, 16
      %v2323 = vrot.slane %v2321, 5
      %v2324 = vsel %vm329, %v2319, %v2323
      %v2325 = vshrl.u32 %v1991, 16
      %v2327 = vrot.slane %v2325, 4
      %v2328 = vor.u32 %v2327, %v2323
      %v2329 = vrot.slane %v2328, 4
      %v2331 = vshll.u32 %v1992, 16
      %v2333 = vrot.slane %v2331, 5
      %v2334 = vsel %vm329, %v2329, %v2333
      %v2336 = vshrl.u32 %v1993, 16
      %v2338 = vrot.slane %v2336, 4
      %v2339 = vshll.u32 %v1993, 16
      %v2341 = vrot.slane %v2339, 5
      %v2342 = vor.u32 %v2338, %v2341
      %v2343 = vrot.slane %v2342, 4
      %v2345 = vshll.u32 %v1994, 16
      %v2347 = vrot.slane %v2345, 5
      %v2348 = vsel %vm329, %v2343, %v2347
      %v2349 = vshrl.u32 %v1994, 16
      %v2351 = vrot.slane %v2349, 4
      %v2352 = vor.u32 %v2351, %v2347
      %v2353 = vrot.slane %v2352, 4
      %v2355 = vshll.u32 %v1995, 16
      %v2357 = vrot.slane %v2355, 5
      %v2358 = vsel %vm329, %v2353, %v2357
      %v2360 = vshrl.u32 %v1996, 16
      %v2362 = vrot.slane %v2360, 4
      %v2363 = vshll.u32 %v1996, 16
      %v2365 = vrot.slane %v2363, 5
      %v2366 = vor.u32 %v2362, %v2365
      %v2367 = vrot.slane %v2366, 4
      %v2369 = vshll.u32 %v1997, 16
      %v2371 = vrot.slane %v2369, 5
      %v2372 = vsel %vm329, %v2367, %v2371
      %v2373 = vshrl.u32 %v1997, 16
      %v2375 = vrot.slane %v2373, 4
      %v2376 = vor.u32 %v2375, %v2371
      %v2377 = vrot.slane %v2376, 4
      %v2379 = vshll.u32 %v1998, 16
      %v2381 = vrot.slane %v2379, 5
      %v2382 = vsel %vm329, %v2377, %v2381
      %2415 = vst [vmem:[#allocation2 + $0x1c] sm:$0xf] %v2012
      %2416 = vst [vmem:[#allocation2 + $0x40] sm:$0xf] %v2022
      %2417 = vst [vmem:[#allocation2 + $0x64] sm:$0xf] %v2036
      %2418 = vst [vmem:[#allocation2 + $0x88] sm:$0xf] %v2046
      %2419 = vst [vmem:[#allocation2 + $0xac] sm:$0xf] %v2060
      %2420 = vst [vmem:[#allocation2 + $0xd0] sm:$0xf] %v2070
      %2421 = vst [vmem:[#allocation2 + $0xf4] sm:$0xf] %v2084
      %2422 = vst [vmem:[#allocation2 + $0x118] sm:$0xf] %v2094
      %2423 = vst [vmem:[#allocation2 + $0x13c] sm:$0xf] %v2108
      %2424 = vst [vmem:[#allocation2 + $0x160] sm:$0xf] %v2118
      %2425 = vst [vmem:[#allocation2 + $0x184] sm:$0xf] %v2132
      %2426 = vst [vmem:[#allocation2 + $0x1a8] sm:$0xf] %v2142
      %2427 = vst [vmem:[#allocation2 + $0x1cc] sm:$0xf] %v2156
      %2428 = vst [vmem:[#allocation2 + $0x1f0] sm:$0xf] %v2166
      %2429 = vst [vmem:[#allocation2 + $0x214] sm:$0xf] %v2180
      %2430 = vst [vmem:[#allocation2 + $0x238] sm:$0xf] %v2190
      %2431 = vst [vmem:[#allocation2 + $0x25c] sm:$0xf] %v2204
      %2432 = vst [vmem:[#allocation2 + $0x280] sm:$0xf] %v2214
      %2433 = vst [vmem:[#allocation2 + $0x2a4] sm:$0xf] %v2228
      %2434 = vst [vmem:[#allocation2 + $0x2c8] sm:$0xf] %v2238
      %2435 = vst [vmem:[#allocation2 + $0x2ec] sm:$0xf] %v2252
      %2436 = vst [vmem:[#allocation2 + $0x310] sm:$0xf] %v2262
      %2437 = vst [vmem:[#allocation2 + $0x334] sm:$0xf] %v2276
      %2438 = vst [vmem:[#allocation2 + $0x358] sm:$0xf] %v2286
      %2439 = vst [vmem:[#allocation2 + $0x37c] sm:$0xf] %v2300
      %2440 = vst [vmem:[#allocation2 + $0x3a0] sm:$0xf] %v2310
      %2441 = vst [vmem:[#allocation2 + $0x3c4] sm:$0xf] %v2324
      %2442 = vst [vmem:[#allocation2 + $0x3e8] sm:$0xf] %v2334
      %2443 = vst [vmem:[#allocation2 + $0x40c] sm:$0xf] %v2348
      %2444 = vst [vmem:[#allocation2 + $0x430] sm:$0xf] %v2358
      %2445 = vst [vmem:[#allocation2 + $0x454] sm:$0xf] %v2372
      %2446 = vst [vmem:[#allocation2 + $0x478] sm:$0xf] %v2382
      %v2447 = vld [vmem:[%s1886] sm:$0xe]
      %v2448 = vld [vmem:[%s1886 + $0x4] sm:$0xf]
      %v2449 = vld [vmem:[%s1886 + $0x8] sm:$0x1]
      %v2450 = vld [vmem:[%s1886 + $0xc] sm:$0xe]
      %v2451 = vld [vmem:[%s1886 + $0x10] sm:$0xf]
      %v2452 = vld [vmem:[%s1886 + $0x14] sm:$0x1]
      %v2453 = vld [vmem:[%s1886 + $0x18] sm:$0xe]
      %v2454 = vld [vmem:[%s1886 + $0x1c] sm:$0xf]
      %v2455 = vld [vmem:[%s1886 + $0x20] sm:$0x1]
      %v2456 = vld [vmem:[%s1886 + $0x24] sm:$0xe]
      %v2457 = vld [vmem:[%s1886 + $0x28] sm:$0xf]
      %v2458 = vld [vmem:[%s1886 + $0x2c] sm:$0x1]
      %v2459 = vld [vmem:[%s1886 + $0x30] sm:$0xe]
      %v2460 = vld [vmem:[%s1886 + $0x34] sm:$0xf]
      %v2461 = vld [vmem:[%s1886 + $0x38] sm:$0x1]
      %v2462 = vld [vmem:[%s1886 + $0x3c] sm:$0xe]
      %v2463 = vld [vmem:[%s1886 + $0x40] sm:$0xf]
      %v2464 = vld [vmem:[%s1886 + $0x44] sm:$0x1]
      %v2465 = vld [vmem:[%s1886 + $0x48] sm:$0xe]
      %v2466 = vld [vmem:[%s1886 + $0x4c] sm:$0xf]
      %v2467 = vld [vmem:[%s1886 + $0x50] sm:$0x1]
      %v2468 = vld [vmem:[%s1886 + $0x54] sm:$0xe]
      %v2469 = vld [vmem:[%s1886 + $0x58] sm:$0xf]
      %v2470 = vld [vmem:[%s1886 + $0x5c] sm:$0x1]
      %v2471 = vld [vmem:[%s1886 + $0x60] sm:$0xe]
      %v2472 = vld [vmem:[%s1886 + $0x64] sm:$0xf]
      %v2473 = vld [vmem:[%s1886 + $0x68] sm:$0x1]
      %v2474 = vld [vmem:[%s1886 + $0x6c] sm:$0xe]
      %v2475 = vld [vmem:[%s1886 + $0x70] sm:$0xf]
      %v2476 = vld [vmem:[%s1886 + $0x74] sm:$0x1]
      %v2477 = vld [vmem:[%s1886 + $0x78] sm:$0xe]
      %v2478 = vld [vmem:[%s1886 + $0x7c] sm:$0xf]
      %v2479 = vld [vmem:[%s1886 + $0x80] sm:$0x1]
      %v2480 = vld [vmem:[%s1886 + $0x84] sm:$0xe]
      %v2481 = vld [vmem:[%s1886 + $0x88] sm:$0xf]
      %v2482 = vld [vmem:[%s1886 + $0x8c] sm:$0x1]
      %v2483 = vld [vmem:[%s1886 + $0x90] sm:$0xe]
      %v2484 = vld [vmem:[%s1886 + $0x94] sm:$0xf]
      %v2485 = vld [vmem:[%s1886 + $0x98] sm:$0x1]
      %v2486 = vld [vmem:[%s1886 + $0x9c] sm:$0xe]
      %v2487 = vld [vmem:[%s1886 + $0xa0] sm:$0xf]
      %v2488 = vld [vmem:[%s1886 + $0xa4] sm:$0x1]
      %v2489 = vld [vmem:[%s1886 + $0xa8] sm:$0xe]
      %v2490 = vld [vmem:[%s1886 + $0xac] sm:$0xf]
      %v2491 = vld [vmem:[%s1886 + $0xb0] sm:$0x1]
      %v2492 = vld [vmem:[%s1886 + $0xb4] sm:$0xe]
      %v2493 = vld [vmem:[%s1886 + $0xb8] sm:$0xf]
      %v2494 = vld [vmem:[%s1886 + $0xbc] sm:$0x1]
      %v2543 = vrot.slane %v2447, 5
      %v2544 = vrot.slane %v2543, 4
      %v2545 = vrot.slane %v2448, 5
      %v2546 = vsel %vm876, %v2544, %v2545
      %v2547 = vrot.slane %v2545, 4
      %v2548 = vrot.slane %v2449, 5
      %v2549 = vsel %vm876, %v2547, %v2548
      %v2550 = vrot.slane %v2450, 5
      %v2551 = vrot.slane %v2550, 4
      %v2552 = vrot.slane %v2451, 5
      %v2553 = vsel %vm876, %v2551, %v2552
      %v2554 = vrot.slane %v2552, 4
      %v2555 = vrot.slane %v2452, 5
      %v2556 = vsel %vm876, %v2554, %v2555
      %v2557 = vrot.slane %v2453, 5
      %v2558 = vrot.slane %v2557, 4
      %v2559 = vrot.slane %v2454, 5
      %v2560 = vsel %vm876, %v2558, %v2559
      %v2561 = vrot.slane %v2559, 4
      %v2562 = vrot.slane %v2455, 5
      %v2563 = vsel %vm876, %v2561, %v2562
      %v2564 = vrot.slane %v2456, 5
      %v2565 = vrot.slane %v2564, 4
      %v2566 = vrot.slane %v2457, 5
      %v2567 = vsel %vm876, %v2565, %v2566
      %v2568 = vrot.slane %v2566, 4
      %v2569 = vrot.slane %v2458, 5
      %v2570 = vsel %vm876, %v2568, %v2569
      %v2571 = vrot.slane %v2459, 5
      %v2572 = vrot.slane %v2571, 4
      %v2573 = vrot.slane %v2460, 5
      %v2574 = vsel %vm876, %v2572, %v2573
      %v2575 = vrot.slane %v2573, 4
      %v2576 = vrot.slane %v2461, 5
      %v2577 = vsel %vm876, %v2575, %v2576
      %v2578 = vrot.slane %v2462, 5
      %v2579 = vrot.slane %v2578, 4
      %v2580 = vrot.slane %v2463, 5
      %v2581 = vsel %vm876, %v2579, %v2580
      %v2582 = vrot.slane %v2580, 4
      %v2583 = vrot.slane %v2464, 5
      %v2584 = vsel %vm876, %v2582, %v2583
      %v2585 = vrot.slane %v2465, 5
      %v2586 = vrot.slane %v2585, 4
      %v2587 = vrot.slane %v2466, 5
      %v2588 = vsel %vm876, %v2586, %v2587
      %v2589 = vrot.slane %v2587, 4
      %v2590 = vrot.slane %v2467, 5
      %v2591 = vsel %vm876, %v2589, %v2590
      %v2592 = vrot.slane %v2468, 5
      %v2593 = vrot.slane %v2592, 4
      %v2594 = vrot.slane %v2469, 5
      %v2595 = vsel %vm876, %v2593, %v2594
      %v2596 = vrot.slane %v2594, 4
      %v2597 = vrot.slane %v2470, 5
      %v2598 = vsel %vm876, %v2596, %v2597
      %v2599 = vrot.slane %v2471, 5
      %v2600 = vrot.slane %v2599, 4
      %v2601 = vrot.slane %v2472, 5
      %v2602 = vsel %vm876, %v2600, %v2601
      %v2603 = vrot.slane %v2601, 4
      %v2604 = vrot.slane %v2473, 5
      %v2605 = vsel %vm876, %v2603, %v2604
      %v2606 = vrot.slane %v2474, 5
      %v2607 = vrot.slane %v2606, 4
      %v2608 = vrot.slane %v2475, 5
      %v2609 = vsel %vm876, %v2607, %v2608
      %v2610 = vrot.slane %v2608, 4
      %v2611 = vrot.slane %v2476, 5
      %v2612 = vsel %vm876, %v2610, %v2611
      %v2613 = vrot.slane %v2477, 5
      %v2614 = vrot.slane %v2613, 4
      %v2615 = vrot.slane %v2478, 5
      %v2616 = vsel %vm876, %v2614, %v2615
      %v2617 = vrot.slane %v2615, 4
      %v2618 = vrot.slane %v2479, 5
      %v2619 = vsel %vm876, %v2617, %v2618
      %v2620 = vrot.slane %v2480, 5
      %v2621 = vrot.slane %v2620, 4
      %v2622 = vrot.slane %v2481, 5
      %v2623 = vsel %vm876, %v2621, %v2622
      %v2624 = vrot.slane %v2622, 4
      %v2625 = vrot.slane %v2482, 5
      %v2626 = vsel %vm876, %v2624, %v2625
      %v2627 = vrot.slane %v2483, 5
      %v2628 = vrot.slane %v2627, 4
      %v2629 = vrot.slane %v2484, 5
      %v2630 = vsel %vm876, %v2628, %v2629
      %v2631 = vrot.slane %v2629, 4
      %v2632 = vrot.slane %v2485, 5
      %v2633 = vsel %vm876, %v2631, %v2632
      %v2634 = vrot.slane %v2486, 5
      %v2635 = vrot.slane %v2634, 4
      %v2636 = vrot.slane %v2487, 5
      %v2637 = vsel %vm876, %v2635, %v2636
      %v2638 = vrot.slane %v2636, 4
      %v2639 = vrot.slane %v2488, 5
      %v2640 = vsel %vm876, %v2638, %v2639
      %v2641 = vrot.slane %v2489, 5
      %v2642 = vrot.slane %v2641, 4
      %v2643 = vrot.slane %v2490, 5
      %v2644 = vsel %vm876, %v2642, %v2643
      %v2645 = vrot.slane %v2643, 4
      %v2646 = vrot.slane %v2491, 5
      %v2647 = vsel %vm876, %v2645, %v2646
      %v2648 = vrot.slane %v2492, 5
      %v2649 = vrot.slane %v2648, 4
      %v2650 = vrot.slane %v2493, 5
      %v2651 = vsel %vm876, %v2649, %v2650
      %v2652 = vrot.slane %v2650, 4
      %v2653 = vrot.slane %v2494, 5
      %v2654 = vsel %vm876, %v2652, %v2653
      %2687 = vst [vmem:[#allocation2 + $0x20] sm:$0xf] %v2546
      %2688 = vst [vmem:[#allocation2 + $0x44] sm:$0xf] %v2549
      %2689 = vst [vmem:[#allocation2 + $0x68] sm:$0xf] %v2553
      %2690 = vst [vmem:[#allocation2 + $0x8c] sm:$0xf] %v2556
      %2691 = vst [vmem:[#allocation2 + $0xb0] sm:$0xf] %v2560
      %2692 = vst [vmem:[#allocation2 + $0xd4] sm:$0xf] %v2563
      %2693 = vst [vmem:[#allocation2 + $0xf8] sm:$0xf] %v2567
      %2694 = vst [vmem:[#allocation2 + $0x11c] sm:$0xf] %v2570
      %2695 = vst [vmem:[#allocation2 + $0x140] sm:$0xf] %v2574
      %2696 = vst [vmem:[#allocation2 + $0x164] sm:$0xf] %v2577
      %2697 = vst [vmem:[#allocation2 + $0x188] sm:$0xf] %v2581
      %2698 = vst [vmem:[#allocation2 + $0x1ac] sm:$0xf] %v2584
      %2699 = vst [vmem:[#allocation2 + $0x1d0] sm:$0xf] %v2588
      %2700 = vst [vmem:[#allocation2 + $0x1f4] sm:$0xf] %v2591
      %2701 = vst [vmem:[#allocation2 + $0x218] sm:$0xf] %v2595
      %2702 = vst [vmem:[#allocation2 + $0x23c] sm:$0xf] %v2598
      %2703 = vst [vmem:[#allocation2 + $0x260] sm:$0xf] %v2602
      %2704 = vst [vmem:[#allocation2 + $0x284] sm:$0xf] %v2605
      %2705 = vst [vmem:[#allocation2 + $0x2a8] sm:$0xf] %v2609
      %2706 = vst [vmem:[#allocation2 + $0x2cc] sm:$0xf] %v2612
      %2707 = vst [vmem:[#allocation2 + $0x2f0] sm:$0xf] %v2616
      %2708 = vst [vmem:[#allocation2 + $0x314] sm:$0xf] %v2619
      %2709 = vst [vmem:[#allocation2 + $0x338] sm:$0xf] %v2623
      %2710 = vst [vmem:[#allocation2 + $0x35c] sm:$0xf] %v2626
      %2711 = vst [vmem:[#allocation2 + $0x380] sm:$0xf] %v2630
      %2712 = vst [vmem:[#allocation2 + $0x3a4] sm:$0xf] %v2633
      %2713 = vst [vmem:[#allocation2 + $0x3c8] sm:$0xf] %v2637
      %2714 = vst [vmem:[#allocation2 + $0x3ec] sm:$0xf] %v2640
      %2715 = vst [vmem:[#allocation2 + $0x410] sm:$0xf] %v2644
      %2716 = vst [vmem:[#allocation2 + $0x434] sm:$0xf] %v2647
      %2717 = vst [vmem:[#allocation2 + $0x458] sm:$0xf] %v2651
      %2718 = vst [vmem:[#allocation2 + $0x47c] sm:$0xf] %v2654
      %v2719 = vld [vmem:[#allocation2] sm:$0xff]
      %v2720 = vld [vmem:[#allocation2 + $0x8] sm:$0xff]
      %v2721 = vld [vmem:[#allocation2 + $0x10] sm:$0xff]
      %v2722 = vld [vmem:[#allocation2 + $0x18] sm:$0xff]
      %v2723 = vld [vmem:[#allocation2 + $0x20] sm:$0xf]
      %v2724 = vld [vmem:[#allocation2 + $0x24] sm:$0xff]
      %v2725 = vld [vmem:[#allocation2 + $0x2c] sm:$0xff]
      %v2726 = vld [vmem:[#allocation2 + $0x34] sm:$0xff]
      %v2727 = vld [vmem:[#allocation2 + $0x3c] sm:$0xff]
      %v2728 = vld [vmem:[#allocation2 + $0x44] sm:$0xf]
      %v2729 = vld [vmem:[#allocation2 + $0x48] sm:$0xff]
      %v2730 = vld [vmem:[#allocation2 + $0x50] sm:$0xff]
      %v2731 = vld [vmem:[#allocation2 + $0x58] sm:$0xff]
      %v2732 = vld [vmem:[#allocation2 + $0x60] sm:$0xff]
      %v2733 = vld [vmem:[#allocation2 + $0x68] sm:$0xf]
      %v2734 = vld [vmem:[#allocation2 + $0x6c] sm:$0xff]
      %v2735 = vld [vmem:[#allocation2 + $0x74] sm:$0xff]
      %v2736 = vld [vmem:[#allocation2 + $0x7c] sm:$0xff]
      %v2737 = vld [vmem:[#allocation2 + $0x84] sm:$0xff]
      %v2738 = vld [vmem:[#allocation2 + $0x8c] sm:$0xf]
      %v2739 = vld [vmem:[#allocation2 + $0x90] sm:$0xff]
      %v2740 = vld [vmem:[#allocation2 + $0x98] sm:$0xff]
      %v2741 = vld [vmem:[#allocation2 + $0xa0] sm:$0xff]
      %v2742 = vld [vmem:[#allocation2 + $0xa8] sm:$0xff]
      %v2743 = vld [vmem:[#allocation2 + $0xb0] sm:$0xf]
      %v2744 = vld [vmem:[#allocation2 + $0xb4] sm:$0xff]
      %v2745 = vld [vmem:[#allocation2 + $0xbc] sm:$0xff]
      %v2746 = vld [vmem:[#allocation2 + $0xc4] sm:$0xff]
      %v2747 = vld [vmem:[#allocation2 + $0xcc] sm:$0xff]
      %v2748 = vld [vmem:[#allocation2 + $0xd4] sm:$0xf]
      %v2749 = vld [vmem:[#allocation2 + $0xd8] sm:$0xff]
      %v2750 = vld [vmem:[#allocation2 + $0xe0] sm:$0xff]
      %v2751 = vld [vmem:[#allocation2 + $0xe8] sm:$0xff]
      %v2752 = vld [vmem:[#allocation2 + $0xf0] sm:$0xff]
      %v2753 = vld [vmem:[#allocation2 + $0xf8] sm:$0xf]
      %v2754 = vld [vmem:[#allocation2 + $0xfc] sm:$0xff]
      %v2755 = vld [vmem:[#allocation2 + $0x104] sm:$0xff]
      %v2756 = vld [vmem:[#allocation2 + $0x10c] sm:$0xff]
      %v2757 = vld [vmem:[#allocation2 + $0x114] sm:$0xff]
      %v2758 = vld [vmem:[#allocation2 + $0x11c] sm:$0xf]
      %v2759 = vld [vmem:[#allocation2 + $0x120] sm:$0xff]
      %v2760 = vld [vmem:[#allocation2 + $0x128] sm:$0xff]
      %v2761 = vld [vmem:[#allocation2 + $0x130] sm:$0xff]
      %v2762 = vld [vmem:[#allocation2 + $0x138] sm:$0xff]
      %v2763 = vld [vmem:[#allocation2 + $0x140] sm:$0xf]
      %v2764 = vld [vmem:[#allocation2 + $0x144] sm:$0xff]
      %v2765 = vld [vmem:[#allocation2 + $0x14c] sm:$0xff]
      %v2766 = vld [vmem:[#allocation2 + $0x154] sm:$0xff]
      %v2767 = vld [vmem:[#allocation2 + $0x15c] sm:$0xff]
      %v2768 = vld [vmem:[#allocation2 + $0x164] sm:$0xf]
      %v2769 = vld [vmem:[#allocation2 + $0x168] sm:$0xff]
      %v2770 = vld [vmem:[#allocation2 + $0x170] sm:$0xff]
      %v2771 = vld [vmem:[#allocation2 + $0x178] sm:$0xff]
      %v2772 = vld [vmem:[#allocation2 + $0x180] sm:$0xff]
      %v2773 = vld [vmem:[#allocation2 + $0x188] sm:$0xf]
      %v2774 = vld [vmem:[#allocation2 + $0x18c] sm:$0xff]
      %v2775 = vld [vmem:[#allocation2 + $0x194] sm:$0xff]
      %v2776 = vld [vmem:[#allocation2 + $0x19c] sm:$0xff]
      %v2777 = vld [vmem:[#allocation2 + $0x1a4] sm:$0xff]
      %v2778 = vld [vmem:[#allocation2 + $0x1ac] sm:$0xf]
      %v2779 = vld [vmem:[#allocation2 + $0x1b0] sm:$0xff]
      %v2780 = vld [vmem:[#allocation2 + $0x1b8] sm:$0xff]
      %v2781 = vld [vmem:[#allocation2 + $0x1c0] sm:$0xff]
      %v2782 = vld [vmem:[#allocation2 + $0x1c8] sm:$0xff]
      %v2783 = vld [vmem:[#allocation2 + $0x1d0] sm:$0xf]
      %v2784 = vld [vmem:[#allocation2 + $0x1d4] sm:$0xff]
      %v2785 = vld [vmem:[#allocation2 + $0x1dc] sm:$0xff]
      %v2786 = vld [vmem:[#allocation2 + $0x1e4] sm:$0xff]
      %v2787 = vld [vmem:[#allocation2 + $0x1ec] sm:$0xff]
      %v2788 = vld [vmem:[#allocation2 + $0x1f4] sm:$0xf]
      %v2789 = vld [vmem:[#allocation2 + $0x1f8] sm:$0xff]
      %v2790 = vld [vmem:[#allocation2 + $0x200] sm:$0xff]
      %v2791 = vld [vmem:[#allocation2 + $0x208] sm:$0xff]
      %v2792 = vld [vmem:[#allocation2 + $0x210] sm:$0xff]
      %v2793 = vld [vmem:[#allocation2 + $0x218] sm:$0xf]
      %v2794 = vld [vmem:[#allocation2 + $0x21c] sm:$0xff]
      %v2795 = vld [vmem:[#allocation2 + $0x224] sm:$0xff]
      %v2796 = vld [vmem:[#allocation2 + $0x22c] sm:$0xff]
      %v2797 = vld [vmem:[#allocation2 + $0x234] sm:$0xff]
      %v2798 = vld [vmem:[#allocation2 + $0x23c] sm:$0xf]
      %v2799 = vld [vmem:[#allocation2 + $0x240] sm:$0xff]
      %v2800 = vld [vmem:[#allocation2 + $0x248] sm:$0xff]
      %v2801 = vld [vmem:[#allocation2 + $0x250] sm:$0xff]
      %v2802 = vld [vmem:[#allocation2 + $0x258] sm:$0xff]
      %v2803 = vld [vmem:[#allocation2 + $0x260] sm:$0xf]
      %v2804 = vld [vmem:[#allocation2 + $0x264] sm:$0xff]
      %v2805 = vld [vmem:[#allocation2 + $0x26c] sm:$0xff]
      %v2806 = vld [vmem:[#allocation2 + $0x274] sm:$0xff]
      %v2807 = vld [vmem:[#allocation2 + $0x27c] sm:$0xff]
      %v2808 = vld [vmem:[#allocation2 + $0x284] sm:$0xf]
      %v2809 = vld [vmem:[#allocation2 + $0x288] sm:$0xff]
      %v2810 = vld [vmem:[#allocation2 + $0x290] sm:$0xff]
      %v2811 = vld [vmem:[#allocation2 + $0x298] sm:$0xff]
      %v2812 = vld [vmem:[#allocation2 + $0x2a0] sm:$0xff]
      %v2813 = vld [vmem:[#allocation2 + $0x2a8] sm:$0xf]
      %v2814 = vld [vmem:[#allocation2 + $0x2ac] sm:$0xff]
      %v2815 = vld [vmem:[#allocation2 + $0x2b4] sm:$0xff]
      %v2816 = vld [vmem:[#allocation2 + $0x2bc] sm:$0xff]
      %v2817 = vld [vmem:[#allocation2 + $0x2c4] sm:$0xff]
      %v2818 = vld [vmem:[#allocation2 + $0x2cc] sm:$0xf]
      %v2819 = vld [vmem:[#allocation2 + $0x2d0] sm:$0xff]
      %v2820 = vld [vmem:[#allocation2 + $0x2d8] sm:$0xff]
      %v2821 = vld [vmem:[#allocation2 + $0x2e0] sm:$0xff]
      %v2822 = vld [vmem:[#allocation2 + $0x2e8] sm:$0xff]
      %v2823 = vld [vmem:[#allocation2 + $0x2f0] sm:$0xf]
      %v2824 = vld [vmem:[#allocation2 + $0x2f4] sm:$0xff]
      %v2825 = vld [vmem:[#allocation2 + $0x2fc] sm:$0xff]
      %v2826 = vld [vmem:[#allocation2 + $0x304] sm:$0xff]
      %v2827 = vld [vmem:[#allocation2 + $0x30c] sm:$0xff]
      %v2828 = vld [vmem:[#allocation2 + $0x314] sm:$0xf]
      %v2829 = vld [vmem:[#allocation2 + $0x318] sm:$0xff]
      %v2830 = vld [vmem:[#allocation2 + $0x320] sm:$0xff]
      %v2831 = vld [vmem:[#allocation2 + $0x328] sm:$0xff]
      %v2832 = vld [vmem:[#allocation2 + $0x330] sm:$0xff]
      %v2833 = vld [vmem:[#allocation2 + $0x338] sm:$0xf]
      %v2834 = vld [vmem:[#allocation2 + $0x33c] sm:$0xff]
      %v2835 = vld [vmem:[#allocation2 + $0x344] sm:$0xff]
      %v2836 = vld [vmem:[#allocation2 + $0x34c] sm:$0xff]
      %v2837 = vld [vmem:[#allocation2 + $0x354] sm:$0xff]
      %v2838 = vld [vmem:[#allocation2 + $0x35c] sm:$0xf]
      %v2839 = vld [vmem:[#allocation2 + $0x360] sm:$0xff]
      %v2840 = vld [vmem:[#allocation2 + $0x368] sm:$0xff]
      %v2841 = vld [vmem:[#allocation2 + $0x370] sm:$0xff]
      %v2842 = vld [vmem:[#allocation2 + $0x378] sm:$0xff]
      %v2843 = vld [vmem:[#allocation2 + $0x380] sm:$0xf]
      %v2844 = vld [vmem:[#allocation2 + $0x384] sm:$0xff]
      %v2845 = vld [vmem:[#allocation2 + $0x38c] sm:$0xff]
      %v2846 = vld [vmem:[#allocation2 + $0x394] sm:$0xff]
      %v2847 = vld [vmem:[#allocation2 + $0x39c] sm:$0xff]
      %v2848 = vld [vmem:[#allocation2 + $0x3a4] sm:$0xf]
      %v2849 = vld [vmem:[#allocation2 + $0x3a8] sm:$0xff]
      %v2850 = vld [vmem:[#allocation2 + $0x3b0] sm:$0xff]
      %v2851 = vld [vmem:[#allocation2 + $0x3b8] sm:$0xff]
      %v2852 = vld [vmem:[#allocation2 + $0x3c0] sm:$0xff]
      %v2853 = vld [vmem:[#allocation2 + $0x3c8] sm:$0xf]
      %v2854 = vld [vmem:[#allocation2 + $0x3cc] sm:$0xff]
      %v2855 = vld [vmem:[#allocation2 + $0x3d4] sm:$0xff]
      %v2856 = vld [vmem:[#allocation2 + $0x3dc] sm:$0xff]
      %v2857 = vld [vmem:[#allocation2 + $0x3e4] sm:$0xff]
      %v2858 = vld [vmem:[#allocation2 + $0x3ec] sm:$0xf]
      %v2859 = vld [vmem:[#allocation2 + $0x3f0] sm:$0xff]
      %v2860 = vld [vmem:[#allocation2 + $0x3f8] sm:$0xff]
      %v2861 = vld [vmem:[#allocation2 + $0x400] sm:$0xff]
      %v2862 = vld [vmem:[#allocation2 + $0x408] sm:$0xff]
      %v2863 = vld [vmem:[#allocation2 + $0x410] sm:$0xf]
      %v2864 = vld [vmem:[#allocation2 + $0x414] sm:$0xff]
      %v2865 = vld [vmem:[#allocation2 + $0x41c] sm:$0xff]
      %v2866 = vld [vmem:[#allocation2 + $0x424] sm:$0xff]
      %v2867 = vld [vmem:[#allocation2 + $0x42c] sm:$0xff]
      %v2868 = vld [vmem:[#allocation2 + $0x434] sm:$0xf]
      %v2869 = vld [vmem:[#allocation2 + $0x438] sm:$0xff]
      %v2870 = vld [vmem:[#allocation2 + $0x440] sm:$0xff]
      %v2871 = vld [vmem:[#allocation2 + $0x448] sm:$0xff]
      %v2872 = vld [vmem:[#allocation2 + $0x450] sm:$0xff]
      %v2873 = vld [vmem:[#allocation2 + $0x458] sm:$0xf]
      %v2874 = vld [vmem:[#allocation2 + $0x45c] sm:$0xff]
      %v2875 = vld [vmem:[#allocation2 + $0x464] sm:$0xff]
      %v2876 = vld [vmem:[#allocation2 + $0x46c] sm:$0xff]
      %v2877 = vld [vmem:[#allocation2 + $0x474] sm:$0xff]
      %v2878 = vld [vmem:[#allocation2 + $0x47c] sm:$0xf]
      %v2879 = vld [vmem:[%s1] sm:$0xf]
      %v2880 = vld [vmem:[%s1 + $0x4] sm:$0xf]
      %v2881 = vld [vmem:[%s1 + $0x8] sm:$0xf]
      %v2882 = vld [vmem:[%s1 + $0xc] sm:$0xf]
      %v2883 = vld [vmem:[%s1 + $0x10] sm:$0xf]
      %v2884 = vld [vmem:[%s1 + $0x14] sm:$0xf]
      %v2885 = vld [vmem:[%s1 + $0x18] sm:$0xf]
      %v2886 = vld [vmem:[%s1 + $0x1c] sm:$0xf]
      %v2887 = vld [vmem:[%s1 + $0x20] sm:$0xf]
      %v2888 = vld [vmem:[%s1 + $0x24] sm:$0xf]
      %v2889 = vld [vmem:[%s1 + $0x28] sm:$0xf]
      %v2890 = vld [vmem:[%s1 + $0x2c] sm:$0xf]
      %v2891 = vld [vmem:[%s1 + $0x30] sm:$0xf]
      %v2892 = vld [vmem:[%s1 + $0x34] sm:$0xf]
      %v2893 = vld [vmem:[%s1 + $0x38] sm:$0xf]
      %v2894 = vld [vmem:[%s1 + $0x3c] sm:$0xf]
      %v2895 = vld [vmem:[%s1 + $0x40] sm:$0xf]
      %v2896 = vld [vmem:[%s1 + $0x44] sm:$0xf]
      %v2897 = vld [vmem:[%s1 + $0x48] sm:$0xf]
      %v2898 = vld [vmem:[%s1 + $0x4c] sm:$0xf]
      %v2899 = vld [vmem:[%s1 + $0x50] sm:$0xf]
      %v2900 = vld [vmem:[%s1 + $0x54] sm:$0xf]
      %v2901 = vld [vmem:[%s1 + $0x58] sm:$0xf]
      %v2902 = vld [vmem:[%s1 + $0x5c] sm:$0xf]
      %v2903 = vld [vmem:[%s1 + $0x60] sm:$0xf]
      %v2904 = vld [vmem:[%s1 + $0x64] sm:$0xf]
      %v2905 = vld [vmem:[%s1 + $0x68] sm:$0xf]
      %v2906 = vld [vmem:[%s1 + $0x6c] sm:$0xf]
      %v2907 = vld [vmem:[%s1 + $0x70] sm:$0xf]
      %v2908 = vld [vmem:[%s1 + $0x74] sm:$0xf]
      %v2909 = vld [vmem:[%s1 + $0x78] sm:$0xf]
      %v2910 = vld [vmem:[%s1 + $0x7c] sm:$0xf]
      %v2911 = vld [vmem:[%s1 + $0x80] sm:$0xf]
      %v2912 = vld [vmem:[%s1 + $0x84] sm:$0xf]
      %v2913 = vld [vmem:[%s1 + $0x88] sm:$0xf]
      %v2914 = vld [vmem:[%s1 + $0x8c] sm:$0xf]
      %v2915 = vld [vmem:[%s1 + $0x90] sm:$0xf]
      %v2916 = vld [vmem:[%s1 + $0x94] sm:$0xf]
      %v2917 = vld [vmem:[%s1 + $0x98] sm:$0xf]
      %v2918 = vld [vmem:[%s1 + $0x9c] sm:$0xf]
      %v2919 = vld [vmem:[%s1 + $0xa0] sm:$0xf]
      %v2920 = vld [vmem:[%s1 + $0xa4] sm:$0xf]
      %v2921 = vld [vmem:[%s1 + $0xa8] sm:$0xf]
      %v2922 = vld [vmem:[%s1 + $0xac] sm:$0xf]
      %v2923 = vld [vmem:[%s1 + $0xb0] sm:$0xf]
      %v2924 = vld [vmem:[%s1 + $0xb4] sm:$0xf]
      %v2925 = vld [vmem:[%s1 + $0xb8] sm:$0xf]
      %v2926 = vld [vmem:[%s1 + $0xbc] sm:$0xf]
      %v2927 = vld [vmem:[%s1 + $0xc0] sm:$0xf]
      %v2928 = vld [vmem:[%s1 + $0xc4] sm:$0xf]
      %v2929 = vld [vmem:[%s1 + $0xc8] sm:$0xf]
      %v2930 = vld [vmem:[%s1 + $0xcc] sm:$0xf]
      %v2931 = vld [vmem:[%s1 + $0xd0] sm:$0xf]
      %v2932 = vld [vmem:[%s1 + $0xd4] sm:$0xf]
      %v2933 = vld [vmem:[%s1 + $0xd8] sm:$0xf]
      %v2934 = vld [vmem:[%s1 + $0xdc] sm:$0xf]
      %v2935 = vld [vmem:[%s1 + $0xe0] sm:$0xf]
      %v2936 = vld [vmem:[%s1 + $0xe4] sm:$0xf]
      %v2937 = vld [vmem:[%s1 + $0xe8] sm:$0xf]
      %v2938 = vld [vmem:[%s1 + $0xec] sm:$0xf]
      %v2939 = vld [vmem:[%s1 + $0xf0] sm:$0xf]
      %v2940 = vld [vmem:[%s1 + $0xf4] sm:$0xf]
      %v2941 = vld [vmem:[%s1 + $0xf8] sm:$0xf]
      %v2942 = vld [vmem:[%s1 + $0xfc] sm:$0xf]
      %v2943 = vld [vmem:[%s1 + $0x100] sm:$0xf]
      %v2944 = vld [vmem:[%s1 + $0x104] sm:$0xf]
      %v2945 = vld [vmem:[%s1 + $0x108] sm:$0xf]
      %v2946 = vld [vmem:[%s1 + $0x10c] sm:$0xf]
      %v2947 = vld [vmem:[%s1 + $0x110] sm:$0xf]
      %v2948 = vld [vmem:[%s1 + $0x114] sm:$0xf]
      %v2949 = vld [vmem:[%s1 + $0x118] sm:$0xf]
      %v2950 = vld [vmem:[%s1 + $0x11c] sm:$0xf]
      %v2951 = vld [vmem:[%s1 + $0x120] sm:$0xf]
      %v2952 = vld [vmem:[%s1 + $0x124] sm:$0xf]
      %v2953 = vld [vmem:[%s1 + $0x128] sm:$0xf]
      %v2954 = vld [vmem:[%s1 + $0x12c] sm:$0xf]
      %v2955 = vld [vmem:[%s1 + $0x130] sm:$0xf]
      %v2956 = vld [vmem:[%s1 + $0x134] sm:$0xf]
      %v2957 = vld [vmem:[%s1 + $0x138] sm:$0xf]
      %v2958 = vld [vmem:[%s1 + $0x13c] sm:$0xf]
      %v2959 = vld [vmem:[%s1 + $0x140] sm:$0xf]
      %v2960 = vld [vmem:[%s1 + $0x144] sm:$0xf]
      %v2961 = vld [vmem:[%s1 + $0x148] sm:$0xf]
      %v2962 = vld [vmem:[%s1 + $0x14c] sm:$0xf]
      %v2963 = vld [vmem:[%s1 + $0x150] sm:$0xf]
      %v2964 = vld [vmem:[%s1 + $0x154] sm:$0xf]
      %v2965 = vld [vmem:[%s1 + $0x158] sm:$0xf]
      %v2966 = vld [vmem:[%s1 + $0x15c] sm:$0xf]
      %v2967 = vld [vmem:[%s1 + $0x160] sm:$0xf]
      %v2968 = vld [vmem:[%s1 + $0x164] sm:$0xf]
      %v2969 = vld [vmem:[%s1 + $0x168] sm:$0xf]
      %v2970 = vld [vmem:[%s1 + $0x16c] sm:$0xf]
      %v2971 = vld [vmem:[%s1 + $0x170] sm:$0xf]
      %v2972 = vld [vmem:[%s1 + $0x174] sm:$0xf]
      %v2973 = vld [vmem:[%s1 + $0x178] sm:$0xf]
      %v2974 = vld [vmem:[%s1 + $0x17c] sm:$0xf]
      %v2975 = vld [vmem:[%s1 + $0x180] sm:$0xf]
      %v2976 = vld [vmem:[%s1 + $0x184] sm:$0xf]
      %v2977 = vld [vmem:[%s1 + $0x188] sm:$0xf]
      %v2978 = vld [vmem:[%s1 + $0x18c] sm:$0xf]
      %v2979 = vld [vmem:[%s1 + $0x190] sm:$0xf]
      %v2980 = vld [vmem:[%s1 + $0x194] sm:$0xf]
      %v2981 = vld [vmem:[%s1 + $0x198] sm:$0xf]
      %v2982 = vld [vmem:[%s1 + $0x19c] sm:$0xf]
      %v2983 = vld [vmem:[%s1 + $0x1a0] sm:$0xf]
      %v2984 = vld [vmem:[%s1 + $0x1a4] sm:$0xf]
      %v2985 = vld [vmem:[%s1 + $0x1a8] sm:$0xf]
      %v2986 = vld [vmem:[%s1 + $0x1ac] sm:$0xf]
      %v2987 = vld [vmem:[%s1 + $0x1b0] sm:$0xf]
      %v2988 = vld [vmem:[%s1 + $0x1b4] sm:$0xf]
      %v2989 = vld [vmem:[%s1 + $0x1b8] sm:$0xf]
      %v2990 = vld [vmem:[%s1 + $0x1bc] sm:$0xf]
      %v2991 = vld [vmem:[%s1 + $0x1c0] sm:$0xf]
      %v2992 = vld [vmem:[%s1 + $0x1c4] sm:$0xf]
      %v2993 = vld [vmem:[%s1 + $0x1c8] sm:$0xf]
      %v2994 = vld [vmem:[%s1 + $0x1cc] sm:$0xf]
      %v2995 = vld [vmem:[%s1 + $0x1d0] sm:$0xf]
      %v2996 = vld [vmem:[%s1 + $0x1d4] sm:$0xf]
      %v2997 = vld [vmem:[%s1 + $0x1d8] sm:$0xf]
      %v2998 = vld [vmem:[%s1 + $0x1dc] sm:$0xf]
      %v2999 = vld [vmem:[%s1 + $0x1e0] sm:$0xf]
      %v3000 = vld [vmem:[%s1 + $0x1e4] sm:$0xf]
      %v3001 = vld [vmem:[%s1 + $0x1e8] sm:$0xf]
      %v3002 = vld [vmem:[%s1 + $0x1ec] sm:$0xf]
      %v3003 = vld [vmem:[%s1 + $0x1f0] sm:$0xf]
      %v3004 = vld [vmem:[%s1 + $0x1f4] sm:$0xf]
      %v3005 = vld [vmem:[%s1 + $0x1f8] sm:$0xf]
      %v3006 = vld [vmem:[%s1 + $0x1fc] sm:$0xf]
      %v3007 = vld [vmem:[%s1 + $0x200] sm:$0xf]
      %v3008 = vld [vmem:[%s1 + $0x204] sm:$0xf]
      %v3009 = vld [vmem:[%s1 + $0x208] sm:$0xf]
      %v3010 = vld [vmem:[%s1 + $0x20c] sm:$0xf]
      %v3011 = vld [vmem:[%s1 + $0x210] sm:$0xf]
      %v3012 = vld [vmem:[%s1 + $0x214] sm:$0xf]
      %v3013 = vld [vmem:[%s1 + $0x218] sm:$0xf]
      %v3014 = vld [vmem:[%s1 + $0x21c] sm:$0xf]
      %v3015 = vld [vmem:[%s1 + $0x220] sm:$0xf]
      %v3016 = vld [vmem:[%s1 + $0x224] sm:$0xf]
      %v3017 = vld [vmem:[%s1 + $0x228] sm:$0xf]
      %v3018 = vld [vmem:[%s1 + $0x22c] sm:$0xf]
      %v3019 = vld [vmem:[%s1 + $0x230] sm:$0xf]
      %v3020 = vld [vmem:[%s1 + $0x234] sm:$0xf]
      %v3021 = vld [vmem:[%s1 + $0x238] sm:$0xf]
      %v3022 = vld [vmem:[%s1 + $0x23c] sm:$0xf]
      %v3183 = vunpack.c.l.b16 %v2719
      %v3184 = vunpack.c.h.b16 %v2719
      %v3185 = vunpack.c.l.b16 %v2720
      %v3186 = vunpack.c.h.b16 %v2720
      %v3187 = vunpack.c.l.b16 %v2721
      %v3188 = vunpack.c.h.b16 %v2721
      %v3189 = vunpack.c.l.b16 %v2722
      %v3190 = vunpack.c.h.b16 %v2722
      %v3191 = vunpack.c.l.b16 %v2723
      %v3192 = vunpack.c.l.b16 %v2724
      %v3193 = vunpack.c.h.b16 %v2724
      %v3194 = vunpack.c.l.b16 %v2725
      %v3195 = vunpack.c.h.b16 %v2725
      %v3196 = vunpack.c.l.b16 %v2726
      %v3197 = vunpack.c.h.b16 %v2726
      %v3198 = vunpack.c.l.b16 %v2727
      %v3199 = vunpack.c.h.b16 %v2727
      %v3200 = vunpack.c.l.b16 %v2728
      %v3201 = vunpack.c.l.b16 %v2729
      %v3202 = vunpack.c.h.b16 %v2729
      %v3203 = vunpack.c.l.b16 %v2730
      %v3204 = vunpack.c.h.b16 %v2730
      %v3205 = vunpack.c.l.b16 %v2731
      %v3206 = vunpack.c.h.b16 %v2731
      %v3207 = vunpack.c.l.b16 %v2732
      %v3208 = vunpack.c.h.b16 %v2732
      %v3209 = vunpack.c.l.b16 %v2733
      %v3210 = vunpack.c.l.b16 %v2734
      %v3211 = vunpack.c.h.b16 %v2734
      %v3212 = vunpack.c.l.b16 %v2735
      %v3213 = vunpack.c.h.b16 %v2735
      %v3214 = vunpack.c.l.b16 %v2736
      %v3215 = vunpack.c.h.b16 %v2736
      %v3216 = vunpack.c.l.b16 %v2737
      %v3217 = vunpack.c.h.b16 %v2737
      %v3218 = vunpack.c.l.b16 %v2738
      %v3219 = vunpack.c.l.b16 %v2739
      %v3220 = vunpack.c.h.b16 %v2739
      %v3221 = vunpack.c.l.b16 %v2740
      %v3222 = vunpack.c.h.b16 %v2740
      %v3223 = vunpack.c.l.b16 %v2741
      %v3224 = vunpack.c.h.b16 %v2741
      %v3225 = vunpack.c.l.b16 %v2742
      %v3226 = vunpack.c.h.b16 %v2742
      %v3227 = vunpack.c.l.b16 %v2743
      %v3228 = vunpack.c.l.b16 %v2744
      %v3229 = vunpack.c.h.b16 %v2744
      %v3230 = vunpack.c.l.b16 %v2745
      %v3231 = vunpack.c.h.b16 %v2745
      %v3232 = vunpack.c.l.b16 %v2746
      %v3233 = vunpack.c.h.b16 %v2746
      %v3234 = vunpack.c.l.b16 %v2747
      %v3235 = vunpack.c.h.b16 %v2747
      %v3236 = vunpack.c.l.b16 %v2748
      %v3237 = vunpack.c.l.b16 %v2749
      %v3238 = vunpack.c.h.b16 %v2749
      %v3239 = vunpack.c.l.b16 %v2750
      %v3240 = vunpack.c.h.b16 %v2750
      %v3241 = vunpack.c.l.b16 %v2751
      %v3242 = vunpack.c.h.b16 %v2751
      %v3243 = vunpack.c.l.b16 %v2752
      %v3244 = vunpack.c.h.b16 %v2752
      %v3245 = vunpack.c.l.b16 %v2753
      %v3246 = vunpack.c.l.b16 %v2754
      %v3247 = vunpack.c.h.b16 %v2754
      %v3248 = vunpack.c.l.b16 %v2755
      %v3249 = vunpack.c.h.b16 %v2755
      %v3250 = vunpack.c.l.b16 %v2756
      %v3251 = vunpack.c.h.b16 %v2756
      %v3252 = vunpack.c.l.b16 %v2757
      %v3253 = vunpack.c.h.b16 %v2757
      %v3254 = vunpack.c.l.b16 %v2758
      %v3255 = vunpack.c.l.b16 %v2759
      %v3256 = vunpack.c.h.b16 %v2759
      %v3257 = vunpack.c.l.b16 %v2760
      %v3258 = vunpack.c.h.b16 %v2760
      %v3259 = vunpack.c.l.b16 %v2761
      %v3260 = vunpack.c.h.b16 %v2761
      %v3261 = vunpack.c.l.b16 %v2762
      %v3262 = vunpack.c.h.b16 %v2762
      %v3263 = vunpack.c.l.b16 %v2763
      %v3264 = vunpack.c.l.b16 %v2764
      %v3265 = vunpack.c.h.b16 %v2764
      %v3266 = vunpack.c.l.b16 %v2765
      %v3267 = vunpack.c.h.b16 %v2765
      %v3268 = vunpack.c.l.b16 %v2766
      %v3269 = vunpack.c.h.b16 %v2766
      %v3270 = vunpack.c.l.b16 %v2767
      %v3271 = vunpack.c.h.b16 %v2767
      %v3272 = vunpack.c.l.b16 %v2768
      %v3273 = vunpack.c.l.b16 %v2769
      %v3274 = vunpack.c.h.b16 %v2769
      %v3275 = vunpack.c.l.b16 %v2770
      %v3276 = vunpack.c.h.b16 %v2770
      %v3277 = vunpack.c.l.b16 %v2771
      %v3278 = vunpack.c.h.b16 %v2771
      %v3279 = vunpack.c.l.b16 %v2772
      %v3280 = vunpack.c.h.b16 %v2772
      %v3281 = vunpack.c.l.b16 %v2773
      %v3282 = vunpack.c.l.b16 %v2774
      %v3283 = vunpack.c.h.b16 %v2774
      %v3284 = vunpack.c.l.b16 %v2775
      %v3285 = vunpack.c.h.b16 %v2775
      %v3286 = vunpack.c.l.b16 %v2776
      %v3287 = vunpack.c.h.b16 %v2776
      %v3288 = vunpack.c.l.b16 %v2777
      %v3289 = vunpack.c.h.b16 %v2777
      %v3290 = vunpack.c.l.b16 %v2778
      %v3291 = vunpack.c.l.b16 %v2779
      %v3292 = vunpack.c.h.b16 %v2779
      %v3293 = vunpack.c.l.b16 %v2780
      %v3294 = vunpack.c.h.b16 %v2780
      %v3295 = vunpack.c.l.b16 %v2781
      %v3296 = vunpack.c.h.b16 %v2781
      %v3297 = vunpack.c.l.b16 %v2782
      %v3298 = vunpack.c.h.b16 %v2782
      %v3299 = vunpack.c.l.b16 %v2783
      %v3300 = vunpack.c.l.b16 %v2784
      %v3301 = vunpack.c.h.b16 %v2784
      %v3302 = vunpack.c.l.b16 %v2785
      %v3303 = vunpack.c.h.b16 %v2785
      %v3304 = vunpack.c.l.b16 %v2786
      %v3305 = vunpack.c.h.b16 %v2786
      %v3306 = vunpack.c.l.b16 %v2787
      %v3307 = vunpack.c.h.b16 %v2787
      %v3308 = vunpack.c.l.b16 %v2788
      %v3309 = vunpack.c.l.b16 %v2789
      %v3310 = vunpack.c.h.b16 %v2789
      %v3311 = vunpack.c.l.b16 %v2790
      %v3312 = vunpack.c.h.b16 %v2790
      %v3313 = vunpack.c.l.b16 %v2791
      %v3314 = vunpack.c.h.b16 %v2791
      %v3315 = vunpack.c.l.b16 %v2792
      %v3316 = vunpack.c.h.b16 %v2792
      %v3317 = vunpack.c.l.b16 %v2793
      %v3318 = vunpack.c.l.b16 %v2794
      %v3319 = vunpack.c.h.b16 %v2794
      %v3320 = vunpack.c.l.b16 %v2795
      %v3321 = vunpack.c.h.b16 %v2795
      %v3322 = vunpack.c.l.b16 %v2796
      %v3323 = vunpack.c.h.b16 %v2796
      %v3324 = vunpack.c.l.b16 %v2797
      %v3325 = vunpack.c.h.b16 %v2797
      %v3326 = vunpack.c.l.b16 %v2798
      %v3327 = vunpack.c.l.b16 %v2799
      %v3328 = vunpack.c.h.b16 %v2799
      %v3329 = vunpack.c.l.b16 %v2800
      %v3330 = vunpack.c.h.b16 %v2800
      %v3331 = vunpack.c.l.b16 %v2801
      %v3332 = vunpack.c.h.b16 %v2801
      %v3333 = vunpack.c.l.b16 %v2802
      %v3334 = vunpack.c.h.b16 %v2802
      %v3335 = vunpack.c.l.b16 %v2803
      %v3336 = vunpack.c.l.b16 %v2804
      %v3337 = vunpack.c.h.b16 %v2804
      %v3338 = vunpack.c.l.b16 %v2805
      %v3339 = vunpack.c.h.b16 %v2805
      %v3340 = vunpack.c.l.b16 %v2806
      %v3341 = vunpack.c.h.b16 %v2806
      %v3342 = vunpack.c.l.b16 %v2807
      %v3343 = vunpack.c.h.b16 %v2807
      %v3344 = vunpack.c.l.b16 %v2808
      %v3345 = vunpack.c.l.b16 %v2809
      %v3346 = vunpack.c.h.b16 %v2809
      %v3347 = vunpack.c.l.b16 %v2810
      %v3348 = vunpack.c.h.b16 %v2810
      %v3349 = vunpack.c.l.b16 %v2811
      %v3350 = vunpack.c.h.b16 %v2811
      %v3351 = vunpack.c.l.b16 %v2812
      %v3352 = vunpack.c.h.b16 %v2812
      %v3353 = vunpack.c.l.b16 %v2813
      %v3354 = vunpack.c.l.b16 %v2814
      %v3355 = vunpack.c.h.b16 %v2814
      %v3356 = vunpack.c.l.b16 %v2815
      %v3357 = vunpack.c.h.b16 %v2815
      %v3358 = vunpack.c.l.b16 %v2816
      %v3359 = vunpack.c.h.b16 %v2816
      %v3360 = vunpack.c.l.b16 %v2817
      %v3361 = vunpack.c.h.b16 %v2817
      %v3362 = vunpack.c.l.b16 %v2818
      %v3363 = vunpack.c.l.b16 %v2819
      %v3364 = vunpack.c.h.b16 %v2819
      %v3365 = vunpack.c.l.b16 %v2820
      %v3366 = vunpack.c.h.b16 %v2820
      %v3367 = vunpack.c.l.b16 %v2821
      %v3368 = vunpack.c.h.b16 %v2821
      %v3369 = vunpack.c.l.b16 %v2822
      %v3370 = vunpack.c.h.b16 %v2822
      %v3371 = vunpack.c.l.b16 %v2823
      %v3372 = vunpack.c.l.b16 %v2824
      %v3373 = vunpack.c.h.b16 %v2824
      %v3374 = vunpack.c.l.b16 %v2825
      %v3375 = vunpack.c.h.b16 %v2825
      %v3376 = vunpack.c.l.b16 %v2826
      %v3377 = vunpack.c.h.b16 %v2826
      %v3378 = vunpack.c.l.b16 %v2827
      %v3379 = vunpack.c.h.b16 %v2827
      %v3380 = vunpack.c.l.b16 %v2828
      %v3381 = vunpack.c.l.b16 %v2829
      %v3382 = vunpack.c.h.b16 %v2829
      %v3383 = vunpack.c.l.b16 %v2830
      %v3384 = vunpack.c.h.b16 %v2830
      %v3385 = vunpack.c.l.b16 %v2831
      %v3386 = vunpack.c.h.b16 %v2831
      %v3387 = vunpack.c.l.b16 %v2832
      %v3388 = vunpack.c.h.b16 %v2832
      %v3389 = vunpack.c.l.b16 %v2833
      %v3390 = vunpack.c.l.b16 %v2834
      %v3391 = vunpack.c.h.b16 %v2834
      %v3392 = vunpack.c.l.b16 %v2835
      %v3393 = vunpack.c.h.b16 %v2835
      %v3394 = vunpack.c.l.b16 %v2836
      %v3395 = vunpack.c.h.b16 %v2836
      %v3396 = vunpack.c.l.b16 %v2837
      %v3397 = vunpack.c.h.b16 %v2837
      %v3398 = vunpack.c.l.b16 %v2838
      %v3399 = vunpack.c.l.b16 %v2839
      %v3400 = vunpack.c.h.b16 %v2839
      %v3401 = vunpack.c.l.b16 %v2840
      %v3402 = vunpack.c.h.b16 %v2840
      %v3403 = vunpack.c.l.b16 %v2841
      %v3404 = vunpack.c.h.b16 %v2841
      %v3405 = vunpack.c.l.b16 %v2842
      %v3406 = vunpack.c.h.b16 %v2842
      %v3407 = vunpack.c.l.b16 %v2843
      %v3408 = vunpack.c.l.b16 %v2844
      %v3409 = vunpack.c.h.b16 %v2844
      %v3410 = vunpack.c.l.b16 %v2845
      %v3411 = vunpack.c.h.b16 %v2845
      %v3412 = vunpack.c.l.b16 %v2846
      %v3413 = vunpack.c.h.b16 %v2846
      %v3414 = vunpack.c.l.b16 %v2847
      %v3415 = vunpack.c.h.b16 %v2847
      %v3416 = vunpack.c.l.b16 %v2848
      %v3417 = vunpack.c.l.b16 %v2849
      %v3418 = vunpack.c.h.b16 %v2849
      %v3419 = vunpack.c.l.b16 %v2850
      %v3420 = vunpack.c.h.b16 %v2850
      %v3421 = vunpack.c.l.b16 %v2851
      %v3422 = vunpack.c.h.b16 %v2851
      %v3423 = vunpack.c.l.b16 %v2852
      %v3424 = vunpack.c.h.b16 %v2852
      %v3425 = vunpack.c.l.b16 %v2853
      %v3426 = vunpack.c.l.b16 %v2854
      %v3427 = vunpack.c.h.b16 %v2854
      %v3428 = vunpack.c.l.b16 %v2855
      %v3429 = vunpack.c.h.b16 %v2855
      %v3430 = vunpack.c.l.b16 %v2856
      %v3431 = vunpack.c.h.b16 %v2856
      %v3432 = vunpack.c.l.b16 %v2857
      %v3433 = vunpack.c.h.b16 %v2857
      %v3434 = vunpack.c.l.b16 %v2858
      %v3435 = vunpack.c.l.b16 %v2859
      %v3436 = vunpack.c.h.b16 %v2859
      %v3437 = vunpack.c.l.b16 %v2860
      %v3438 = vunpack.c.h.b16 %v2860
      %v3439 = vunpack.c.l.b16 %v2861
      %v3440 = vunpack.c.h.b16 %v2861
      %v3441 = vunpack.c.l.b16 %v2862
      %v3442 = vunpack.c.h.b16 %v2862
      %v3443 = vunpack.c.l.b16 %v2863
      %v3444 = vunpack.c.l.b16 %v2864
      %v3445 = vunpack.c.h.b16 %v2864
      %v3446 = vunpack.c.l.b16 %v2865
      %v3447 = vunpack.c.h.b16 %v2865
      %v3448 = vunpack.c.l.b16 %v2866
      %v3449 = vunpack.c.h.b16 %v2866
      %v3450 = vunpack.c.l.b16 %v2867
      %v3451 = vunpack.c.h.b16 %v2867
      %v3452 = vunpack.c.l.b16 %v2868
      %v3453 = vunpack.c.l.b16 %v2869
      %v3454 = vunpack.c.h.b16 %v2869
      %v3455 = vunpack.c.l.b16 %v2870
      %v3456 = vunpack.c.h.b16 %v2870
      %v3457 = vunpack.c.l.b16 %v2871
      %v3458 = vunpack.c.h.b16 %v2871
      %v3459 = vunpack.c.l.b16 %v2872
      %v3460 = vunpack.c.h.b16 %v2872
      %v3461 = vunpack.c.l.b16 %v2873
      %v3462 = vunpack.c.l.b16 %v2874
      %v3463 = vunpack.c.h.b16 %v2874
      %v3464 = vunpack.c.l.b16 %v2875
      %v3465 = vunpack.c.h.b16 %v2875
      %v3466 = vunpack.c.l.b16 %v2876
      %v3467 = vunpack.c.h.b16 %v2876
      %v3468 = vunpack.c.l.b16 %v2877
      %v3469 = vunpack.c.h.b16 %v2877
      %v3470 = vunpack.c.l.b16 %v2878
      %v3471 = vpack.c.b16 %v3192, %v3183
      %v3472 = vpack.c.b16 %v3193, %v3184
      %v3473 = vpack.c.b16 %v3194, %v3185
      %v3474 = vpack.c.b16 %v3195, %v3186
      %v3475 = vpack.c.b16 %v3196, %v3187
      %v3476 = vpack.c.b16 %v3197, %v3188
      %v3477 = vpack.c.b16 %v3198, %v3189
      %v3478 = vpack.c.b16 %v3199, %v3190
      %v3479 = vpack.c.b16 %v3200, %v3191
      %v3480 = vpack.c.b16 %v3210, %v3201
      %v3481 = vpack.c.b16 %v3211, %v3202
      %v3482 = vpack.c.b16 %v3212, %v3203
      %v3483 = vpack.c.b16 %v3213, %v3204
      %v3484 = vpack.c.b16 %v3214, %v3205
      %v3485 = vpack.c.b16 %v3215, %v3206
      %v3486 = vpack.c.b16 %v3216, %v3207
      %v3487 = vpack.c.b16 %v3217, %v3208
      %v3488 = vpack.c.b16 %v3218, %v3209
      %v3489 = vpack.c.b16 %v3228, %v3219
      %v3490 = vpack.c.b16 %v3229, %v3220
      %v3491 = vpack.c.b16 %v3230, %v3221
      %v3492 = vpack.c.b16 %v3231, %v3222
      %v3493 = vpack.c.b16 %v3232, %v3223
      %v3494 = vpack.c.b16 %v3233, %v3224
      %v3495 = vpack.c.b16 %v3234, %v3225
      %v3496 = vpack.c.b16 %v3235, %v3226
      %v3497 = vpack.c.b16 %v3236, %v3227
      %v3498 = vpack.c.b16 %v3246, %v3237
      %v3499 = vpack.c.b16 %v3247, %v3238
      %v3500 = vpack.c.b16 %v3248, %v3239
      %v3501 = vpack.c.b16 %v3249, %v3240
      %v3502 = vpack.c.b16 %v3250, %v3241
      %v3503 = vpack.c.b16 %v3251, %v3242
      %v3504 = vpack.c.b16 %v3252, %v3243
      %v3505 = vpack.c.b16 %v3253, %v3244
      %v3506 = vpack.c.b16 %v3254, %v3245
      %v3507 = vpack.c.b16 %v3264, %v3255
      %v3508 = vpack.c.b16 %v3265, %v3256
      %v3509 = vpack.c.b16 %v3266, %v3257
      %v3510 = vpack.c.b16 %v3267, %v3258
      %v3511 = vpack.c.b16 %v3268, %v3259
      %v3512 = vpack.c.b16 %v3269, %v3260
      %v3513 = vpack.c.b16 %v3270, %v3261
      %v3514 = vpack.c.b16 %v3271, %v3262
      %v3515 = vpack.c.b16 %v3272, %v3263
      %v3516 = vpack.c.b16 %v3282, %v3273
      %v3517 = vpack.c.b16 %v3283, %v3274
      %v3518 = vpack.c.b16 %v3284, %v3275
      %v3519 = vpack.c.b16 %v3285, %v3276
      %v3520 = vpack.c.b16 %v3286, %v3277
      %v3521 = vpack.c.b16 %v3287, %v3278
      %v3522 = vpack.c.b16 %v3288, %v3279
      %v3523 = vpack.c.b16 %v3289, %v3280
      %v3524 = vpack.c.b16 %v3290, %v3281
      %v3525 = vpack.c.b16 %v3300, %v3291
      %v3526 = vpack.c.b16 %v3301, %v3292
      %v3527 = vpack.c.b16 %v3302, %v3293
      %v3528 = vpack.c.b16 %v3303, %v3294
      %v3529 = vpack.c.b16 %v3304, %v3295
      %v3530 = vpack.c.b16 %v3305, %v3296
      %v3531 = vpack.c.b16 %v3306, %v3297
      %v3532 = vpack.c.b16 %v3307, %v3298
      %v3533 = vpack.c.b16 %v3308, %v3299
      %v3534 = vpack.c.b16 %v3318, %v3309
      %v3535 = vpack.c.b16 %v3319, %v3310
      %v3536 = vpack.c.b16 %v3320, %v3311
      %v3537 = vpack.c.b16 %v3321, %v3312
      %v3538 = vpack.c.b16 %v3322, %v3313
      %v3539 = vpack.c.b16 %v3323, %v3314
      %v3540 = vpack.c.b16 %v3324, %v3315
      %v3541 = vpack.c.b16 %v3325, %v3316
      %v3542 = vpack.c.b16 %v3326, %v3317
      %v3543 = vpack.c.b16 %v3336, %v3327
      %v3544 = vpack.c.b16 %v3337, %v3328
      %v3545 = vpack.c.b16 %v3338, %v3329
      %v3546 = vpack.c.b16 %v3339, %v3330
      %v3547 = vpack.c.b16 %v3340, %v3331
      %v3548 = vpack.c.b16 %v3341, %v3332
      %v3549 = vpack.c.b16 %v3342, %v3333
      %v3550 = vpack.c.b16 %v3343, %v3334
      %v3551 = vpack.c.b16 %v3344, %v3335
      %v3552 = vpack.c.b16 %v3354, %v3345
      %v3553 = vpack.c.b16 %v3355, %v3346
      %v3554 = vpack.c.b16 %v3356, %v3347
      %v3555 = vpack.c.b16 %v3357, %v3348
      %v3556 = vpack.c.b16 %v3358, %v3349
      %v3557 = vpack.c.b16 %v3359, %v3350
      %v3558 = vpack.c.b16 %v3360, %v3351
      %v3559 = vpack.c.b16 %v3361, %v3352
      %v3560 = vpack.c.b16 %v3362, %v3353
      %v3561 = vpack.c.b16 %v3372, %v3363
      %v3562 = vpack.c.b16 %v3373, %v3364
      %v3563 = vpack.c.b16 %v3374, %v3365
      %v3564 = vpack.c.b16 %v3375, %v3366
      %v3565 = vpack.c.b16 %v3376, %v3367
      %v3566 = vpack.c.b16 %v3377, %v3368
      %v3567 = vpack.c.b16 %v3378, %v3369
      %v3568 = vpack.c.b16 %v3379, %v3370
      %v3569 = vpack.c.b16 %v3380, %v3371
      %v3570 = vpack.c.b16 %v3390, %v3381
      %v3571 = vpack.c.b16 %v3391, %v3382
      %v3572 = vpack.c.b16 %v3392, %v3383
      %v3573 = vpack.c.b16 %v3393, %v3384
      %v3574 = vpack.c.b16 %v3394, %v3385
      %v3575 = vpack.c.b16 %v3395, %v3386
      %v3576 = vpack.c.b16 %v3396, %v3387
      %v3577 = vpack.c.b16 %v3397, %v3388
      %v3578 = vpack.c.b16 %v3398, %v3389
      %v3579 = vpack.c.b16 %v3408, %v3399
      %v3580 = vpack.c.b16 %v3409, %v3400
      %v3581 = vpack.c.b16 %v3410, %v3401
      %v3582 = vpack.c.b16 %v3411, %v3402
      %v3583 = vpack.c.b16 %v3412, %v3403
      %v3584 = vpack.c.b16 %v3413, %v3404
      %v3585 = vpack.c.b16 %v3414, %v3405
      %v3586 = vpack.c.b16 %v3415, %v3406
      %v3587 = vpack.c.b16 %v3416, %v3407
      %v3588 = vpack.c.b16 %v3426, %v3417
      %v3589 = vpack.c.b16 %v3427, %v3418
      %v3590 = vpack.c.b16 %v3428, %v3419
      %v3591 = vpack.c.b16 %v3429, %v3420
      %v3592 = vpack.c.b16 %v3430, %v3421
      %v3593 = vpack.c.b16 %v3431, %v3422
      %v3594 = vpack.c.b16 %v3432, %v3423
      %v3595 = vpack.c.b16 %v3433, %v3424
      %v3596 = vpack.c.b16 %v3434, %v3425
      %v3597 = vpack.c.b16 %v3444, %v3435
      %v3598 = vpack.c.b16 %v3445, %v3436
      %v3599 = vpack.c.b16 %v3446, %v3437
      %v3600 = vpack.c.b16 %v3447, %v3438
      %v3601 = vpack.c.b16 %v3448, %v3439
      %v3602 = vpack.c.b16 %v3449, %v3440
      %v3603 = vpack.c.b16 %v3450, %v3441
      %v3604 = vpack.c.b16 %v3451, %v3442
      %v3605 = vpack.c.b16 %v3452, %v3443
      %v3606 = vpack.c.b16 %v3462, %v3453
      %v3607 = vpack.c.b16 %v3463, %v3454
      %v3608 = vpack.c.b16 %v3464, %v3455
      %v3609 = vpack.c.b16 %v3465, %v3456
      %v3610 = vpack.c.b16 %v3466, %v3457
      %v3611 = vpack.c.b16 %v3467, %v3458
      %v3612 = vpack.c.b16 %v3468, %v3459
      %v3613 = vpack.c.b16 %v3469, %v3460
      %v3614 = vpack.c.b16 %v3470, %v3461
      %v3903 = vunpack.c.l.b16 %v2879
      %v3904 = vunpack.c.l.b16 %v2880
      %v3905 = vunpack.c.l.b16 %v2881
      %v3906 = vunpack.c.l.b16 %v2882
      %v3907 = vunpack.c.l.b16 %v2883
      %v3908 = vunpack.c.l.b16 %v2884
      %v3909 = vunpack.c.l.b16 %v2885
      %v3910 = vunpack.c.l.b16 %v2886
      %v3911 = vunpack.c.l.b16 %v2887
      %v3912 = vunpack.c.l.b16 %v2888
      %v3913 = vunpack.c.l.b16 %v2889
      %v3914 = vunpack.c.l.b16 %v2890
      %v3915 = vunpack.c.l.b16 %v2891
      %v3916 = vunpack.c.l.b16 %v2892
      %v3917 = vunpack.c.l.b16 %v2893
      %v3918 = vunpack.c.l.b16 %v2894
      %v3919 = vunpack.c.l.b16 %v2895
      %v3920 = vunpack.c.l.b16 %v2896
      %v3921 = vunpack.c.l.b16 %v2897
      %v3922 = vunpack.c.l.b16 %v2898
      %v3923 = vunpack.c.l.b16 %v2899
      %v3924 = vunpack.c.l.b16 %v2900
      %v3925 = vunpack.c.l.b16 %v2901
      %v3926 = vunpack.c.l.b16 %v2902
      %v3927 = vunpack.c.l.b16 %v2903
      %v3928 = vunpack.c.l.b16 %v2904
      %v3929 = vunpack.c.l.b16 %v2905
      %v3930 = vunpack.c.l.b16 %v2906
      %v3931 = vunpack.c.l.b16 %v2907
      %v3932 = vunpack.c.l.b16 %v2908
      %v3933 = vunpack.c.l.b16 %v2909
      %v3934 = vunpack.c.l.b16 %v2910
      %v3935 = vunpack.c.l.b16 %v2911
      %v3936 = vunpack.c.l.b16 %v2912
      %v3937 = vunpack.c.l.b16 %v2913
      %v3938 = vunpack.c.l.b16 %v2914
      %v3939 = vunpack.c.l.b16 %v2915
      %v3940 = vunpack.c.l.b16 %v2916
      %v3941 = vunpack.c.l.b16 %v2917
      %v3942 = vunpack.c.l.b16 %v2918
      %v3943 = vunpack.c.l.b16 %v2919
      %v3944 = vunpack.c.l.b16 %v2920
      %v3945 = vunpack.c.l.b16 %v2921
      %v3946 = vunpack.c.l.b16 %v2922
      %v3947 = vunpack.c.l.b16 %v2923
      %v3948 = vunpack.c.l.b16 %v2924
      %v3949 = vunpack.c.l.b16 %v2925
      %v3950 = vunpack.c.l.b16 %v2926
      %v3951 = vunpack.c.l.b16 %v2927
      %v3952 = vunpack.c.l.b16 %v2928
      %v3953 = vunpack.c.l.b16 %v2929
      %v3954 = vunpack.c.l.b16 %v2930
      %v3955 = vunpack.c.l.b16 %v2931
      %v3956 = vunpack.c.l.b16 %v2932
      %v3957 = vunpack.c.l.b16 %v2933
      %v3958 = vunpack.c.l.b16 %v2934
      %v3959 = vunpack.c.l.b16 %v2935
      %v3960 = vunpack.c.l.b16 %v2936
      %v3961 = vunpack.c.l.b16 %v2937
      %v3962 = vunpack.c.l.b16 %v2938
      %v3963 = vunpack.c.l.b16 %v2939
      %v3964 = vunpack.c.l.b16 %v2940
      %v3965 = vunpack.c.l.b16 %v2941
      %v3966 = vunpack.c.l.b16 %v2942
      %v3967 = vunpack.c.l.b16 %v2943
      %v3968 = vunpack.c.l.b16 %v2944
      %v3969 = vunpack.c.l.b16 %v2945
      %v3970 = vunpack.c.l.b16 %v2946
      %v3971 = vunpack.c.l.b16 %v2947
      %v3972 = vunpack.c.l.b16 %v2948
      %v3973 = vunpack.c.l.b16 %v2949
      %v3974 = vunpack.c.l.b16 %v2950
      %v3975 = vunpack.c.l.b16 %v2951
      %v3976 = vunpack.c.l.b16 %v2952
      %v3977 = vunpack.c.l.b16 %v2953
      %v3978 = vunpack.c.l.b16 %v2954
      %v3979 = vunpack.c.l.b16 %v2955
      %v3980 = vunpack.c.l.b16 %v2956
      %v3981 = vunpack.c.l.b16 %v2957
      %v3982 = vunpack.c.l.b16 %v2958
      %v3983 = vunpack.c.l.b16 %v2959
      %v3984 = vunpack.c.l.b16 %v2960
      %v3985 = vunpack.c.l.b16 %v2961
      %v3986 = vunpack.c.l.b16 %v2962
      %v3987 = vunpack.c.l.b16 %v2963
      %v3988 = vunpack.c.l.b16 %v2964
      %v3989 = vunpack.c.l.b16 %v2965
      %v3990 = vunpack.c.l.b16 %v2966
      %v3991 = vunpack.c.l.b16 %v2967
      %v3992 = vunpack.c.l.b16 %v2968
      %v3993 = vunpack.c.l.b16 %v2969
      %v3994 = vunpack.c.l.b16 %v2970
      %v3995 = vunpack.c.l.b16 %v2971
      %v3996 = vunpack.c.l.b16 %v2972
      %v3997 = vunpack.c.l.b16 %v2973
      %v3998 = vunpack.c.l.b16 %v2974
      %v3999 = vunpack.c.l.b16 %v2975
      %v4000 = vunpack.c.l.b16 %v2976
      %v4001 = vunpack.c.l.b16 %v2977
      %v4002 = vunpack.c.l.b16 %v2978
      %v4003 = vunpack.c.l.b16 %v2979
      %v4004 = vunpack.c.l.b16 %v2980
      %v4005 = vunpack.c.l.b16 %v2981
      %v4006 = vunpack.c.l.b16 %v2982
      %v4007 = vunpack.c.l.b16 %v2983
      %v4008 = vunpack.c.l.b16 %v2984
      %v4009 = vunpack.c.l.b16 %v2985
      %v4010 = vunpack.c.l.b16 %v2986
      %v4011 = vunpack.c.l.b16 %v2987
      %v4012 = vunpack.c.l.b16 %v2988
      %v4013 = vunpack.c.l.b16 %v2989
      %v4014 = vunpack.c.l.b16 %v2990
      %v4015 = vunpack.c.l.b16 %v2991
      %v4016 = vunpack.c.l.b16 %v2992
      %v4017 = vunpack.c.l.b16 %v2993
      %v4018 = vunpack.c.l.b16 %v2994
      %v4019 = vunpack.c.l.b16 %v2995
      %v4020 = vunpack.c.l.b16 %v2996
      %v4021 = vunpack.c.l.b16 %v2997
      %v4022 = vunpack.c.l.b16 %v2998
      %v4023 = vunpack.c.l.b16 %v2999
      %v4024 = vunpack.c.l.b16 %v3000
      %v4025 = vunpack.c.l.b16 %v3001
      %v4026 = vunpack.c.l.b16 %v3002
      %v4027 = vunpack.c.l.b16 %v3003
      %v4028 = vunpack.c.l.b16 %v3004
      %v4029 = vunpack.c.l.b16 %v3005
      %v4030 = vunpack.c.l.b16 %v3006
      %v4031 = vunpack.c.l.b16 %v3007
      %v4032 = vunpack.c.l.b16 %v3008
      %v4033 = vunpack.c.l.b16 %v3009
      %v4034 = vunpack.c.l.b16 %v3010
      %v4035 = vunpack.c.l.b16 %v3011
      %v4036 = vunpack.c.l.b16 %v3012
      %v4037 = vunpack.c.l.b16 %v3013
      %v4038 = vunpack.c.l.b16 %v3014
      %v4039 = vunpack.c.l.b16 %v3015
      %v4040 = vunpack.c.l.b16 %v3016
      %v4041 = vunpack.c.l.b16 %v3017
      %v4042 = vunpack.c.l.b16 %v3018
      %v4043 = vunpack.c.l.b16 %v3019
      %v4044 = vunpack.c.l.b16 %v3020
      %v4045 = vunpack.c.l.b16 %v3021
      %v4046 = vunpack.c.l.b16 %v3022
      %v4047 = vpack.c.b16 %v3904, %v3903
      %v4048 = vpack.c.b16 %v3906, %v3905
      %v4049 = vpack.c.b16 %v3908, %v3907
      %v4050 = vpack.c.b16 %v3910, %v3909
      %v4051 = vpack.c.b16 %v3912, %v3911
      %v4052 = vpack.c.b16 %v3914, %v3913
      %v4053 = vpack.c.b16 %v3916, %v3915
      %v4054 = vpack.c.b16 %v3918, %v3917
      %v4055 = vpack.c.b16 %v3920, %v3919
      %v4056 = vpack.c.b16 %v3922, %v3921
      %v4057 = vpack.c.b16 %v3924, %v3923
      %v4058 = vpack.c.b16 %v3926, %v3925
      %v4059 = vpack.c.b16 %v3928, %v3927
      %v4060 = vpack.c.b16 %v3930, %v3929
      %v4061 = vpack.c.b16 %v3932, %v3931
      %v4062 = vpack.c.b16 %v3934, %v3933
      %v4063 = vpack.c.b16 %v3936, %v3935
      %v4064 = vpack.c.b16 %v3938, %v3937
      %v4065 = vpack.c.b16 %v3940, %v3939
      %v4066 = vpack.c.b16 %v3942, %v3941
      %v4067 = vpack.c.b16 %v3944, %v3943
      %v4068 = vpack.c.b16 %v3946, %v3945
      %v4069 = vpack.c.b16 %v3948, %v3947
      %v4070 = vpack.c.b16 %v3950, %v3949
      %v4071 = vpack.c.b16 %v3952, %v3951
      %v4072 = vpack.c.b16 %v3954, %v3953
      %v4073 = vpack.c.b16 %v3956, %v3955
      %v4074 = vpack.c.b16 %v3958, %v3957
      %v4075 = vpack.c.b16 %v3960, %v3959
      %v4076 = vpack.c.b16 %v3962, %v3961
      %v4077 = vpack.c.b16 %v3964, %v3963
      %v4078 = vpack.c.b16 %v3966, %v3965
      %v4079 = vpack.c.b16 %v3968, %v3967
      %v4080 = vpack.c.b16 %v3970, %v3969
      %v4081 = vpack.c.b16 %v3972, %v3971
      %v4082 = vpack.c.b16 %v3974, %v3973
      %v4083 = vpack.c.b16 %v3976, %v3975
      %v4084 = vpack.c.b16 %v3978, %v3977
      %v4085 = vpack.c.b16 %v3980, %v3979
      %v4086 = vpack.c.b16 %v3982, %v3981
      %v4087 = vpack.c.b16 %v3984, %v3983
      %v4088 = vpack.c.b16 %v3986, %v3985
      %v4089 = vpack.c.b16 %v3988, %v3987
      %v4090 = vpack.c.b16 %v3990, %v3989
      %v4091 = vpack.c.b16 %v3992, %v3991
      %v4092 = vpack.c.b16 %v3994, %v3993
      %v4093 = vpack.c.b16 %v3996, %v3995
      %v4094 = vpack.c.b16 %v3998, %v3997
      %v4095 = vpack.c.b16 %v4000, %v3999
      %v4096 = vpack.c.b16 %v4002, %v4001
      %v4097 = vpack.c.b16 %v4004, %v4003
      %v4098 = vpack.c.b16 %v4006, %v4005
      %v4099 = vpack.c.b16 %v4008, %v4007
      %v4100 = vpack.c.b16 %v4010, %v4009
      %v4101 = vpack.c.b16 %v4012, %v4011
      %v4102 = vpack.c.b16 %v4014, %v4013
      %v4103 = vpack.c.b16 %v4016, %v4015
      %v4104 = vpack.c.b16 %v4018, %v4017
      %v4105 = vpack.c.b16 %v4020, %v4019
      %v4106 = vpack.c.b16 %v4022, %v4021
      %v4107 = vpack.c.b16 %v4024, %v4023
      %v4108 = vpack.c.b16 %v4026, %v4025
      %v4109 = vpack.c.b16 %v4028, %v4027
      %v4110 = vpack.c.b16 %v4030, %v4029
      %v4111 = vpack.c.b16 %v4032, %v4031
      %v4112 = vpack.c.b16 %v4034, %v4033
      %v4113 = vpack.c.b16 %v4036, %v4035
      %v4114 = vpack.c.b16 %v4038, %v4037
      %v4115 = vpack.c.b16 %v4040, %v4039
      %v4116 = vpack.c.b16 %v4042, %v4041
      %v4117 = vpack.c.b16 %v4044, %v4043
      %v4118 = vpack.c.b16 %v4046, %v4045
      %4191 = vmatpush.bf16.msra.mxu0 %v4054
      %4192 = vmatpush.bf16.msra.mxu0 %v4053
      %4193 = vmatpush.bf16.msra.mxu0 %v4052
      %4194 = vmatpush.bf16.msra.mxu0 %v4051
      %4195 = vmatpush.bf16.msra.mxu0 %v4050
      %4196 = vmatpush.bf16.msra.mxu0 %v4049
      %4197 = vmatpush.bf16.msra.mxu0 %v4048
      %4198 = vmatpush.bf16.msra.mxu0 %v4047
      %4199 = vmatmul.bf16.gmra.mxu0 %v3471
      %v4200 = vpop.f32.mrf.mxu0
      %v4201 = vadd.f32 0.0, %v4200
      %v4202 = vpop.f32.mrf.mxu0
      %v4203 = vadd.f32 0.0, %v4202
      %4204 = vmatmul.bf16.gmra.mxu0 %v3480
      %v4205 = vpop.f32.mrf.mxu0
      %v4206 = vadd.f32 0.0, %v4205
      %v4207 = vpop.f32.mrf.mxu0
      %v4208 = vadd.f32 0.0, %v4207
      %4209 = vmatmul.bf16.gmra.mxu0 %v3489
      %v4210 = vpop.f32.mrf.mxu0
      %v4211 = vadd.f32 0.0, %v4210
      %v4212 = vpop.f32.mrf.mxu0
      %v4213 = vadd.f32 0.0, %v4212
      %4214 = vmatmul.bf16.gmra.mxu0 %v3498
      %v4215 = vpop.f32.mrf.mxu0
      %v4216 = vadd.f32 0.0, %v4215
      %v4217 = vpop.f32.mrf.mxu0
      %v4218 = vadd.f32 0.0, %v4217
      %4219 = vmatmul.bf16.gmra.mxu0 %v3507
      %v4220 = vpop.f32.mrf.mxu0
      %v4221 = vadd.f32 0.0, %v4220
      %v4222 = vpop.f32.mrf.mxu0
      %v4223 = vadd.f32 0.0, %v4222
      %4224 = vmatmul.bf16.gmra.mxu0 %v3516
      %v4225 = vpop.f32.mrf.mxu0
      %v4226 = vadd.f32 0.0, %v4225
      %v4227 = vpop.f32.mrf.mxu0
      %v4228 = vadd.f32 0.0, %v4227
      %4229 = vmatmul.bf16.gmra.mxu0 %v3525
      %v4230 = vpop.f32.mrf.mxu0
      %v4231 = vadd.f32 0.0, %v4230
      %v4232 = vpop.f32.mrf.mxu0
      %v4233 = vadd.f32 0.0, %v4232
      %4234 = vmatmul.bf16.gmra.mxu0 %v3534
      %v4235 = vpop.f32.mrf.mxu0
      %v4236 = vadd.f32 0.0, %v4235
      %v4237 = vpop.f32.mrf.mxu0
      %v4238 = vadd.f32 0.0, %v4237
      %4239 = vmatmul.bf16.gmra.mxu0 %v3543
      %v4240 = vpop.f32.mrf.mxu0
      %v4241 = vadd.f32 0.0, %v4240
      %v4242 = vpop.f32.mrf.mxu0
      %v4243 = vadd.f32 0.0, %v4242
      %4244 = vmatmul.bf16.gmra.mxu0 %v3552
      %v4245 = vpop.f32.mrf.mxu0
      %v4246 = vadd.f32 0.0, %v4245
      %v4247 = vpop.f32.mrf.mxu0
      %v4248 = vadd.f32 0.0, %v4247
      %4249 = vmatmul.bf16.gmra.mxu0 %v3561
      %v4250 = vpop.f32.mrf.mxu0
      %v4251 = vadd.f32 0.0, %v4250
      %v4252 = vpop.f32.mrf.mxu0
      %v4253 = vadd.f32 0.0, %v4252
      %4254 = vmatmul.bf16.gmra.mxu0 %v3570
      %v4255 = vpop.f32.mrf.mxu0
      %v4256 = vadd.f32 0.0, %v4255
      %v4257 = vpop.f32.mrf.mxu0
      %v4258 = vadd.f32 0.0, %v4257
      %4259 = vmatmul.bf16.gmra.mxu0 %v3579
      %v4260 = vpop.f32.mrf.mxu0
      %v4261 = vadd.f32 0.0, %v4260
      %v4262 = vpop.f32.mrf.mxu0
      %v4263 = vadd.f32 0.0, %v4262
      %4264 = vmatmul.bf16.gmra.mxu0 %v3588
      %v4265 = vpop.f32.mrf.mxu0
      %v4266 = vadd.f32 0.0, %v4265
      %v4267 = vpop.f32.mrf.mxu0
      %v4268 = vadd.f32 0.0, %v4267
      %4269 = vmatmul.bf16.gmra.mxu0 %v3597
      %v4270 = vpop.f32.mrf.mxu0
      %v4271 = vadd.f32 0.0, %v4270
      %v4272 = vpop.f32.mrf.mxu0
      %v4273 = vadd.f32 0.0, %v4272
      %4274 = vmatmul.bf16.gmra.mxu0 %v3606
      %v4275 = vpop.f32.mrf.mxu0
      %v4276 = vadd.f32 0.0, %v4275
      %v4277 = vpop.f32.mrf.mxu0
      %v4278 = vadd.f32 0.0, %v4277
      %4279 = vdwg.mxu0
      %4280 = vmatpush.bf16.msra.mxu0 %v4062
      %4281 = vmatpush.bf16.msra.mxu0 %v4061
      %4282 = vmatpush.bf16.msra.mxu0 %v4060
      %4283 = vmatpush.bf16.msra.mxu0 %v4059
      %4284 = vmatpush.bf16.msra.mxu0 %v4058
      %4285 = vmatpush.bf16.msra.mxu0 %v4057
      %4286 = vmatpush.bf16.msra.mxu0 %v4056
      %4287 = vmatpush.bf16.msra.mxu0 %v4055
      %4288 = vmatmul.bf16.gmra.mxu0 %v3472
      %v4289 = vpop.f32.mrf.mxu0
      %v4290 = vadd.f32 %v4201, %v4289
      %v4291 = vpop.f32.mrf.mxu0
      %v4292 = vadd.f32 %v4203, %v4291
      %4293 = vmatmul.bf16.gmra.mxu0 %v3481
      %v4294 = vpop.f32.mrf.mxu0
      %v4295 = vadd.f32 %v4206, %v4294
      %v4296 = vpop.f32.mrf.mxu0
      %v4297 = vadd.f32 %v4208, %v4296
      %4298 = vmatmul.bf16.gmra.mxu0 %v3490
      %v4299 = vpop.f32.mrf.mxu0
      %v4300 = vadd.f32 %v4211, %v4299
      %v4301 = vpop.f32.mrf.mxu0
      %v4302 = vadd.f32 %v4213, %v4301
      %4303 = vmatmul.bf16.gmra.mxu0 %v3499
      %v4304 = vpop.f32.mrf.mxu0
      %v4305 = vadd.f32 %v4216, %v4304
      %v4306 = vpop.f32.mrf.mxu0
      %v4307 = vadd.f32 %v4218, %v4306
      %4308 = vmatmul.bf16.gmra.mxu0 %v3508
      %v4309 = vpop.f32.mrf.mxu0
      %v4310 = vadd.f32 %v4221, %v4309
      %v4311 = vpop.f32.mrf.mxu0
      %v4312 = vadd.f32 %v4223, %v4311
      %4313 = vmatmul.bf16.gmra.mxu0 %v3517
      %v4314 = vpop.f32.mrf.mxu0
      %v4315 = vadd.f32 %v4226, %v4314
      %v4316 = vpop.f32.mrf.mxu0
      %v4317 = vadd.f32 %v4228, %v4316
      %4318 = vmatmul.bf16.gmra.mxu0 %v3526
      %v4319 = vpop.f32.mrf.mxu0
      %v4320 = vadd.f32 %v4231, %v4319
      %v4321 = vpop.f32.mrf.mxu0
      %v4322 = vadd.f32 %v4233, %v4321
      %4323 = vmatmul.bf16.gmra.mxu0 %v3535
      %v4324 = vpop.f32.mrf.mxu0
      %v4325 = vadd.f32 %v4236, %v4324
      %v4326 = vpop.f32.mrf.mxu0
      %v4327 = vadd.f32 %v4238, %v4326
      %4328 = vmatmul.bf16.gmra.mxu0 %v3544
      %v4329 = vpop.f32.mrf.mxu0
      %v4330 = vadd.f32 %v4241, %v4329
      %v4331 = vpop.f32.mrf.mxu0
      %v4332 = vadd.f32 %v4243, %v4331
      %4333 = vmatmul.bf16.gmra.mxu0 %v3553
      %v4334 = vpop.f32.mrf.mxu0
      %v4335 = vadd.f32 %v4246, %v4334
      %v4336 = vpop.f32.mrf.mxu0
      %v4337 = vadd.f32 %v4248, %v4336
      %4338 = vmatmul.bf16.gmra.mxu0 %v3562
      %v4339 = vpop.f32.mrf.mxu0
      %v4340 = vadd.f32 %v4251, %v4339
      %v4341 = vpop.f32.mrf.mxu0
      %v4342 = vadd.f32 %v4253, %v4341
      %4343 = vmatmul.bf16.gmra.mxu0 %v3571
      %v4344 = vpop.f32.mrf.mxu0
      %v4345 = vadd.f32 %v4256, %v4344
      %v4346 = vpop.f32.mrf.mxu0
      %v4347 = vadd.f32 %v4258, %v4346
      %4348 = vmatmul.bf16.gmra.mxu0 %v3580
      %v4349 = vpop.f32.mrf.mxu0
      %v4350 = vadd.f32 %v4261, %v4349
      %v4351 = vpop.f32.mrf.mxu0
      %v4352 = vadd.f32 %v4263, %v4351
      %4353 = vmatmul.bf16.gmra.mxu0 %v3589
      %v4354 = vpop.f32.mrf.mxu0
      %v4355 = vadd.f32 %v4266, %v4354
      %v4356 = vpop.f32.mrf.mxu0
      %v4357 = vadd.f32 %v4268, %v4356
      %4358 = vmatmul.bf16.gmra.mxu0 %v3598
      %v4359 = vpop.f32.mrf.mxu0
      %v4360 = vadd.f32 %v4271, %v4359
      %v4361 = vpop.f32.mrf.mxu0
      %v4362 = vadd.f32 %v4273, %v4361
      %4363 = vmatmul.bf16.gmra.mxu0 %v3607
      %v4364 = vpop.f32.mrf.mxu0
      %v4365 = vadd.f32 %v4276, %v4364
      %v4366 = vpop.f32.mrf.mxu0
      %v4367 = vadd.f32 %v4278, %v4366
      %4368 = vdwg.mxu0
      %4369 = vmatpush.bf16.msra.mxu0 %v4070
      %4370 = vmatpush.bf16.msra.mxu0 %v4069
      %4371 = vmatpush.bf16.msra.mxu0 %v4068
      %4372 = vmatpush.bf16.msra.mxu0 %v4067
      %4373 = vmatpush.bf16.msra.mxu0 %v4066
      %4374 = vmatpush.bf16.msra.mxu0 %v4065
      %4375 = vmatpush.bf16.msra.mxu0 %v4064
      %4376 = vmatpush.bf16.msra.mxu0 %v4063
      %4377 = vmatmul.bf16.gmra.mxu0 %v3473
      %v4378 = vpop.f32.mrf.mxu0
      %v4379 = vadd.f32 %v4290, %v4378
      %v4380 = vpop.f32.mrf.mxu0
      %v4381 = vadd.f32 %v4292, %v4380
      %4382 = vmatmul.bf16.gmra.mxu0 %v3482
      %v4383 = vpop.f32.mrf.mxu0
      %v4384 = vadd.f32 %v4295, %v4383
      %v4385 = vpop.f32.mrf.mxu0
      %v4386 = vadd.f32 %v4297, %v4385
      %4387 = vmatmul.bf16.gmra.mxu0 %v3491
      %v4388 = vpop.f32.mrf.mxu0
      %v4389 = vadd.f32 %v4300, %v4388
      %v4390 = vpop.f32.mrf.mxu0
      %v4391 = vadd.f32 %v4302, %v4390
      %4392 = vmatmul.bf16.gmra.mxu0 %v3500
      %v4393 = vpop.f32.mrf.mxu0
      %v4394 = vadd.f32 %v4305, %v4393
      %v4395 = vpop.f32.mrf.mxu0
      %v4396 = vadd.f32 %v4307, %v4395
      %4397 = vmatmul.bf16.gmra.mxu0 %v3509
      %v4398 = vpop.f32.mrf.mxu0
      %v4399 = vadd.f32 %v4310, %v4398
      %v4400 = vpop.f32.mrf.mxu0
      %v4401 = vadd.f32 %v4312, %v4400
      %4402 = vmatmul.bf16.gmra.mxu0 %v3518
      %v4403 = vpop.f32.mrf.mxu0
      %v4404 = vadd.f32 %v4315, %v4403
      %v4405 = vpop.f32.mrf.mxu0
      %v4406 = vadd.f32 %v4317, %v4405
      %4407 = vmatmul.bf16.gmra.mxu0 %v3527
      %v4408 = vpop.f32.mrf.mxu0
      %v4409 = vadd.f32 %v4320, %v4408
      %v4410 = vpop.f32.mrf.mxu0
      %v4411 = vadd.f32 %v4322, %v4410
      %4412 = vmatmul.bf16.gmra.mxu0 %v3536
      %v4413 = vpop.f32.mrf.mxu0
      %v4414 = vadd.f32 %v4325, %v4413
      %v4415 = vpop.f32.mrf.mxu0
      %v4416 = vadd.f32 %v4327, %v4415
      %4417 = vmatmul.bf16.gmra.mxu0 %v3545
      %v4418 = vpop.f32.mrf.mxu0
      %v4419 = vadd.f32 %v4330, %v4418
      %v4420 = vpop.f32.mrf.mxu0
      %v4421 = vadd.f32 %v4332, %v4420
      %4422 = vmatmul.bf16.gmra.mxu0 %v3554
      %v4423 = vpop.f32.mrf.mxu0
      %v4424 = vadd.f32 %v4335, %v4423
      %v4425 = vpop.f32.mrf.mxu0
      %v4426 = vadd.f32 %v4337, %v4425
      %4427 = vmatmul.bf16.gmra.mxu0 %v3563
      %v4428 = vpop.f32.mrf.mxu0
      %v4429 = vadd.f32 %v4340, %v4428
      %v4430 = vpop.f32.mrf.mxu0
      %v4431 = vadd.f32 %v4342, %v4430
      %4432 = vmatmul.bf16.gmra.mxu0 %v3572
      %v4433 = vpop.f32.mrf.mxu0
      %v4434 = vadd.f32 %v4345, %v4433
      %v4435 = vpop.f32.mrf.mxu0
      %v4436 = vadd.f32 %v4347, %v4435
      %4437 = vmatmul.bf16.gmra.mxu0 %v3581
      %v4438 = vpop.f32.mrf.mxu0
      %v4439 = vadd.f32 %v4350, %v4438
      %v4440 = vpop.f32.mrf.mxu0
      %v4441 = vadd.f32 %v4352, %v4440
      %4442 = vmatmul.bf16.gmra.mxu0 %v3590
      %v4443 = vpop.f32.mrf.mxu0
      %v4444 = vadd.f32 %v4355, %v4443
      %v4445 = vpop.f32.mrf.mxu0
      %v4446 = vadd.f32 %v4357, %v4445
      %4447 = vmatmul.bf16.gmra.mxu0 %v3599
      %v4448 = vpop.f32.mrf.mxu0
      %v4449 = vadd.f32 %v4360, %v4448
      %v4450 = vpop.f32.mrf.mxu0
      %v4451 = vadd.f32 %v4362, %v4450
      %4452 = vmatmul.bf16.gmra.mxu0 %v3608
      %v4453 = vpop.f32.mrf.mxu0
      %v4454 = vadd.f32 %v4365, %v4453
      %v4455 = vpop.f32.mrf.mxu0
      %v4456 = vadd.f32 %v4367, %v4455
      %4457 = vdwg.mxu0
      %4458 = vmatpush.bf16.msra.mxu0 %v4078
      %4459 = vmatpush.bf16.msra.mxu0 %v4077
      %4460 = vmatpush.bf16.msra.mxu0 %v4076
      %4461 = vmatpush.bf16.msra.mxu0 %v4075
      %4462 = vmatpush.bf16.msra.mxu0 %v4074
      %4463 = vmatpush.bf16.msra.mxu0 %v4073
      %4464 = vmatpush.bf16.msra.mxu0 %v4072
      %4465 = vmatpush.bf16.msra.mxu0 %v4071
      %4466 = vmatmul.bf16.gmra.mxu0 %v3474
      %v4467 = vpop.f32.mrf.mxu0
      %v4468 = vadd.f32 %v4379, %v4467
      %v4469 = vpop.f32.mrf.mxu0
      %v4470 = vadd.f32 %v4381, %v4469
      %4471 = vmatmul.bf16.gmra.mxu0 %v3483
      %v4472 = vpop.f32.mrf.mxu0
      %v4473 = vadd.f32 %v4384, %v4472
      %v4474 = vpop.f32.mrf.mxu0
      %v4475 = vadd.f32 %v4386, %v4474
      %4476 = vmatmul.bf16.gmra.mxu0 %v3492
      %v4477 = vpop.f32.mrf.mxu0
      %v4478 = vadd.f32 %v4389, %v4477
      %v4479 = vpop.f32.mrf.mxu0
      %v4480 = vadd.f32 %v4391, %v4479
      %4481 = vmatmul.bf16.gmra.mxu0 %v3501
      %v4482 = vpop.f32.mrf.mxu0
      %v4483 = vadd.f32 %v4394, %v4482
      %v4484 = vpop.f32.mrf.mxu0
      %v4485 = vadd.f32 %v4396, %v4484
      %4486 = vmatmul.bf16.gmra.mxu0 %v3510
      %v4487 = vpop.f32.mrf.mxu0
      %v4488 = vadd.f32 %v4399, %v4487
      %v4489 = vpop.f32.mrf.mxu0
      %v4490 = vadd.f32 %v4401, %v4489
      %4491 = vmatmul.bf16.gmra.mxu0 %v3519
      %v4492 = vpop.f32.mrf.mxu0
      %v4493 = vadd.f32 %v4404, %v4492
      %v4494 = vpop.f32.mrf.mxu0
      %v4495 = vadd.f32 %v4406, %v4494
      %4496 = vmatmul.bf16.gmra.mxu0 %v3528
      %v4497 = vpop.f32.mrf.mxu0
      %v4498 = vadd.f32 %v4409, %v4497
      %v4499 = vpop.f32.mrf.mxu0
      %v4500 = vadd.f32 %v4411, %v4499
      %4501 = vmatmul.bf16.gmra.mxu0 %v3537
      %v4502 = vpop.f32.mrf.mxu0
      %v4503 = vadd.f32 %v4414, %v4502
      %v4504 = vpop.f32.mrf.mxu0
      %v4505 = vadd.f32 %v4416, %v4504
      %4506 = vmatmul.bf16.gmra.mxu0 %v3546
      %v4507 = vpop.f32.mrf.mxu0
      %v4508 = vadd.f32 %v4419, %v4507
      %v4509 = vpop.f32.mrf.mxu0
      %v4510 = vadd.f32 %v4421, %v4509
      %4511 = vmatmul.bf16.gmra.mxu0 %v3555
      %v4512 = vpop.f32.mrf.mxu0
      %v4513 = vadd.f32 %v4424, %v4512
      %v4514 = vpop.f32.mrf.mxu0
      %v4515 = vadd.f32 %v4426, %v4514
      %4516 = vmatmul.bf16.gmra.mxu0 %v3564
      %v4517 = vpop.f32.mrf.mxu0
      %v4518 = vadd.f32 %v4429, %v4517
      %v4519 = vpop.f32.mrf.mxu0
      %v4520 = vadd.f32 %v4431, %v4519
      %4521 = vmatmul.bf16.gmra.mxu0 %v3573
      %v4522 = vpop.f32.mrf.mxu0
      %v4523 = vadd.f32 %v4434, %v4522
      %v4524 = vpop.f32.mrf.mxu0
      %v4525 = vadd.f32 %v4436, %v4524
      %4526 = vmatmul.bf16.gmra.mxu0 %v3582
      %v4527 = vpop.f32.mrf.mxu0
      %v4528 = vadd.f32 %v4439, %v4527
      %v4529 = vpop.f32.mrf.mxu0
      %v4530 = vadd.f32 %v4441, %v4529
      %4531 = vmatmul.bf16.gmra.mxu0 %v3591
      %v4532 = vpop.f32.mrf.mxu0
      %v4533 = vadd.f32 %v4444, %v4532
      %v4534 = vpop.f32.mrf.mxu0
      %v4535 = vadd.f32 %v4446, %v4534
      %4536 = vmatmul.bf16.gmra.mxu0 %v3600
      %v4537 = vpop.f32.mrf.mxu0
      %v4538 = vadd.f32 %v4449, %v4537
      %v4539 = vpop.f32.mrf.mxu0
      %v4540 = vadd.f32 %v4451, %v4539
      %4541 = vmatmul.bf16.gmra.mxu0 %v3609
      %v4542 = vpop.f32.mrf.mxu0
      %v4543 = vadd.f32 %v4454, %v4542
      %v4544 = vpop.f32.mrf.mxu0
      %v4545 = vadd.f32 %v4456, %v4544
      %4546 = vdwg.mxu0
      %4547 = vmatpush.bf16.msra.mxu0 %v4086
      %4548 = vmatpush.bf16.msra.mxu0 %v4085
      %4549 = vmatpush.bf16.msra.mxu0 %v4084
      %4550 = vmatpush.bf16.msra.mxu0 %v4083
      %4551 = vmatpush.bf16.msra.mxu0 %v4082
      %4552 = vmatpush.bf16.msra.mxu0 %v4081
      %4553 = vmatpush.bf16.msra.mxu0 %v4080
      %4554 = vmatpush.bf16.msra.mxu0 %v4079
      %4555 = vmatmul.bf16.gmra.mxu0 %v3475
      %v4556 = vpop.f32.mrf.mxu0
      %v4557 = vadd.f32 %v4468, %v4556
      %v4558 = vpop.f32.mrf.mxu0
      %v4559 = vadd.f32 %v4470, %v4558
      %4560 = vmatmul.bf16.gmra.mxu0 %v3484
      %v4561 = vpop.f32.mrf.mxu0
      %v4562 = vadd.f32 %v4473, %v4561
      %v4563 = vpop.f32.mrf.mxu0
      %v4564 = vadd.f32 %v4475, %v4563
      %4565 = vmatmul.bf16.gmra.mxu0 %v3493
      %v4566 = vpop.f32.mrf.mxu0
      %v4567 = vadd.f32 %v4478, %v4566
      %v4568 = vpop.f32.mrf.mxu0
      %v4569 = vadd.f32 %v4480, %v4568
      %4570 = vmatmul.bf16.gmra.mxu0 %v3502
      %v4571 = vpop.f32.mrf.mxu0
      %v4572 = vadd.f32 %v4483, %v4571
      %v4573 = vpop.f32.mrf.mxu0
      %v4574 = vadd.f32 %v4485, %v4573
      %4575 = vmatmul.bf16.gmra.mxu0 %v3511
      %v4576 = vpop.f32.mrf.mxu0
      %v4577 = vadd.f32 %v4488, %v4576
      %v4578 = vpop.f32.mrf.mxu0
      %v4579 = vadd.f32 %v4490, %v4578
      %4580 = vmatmul.bf16.gmra.mxu0 %v3520
      %v4581 = vpop.f32.mrf.mxu0
      %v4582 = vadd.f32 %v4493, %v4581
      %v4583 = vpop.f32.mrf.mxu0
      %v4584 = vadd.f32 %v4495, %v4583
      %4585 = vmatmul.bf16.gmra.mxu0 %v3529
      %v4586 = vpop.f32.mrf.mxu0
      %v4587 = vadd.f32 %v4498, %v4586
      %v4588 = vpop.f32.mrf.mxu0
      %v4589 = vadd.f32 %v4500, %v4588
      %4590 = vmatmul.bf16.gmra.mxu0 %v3538
      %v4591 = vpop.f32.mrf.mxu0
      %v4592 = vadd.f32 %v4503, %v4591
      %v4593 = vpop.f32.mrf.mxu0
      %v4594 = vadd.f32 %v4505, %v4593
      %4595 = vmatmul.bf16.gmra.mxu0 %v3547
      %v4596 = vpop.f32.mrf.mxu0
      %v4597 = vadd.f32 %v4508, %v4596
      %v4598 = vpop.f32.mrf.mxu0
      %v4599 = vadd.f32 %v4510, %v4598
      %4600 = vmatmul.bf16.gmra.mxu0 %v3556
      %v4601 = vpop.f32.mrf.mxu0
      %v4602 = vadd.f32 %v4513, %v4601
      %v4603 = vpop.f32.mrf.mxu0
      %v4604 = vadd.f32 %v4515, %v4603
      %4605 = vmatmul.bf16.gmra.mxu0 %v3565
      %v4606 = vpop.f32.mrf.mxu0
      %v4607 = vadd.f32 %v4518, %v4606
      %v4608 = vpop.f32.mrf.mxu0
      %v4609 = vadd.f32 %v4520, %v4608
      %4610 = vmatmul.bf16.gmra.mxu0 %v3574
      %v4611 = vpop.f32.mrf.mxu0
      %v4612 = vadd.f32 %v4523, %v4611
      %v4613 = vpop.f32.mrf.mxu0
      %v4614 = vadd.f32 %v4525, %v4613
      %4615 = vmatmul.bf16.gmra.mxu0 %v3583
      %v4616 = vpop.f32.mrf.mxu0
      %v4617 = vadd.f32 %v4528, %v4616
      %v4618 = vpop.f32.mrf.mxu0
      %v4619 = vadd.f32 %v4530, %v4618
      %4620 = vmatmul.bf16.gmra.mxu0 %v3592
      %v4621 = vpop.f32.mrf.mxu0
      %v4622 = vadd.f32 %v4533, %v4621
      %v4623 = vpop.f32.mrf.mxu0
      %v4624 = vadd.f32 %v4535, %v4623
      %4625 = vmatmul.bf16.gmra.mxu0 %v3601
      %v4626 = vpop.f32.mrf.mxu0
      %v4627 = vadd.f32 %v4538, %v4626
      %v4628 = vpop.f32.mrf.mxu0
      %v4629 = vadd.f32 %v4540, %v4628
      %4630 = vmatmul.bf16.gmra.mxu0 %v3610
      %v4631 = vpop.f32.mrf.mxu0
      %v4632 = vadd.f32 %v4543, %v4631
      %v4633 = vpop.f32.mrf.mxu0
      %v4634 = vadd.f32 %v4545, %v4633
      %4635 = vdwg.mxu0
      %4636 = vmatpush.bf16.msra.mxu0 %v4094
      %4637 = vmatpush.bf16.msra.mxu0 %v4093
      %4638 = vmatpush.bf16.msra.mxu0 %v4092
      %4639 = vmatpush.bf16.msra.mxu0 %v4091
      %4640 = vmatpush.bf16.msra.mxu0 %v4090
      %4641 = vmatpush.bf16.msra.mxu0 %v4089
      %4642 = vmatpush.bf16.msra.mxu0 %v4088
      %4643 = vmatpush.bf16.msra.mxu0 %v4087
      %4644 = vmatmul.bf16.gmra.mxu0 %v3476
      %v4645 = vpop.f32.mrf.mxu0
      %v4646 = vadd.f32 %v4557, %v4645
      %v4647 = vpop.f32.mrf.mxu0
      %v4648 = vadd.f32 %v4559, %v4647
      %4649 = vmatmul.bf16.gmra.mxu0 %v3485
      %v4650 = vpop.f32.mrf.mxu0
      %v4651 = vadd.f32 %v4562, %v4650
      %v4652 = vpop.f32.mrf.mxu0
      %v4653 = vadd.f32 %v4564, %v4652
      %4654 = vmatmul.bf16.gmra.mxu0 %v3494
      %v4655 = vpop.f32.mrf.mxu0
      %v4656 = vadd.f32 %v4567, %v4655
      %v4657 = vpop.f32.mrf.mxu0
      %v4658 = vadd.f32 %v4569, %v4657
      %4659 = vmatmul.bf16.gmra.mxu0 %v3503
      %v4660 = vpop.f32.mrf.mxu0
      %v4661 = vadd.f32 %v4572, %v4660
      %v4662 = vpop.f32.mrf.mxu0
      %v4663 = vadd.f32 %v4574, %v4662
      %4664 = vmatmul.bf16.gmra.mxu0 %v3512
      %v4665 = vpop.f32.mrf.mxu0
      %v4666 = vadd.f32 %v4577, %v4665
      %v4667 = vpop.f32.mrf.mxu0
      %v4668 = vadd.f32 %v4579, %v4667
      %4669 = vmatmul.bf16.gmra.mxu0 %v3521
      %v4670 = vpop.f32.mrf.mxu0
      %v4671 = vadd.f32 %v4582, %v4670
      %v4672 = vpop.f32.mrf.mxu0
      %v4673 = vadd.f32 %v4584, %v4672
      %4674 = vmatmul.bf16.gmra.mxu0 %v3530
      %v4675 = vpop.f32.mrf.mxu0
      %v4676 = vadd.f32 %v4587, %v4675
      %v4677 = vpop.f32.mrf.mxu0
      %v4678 = vadd.f32 %v4589, %v4677
      %4679 = vmatmul.bf16.gmra.mxu0 %v3539
      %v4680 = vpop.f32.mrf.mxu0
      %v4681 = vadd.f32 %v4592, %v4680
      %v4682 = vpop.f32.mrf.mxu0
      %v4683 = vadd.f32 %v4594, %v4682
      %4684 = vmatmul.bf16.gmra.mxu0 %v3548
      %v4685 = vpop.f32.mrf.mxu0
      %v4686 = vadd.f32 %v4597, %v4685
      %v4687 = vpop.f32.mrf.mxu0
      %v4688 = vadd.f32 %v4599, %v4687
      %4689 = vmatmul.bf16.gmra.mxu0 %v3557
      %v4690 = vpop.f32.mrf.mxu0
      %v4691 = vadd.f32 %v4602, %v4690
      %v4692 = vpop.f32.mrf.mxu0
      %v4693 = vadd.f32 %v4604, %v4692
      %4694 = vmatmul.bf16.gmra.mxu0 %v3566
      %v4695 = vpop.f32.mrf.mxu0
      %v4696 = vadd.f32 %v4607, %v4695
      %v4697 = vpop.f32.mrf.mxu0
      %v4698 = vadd.f32 %v4609, %v4697
      %4699 = vmatmul.bf16.gmra.mxu0 %v3575
      %v4700 = vpop.f32.mrf.mxu0
      %v4701 = vadd.f32 %v4612, %v4700
      %v4702 = vpop.f32.mrf.mxu0
      %v4703 = vadd.f32 %v4614, %v4702
      %4704 = vmatmul.bf16.gmra.mxu0 %v3584
      %v4705 = vpop.f32.mrf.mxu0
      %v4706 = vadd.f32 %v4617, %v4705
      %v4707 = vpop.f32.mrf.mxu0
      %v4708 = vadd.f32 %v4619, %v4707
      %4709 = vmatmul.bf16.gmra.mxu0 %v3593
      %v4710 = vpop.f32.mrf.mxu0
      %v4711 = vadd.f32 %v4622, %v4710
      %v4712 = vpop.f32.mrf.mxu0
      %v4713 = vadd.f32 %v4624, %v4712
      %4714 = vmatmul.bf16.gmra.mxu0 %v3602
      %v4715 = vpop.f32.mrf.mxu0
      %v4716 = vadd.f32 %v4627, %v4715
      %v4717 = vpop.f32.mrf.mxu0
      %v4718 = vadd.f32 %v4629, %v4717
      %4719 = vmatmul.bf16.gmra.mxu0 %v3611
      %v4720 = vpop.f32.mrf.mxu0
      %v4721 = vadd.f32 %v4632, %v4720
      %v4722 = vpop.f32.mrf.mxu0
      %v4723 = vadd.f32 %v4634, %v4722
      %4724 = vdwg.mxu0
      %4725 = vmatpush.bf16.msra.mxu0 %v4102
      %4726 = vmatpush.bf16.msra.mxu0 %v4101
      %4727 = vmatpush.bf16.msra.mxu0 %v4100
      %4728 = vmatpush.bf16.msra.mxu0 %v4099
      %4729 = vmatpush.bf16.msra.mxu0 %v4098
      %4730 = vmatpush.bf16.msra.mxu0 %v4097
      %4731 = vmatpush.bf16.msra.mxu0 %v4096
      %4732 = vmatpush.bf16.msra.mxu0 %v4095
      %4733 = vmatmul.bf16.gmra.mxu0 %v3477
      %v4734 = vpop.f32.mrf.mxu0
      %v4735 = vadd.f32 %v4646, %v4734
      %v4736 = vpop.f32.mrf.mxu0
      %v4737 = vadd.f32 %v4648, %v4736
      %4738 = vmatmul.bf16.gmra.mxu0 %v3486
      %v4739 = vpop.f32.mrf.mxu0
      %v4740 = vadd.f32 %v4651, %v4739
      %v4741 = vpop.f32.mrf.mxu0
      %v4742 = vadd.f32 %v4653, %v4741
      %4743 = vmatmul.bf16.gmra.mxu0 %v3495
      %v4744 = vpop.f32.mrf.mxu0
      %v4745 = vadd.f32 %v4656, %v4744
      %v4746 = vpop.f32.mrf.mxu0
      %v4747 = vadd.f32 %v4658, %v4746
      %4748 = vmatmul.bf16.gmra.mxu0 %v3504
      %v4749 = vpop.f32.mrf.mxu0
      %v4750 = vadd.f32 %v4661, %v4749
      %v4751 = vpop.f32.mrf.mxu0
      %v4752 = vadd.f32 %v4663, %v4751
      %4753 = vmatmul.bf16.gmra.mxu0 %v3513
      %v4754 = vpop.f32.mrf.mxu0
      %v4755 = vadd.f32 %v4666, %v4754
      %v4756 = vpop.f32.mrf.mxu0
      %v4757 = vadd.f32 %v4668, %v4756
      %4758 = vmatmul.bf16.gmra.mxu0 %v3522
      %v4759 = vpop.f32.mrf.mxu0
      %v4760 = vadd.f32 %v4671, %v4759
      %v4761 = vpop.f32.mrf.mxu0
      %v4762 = vadd.f32 %v4673, %v4761
      %4763 = vmatmul.bf16.gmra.mxu0 %v3531
      %v4764 = vpop.f32.mrf.mxu0
      %v4765 = vadd.f32 %v4676, %v4764
      %v4766 = vpop.f32.mrf.mxu0
      %v4767 = vadd.f32 %v4678, %v4766
      %4768 = vmatmul.bf16.gmra.mxu0 %v3540
      %v4769 = vpop.f32.mrf.mxu0
      %v4770 = vadd.f32 %v4681, %v4769
      %v4771 = vpop.f32.mrf.mxu0
      %v4772 = vadd.f32 %v4683, %v4771
      %4773 = vmatmul.bf16.gmra.mxu0 %v3549
      %v4774 = vpop.f32.mrf.mxu0
      %v4775 = vadd.f32 %v4686, %v4774
      %v4776 = vpop.f32.mrf.mxu0
      %v4777 = vadd.f32 %v4688, %v4776
      %4778 = vmatmul.bf16.gmra.mxu0 %v3558
      %v4779 = vpop.f32.mrf.mxu0
      %v4780 = vadd.f32 %v4691, %v4779
      %v4781 = vpop.f32.mrf.mxu0
      %v4782 = vadd.f32 %v4693, %v4781
      %4783 = vmatmul.bf16.gmra.mxu0 %v3567
      %v4784 = vpop.f32.mrf.mxu0
      %v4785 = vadd.f32 %v4696, %v4784
      %v4786 = vpop.f32.mrf.mxu0
      %v4787 = vadd.f32 %v4698, %v4786
      %4788 = vmatmul.bf16.gmra.mxu0 %v3576
      %v4789 = vpop.f32.mrf.mxu0
      %v4790 = vadd.f32 %v4701, %v4789
      %v4791 = vpop.f32.mrf.mxu0
      %v4792 = vadd.f32 %v4703, %v4791
      %4793 = vmatmul.bf16.gmra.mxu0 %v3585
      %v4794 = vpop.f32.mrf.mxu0
      %v4795 = vadd.f32 %v4706, %v4794
      %v4796 = vpop.f32.mrf.mxu0
      %v4797 = vadd.f32 %v4708, %v4796
      %4798 = vmatmul.bf16.gmra.mxu0 %v3594
      %v4799 = vpop.f32.mrf.mxu0
      %v4800 = vadd.f32 %v4711, %v4799
      %v4801 = vpop.f32.mrf.mxu0
      %v4802 = vadd.f32 %v4713, %v4801
      %4803 = vmatmul.bf16.gmra.mxu0 %v3603
      %v4804 = vpop.f32.mrf.mxu0
      %v4805 = vadd.f32 %v4716, %v4804
      %v4806 = vpop.f32.mrf.mxu0
      %v4807 = vadd.f32 %v4718, %v4806
      %4808 = vmatmul.bf16.gmra.mxu0 %v3612
      %v4809 = vpop.f32.mrf.mxu0
      %v4810 = vadd.f32 %v4721, %v4809
      %v4811 = vpop.f32.mrf.mxu0
      %v4812 = vadd.f32 %v4723, %v4811
      %4813 = vdwg.mxu0
      %4814 = vmatpush.bf16.msra.mxu0 %v4110
      %4815 = vmatpush.bf16.msra.mxu0 %v4109
      %4816 = vmatpush.bf16.msra.mxu0 %v4108
      %4817 = vmatpush.bf16.msra.mxu0 %v4107
      %4818 = vmatpush.bf16.msra.mxu0 %v4106
      %4819 = vmatpush.bf16.msra.mxu0 %v4105
      %4820 = vmatpush.bf16.msra.mxu0 %v4104
      %4821 = vmatpush.bf16.msra.mxu0 %v4103
      %4822 = vmatmul.bf16.gmra.mxu0 %v3478
      %v4823 = vpop.f32.mrf.mxu0
      %v4824 = vadd.f32 %v4735, %v4823
      %v4825 = vpop.f32.mrf.mxu0
      %v4826 = vadd.f32 %v4737, %v4825
      %4827 = vmatmul.bf16.gmra.mxu0 %v3487
      %v4828 = vpop.f32.mrf.mxu0
      %v4829 = vadd.f32 %v4740, %v4828
      %v4830 = vpop.f32.mrf.mxu0
      %v4831 = vadd.f32 %v4742, %v4830
      %4832 = vmatmul.bf16.gmra.mxu0 %v3496
      %v4833 = vpop.f32.mrf.mxu0
      %v4834 = vadd.f32 %v4745, %v4833
      %v4835 = vpop.f32.mrf.mxu0
      %v4836 = vadd.f32 %v4747, %v4835
      %4837 = vmatmul.bf16.gmra.mxu0 %v3505
      %v4838 = vpop.f32.mrf.mxu0
      %v4839 = vadd.f32 %v4750, %v4838
      %v4840 = vpop.f32.mrf.mxu0
      %v4841 = vadd.f32 %v4752, %v4840
      %4842 = vmatmul.bf16.gmra.mxu0 %v3514
      %v4843 = vpop.f32.mrf.mxu0
      %v4844 = vadd.f32 %v4755, %v4843
      %v4845 = vpop.f32.mrf.mxu0
      %v4846 = vadd.f32 %v4757, %v4845
      %4847 = vmatmul.bf16.gmra.mxu0 %v3523
      %v4848 = vpop.f32.mrf.mxu0
      %v4849 = vadd.f32 %v4760, %v4848
      %v4850 = vpop.f32.mrf.mxu0
      %v4851 = vadd.f32 %v4762, %v4850
      %4852 = vmatmul.bf16.gmra.mxu0 %v3532
      %v4853 = vpop.f32.mrf.mxu0
      %v4854 = vadd.f32 %v4765, %v4853
      %v4855 = vpop.f32.mrf.mxu0
      %v4856 = vadd.f32 %v4767, %v4855
      %4857 = vmatmul.bf16.gmra.mxu0 %v3541
      %v4858 = vpop.f32.mrf.mxu0
      %v4859 = vadd.f32 %v4770, %v4858
      %v4860 = vpop.f32.mrf.mxu0
      %v4861 = vadd.f32 %v4772, %v4860
      %4862 = vmatmul.bf16.gmra.mxu0 %v3550
      %v4863 = vpop.f32.mrf.mxu0
      %v4864 = vadd.f32 %v4775, %v4863
      %v4865 = vpop.f32.mrf.mxu0
      %v4866 = vadd.f32 %v4777, %v4865
      %4867 = vmatmul.bf16.gmra.mxu0 %v3559
      %v4868 = vpop.f32.mrf.mxu0
      %v4869 = vadd.f32 %v4780, %v4868
      %v4870 = vpop.f32.mrf.mxu0
      %v4871 = vadd.f32 %v4782, %v4870
      %4872 = vmatmul.bf16.gmra.mxu0 %v3568
      %v4873 = vpop.f32.mrf.mxu0
      %v4874 = vadd.f32 %v4785, %v4873
      %v4875 = vpop.f32.mrf.mxu0
      %v4876 = vadd.f32 %v4787, %v4875
      %4877 = vmatmul.bf16.gmra.mxu0 %v3577
      %v4878 = vpop.f32.mrf.mxu0
      %v4879 = vadd.f32 %v4790, %v4878
      %v4880 = vpop.f32.mrf.mxu0
      %v4881 = vadd.f32 %v4792, %v4880
      %4882 = vmatmul.bf16.gmra.mxu0 %v3586
      %v4883 = vpop.f32.mrf.mxu0
      %v4884 = vadd.f32 %v4795, %v4883
      %v4885 = vpop.f32.mrf.mxu0
      %v4886 = vadd.f32 %v4797, %v4885
      %4887 = vmatmul.bf16.gmra.mxu0 %v3595
      %v4888 = vpop.f32.mrf.mxu0
      %v4889 = vadd.f32 %v4800, %v4888
      %v4890 = vpop.f32.mrf.mxu0
      %v4891 = vadd.f32 %v4802, %v4890
      %4892 = vmatmul.bf16.gmra.mxu0 %v3604
      %v4893 = vpop.f32.mrf.mxu0
      %v4894 = vadd.f32 %v4805, %v4893
      %v4895 = vpop.f32.mrf.mxu0
      %v4896 = vadd.f32 %v4807, %v4895
      %4897 = vmatmul.bf16.gmra.mxu0 %v3613
      %v4898 = vpop.f32.mrf.mxu0
      %v4899 = vadd.f32 %v4810, %v4898
      %v4900 = vpop.f32.mrf.mxu0
      %v4901 = vadd.f32 %v4812, %v4900
      %4902 = vdwg.mxu0
      %4903 = vmatpush.bf16.msra.mxu0 %v4118
      %4904 = vmatpush.bf16.msra.mxu0 %v4117
      %4905 = vmatpush.bf16.msra.mxu0 %v4116
      %4906 = vmatpush.bf16.msra.mxu0 %v4115
      %4907 = vmatpush.bf16.msra.mxu0 %v4114
      %4908 = vmatpush.bf16.msra.mxu0 %v4113
      %4909 = vmatpush.bf16.msra.mxu0 %v4112
      %4910 = vmatpush.bf16.msra.mxu0 %v4111
      %4911 = vmatmul.bf16.gmra.mxu0 %v3479
      %v4912 = vpop.f32.mrf.mxu0
      %v4913 = vadd.f32 %v4824, %v4912
      %v4914 = vpop.f32.mrf.mxu0
      %v4915 = vadd.f32 %v4826, %v4914
      %4916 = vmatmul.bf16.gmra.mxu0 %v3488
      %v4917 = vpop.f32.mrf.mxu0
      %v4918 = vadd.f32 %v4829, %v4917
      %v4919 = vpop.f32.mrf.mxu0
      %v4920 = vadd.f32 %v4831, %v4919
      %4921 = vmatmul.bf16.gmra.mxu0 %v3497
      %v4922 = vpop.f32.mrf.mxu0
      %v4923 = vadd.f32 %v4834, %v4922
      %v4924 = vpop.f32.mrf.mxu0
      %v4925 = vadd.f32 %v4836, %v4924
      %4926 = vmatmul.bf16.gmra.mxu0 %v3506
      %v4927 = vpop.f32.mrf.mxu0
      %v4928 = vadd.f32 %v4839, %v4927
      %v4929 = vpop.f32.mrf.mxu0
      %v4930 = vadd.f32 %v4841, %v4929
      %4931 = vmatmul.bf16.gmra.mxu0 %v3515
      %v4932 = vpop.f32.mrf.mxu0
      %v4933 = vadd.f32 %v4844, %v4932
      %v4934 = vpop.f32.mrf.mxu0
      %v4935 = vadd.f32 %v4846, %v4934
      %4936 = vmatmul.bf16.gmra.mxu0 %v3524
      %v4937 = vpop.f32.mrf.mxu0
      %v4938 = vadd.f32 %v4849, %v4937
      %v4939 = vpop.f32.mrf.mxu0
      %v4940 = vadd.f32 %v4851, %v4939
      %4941 = vmatmul.bf16.gmra.mxu0 %v3533
      %v4942 = vpop.f32.mrf.mxu0
      %v4943 = vadd.f32 %v4854, %v4942
      %v4944 = vpop.f32.mrf.mxu0
      %v4945 = vadd.f32 %v4856, %v4944
      %4946 = vmatmul.bf16.gmra.mxu0 %v3542
      %v4947 = vpop.f32.mrf.mxu0
      %v4948 = vadd.f32 %v4859, %v4947
      %v4949 = vpop.f32.mrf.mxu0
      %v4950 = vadd.f32 %v4861, %v4949
      %4951 = vmatmul.bf16.gmra.mxu0 %v3551
      %v4952 = vpop.f32.mrf.mxu0
      %v4953 = vadd.f32 %v4864, %v4952
      %v4954 = vpop.f32.mrf.mxu0
      %v4955 = vadd.f32 %v4866, %v4954
      %4956 = vmatmul.bf16.gmra.mxu0 %v3560
      %v4957 = vpop.f32.mrf.mxu0
      %v4958 = vadd.f32 %v4869, %v4957
      %v4959 = vpop.f32.mrf.mxu0
      %v4960 = vadd.f32 %v4871, %v4959
      %4961 = vmatmul.bf16.gmra.mxu0 %v3569
      %v4962 = vpop.f32.mrf.mxu0
      %v4963 = vadd.f32 %v4874, %v4962
      %v4964 = vpop.f32.mrf.mxu0
      %v4965 = vadd.f32 %v4876, %v4964
      %4966 = vmatmul.bf16.gmra.mxu0 %v3578
      %v4967 = vpop.f32.mrf.mxu0
      %v4968 = vadd.f32 %v4879, %v4967
      %v4969 = vpop.f32.mrf.mxu0
      %v4970 = vadd.f32 %v4881, %v4969
      %4971 = vmatmul.bf16.gmra.mxu0 %v3587
      %v4972 = vpop.f32.mrf.mxu0
      %v4973 = vadd.f32 %v4884, %v4972
      %v4974 = vpop.f32.mrf.mxu0
      %v4975 = vadd.f32 %v4886, %v4974
      %4976 = vmatmul.bf16.gmra.mxu0 %v3596
      %v4977 = vpop.f32.mrf.mxu0
      %v4978 = vadd.f32 %v4889, %v4977
      %v4979 = vpop.f32.mrf.mxu0
      %v4980 = vadd.f32 %v4891, %v4979
      %4981 = vmatmul.bf16.gmra.mxu0 %v3605
      %v4982 = vpop.f32.mrf.mxu0
      %v4983 = vadd.f32 %v4894, %v4982
      %v4984 = vpop.f32.mrf.mxu0
      %v4985 = vadd.f32 %v4896, %v4984
      %4986 = vmatmul.bf16.gmra.mxu0 %v3614
      %v4987 = vpop.f32.mrf.mxu0
      %v4988 = vadd.f32 %v4899, %v4987
      %v4989 = vpop.f32.mrf.mxu0
      %v4990 = vadd.f32 %v4901, %v4989
      %4991 = vdwg.mxu0
      %4992 = vst [vmem:[%s208] sm:$0xff] %v4913
      %4993 = vst [vmem:[%s208 + $0x8] sm:$0xff] %v4915
      %4994 = vst [vmem:[%s208 + $0x10] sm:$0xff] %v4918
      %4995 = vst [vmem:[%s208 + $0x18] sm:$0xff] %v4920
      %4996 = vst [vmem:[%s208 + $0x20] sm:$0xff] %v4923
      %4997 = vst [vmem:[%s208 + $0x28] sm:$0xff] %v4925
      %4998 = vst [vmem:[%s208 + $0x30] sm:$0xff] %v4928
      %4999 = vst [vmem:[%s208 + $0x38] sm:$0xff] %v4930
      %5000 = vst [vmem:[%s208 + $0x40] sm:$0xff] %v4933
      %5001 = vst [vmem:[%s208 + $0x48] sm:$0xff] %v4935
      %5002 = vst [vmem:[%s208 + $0x50] sm:$0xff] %v4938
      %5003 = vst [vmem:[%s208 + $0x58] sm:$0xff] %v4940
      %5004 = vst [vmem:[%s208 + $0x60] sm:$0xff] %v4943
      %5005 = vst [vmem:[%s208 + $0x68] sm:$0xff] %v4945
      %5006 = vst [vmem:[%s208 + $0x70] sm:$0xff] %v4948
      %5007 = vst [vmem:[%s208 + $0x78] sm:$0xff] %v4950
      %5008 = vst [vmem:[%s208 + $0x80] sm:$0xff] %v4953
      %5009 = vst [vmem:[%s208 + $0x88] sm:$0xff] %v4955
      %5010 = vst [vmem:[%s208 + $0x90] sm:$0xff] %v4958
      %5011 = vst [vmem:[%s208 + $0x98] sm:$0xff] %v4960
      %5012 = vst [vmem:[%s208 + $0xa0] sm:$0xff] %v4963
      %5013 = vst [vmem:[%s208 + $0xa8] sm:$0xff] %v4965
      %5014 = vst [vmem:[%s208 + $0xb0] sm:$0xff] %v4968
      %5015 = vst [vmem:[%s208 + $0xb8] sm:$0xff] %v4970
      %5016 = vst [vmem:[%s208 + $0xc0] sm:$0xff] %v4973
      %5017 = vst [vmem:[%s208 + $0xc8] sm:$0xff] %v4975
      %5018 = vst [vmem:[%s208 + $0xd0] sm:$0xff] %v4978
      %5019 = vst [vmem:[%s208 + $0xd8] sm:$0xff] %v4980
      %5020 = vst [vmem:[%s208 + $0xe0] sm:$0xff] %v4983
      %5021 = vst [vmem:[%s208 + $0xe8] sm:$0xff] %v4985
      %5022 = vst [vmem:[%s208 + $0xf0] sm:$0xff] %v4988
      %5023 = vst [vmem:[%s208 + $0xf8] sm:$0xff] %v4990
      %v5024 = vadd.f32 %v4913, %v4915
      %v5025 = vadd.f32 %v5024, %v4918
      %v5026 = vadd.f32 %v5025, %v4920
      %v5027 = vadd.f32 %v5026, %v4923
      %v5028 = vadd.f32 %v5027, %v4925
      %v5029 = vadd.f32 %v5028, %v4928
      %v5030 = vadd.f32 %v5029, %v4930
      %v5031 = vadd.f32 %v5030, %v4933
      %v5032 = vadd.f32 %v5031, %v4935
      %v5033 = vadd.f32 %v5032, %v4938
      %v5034 = vadd.f32 %v5033, %v4940
      %v5035 = vadd.f32 %v5034, %v4943
      %v5036 = vadd.f32 %v5035, %v4945
      %v5037 = vadd.f32 %v5036, %v4948
      %v5038 = vadd.f32 %v5037, %v4950
      %v5039 = vadd.f32 %v5038, %v4953
      %v5040 = vadd.f32 %v5039, %v4955
      %v5041 = vadd.f32 %v5040, %v4958
      %v5042 = vadd.f32 %v5041, %v4960
      %v5043 = vadd.f32 %v5042, %v4963
      %v5044 = vadd.f32 %v5043, %v4965
      %v5045 = vadd.f32 %v5044, %v4968
      %v5046 = vadd.f32 %v5045, %v4970
      %v5047 = vadd.f32 %v5046, %v4973
      %v5048 = vadd.f32 %v5047, %v4975
      %v5049 = vadd.f32 %v5048, %v4978
      %v5050 = vadd.f32 %v5049, %v4980
      %v5051 = vadd.f32 %v5050, %v4983
      %v5052 = vadd.f32 %v5051, %v4985
      %v5053 = vadd.f32 %v5052, %v4988
      %v5054 = vadd.f32 %v5053, %v4990
      %v5055 = vrot.slane %v5054, 4
      %v5056 = vadd.f32 %v5054, %v5055
      %v5057 = vrot.slane %v5056, 2
      %v5058 = vadd.f32 %v5056, %v5057
      %v5059 = vrot.slane %v5058, 1
      %v5060 = vadd.f32 %v5058, %v5059
      %5061 = vst [vmem:[%s211] sm:$0x1] %v5060
      %v5062 = vmul.f32 %v4913, %v4913
      %v5063 = vmul.f32 %v4915, %v4915
      %v5064 = vmul.f32 %v4918, %v4918
      %v5065 = vmul.f32 %v4920, %v4920
      %v5066 = vmul.f32 %v4923, %v4923
      %v5067 = vmul.f32 %v4925, %v4925
      %v5068 = vmul.f32 %v4928, %v4928
      %v5069 = vmul.f32 %v4930, %v4930
      %v5070 = vmul.f32 %v4933, %v4933
      %v5071 = vmul.f32 %v4935, %v4935
      %v5072 = vmul.f32 %v4938, %v4938
      %v5073 = vmul.f32 %v4940, %v4940
      %v5074 = vmul.f32 %v4943, %v4943
      %v5075 = vmul.f32 %v4945, %v4945
      %v5076 = vmul.f32 %v4948, %v4948
      %v5077 = vmul.f32 %v4950, %v4950
      %v5078 = vmul.f32 %v4953, %v4953
      %v5079 = vmul.f32 %v4955, %v4955
      %v5080 = vmul.f32 %v4958, %v4958
      %v5081 = vmul.f32 %v4960, %v4960
      %v5082 = vmul.f32 %v4963, %v4963
      %v5083 = vmul.f32 %v4965, %v4965
      %v5084 = vmul.f32 %v4968, %v4968
      %v5085 = vmul.f32 %v4970, %v4970
      %v5086 = vmul.f32 %v4973, %v4973
      %v5087 = vmul.f32 %v4975, %v4975
      %v5088 = vmul.f32 %v4978, %v4978
      %v5089 = vmul.f32 %v4980, %v4980
      %v5090 = vmul.f32 %v4983, %v4983
      %v5091 = vmul.f32 %v4985, %v4985
      %v5092 = vmul.f32 %v4988, %v4988
      %v5093 = vmul.f32 %v4990, %v4990
      %v5094 = vadd.f32 %v5062, %v5063
      %v5095 = vadd.f32 %v5094, %v5064
      %v5096 = vadd.f32 %v5095, %v5065
      %v5097 = vadd.f32 %v5096, %v5066
      %v5098 = vadd.f32 %v5097, %v5067
      %v5099 = vadd.f32 %v5098, %v5068
      %v5100 = vadd.f32 %v5099, %v5069
      %v5101 = vadd.f32 %v5100, %v5070
      %v5102 = vadd.f32 %v5101, %v5071
      %v5103 = vadd.f32 %v5102, %v5072
      %v5104 = vadd.f32 %v5103, %v5073
      %v5105 = vadd.f32 %v5104, %v5074
      %v5106 = vadd.f32 %v5105, %v5075
      %v5107 = vadd.f32 %v5106, %v5076
      %v5108 = vadd.f32 %v5107, %v5077
      %v5109 = vadd.f32 %v5108, %v5078
      %v5110 = vadd.f32 %v5109, %v5079
      %v5111 = vadd.f32 %v5110, %v5080
      %v5112 = vadd.f32 %v5111, %v5081
      %v5113 = vadd.f32 %v5112, %v5082
      %v5114 = vadd.f32 %v5113, %v5083
      %v5115 = vadd.f32 %v5114, %v5084
      %v5116 = vadd.f32 %v5115, %v5085
      %v5117 = vadd.f32 %v5116, %v5086
      %v5118 = vadd.f32 %v5117, %v5087
      %v5119 = vadd.f32 %v5118, %v5088
      %v5120 = vadd.f32 %v5119, %v5089
      %v5121 = vadd.f32 %v5120, %v5090
      %v5122 = vadd.f32 %v5121, %v5091
      %v5123 = vadd.f32 %v5122, %v5092
      %v5124 = vadd.f32 %v5123, %v5093
      %v5125 = vrot.slane %v5124, 4
      %v5126 = vadd.f32 %v5124, %v5125
      %v5127 = vrot.slane %v5126, 2
      %v5128 = vadd.f32 %v5126, %v5127
      %v5129 = vrot.slane %v5128, 1
      %v5130 = vadd.f32 %v5128, %v5129
      %5131 = vst [vmem:[%s214] sm:$0x1] %v5130
      %p5132 = scmp.lt.s32.totalorder %s16, 1
      %s5133 = scalar_select %p5132, %s16, 1
      %s5134 = smul.addr %s5133, 32
      %s5135 = smul.addr %s5134, 8
      %s5136 = scalar_lea.vmem %s2, %s5135
      %p5137 = scmp.lt.s32.totalorder %s16, 1
      %s5138 = scalar_select %p5137, %s16, 1
      %s5139 = scalar_lea.vmem %s3, %s5138
      %p5140 = scmp.lt.s32.totalorder %s16, 1
      %s5141 = scalar_select %p5140, %s16, 1
      %s5142 = scalar_lea.vmem %s4, %s5141
      // Predicated region
      $region29: #{basic_block_pallas.3} parent=27 // pred_check
        %p5143 = pneg %p81
      $region30: #{basic_block_pallas.3} parent=27 // pred_check_branch
        %5145 = sbr.rel (%p5143) target = $region32
      $region31: #{basic_block_pallas.3} parent=27 // pred_region
        _
      $region32: #{basic_block_pallas.3} parent=27 // pred_fallthru
        _
      // Predicated region
      $region33: #{basic_block_pallas.3} parent=27 // pred_check
        %p5146 = pneg %p107
      $region34: #{basic_block_pallas.3} parent=27 // pred_check_branch
        %5148 = sbr.rel (%p5146) target = $region36
      $region35: #{basic_block_pallas.3} parent=27 // pred_region
        _
      $region36: #{basic_block_pallas.3} parent=27 // pred_fallthru
        _
      // Predicated region
      $region37: #{basic_block_pallas.3} parent=27 // pred_check
        %p5149 = pneg %p133
      $region38: #{basic_block_pallas.3} parent=27 // pred_check_branch
        %5151 = sbr.rel (%p5149) target = $region40
      $region39: #{basic_block_pallas.3} parent=27 // pred_region
        _
      $region40: #{basic_block_pallas.3} parent=27 // pred_fallthru
        _
    $region28: #{basic_block_pallas.3} parent=5 // pred_fallthru
      _
    %p5152 = scmp.le.s32.totalorder 2, %s11
    // Predicated region
    $region41: #{basic_block_pallas.3} parent=5 // pred_check
      %p5153 = pneg %p5152
    $region42: #{basic_block_pallas.3} parent=5 // pred_check_branch
      %5155 = sbr.rel (%p5153) target = $region44
    $region43: #{basic_block_pallas.3} parent=5 // pred_region
      %s5156 = ssub.s32 %s11, 2
      // Predicated region
      $region45: #{basic_block_pallas.3} parent=43 // pred_check
        %p5157 = pneg %p87
      $region46: #{basic_block_pallas.3} parent=43 // pred_check_branch
        %5159 = sbr.rel (%p5157) target = $region48
      $region47: #{basic_block_pallas.3} parent=43 // pred_region
        %p5160 = scmp.lt.s32.totalorder %s17, 1
        %s5161 = scalar_select %p5160, %s17, 1
        %s5162 = smul.addr %s5161, 32
        %s5163 = smul.addr %s5162, 8
        %s5164 = scalar_lea.vmem %s2, %s5163
      $region48: #{basic_block_pallas.3} parent=43 // pred_fallthru
        _
      // Predicated region
      $region49: #{basic_block_pallas.3} parent=43 // pred_check
        %p5165 = pneg %p113
      $region50: #{basic_block_pallas.3} parent=43 // pred_check_branch
        %5167 = sbr.rel (%p5165) target = $region52
      $region51: #{basic_block_pallas.3} parent=43 // pred_region
        %p5168 = scmp.lt.s32.totalorder %s17, 1
        %s5169 = scalar_select %p5168, %s17, 1
        %s5170 = scalar_lea.vmem %s3, %s5169
      $region52: #{basic_block_pallas.3} parent=43 // pred_fallthru
        _
      // Predicated region
      $region53: #{basic_block_pallas.3} parent=43 // pred_check
        %p5171 = pneg %p139
      $region54: #{basic_block_pallas.3} parent=43 // pred_check_branch
        %5173 = sbr.rel (%p5171) target = $region56
      $region55: #{basic_block_pallas.3} parent=43 // pred_region
        %p5174 = scmp.lt.s32.totalorder %s17, 1
        %s5175 = scalar_select %p5174, %s17, 1
        %s5176 = scalar_lea.vmem %s4, %s5175
      $region56: #{basic_block_pallas.3} parent=43 // pred_fallthru
        _
    $region44: #{basic_block_pallas.3} parent=5 // pred_fallthru
      _
  $region6: #{basic_block_pallas.3} parent=0 // loop_footer
    %s15 = sadd.s32 1, %s11
  $region7: #{basic_block_pallas.3} parent=0 // loop_footer_branch
    %10 = sbr.rel target = $region3
  $region8: #{basic_block_pallas.3} parent=0 // loop_exit
    _

// kernel: basic_block_pallas.4
$region0: #{basic_block_pallas.4}
  #allocation0 [shape = 'u32[]', space=smem, size = 0x4, offset = 0x4, fixed_abs, tag = 'smem constant byte address 0x4 - core index']
  #allocation1 [shape = 'u32[72,128]{1,0:T(1,128)}', space=vmem, size = 0x9000, scoped, tag = 'internal scratch']
  #allocation2 [shape = 'bf16[1,18,18,128]{3,2,1,0:T(8,128)(2,1)}', space=vmem, size = 0x1b000, scoped, tag = 'scratch operand']
  #allocation3 [shape = 'bf16[256,1152]{1,0:T(8,128)(2,1)}', space=vmem, size = 0x90000, scoped, tag = 'scratch operand']
  %s0 = inlined_call_operand.vmem [shape: f32[1,128], index: 0, kind: input, shape index: {}]
  %s1 = inlined_call_operand.vmem [shape: f32[1,128], index: 1, kind: input, shape index: {}]
  %s2 = inlined_call_operand.vmem [shape: f32[2,16,16,128], index: 2, kind: input, shape index: {}]
  %s3 = inlined_call_operand.vmem [shape: bf16[1152,128], index: 3, kind: input, shape index: {}]
  %s4 = inlined_call_operand.vmem [shape: f32[2,16,16,128], index: 4, kind: output, shape index: {0}]
  %s5 = inlined_call_operand.vmem [shape: f32[2,1,128], index: 5, kind: output, shape index: {1}]
  %s6 = inlined_call_operand.vmem [shape: f32[2,1,128], index: 6, kind: output, shape index: {2}]
  %7 = xla_tuple %s4, %s5, %s6
  %s8 = sld [smem:[#allocation0]]
  $region65: #{basic_block_pallas.4} parent=0
    _
  %s10 = ssub.s32 1, %s8
  %s11 = scalar_select 0, %s10, %s8
  loop: start=0, step=1, limit=4
  $region2: #{basic_block_pallas.4} parent=0 // loop_pre_header
    _
  $region3: #{basic_block_pallas.4} parent=0 // loop_header
    %s13 = sphi 0, %s17
    %p14 = scmp.ge.s32.totalorder %s13, 4
    %s21 = sphi 0, %s21
    %s23 = sphi 0, %s21
    %s24 = sphi 0, %s23
    %s38 = sphi 0, %s24
    %s42 = sphi 0, %s42
    %s44 = sphi 0, %s42
    %s45 = sphi 0, %s44
    %s59 = sphi 0, %s45
    %s65 = sphi 0, %s67
    %s68 = sphi 0, %s65
    %s69 = sphi 0, %s68
    %s85 = sphi 0, %s69
    %s89 = sphi 0, %s89
    %s91 = sphi 0, %s89
    %s92 = sphi 0, %s91
    %s106 = sphi 0, %s92
    %s112 = sphi 0, %s114
    %s115 = sphi 0, %s112
    %s116 = sphi 0, %s115
    %s132 = sphi 0, %s116
    %s138 = sphi 0, %s140
    %s141 = sphi 0, %s138
    %s142 = sphi 0, %s141
    %s158 = sphi 0, %s142
    %s164 = sphi 0, %s166
    %s167 = sphi 0, %s164
    %s168 = sphi 0, %s167
    %s184 = sphi 0, %s168
  $region4: #{basic_block_pallas.4} parent=0 // loop_header_branch
    %16 = sbr.rel (%p14) target = $region8
  $region5: #{basic_block_pallas.4} parent=0 // loop_body
    %s18 = ssub.s32 %s13, 1
    %s19 = ssub.s32 %s13, 2
    %s20 = sadd.s32 %s13, 1
    %s22 = sadd.s32 %s21, 1
    %p25 = scmp.eq.s32.totalorder %s13, 1
    %p26 = scmp.ne.s32.totalorder %s21, %s23
    %p27 = scmp.eq.s32.totalorder %s13, 0
    %p28 = por %p26, %p27
    %p29 = scmp.ne.s32.totalorder %s21, %s23
    %p30 = scmp.eq.s32.totalorder %s18, 1
    %p31 = por %p29, %p30
    %p32 = scmp.ne.s32.totalorder %s23, %s24
    %p33 = scmp.eq.s32.totalorder %s18, 0
    %p34 = por %p32, %p33
    %p35 = scmp.ne.s32.totalorder %s23, %s24
    %p36 = scmp.eq.s32.totalorder %s19, 1
    %p37 = por %p35, %p36
    %p39 = scmp.ne.s32.totalorder %s24, %s38
    %p40 = scmp.eq.s32.totalorder %s19, 0
    %p41 = por %p39, %p40
    %s43 = sadd.s32 %s42, 1
    %p46 = scmp.eq.s32.totalorder %s13, 1
    %p47 = scmp.ne.s32.totalorder %s42, %s44
    %p48 = scmp.eq.s32.totalorder %s13, 0
    %p49 = por %p47, %p48
    %p50 = scmp.ne.s32.totalorder %s42, %s44
    %p51 = scmp.eq.s32.totalorder %s18, 1
    %p52 = por %p50, %p51
    %p53 = scmp.ne.s32.totalorder %s44, %s45
    %p54 = scmp.eq.s32.totalorder %s18, 0
    %p55 = por %p53, %p54
    %p56 = scmp.ne.s32.totalorder %s44, %s45
    %p57 = scmp.eq.s32.totalorder %s19, 1
    %p58 = por %p56, %p57
    %p60 = scmp.ne.s32.totalorder %s45, %s59
    %p61 = scmp.eq.s32.totalorder %s19, 0
    %p62 = por %p60, %p61
    %s63 = ssub.s32 %s13, %s20
    %p64 = scmp.eq.s32.totalorder %s63, 0
    %s66 = sadd.s32 %s65, 1
    %s67 = scalar_select %p64, %s65, %s66
    %p70 = pneg %p64
    %p71 = scmp.eq.s32.totalorder %s13, 1
    %p72 = por %p70, %p71
    %p73 = scmp.ne.s32.totalorder %s65, %s68
    %p74 = scmp.eq.s32.totalorder %s13, 0
    %p75 = por %p73, %p74
    %p76 = scmp.ne.s32.totalorder %s65, %s68
    %p77 = scmp.eq.s32.totalorder %s18, 1
    %p78 = por %p76, %p77
    %p79 = scmp.ne.s32.totalorder %s68, %s69
    %p80 = scmp.eq.s32.totalorder %s18, 0
    %p81 = por %p79, %p80
    %p82 = scmp.ne.s32.totalorder %s68, %s69
    %p83 = scmp.eq.s32.totalorder %s19, 1
    %p84 = por %p82, %p83
    %p86 = scmp.ne.s32.totalorder %s69, %s85
    %p87 = scmp.eq.s32.totalorder %s19, 0
    %p88 = por %p86, %p87
    %s90 = sadd.s32 %s89, 1
    %p93 = scmp.eq.s32.totalorder %s13, 1
    %p94 = scmp.ne.s32.totalorder %s89, %s91
    %p95 = scmp.eq.s32.totalorder %s13, 0
    %p96 = por %p94, %p95
    %p97 = scmp.ne.s32.totalorder %s89, %s91
    %p98 = scmp.eq.s32.totalorder %s18, 1
    %p99 = por %p97, %p98
    %p100 = scmp.ne.s32.totalorder %s91, %s92
    %p101 = scmp.eq.s32.totalorder %s18, 0
    %p102 = por %p100, %p101
    %p103 = scmp.ne.s32.totalorder %s91, %s92
    %p104 = scmp.eq.s32.totalorder %s19, 1
    %p105 = por %p103, %p104
    %p107 = scmp.ne.s32.totalorder %s92, %s106
    %p108 = scmp.eq.s32.totalorder %s19, 0
    %p109 = por %p107, %p108
    %s110 = ssub.s32 %s13, %s20
    %p111 = scmp.eq.s32.totalorder %s110, 0
    %s113 = sadd.s32 %s112, 1
    %s114 = scalar_select %p111, %s112, %s113
    %p117 = pneg %p111
    %p118 = scmp.eq.s32.totalorder %s13, 1
    %p119 = por %p117, %p118
    %p120 = scmp.ne.s32.totalorder %s112, %s115
    %p121 = scmp.eq.s32.totalorder %s13, 0
    %p122 = por %p120, %p121
    %p123 = scmp.ne.s32.totalorder %s112, %s115
    %p124 = scmp.eq.s32.totalorder %s18, 1
    %p125 = por %p123, %p124
    %p126 = scmp.ne.s32.totalorder %s115, %s116
    %p127 = scmp.eq.s32.totalorder %s18, 0
    %p128 = por %p126, %p127
    %p129 = scmp.ne.s32.totalorder %s115, %s116
    %p130 = scmp.eq.s32.totalorder %s19, 1
    %p131 = por %p129, %p130
    %p133 = scmp.ne.s32.totalorder %s116, %s132
    %p134 = scmp.eq.s32.totalorder %s19, 0
    %p135 = por %p133, %p134
    %s136 = ssub.s32 %s13, %s20
    %p137 = scmp.eq.s32.totalorder %s136, 0
    %s139 = sadd.s32 %s138, 1
    %s140 = scalar_select %p137, %s138, %s139
    %p143 = pneg %p137
    %p144 = scmp.eq.s32.totalorder %s13, 1
    %p145 = por %p143, %p144
    %p146 = scmp.ne.s32.totalorder %s138, %s141
    %p147 = scmp.eq.s32.totalorder %s13, 0
    %p148 = por %p146, %p147
    %p149 = scmp.ne.s32.totalorder %s138, %s141
    %p150 = scmp.eq.s32.totalorder %s18, 1
    %p151 = por %p149, %p150
    %p152 = scmp.ne.s32.totalorder %s141, %s142
    %p153 = scmp.eq.s32.totalorder %s18, 0
    %p154 = por %p152, %p153
    %p155 = scmp.ne.s32.totalorder %s141, %s142
    %p156 = scmp.eq.s32.totalorder %s19, 1
    %p157 = por %p155, %p156
    %p159 = scmp.ne.s32.totalorder %s142, %s158
    %p160 = scmp.eq.s32.totalorder %s19, 0
    %p161 = por %p159, %p160
    %s162 = ssub.s32 %s13, %s20
    %p163 = scmp.eq.s32.totalorder %s162, 0
    %s165 = sadd.s32 %s164, 1
    %s166 = scalar_select %p163, %s164, %s165
    %p169 = pneg %p163
    %p170 = scmp.eq.s32.totalorder %s13, 1
    %p171 = por %p169, %p170
    %p172 = scmp.ne.s32.totalorder %s164, %s167
    %p173 = scmp.eq.s32.totalorder %s13, 0
    %p174 = por %p172, %p173
    %p175 = scmp.ne.s32.totalorder %s164, %s167
    %p176 = scmp.eq.s32.totalorder %s18, 1
    %p177 = por %p175, %p176
    %p178 = scmp.ne.s32.totalorder %s167, %s168
    %p179 = scmp.eq.s32.totalorder %s18, 0
    %p180 = por %p178, %p179
    %p181 = scmp.ne.s32.totalorder %s167, %s168
    %p182 = scmp.eq.s32.totalorder %s19, 1
    %p183 = por %p181, %p182
    %p185 = scmp.ne.s32.totalorder %s168, %s184
    %p186 = scmp.eq.s32.totalorder %s19, 0
    %p187 = por %p185, %p186
    %p188 = scmp.le.s32.totalorder 1, %s13
    %p189 = scmp.lt.s32.totalorder %s13, 3
    %p190 = pnand %p188, %p189
    %p191 = pneg %p190
    // Predicated region
    $region9: #{basic_block_pallas.4} parent=5 // pred_check
      _
    $region10: #{basic_block_pallas.4} parent=5 // pred_check_branch
      %193 = sbr.rel (%p190) target = $region12
    $region11: #{basic_block_pallas.4} parent=5 // pred_region
      %s194 = ssub.s32 %s13, 1
      // Predicated region
      $region13: #{basic_block_pallas.4} parent=11 // pred_check
        %p195 = pneg %p34
      $region14: #{basic_block_pallas.4} parent=11 // pred_check_branch
        %197 = sbr.rel (%p195) target = $region16
      $region15: #{basic_block_pallas.4} parent=11 // pred_region
        _
      $region16: #{basic_block_pallas.4} parent=11 // pred_fallthru
        _
      // Predicated region
      $region17: #{basic_block_pallas.4} parent=11 // pred_check
        %p198 = pneg %p55
      $region18: #{basic_block_pallas.4} parent=11 // pred_check_branch
        %200 = sbr.rel (%p198) target = $region20
      $region19: #{basic_block_pallas.4} parent=11 // pred_region
        _
      $region20: #{basic_block_pallas.4} parent=11 // pred_fallthru
        _
      // Predicated region
      $region21: #{basic_block_pallas.4} parent=11 // pred_check
        %p201 = pneg %p102
      $region22: #{basic_block_pallas.4} parent=11 // pred_check_branch
        %203 = sbr.rel (%p201) target = $region24
      $region23: #{basic_block_pallas.4} parent=11 // pred_region
        _
      $region24: #{basic_block_pallas.4} parent=11 // pred_fallthru
        _
    $region12: #{basic_block_pallas.4} parent=5 // pred_fallthru
      _
    %p204 = scmp.lt.s32.totalorder %s13, 2
    // Predicated region
    $region25: #{basic_block_pallas.4} parent=5 // pred_check
      %p205 = pneg %p204
    $region26: #{basic_block_pallas.4} parent=5 // pred_check_branch
      %207 = sbr.rel (%p205) target = $region28
    $region27: #{basic_block_pallas.4} parent=5 // pred_region
      // Predicated region
      $region29: #{basic_block_pallas.4} parent=27 // pred_check
        %p208 = pneg %p75
      $region30: #{basic_block_pallas.4} parent=27 // pred_check_branch
        %210 = sbr.rel (%p208) target = $region32
      $region31: #{basic_block_pallas.4} parent=27 // pred_region
        %p211 = scmp.lt.s32.totalorder %s13, 1
        %s212 = scalar_select %p211, %s13, 1
        %s213 = smul.addr %s212, 32
        %s214 = smul.addr %s213, 8
        %s215 = scalar_lea.vmem %s2, %s214
      $region32: #{basic_block_pallas.4} parent=27 // pred_fallthru
        _
    $region28: #{basic_block_pallas.4} parent=5 // pred_fallthru
      _
    %p216 = scmp.le.s32.totalorder 1, %s13
    %p217 = scmp.lt.s32.totalorder %s13, 3
    %p218 = pnand %p216, %p217
    %p219 = pneg %p218
    // Predicated region
    $region33: #{basic_block_pallas.4} parent=5 // pred_check
      _
    $region34: #{basic_block_pallas.4} parent=5 // pred_check_branch
      %221 = sbr.rel (%p218) target = $region36
    $region35: #{basic_block_pallas.4} parent=5 // pred_region
      %s222 = ssub.s32 %s13, 1
      %p223 = pneg %p34
      %p224 = pneg %p31
      %p225 = pneg %p55
      %p226 = pneg %p52
      %p227 = scmp.lt.s32.totalorder %s18, 1
      %s228 = scalar_select %p227, %s18, 1
      %s229 = smul.addr %s228, 32
      %s230 = smul.addr %s229, 8
      %s231 = scalar_lea.vmem %s2, %s230
      %p232 = pneg %p81
      %p233 = pneg %p78
      %p234 = pneg %p102
      %p235 = pneg %p99
      %p236 = pneg %p128
      %p237 = pneg %p125
      %p238 = scmp.lt.s32.totalorder %s18, 1
      %s239 = scalar_select %p238, %s18, 1
      %s240 = smul.addr %s239, 32
      %s241 = smul.addr %s240, 8
      %s242 = scalar_lea.vmem %s4, %s241
      %p243 = pneg %p154
      %p244 = pneg %p151
      %p245 = scmp.lt.s32.totalorder %s18, 1
      %s246 = scalar_select %p245, %s18, 1
      %s247 = scalar_lea.vmem %s5, %s246
      %p248 = pneg %p180
      %p249 = pneg %p177
      %p250 = scmp.lt.s32.totalorder %s18, 1
      %s251 = scalar_select %p250, %s18, 1
      %s252 = scalar_lea.vmem %s6, %s251
      %p253 = scmp.lt.s32.totalorder %s18, 1
      %s254 = scalar_select %p253, %s18, 1
      %s255 = smul.addr %s254, 32
      %s256 = smul.addr %s255, 8
      %s257 = scalar_lea.vmem %s2, %s256
      %p258 = scmp.lt.s32.totalorder %s18, 1
      %s259 = scalar_select %p258, %s18, 1
      %s260 = smul.addr %s259, 32
      %s261 = smul.addr %s260, 8
      %s262 = scalar_lea.vmem %s4, %s261
      %p263 = scmp.lt.s32.totalorder %s18, 1
      %s264 = scalar_select %p263, %s18, 1
      %s265 = scalar_lea.vmem %s5, %s264
      %p266 = scmp.lt.s32.totalorder %s18, 1
      %s267 = scalar_select %p266, %s18, 1
      %s268 = scalar_lea.vmem %s6, %s267
      %v270 = vld [vmem:[%s0] sm:$0x1]
      %v271 = vld [vmem:[%s1] sm:$0x1]
      %v272 = vld [vmem:[%s257] sm:$0xff]
      %v273 = vld [vmem:[%s257 + $0x8] sm:$0xff]
      %v274 = vld [vmem:[%s257 + $0x10] sm:$0xff]
      %v275 = vld [vmem:[%s257 + $0x18] sm:$0xff]
      %v276 = vld [vmem:[%s257 + $0x20] sm:$0xff]
      %v277 = vld [vmem:[%s257 + $0x28] sm:$0xff]
      %v278 = vld [vmem:[%s257 + $0x30] sm:$0xff]
      %v279 = vld [vmem:[%s257 + $0x38] sm:$0xff]
      %v280 = vld [vmem:[%s257 + $0x40] sm:$0xff]
      %v281 = vld [vmem:[%s257 + $0x48] sm:$0xff]
      %v282 = vld [vmem:[%s257 + $0x50] sm:$0xff]
      %v283 = vld [vmem:[%s257 + $0x58] sm:$0xff]
      %v284 = vld [vmem:[%s257 + $0x60] sm:$0xff]
      %v285 = vld [vmem:[%s257 + $0x68] sm:$0xff]
      %v286 = vld [vmem:[%s257 + $0x70] sm:$0xff]
      %v287 = vld [vmem:[%s257 + $0x78] sm:$0xff]
      %v288 = vld [vmem:[%s257 + $0x80] sm:$0xff]
      %v289 = vld [vmem:[%s257 + $0x88] sm:$0xff]
      %v290 = vld [vmem:[%s257 + $0x90] sm:$0xff]
      %v291 = vld [vmem:[%s257 + $0x98] sm:$0xff]
      %v292 = vld [vmem:[%s257 + $0xa0] sm:$0xff]
      %v293 = vld [vmem:[%s257 + $0xa8] sm:$0xff]
      %v294 = vld [vmem:[%s257 + $0xb0] sm:$0xff]
      %v295 = vld [vmem:[%s257 + $0xb8] sm:$0xff]
      %v296 = vld [vmem:[%s257 + $0xc0] sm:$0xff]
      %v297 = vld [vmem:[%s257 + $0xc8] sm:$0xff]
      %v298 = vld [vmem:[%s257 + $0xd0] sm:$0xff]
      %v299 = vld [vmem:[%s257 + $0xd8] sm:$0xff]
      %v300 = vld [vmem:[%s257 + $0xe0] sm:$0xff]
      %v301 = vld [vmem:[%s257 + $0xe8] sm:$0xff]
      %v302 = vld [vmem:[%s257 + $0xf0] sm:$0xff]
      %v303 = vld [vmem:[%s257 + $0xf8] sm:$0xff]
      %v305 = vperm.slane %v270, 0
      %v307 = vmul.f32 %v272, %v305
      %v308 = vmul.f32 %v273, %v305
      %v309 = vmul.f32 %v274, %v305
      %v310 = vmul.f32 %v275, %v305
      %v311 = vmul.f32 %v276, %v305
      %v312 = vmul.f32 %v277, %v305
      %v313 = vmul.f32 %v278, %v305
      %v314 = vmul.f32 %v279, %v305
      %v315 = vmul.f32 %v280, %v305
      %v316 = vmul.f32 %v281, %v305
      %v317 = vmul.f32 %v282, %v305
      %v318 = vmul.f32 %v283, %v305
      %v319 = vmul.f32 %v284, %v305
      %v320 = vmul.f32 %v285, %v305
      %v321 = vmul.f32 %v286, %v305
      %v322 = vmul.f32 %v287, %v305
      %v323 = vmul.f32 %v288, %v305
      %v324 = vmul.f32 %v289, %v305
      %v325 = vmul.f32 %v290, %v305
      %v326 = vmul.f32 %v291, %v305
      %v327 = vmul.f32 %v292, %v305
      %v328 = vmul.f32 %v293, %v305
      %v329 = vmul.f32 %v294, %v305
      %v330 = vmul.f32 %v295, %v305
      %v331 = vmul.f32 %v296, %v305
      %v332 = vmul.f32 %v297, %v305
      %v333 = vmul.f32 %v298, %v305
      %v334 = vmul.f32 %v299, %v305
      %v335 = vmul.f32 %v300, %v305
      %v336 = vmul.f32 %v301, %v305
      %v337 = vmul.f32 %v302, %v305
      %v338 = vmul.f32 %v303, %v305
      %v340 = vperm.slane %v271, 0
      %v342 = vadd.f32 %v307, %v340
      %v343 = vadd.f32 %v308, %v340
      %v344 = vadd.f32 %v309, %v340
      %v345 = vadd.f32 %v310, %v340
      %v346 = vadd.f32 %v311, %v340
      %v347 = vadd.f32 %v312, %v340
      %v348 = vadd.f32 %v313, %v340
      %v349 = vadd.f32 %v314, %v340
      %v350 = vadd.f32 %v315, %v340
      %v351 = vadd.f32 %v316, %v340
      %v352 = vadd.f32 %v317, %v340
      %v353 = vadd.f32 %v318, %v340
      %v354 = vadd.f32 %v319, %v340
      %v355 = vadd.f32 %v320, %v340
      %v356 = vadd.f32 %v321, %v340
      %v357 = vadd.f32 %v322, %v340
      %v358 = vadd.f32 %v323, %v340
      %v359 = vadd.f32 %v324, %v340
      %v360 = vadd.f32 %v325, %v340
      %v361 = vadd.f32 %v326, %v340
      %v362 = vadd.f32 %v327, %v340
      %v363 = vadd.f32 %v328, %v340
      %v364 = vadd.f32 %v329, %v340
      %v365 = vadd.f32 %v330, %v340
      %v366 = vadd.f32 %v331, %v340
      %v367 = vadd.f32 %v332, %v340
      %v368 = vadd.f32 %v333, %v340
      %v369 = vadd.f32 %v334, %v340
      %v370 = vadd.f32 %v335, %v340
      %v371 = vadd.f32 %v336, %v340
      %v372 = vadd.f32 %v337, %v340
      %v373 = vadd.f32 %v338, %v340
      %v374 = vmax.f32 %v342, 0.0
      %v375 = vmax.f32 %v343, 0.0
      %v376 = vmax.f32 %v344, 0.0
      %v377 = vmax.f32 %v345, 0.0
      %v378 = vmax.f32 %v346, 0.0
      %v379 = vmax.f32 %v347, 0.0
      %v380 = vmax.f32 %v348, 0.0
      %v381 = vmax.f32 %v349, 0.0
      %v382 = vmax.f32 %v350, 0.0
      %v383 = vmax.f32 %v351, 0.0
      %v384 = vmax.f32 %v352, 0.0
      %v385 = vmax.f32 %v353, 0.0
      %v386 = vmax.f32 %v354, 0.0
      %v387 = vmax.f32 %v355, 0.0
      %v388 = vmax.f32 %v356, 0.0
      %v389 = vmax.f32 %v357, 0.0
      %v390 = vmax.f32 %v358, 0.0
      %v391 = vmax.f32 %v359, 0.0
      %v392 = vmax.f32 %v360, 0.0
      %v393 = vmax.f32 %v361, 0.0
      %v394 = vmax.f32 %v362, 0.0
      %v395 = vmax.f32 %v363, 0.0
      %v396 = vmax.f32 %v364, 0.0
      %v397 = vmax.f32 %v365, 0.0
      %v398 = vmax.f32 %v366, 0.0
      %v399 = vmax.f32 %v367, 0.0
      %v400 = vmax.f32 %v368, 0.0
      %v401 = vmax.f32 %v369, 0.0
      %v402 = vmax.f32 %v370, 0.0
      %v403 = vmax.f32 %v371, 0.0
      %v404 = vmax.f32 %v372, 0.0
      %v405 = vmax.f32 %v373, 0.0
      %v406 = vpack.c.bf16 %v374, %v374
      %v407 = vpack.c.bf16 %v375, %v375
      %v408 = vpack.c.bf16 %v376, %v376
      %v409 = vpack.c.bf16 %v377, %v377
      %v410 = vpack.c.bf16 %v378, %v378
      %v411 = vpack.c.bf16 %v379, %v379
      %v412 = vpack.c.bf16 %v380, %v380
      %v413 = vpack.c.bf16 %v381, %v381
      %v414 = vpack.c.bf16 %v382, %v382
      %v415 = vpack.c.bf16 %v383, %v383
      %v416 = vpack.c.bf16 %v384, %v384
      %v417 = vpack.c.bf16 %v385, %v385
      %v418 = vpack.c.bf16 %v386, %v386
      %v419 = vpack.c.bf16 %v387, %v387
      %v420 = vpack.c.bf16 %v388, %v388
      %v421 = vpack.c.bf16 %v389, %v389
      %v422 = vpack.c.bf16 %v390, %v390
      %v423 = vpack.c.bf16 %v391, %v391
      %v424 = vpack.c.bf16 %v392, %v392
      %v425 = vpack.c.bf16 %v393, %v393
      %v426 = vpack.c.bf16 %v394, %v394
      %v427 = vpack.c.bf16 %v395, %v395
      %v428 = vpack.c.bf16 %v396, %v396
      %v429 = vpack.c.bf16 %v397, %v397
      %v430 = vpack.c.bf16 %v398, %v398
      %v431 = vpack.c.bf16 %v399, %v399
      %v432 = vpack.c.bf16 %v400, %v400
      %v433 = vpack.c.bf16 %v401, %v401
      %v434 = vpack.c.bf16 %v402, %v402
      %v435 = vpack.c.bf16 %v403, %v403
      %v436 = vpack.c.bf16 %v404, %v404
      %v437 = vpack.c.bf16 %v405, %v405
      %438 = vst [vmem:[#allocation2] sm:$0xf] 0
      %439 = vst [vmem:[#allocation2 + $0x4] sm:$0xf] 0
      %440 = vst [vmem:[#allocation2 + $0x8] sm:$0x1] 0
      %s441 = scalar_lea.vmem [#allocation2], 204
      %442 = vst [vmem:[%s441] sm:$0xf] 0
      %443 = vst [vmem:[%s441 + $0x4] sm:$0xf] 0
      %444 = vst [vmem:[%s441 + $0x8] sm:$0x1] 0
      %s445 = scalar_lea.vmem [#allocation2], 12
      %vm446 = vcmask 1040384
      %vm447 = vsmask.f32 256
      %vm448 = vmand %vm446, %vm447
      %v449 = vld [vmem:[%s445] sm:$0x1]
      %v450 = vsel %vm448, 0, %v449
      %451 = vst [vmem:[%s445] sm:$0x1] %v450
      %v452 = vld [vmem:[%s445 + $0xc] sm:$0x1]
      %v453 = vsel %vm448, 0, %v452
      %454 = vst [vmem:[%s445 + $0xc] sm:$0x1] %v453
      %v455 = vld [vmem:[%s445 + $0x18] sm:$0x1]
      %v456 = vsel %vm448, 0, %v455
      %457 = vst [vmem:[%s445 + $0x18] sm:$0x1] %v456
      %v458 = vld [vmem:[%s445 + $0x24] sm:$0x1]
      %v459 = vsel %vm448, 0, %v458
      %460 = vst [vmem:[%s445 + $0x24] sm:$0x1] %v459
      %v461 = vld [vmem:[%s445 + $0x30] sm:$0x1]
      %v462 = vsel %vm448, 0, %v461
      %463 = vst [vmem:[%s445 + $0x30] sm:$0x1] %v462
      %v464 = vld [vmem:[%s445 + $0x3c] sm:$0x1]
      %v465 = vsel %vm448, 0, %v464
      %466 = vst [vmem:[%s445 + $0x3c] sm:$0x1] %v465
      %v467 = vld [vmem:[%s445 + $0x48] sm:$0x1]
      %v468 = vsel %vm448, 0, %v467
      %469 = vst [vmem:[%s445 + $0x48] sm:$0x1] %v468
      %v470 = vld [vmem:[%s445 + $0x54] sm:$0x1]
      %v471 = vsel %vm448, 0, %v470
      %472 = vst [vmem:[%s445 + $0x54] sm:$0x1] %v471
      %v473 = vld [vmem:[%s445 + $0x60] sm:$0x1]
      %v474 = vsel %vm448, 0, %v473
      %475 = vst [vmem:[%s445 + $0x60] sm:$0x1] %v474
      %v476 = vld [vmem:[%s445 + $0x6c] sm:$0x1]
      %v477 = vsel %vm448, 0, %v476
      %478 = vst [vmem:[%s445 + $0x6c] sm:$0x1] %v477
      %v479 = vld [vmem:[%s445 + $0x78] sm:$0x1]
      %v480 = vsel %vm448, 0, %v479
      %481 = vst [vmem:[%s445 + $0x78] sm:$0x1] %v480
      %v482 = vld [vmem:[%s445 + $0x84] sm:$0x1]
      %v483 = vsel %vm448, 0, %v482
      %484 = vst [vmem:[%s445 + $0x84] sm:$0x1] %v483
      %v485 = vld [vmem:[%s445 + $0x90] sm:$0x1]
      %v486 = vsel %vm448, 0, %v485
      %487 = vst [vmem:[%s445 + $0x90] sm:$0x1] %v486
      %v488 = vld [vmem:[%s445 + $0x9c] sm:$0x1]
      %v489 = vsel %vm448, 0, %v488
      %490 = vst [vmem:[%s445 + $0x9c] sm:$0x1] %v489
      %v491 = vld [vmem:[%s445 + $0xa8] sm:$0x1]
      %v492 = vsel %vm448, 0, %v491
      %493 = vst [vmem:[%s445 + $0xa8] sm:$0x1] %v492
      %v494 = vld [vmem:[%s445 + $0xb4] sm:$0x1]
      %v495 = vsel %vm448, 0, %v494
      %496 = vst [vmem:[%s445 + $0xb4] sm:$0x1] %v495
      %vm497 = vsmask.f32 7938
      %vm498 = vmand %vm446, %vm497
      %v499 = vld [vmem:[%s445 + $0x8] sm:$0x1]
      %v500 = vsel %vm498, 0, %v499
      %501 = vst [vmem:[%s445 + $0x8] sm:$0x1] %v500
      %v502 = vld [vmem:[%s445 + $0x14] sm:$0x1]
      %v503 = vsel %vm498, 0, %v502
      %504 = vst [vmem:[%s445 + $0x14] sm:$0x1] %v503
      %v505 = vld [vmem:[%s445 + $0x20] sm:$0x1]
      %v506 = vsel %vm498, 0, %v505
      %507 = vst [vmem:[%s445 + $0x20] sm:$0x1] %v506
      %v508 = vld [vmem:[%s445 + $0x2c] sm:$0x1]
      %v509 = vsel %vm498, 0, %v508
      %510 = vst [vmem:[%s445 + $0x2c] sm:$0x1] %v509
      %v511 = vld [vmem:[%s445 + $0x38] sm:$0x1]
      %v512 = vsel %vm498, 0, %v511
      %513 = vst [vmem:[%s445 + $0x38] sm:$0x1] %v512
      %v514 = vld [vmem:[%s445 + $0x44] sm:$0x1]
      %v515 = vsel %vm498, 0, %v514
      %516 = vst [vmem:[%s445 + $0x44] sm:$0x1] %v515
      %v517 = vld [vmem:[%s445 + $0x50] sm:$0x1]
      %v518 = vsel %vm498, 0, %v517
      %519 = vst [vmem:[%s445 + $0x50] sm:$0x1] %v518
      %v520 = vld [vmem:[%s445 + $0x5c] sm:$0x1]
      %v521 = vsel %vm498, 0, %v520
      %522 = vst [vmem:[%s445 + $0x5c] sm:$0x1] %v521
      %v523 = vld [vmem:[%s445 + $0x68] sm:$0x1]
      %v524 = vsel %vm498, 0, %v523
      %525 = vst [vmem:[%s445 + $0x68] sm:$0x1] %v524
      %v526 = vld [vmem:[%s445 + $0x74] sm:$0x1]
      %v527 = vsel %vm498, 0, %v526
      %528 = vst [vmem:[%s445 + $0x74] sm:$0x1] %v527
      %v529 = vld [vmem:[%s445 + $0x80] sm:$0x1]
      %v530 = vsel %vm498, 0, %v529
      %531 = vst [vmem:[%s445 + $0x80] sm:$0x1] %v530
      %v532 = vld [vmem:[%s445 + $0x8c] sm:$0x1]
      %v533 = vsel %vm498, 0, %v532
      %534 = vst [vmem:[%s445 + $0x8c] sm:$0x1] %v533
      %v535 = vld [vmem:[%s445 + $0x98] sm:$0x1]
      %v536 = vsel %vm498, 0, %v535
      %537 = vst [vmem:[%s445 + $0x98] sm:$0x1] %v536
      %v538 = vld [vmem:[%s445 + $0xa4] sm:$0x1]
      %v539 = vsel %vm498, 0, %v538
      %540 = vst [vmem:[%s445 + $0xa4] sm:$0x1] %v539
      %v541 = vld [vmem:[%s445 + $0xb0] sm:$0x1]
      %v542 = vsel %vm498, 0, %v541
      %543 = vst [vmem:[%s445 + $0xb0] sm:$0x1] %v542
      %v544 = vld [vmem:[%s445 + $0xbc] sm:$0x1]
      %v545 = vsel %vm498, 0, %v544
      %546 = vst [vmem:[%s445 + $0xbc] sm:$0x1] %v545
      %vm547 = vsmask.f32 4368
      %vm548 = vmor %vm447, %vm547
      %v550 = vshrl.u32 %v406, 16
      %v552 = vrot.slane %v550, 7
      %v553 = vshll.u32 %v406, 16
      %v555 = vor.u32 %v552, %v553
      %v556 = vrot.slane %v552, 4
      %v558 = vshrl.u32 %v407, 16
      %v560 = vrot.slane %v558, 7
      %v561 = vshll.u32 %v407, 16
      %v563 = vor.u32 %v560, %v561
      %v564 = vsel %vm548, %v556, %v563
      %v565 = vrot.slane %v560, 4
      %v567 = vshrl.u32 %v408, 16
      %v569 = vrot.slane %v567, 7
      %v570 = vshll.u32 %v408, 16
      %v572 = vor.u32 %v569, %v570
      %v573 = vrot.slane %v569, 4
      %v575 = vshrl.u32 %v409, 16
      %v577 = vrot.slane %v575, 7
      %v578 = vshll.u32 %v409, 16
      %v580 = vor.u32 %v577, %v578
      %v581 = vsel %vm548, %v573, %v580
      %v582 = vrot.slane %v577, 4
      %v584 = vshrl.u32 %v410, 16
      %v586 = vrot.slane %v584, 7
      %v587 = vshll.u32 %v410, 16
      %v589 = vor.u32 %v586, %v587
      %v590 = vrot.slane %v586, 4
      %v592 = vshrl.u32 %v411, 16
      %v594 = vrot.slane %v592, 7
      %v595 = vshll.u32 %v411, 16
      %v597 = vor.u32 %v594, %v595
      %v598 = vsel %vm548, %v590, %v597
      %v599 = vrot.slane %v594, 4
      %v601 = vshrl.u32 %v412, 16
      %v603 = vrot.slane %v601, 7
      %v604 = vshll.u32 %v412, 16
      %v606 = vor.u32 %v603, %v604
      %v607 = vrot.slane %v603, 4
      %v609 = vshrl.u32 %v413, 16
      %v611 = vrot.slane %v609, 7
      %v612 = vshll.u32 %v413, 16
      %v614 = vor.u32 %v611, %v612
      %v615 = vsel %vm548, %v607, %v614
      %v616 = vrot.slane %v611, 4
      %v618 = vshrl.u32 %v414, 16
      %v620 = vrot.slane %v618, 7
      %v621 = vshll.u32 %v414, 16
      %v623 = vor.u32 %v620, %v621
      %v624 = vrot.slane %v620, 4
      %v626 = vshrl.u32 %v415, 16
      %v628 = vrot.slane %v626, 7
      %v629 = vshll.u32 %v415, 16
      %v631 = vor.u32 %v628, %v629
      %v632 = vsel %vm548, %v624, %v631
      %v633 = vrot.slane %v628, 4
      %v635 = vshrl.u32 %v416, 16
      %v637 = vrot.slane %v635, 7
      %v638 = vshll.u32 %v416, 16
      %v640 = vor.u32 %v637, %v638
      %v641 = vrot.slane %v637, 4
      %v643 = vshrl.u32 %v417, 16
      %v645 = vrot.slane %v643, 7
      %v646 = vshll.u32 %v417, 16
      %v648 = vor.u32 %v645, %v646
      %v649 = vsel %vm548, %v641, %v648
      %v650 = vrot.slane %v645, 4
      %v652 = vshrl.u32 %v418, 16
      %v654 = vrot.slane %v652, 7
      %v655 = vshll.u32 %v418, 16
      %v657 = vor.u32 %v654, %v655
      %v658 = vrot.slane %v654, 4
      %v660 = vshrl.u32 %v419, 16
      %v662 = vrot.slane %v660, 7
      %v663 = vshll.u32 %v419, 16
      %v665 = vor.u32 %v662, %v663
      %v666 = vsel %vm548, %v658, %v665
      %v667 = vrot.slane %v662, 4
      %v669 = vshrl.u32 %v420, 16
      %v671 = vrot.slane %v669, 7
      %v672 = vshll.u32 %v420, 16
      %v674 = vor.u32 %v671, %v672
      %v675 = vrot.slane %v671, 4
      %v677 = vshrl.u32 %v421, 16
      %v679 = vrot.slane %v677, 7
      %v680 = vshll.u32 %v421, 16
      %v682 = vor.u32 %v679, %v680
      %v683 = vsel %vm548, %v675, %v682
      %v684 = vrot.slane %v679, 4
      %v686 = vshrl.u32 %v422, 16
      %v688 = vrot.slane %v686, 7
      %v689 = vshll.u32 %v422, 16
      %v691 = vor.u32 %v688, %v689
      %v692 = vrot.slane %v688, 4
      %v694 = vshrl.u32 %v423, 16
      %v696 = vrot.slane %v694, 7
      %v697 = vshll.u32 %v423, 16
      %v699 = vor.u32 %v696, %v697
      %v700 = vsel %vm548, %v692, %v699
      %v701 = vrot.slane %v696, 4
      %v703 = vshrl.u32 %v424, 16
      %v705 = vrot.slane %v703, 7
      %v706 = vshll.u32 %v424, 16
      %v708 = vor.u32 %v705, %v706
      %v709 = vrot.slane %v705, 4
      %v711 = vshrl.u32 %v425, 16
      %v713 = vrot.slane %v711, 7
      %v714 = vshll.u32 %v425, 16
      %v716 = vor.u32 %v713, %v714
      %v717 = vsel %vm548, %v709, %v716
      %v718 = vrot.slane %v713, 4
      %v720 = vshrl.u32 %v426, 16
      %v722 = vrot.slane %v720, 7
      %v723 = vshll.u32 %v426, 16
      %v725 = vor.u32 %v722, %v723
      %v726 = vrot.slane %v722, 4
      %v728 = vshrl.u32 %v427, 16
      %v730 = vrot.slane %v728, 7
      %v731 = vshll.u32 %v427, 16
      %v733 = vor.u32 %v730, %v731
      %v734 = vsel %vm548, %v726, %v733
      %v735 = vrot.slane %v730, 4
      %v737 = vshrl.u32 %v428, 16
      %v739 = vrot.slane %v737, 7
      %v740 = vshll.u32 %v428, 16
      %v742 = vor.u32 %v739, %v740
      %v743 = vrot.slane %v739, 4
      %v745 = vshrl.u32 %v429, 16
      %v747 = vrot.slane %v745, 7
      %v748 = vshll.u32 %v429, 16
      %v750 = vor.u32 %v747, %v748
      %v751 = vsel %vm548, %v743, %v750
      %v752 = vrot.slane %v747, 4
      %v754 = vshrl.u32 %v430, 16
      %v756 = vrot.slane %v754, 7
      %v757 = vshll.u32 %v430, 16
      %v759 = vor.u32 %v756, %v757
      %v760 = vrot.slane %v756, 4
      %v762 = vshrl.u32 %v431, 16
      %v764 = vrot.slane %v762, 7
      %v765 = vshll.u32 %v431, 16
      %v767 = vor.u32 %v764, %v765
      %v768 = vsel %vm548, %v760, %v767
      %v769 = vrot.slane %v764, 4
      %v771 = vshrl.u32 %v432, 16
      %v773 = vrot.slane %v771, 7
      %v774 = vshll.u32 %v432, 16
      %v776 = vor.u32 %v773, %v774
      %v777 = vrot.slane %v773, 4
      %v779 = vshrl.u32 %v433, 16
      %v781 = vrot.slane %v779, 7
      %v782 = vshll.u32 %v433, 16
      %v784 = vor.u32 %v781, %v782
      %v785 = vsel %vm548, %v777, %v784
      %v786 = vrot.slane %v781, 4
      %v788 = vshrl.u32 %v434, 16
      %v790 = vrot.slane %v788, 7
      %v791 = vshll.u32 %v434, 16
      %v793 = vor.u32 %v790, %v791
      %v794 = vrot.slane %v790, 4
      %v796 = vshrl.u32 %v435, 16
      %v798 = vrot.slane %v796, 7
      %v799 = vshll.u32 %v435, 16
      %v801 = vor.u32 %v798, %v799
      %v802 = vsel %vm548, %v794, %v801
      %v803 = vrot.slane %v798, 4
      %v805 = vshrl.u32 %v436, 16
      %v807 = vrot.slane %v805, 7
      %v808 = vshll.u32 %v436, 16
      %v810 = vor.u32 %v807, %v808
      %v811 = vrot.slane %v807, 4
      %v813 = vshrl.u32 %v437, 16
      %v815 = vrot.slane %v813, 7
      %v816 = vshll.u32 %v437, 16
      %v818 = vor.u32 %v815, %v816
      %v819 = vsel %vm548, %v811, %v818
      %v820 = vrot.slane %v815, 4
      %vm869 = vcmask 1043456
      %vm870 = vmand %vm869, %vm497
      %v871 = vld [vmem:[%s445] sm:$0xf]
      %v872 = vsel %vm870, %v555, %v871
      %873 = vst [vmem:[%s445] sm:$0xf] %v872
      %874 = vst [vmem:[%s445 + $0x4] sm:$0xf] %v564
      %v875 = vld [vmem:[%s445 + $0x8] sm:$0x1]
      %v876 = vsel %vm448, %v565, %v875
      %877 = vst [vmem:[%s445 + $0x8] sm:$0x1] %v876
      %v878 = vld [vmem:[%s445 + $0xc] sm:$0xf]
      %v879 = vsel %vm870, %v572, %v878
      %880 = vst [vmem:[%s445 + $0xc] sm:$0xf] %v879
      %881 = vst [vmem:[%s445 + $0x10] sm:$0xf] %v581
      %v882 = vld [vmem:[%s445 + $0x14] sm:$0x1]
      %v883 = vsel %vm448, %v582, %v882
      %884 = vst [vmem:[%s445 + $0x14] sm:$0x1] %v883
      %v885 = vld [vmem:[%s445 + $0x18] sm:$0xf]
      %v886 = vsel %vm870, %v589, %v885
      %887 = vst [vmem:[%s445 + $0x18] sm:$0xf] %v886
      %888 = vst [vmem:[%s445 + $0x1c] sm:$0xf] %v598
      %v889 = vld [vmem:[%s445 + $0x20] sm:$0x1]
      %v890 = vsel %vm448, %v599, %v889
      %891 = vst [vmem:[%s445 + $0x20] sm:$0x1] %v890
      %v892 = vld [vmem:[%s445 + $0x24] sm:$0xf]
      %v893 = vsel %vm870, %v606, %v892
      %894 = vst [vmem:[%s445 + $0x24] sm:$0xf] %v893
      %895 = vst [vmem:[%s445 + $0x28] sm:$0xf] %v615
      %v896 = vld [vmem:[%s445 + $0x2c] sm:$0x1]
      %v897 = vsel %vm448, %v616, %v896
      %898 = vst [vmem:[%s445 + $0x2c] sm:$0x1] %v897
      %v899 = vld [vmem:[%s445 + $0x30] sm:$0xf]
      %v900 = vsel %vm870, %v623, %v899
      %901 = vst [vmem:[%s445 + $0x30] sm:$0xf] %v900
      %902 = vst [vmem:[%s445 + $0x34] sm:$0xf] %v632
      %v903 = vld [vmem:[%s445 + $0x38] sm:$0x1]
      %v904 = vsel %vm448, %v633, %v903
      %905 = vst [vmem:[%s445 + $0x38] sm:$0x1] %v904
      %v906 = vld [vmem:[%s445 + $0x3c] sm:$0xf]
      %v907 = vsel %vm870, %v640, %v906
      %908 = vst [vmem:[%s445 + $0x3c] sm:$0xf] %v907
      %909 = vst [vmem:[%s445 + $0x40] sm:$0xf] %v649
      %v910 = vld [vmem:[%s445 + $0x44] sm:$0x1]
      %v911 = vsel %vm448, %v650, %v910
      %912 = vst [vmem:[%s445 + $0x44] sm:$0x1] %v911
      %v913 = vld [vmem:[%s445 + $0x48] sm:$0xf]
      %v914 = vsel %vm870, %v657, %v913
      %915 = vst [vmem:[%s445 + $0x48] sm:$0xf] %v914
      %916 = vst [vmem:[%s445 + $0x4c] sm:$0xf] %v666
      %v917 = vld [vmem:[%s445 + $0x50] sm:$0x1]
      %v918 = vsel %vm448, %v667, %v917
      %919 = vst [vmem:[%s445 + $0x50] sm:$0x1] %v918
      %v920 = vld [vmem:[%s445 + $0x54] sm:$0xf]
      %v921 = vsel %vm870, %v674, %v920
      %922 = vst [vmem:[%s445 + $0x54] sm:$0xf] %v921
      %923 = vst [vmem:[%s445 + $0x58] sm:$0xf] %v683
      %v924 = vld [vmem:[%s445 + $0x5c] sm:$0x1]
      %v925 = vsel %vm448, %v684, %v924
      %926 = vst [vmem:[%s445 + $0x5c] sm:$0x1] %v925
      %v927 = vld [vmem:[%s445 + $0x60] sm:$0xf]
      %v928 = vsel %vm870, %v691, %v927
      %929 = vst [vmem:[%s445 + $0x60] sm:$0xf] %v928
      %930 = vst [vmem:[%s445 + $0x64] sm:$0xf] %v700
      %v931 = vld [vmem:[%s445 + $0x68] sm:$0x1]
      %v932 = vsel %vm448, %v701, %v931
      %933 = vst [vmem:[%s445 + $0x68] sm:$0x1] %v932
      %v934 = vld [vmem:[%s445 + $0x6c] sm:$0xf]
      %v935 = vsel %vm870, %v708, %v934
      %936 = vst [vmem:[%s445 + $0x6c] sm:$0xf] %v935
      %937 = vst [vmem:[%s445 + $0x70] sm:$0xf] %v717
      %v938 = vld [vmem:[%s445 + $0x74] sm:$0x1]
      %v939 = vsel %vm448, %v718, %v938
      %940 = vst [vmem:[%s445 + $0x74] sm:$0x1] %v939
      %v941 = vld [vmem:[%s445 + $0x78] sm:$0xf]
      %v942 = vsel %vm870, %v725, %v941
      %943 = vst [vmem:[%s445 + $0x78] sm:$0xf] %v942
      %944 = vst [vmem:[%s445 + $0x7c] sm:$0xf] %v734
      %v945 = vld [vmem:[%s445 + $0x80] sm:$0x1]
      %v946 = vsel %vm448, %v735, %v945
      %947 = vst [vmem:[%s445 + $0x80] sm:$0x1] %v946
      %v948 = vld [vmem:[%s445 + $0x84] sm:$0xf]
      %v949 = vsel %vm870, %v742, %v948
      %950 = vst [vmem:[%s445 + $0x84] sm:$0xf] %v949
      %951 = vst [vmem:[%s445 + $0x88] sm:$0xf] %v751
      %v952 = vld [vmem:[%s445 + $0x8c] sm:$0x1]
      %v953 = vsel %vm448, %v752, %v952
      %954 = vst [vmem:[%s445 + $0x8c] sm:$0x1] %v953
      %v955 = vld [vmem:[%s445 + $0x90] sm:$0xf]
      %v956 = vsel %vm870, %v759, %v955
      %957 = vst [vmem:[%s445 + $0x90] sm:$0xf] %v956
      %958 = vst [vmem:[%s445 + $0x94] sm:$0xf] %v768
      %v959 = vld [vmem:[%s445 + $0x98] sm:$0x1]
      %v960 = vsel %vm448, %v769, %v959
      %961 = vst [vmem:[%s445 + $0x98] sm:$0x1] %v960
      %v962 = vld [vmem:[%s445 + $0x9c] sm:$0xf]
      %v963 = vsel %vm870, %v776, %v962
      %964 = vst [vmem:[%s445 + $0x9c] sm:$0xf] %v963
      %965 = vst [vmem:[%s445 + $0xa0] sm:$0xf] %v785
      %v966 = vld [vmem:[%s445 + $0xa4] sm:$0x1]
      %v967 = vsel %vm448, %v786, %v966
      %968 = vst [vmem:[%s445 + $0xa4] sm:$0x1] %v967
      %v969 = vld [vmem:[%s445 + $0xa8] sm:$0xf]
      %v970 = vsel %vm870, %v793, %v969
      %971 = vst [vmem:[%s445 + $0xa8] sm:$0xf] %v970
      %972 = vst [vmem:[%s445 + $0xac] sm:$0xf] %v802
      %v973 = vld [vmem:[%s445 + $0xb0] sm:$0x1]
      %v974 = vsel %vm448, %v803, %v973
      %975 = vst [vmem:[%s445 + $0xb0] sm:$0x1] %v974
      %v976 = vld [vmem:[%s445 + $0xb4] sm:$0xf]
      %v977 = vsel %vm870, %v810, %v976
      %978 = vst [vmem:[%s445 + $0xb4] sm:$0xf] %v977
      %979 = vst [vmem:[%s445 + $0xb8] sm:$0xf] %v819
      %v980 = vld [vmem:[%s445 + $0xbc] sm:$0x1]
      %v981 = vsel %vm448, %v820, %v980
      %982 = vst [vmem:[%s445 + $0xbc] sm:$0x1] %v981
      %v983 = vld [vmem:[#allocation2] sm:$0xf]
      %v984 = vld [vmem:[#allocation2 + $0x4] sm:$0xf]
      %v985 = vld [vmem:[#allocation2 + $0xc] sm:$0xf]
      %v986 = vld [vmem:[#allocation2 + $0x10] sm:$0xf]
      %v987 = vld [vmem:[#allocation2 + $0x18] sm:$0xf]
      %v988 = vld [vmem:[#allocation2 + $0x1c] sm:$0xf]
      %v989 = vld [vmem:[#allocation2 + $0x24] sm:$0xf]
      %v990 = vld [vmem:[#allocation2 + $0x28] sm:$0xf]
      %v991 = vld [vmem:[#allocation2 + $0x30] sm:$0xf]
      %v992 = vld [vmem:[#allocation2 + $0x34] sm:$0xf]
      %v993 = vld [vmem:[#allocation2 + $0x3c] sm:$0xf]
      %v994 = vld [vmem:[#allocation2 + $0x40] sm:$0xf]
      %v995 = vld [vmem:[#allocation2 + $0x48] sm:$0xf]
      %v996 = vld [vmem:[#allocation2 + $0x4c] sm:$0xf]
      %v997 = vld [vmem:[#allocation2 + $0x54] sm:$0xf]
      %v998 = vld [vmem:[#allocation2 + $0x58] sm:$0xf]
      %v999 = vld [vmem:[#allocation2 + $0x60] sm:$0xf]
      %v1000 = vld [vmem:[#allocation2 + $0x64] sm:$0xf]
      %v1001 = vld [vmem:[#allocation2 + $0x6c] sm:$0xf]
      %v1002 = vld [vmem:[#allocation2 + $0x70] sm:$0xf]
      %v1003 = vld [vmem:[#allocation2 + $0x78] sm:$0xf]
      %v1004 = vld [vmem:[#allocation2 + $0x7c] sm:$0xf]
      %v1005 = vld [vmem:[#allocation2 + $0x84] sm:$0xf]
      %v1006 = vld [vmem:[#allocation2 + $0x88] sm:$0xf]
      %v1007 = vld [vmem:[#allocation2 + $0x90] sm:$0xf]
      %v1008 = vld [vmem:[#allocation2 + $0x94] sm:$0xf]
      %v1009 = vld [vmem:[#allocation2 + $0x9c] sm:$0xf]
      %v1010 = vld [vmem:[#allocation2 + $0xa0] sm:$0xf]
      %v1011 = vld [vmem:[#allocation2 + $0xa8] sm:$0xf]
      %v1012 = vld [vmem:[#allocation2 + $0xac] sm:$0xf]
      %v1013 = vld [vmem:[#allocation2 + $0xb4] sm:$0xf]
      %v1014 = vld [vmem:[#allocation2 + $0xb8] sm:$0xf]
      %1015 = vst [vmem:[#allocation3] sm:$0xf] %v983
      %1016 = vst [vmem:[#allocation3 + $0x24] sm:$0xf] %v984
      %1017 = vst [vmem:[#allocation3 + $0x48] sm:$0xf] %v985
      %1018 = vst [vmem:[#allocation3 + $0x6c] sm:$0xf] %v986
      %1019 = vst [vmem:[#allocation3 + $0x90] sm:$0xf] %v987
      %1020 = vst [vmem:[#allocation3 + $0xb4] sm:$0xf] %v988
      %1021 = vst [vmem:[#allocation3 + $0xd8] sm:$0xf] %v989
      %1022 = vst [vmem:[#allocation3 + $0xfc] sm:$0xf] %v990
      %1023 = vst [vmem:[#allocation3 + $0x120] sm:$0xf] %v991
      %1024 = vst [vmem:[#allocation3 + $0x144] sm:$0xf] %v992
      %1025 = vst [vmem:[#allocation3 + $0x168] sm:$0xf] %v993
      %1026 = vst [vmem:[#allocation3 + $0x18c] sm:$0xf] %v994
      %1027 = vst [vmem:[#allocation3 + $0x1b0] sm:$0xf] %v995
      %1028 = vst [vmem:[#allocation3 + $0x1d4] sm:$0xf] %v996
      %1029 = vst [vmem:[#allocation3 + $0x1f8] sm:$0xf] %v997
      %1030 = vst [vmem:[#allocation3 + $0x21c] sm:$0xf] %v998
      %1031 = vst [vmem:[#allocation3 + $0x240] sm:$0xf] %v999
      %1032 = vst [vmem:[#allocation3 + $0x264] sm:$0xf] %v1000
      %1033 = vst [vmem:[#allocation3 + $0x288] sm:$0xf] %v1001
      %1034 = vst [vmem:[#allocation3 + $0x2ac] sm:$0xf] %v1002
      %1035 = vst [vmem:[#allocation3 + $0x2d0] sm:$0xf] %v1003
      %1036 = vst [vmem:[#allocation3 + $0x2f4] sm:$0xf] %v1004
      %1037 = vst [vmem:[#allocation3 + $0x318] sm:$0xf] %v1005
      %1038 = vst [vmem:[#allocation3 + $0x33c] sm:$0xf] %v1006
      %1039 = vst [vmem:[#allocation3 + $0x360] sm:$0xf] %v1007
      %1040 = vst [vmem:[#allocation3 + $0x384] sm:$0xf] %v1008
      %1041 = vst [vmem:[#allocation3 + $0x3a8] sm:$0xf] %v1009
      %1042 = vst [vmem:[#allocation3 + $0x3cc] sm:$0xf] %v1010
      %1043 = vst [vmem:[#allocation3 + $0x3f0] sm:$0xf] %v1011
      %1044 = vst [vmem:[#allocation3 + $0x414] sm:$0xf] %v1012
      %1045 = vst [vmem:[#allocation3 + $0x438] sm:$0xf] %v1013
      %1046 = vst [vmem:[#allocation3 + $0x45c] sm:$0xf] %v1014
      %v1047 = vld [vmem:[#allocation2] sm:$0xf]
      %v1048 = vld [vmem:[#allocation2 + $0x4] sm:$0xf]
      %v1049 = vld [vmem:[#allocation2 + $0x8] sm:$0x1]
      %v1050 = vld [vmem:[#allocation2 + $0xc] sm:$0xf]
      %v1051 = vld [vmem:[#allocation2 + $0x10] sm:$0xf]
      %v1052 = vld [vmem:[#allocation2 + $0x14] sm:$0x1]
      %v1053 = vld [vmem:[#allocation2 + $0x18] sm:$0xf]
      %v1054 = vld [vmem:[#allocation2 + $0x1c] sm:$0xf]
      %v1055 = vld [vmem:[#allocation2 + $0x20] sm:$0x1]
      %v1056 = vld [vmem:[#allocation2 + $0x24] sm:$0xf]
      %v1057 = vld [vmem:[#allocation2 + $0x28] sm:$0xf]
      %v1058 = vld [vmem:[#allocation2 + $0x2c] sm:$0x1]
      %v1059 = vld [vmem:[#allocation2 + $0x30] sm:$0xf]
      %v1060 = vld [vmem:[#allocation2 + $0x34] sm:$0xf]
      %v1061 = vld [vmem:[#allocation2 + $0x38] sm:$0x1]
      %v1062 = vld [vmem:[#allocation2 + $0x3c] sm:$0xf]
      %v1063 = vld [vmem:[#allocation2 + $0x40] sm:$0xf]
      %v1064 = vld [vmem:[#allocation2 + $0x44] sm:$0x1]
      %v1065 = vld [vmem:[#allocation2 + $0x48] sm:$0xf]
      %v1066 = vld [vmem:[#allocation2 + $0x4c] sm:$0xf]
      %v1067 = vld [vmem:[#allocation2 + $0x50] sm:$0x1]
      %v1068 = vld [vmem:[#allocation2 + $0x54] sm:$0xf]
      %v1069 = vld [vmem:[#allocation2 + $0x58] sm:$0xf]
      %v1070 = vld [vmem:[#allocation2 + $0x5c] sm:$0x1]
      %v1071 = vld [vmem:[#allocation2 + $0x60] sm:$0xf]
      %v1072 = vld [vmem:[#allocation2 + $0x64] sm:$0xf]
      %v1073 = vld [vmem:[#allocation2 + $0x68] sm:$0x1]
      %v1074 = vld [vmem:[#allocation2 + $0x6c] sm:$0xf]
      %v1075 = vld [vmem:[#allocation2 + $0x70] sm:$0xf]
      %v1076 = vld [vmem:[#allocation2 + $0x74] sm:$0x1]
      %v1077 = vld [vmem:[#allocation2 + $0x78] sm:$0xf]
      %v1078 = vld [vmem:[#allocation2 + $0x7c] sm:$0xf]
      %v1079 = vld [vmem:[#allocation2 + $0x80] sm:$0x1]
      %v1080 = vld [vmem:[#allocation2 + $0x84] sm:$0xf]
      %v1081 = vld [vmem:[#allocation2 + $0x88] sm:$0xf]
      %v1082 = vld [vmem:[#allocation2 + $0x8c] sm:$0x1]
      %v1083 = vld [vmem:[#allocation2 + $0x90] sm:$0xf]
      %v1084 = vld [vmem:[#allocation2 + $0x94] sm:$0xf]
      %v1085 = vld [vmem:[#allocation2 + $0x98] sm:$0x1]
      %v1086 = vld [vmem:[#allocation2 + $0x9c] sm:$0xf]
      %v1087 = vld [vmem:[#allocation2 + $0xa0] sm:$0xf]
      %v1088 = vld [vmem:[#allocation2 + $0xa4] sm:$0x1]
      %v1089 = vld [vmem:[#allocation2 + $0xa8] sm:$0xf]
      %v1090 = vld [vmem:[#allocation2 + $0xac] sm:$0xf]
      %v1091 = vld [vmem:[#allocation2 + $0xb0] sm:$0x1]
      %v1092 = vld [vmem:[#allocation2 + $0xb4] sm:$0xf]
      %v1093 = vld [vmem:[#allocation2 + $0xb8] sm:$0xf]
      %v1094 = vld [vmem:[#allocation2 + $0xbc] sm:$0x1]
      %vm1095 = vsmask.f32 3328
      %vm1096 = vsmask.f32 7440
      %vm1097 = vmor %vm1095, %vm1096
      %v1099 = vshrl.u32 %v1047, 16
      %v1101 = vrot.slane %v1099, 4
      %v1102 = vshll.u32 %v1047, 16
      %v1104 = vrot.slane %v1102, 5
      %v1105 = vor.u32 %v1101, %v1104
      %v1106 = vrot.slane %v1105, 4
      %v1108 = vshll.u32 %v1048, 16
      %v1110 = vrot.slane %v1108, 5
      %v1111 = vsel %vm1097, %v1106, %v1110
      %v1112 = vshrl.u32 %v1048, 16
      %v1114 = vrot.slane %v1112, 4
      %v1115 = vor.u32 %v1114, %v1110
      %v1116 = vrot.slane %v1115, 4
      %v1118 = vshll.u32 %v1049, 16
      %v1120 = vrot.slane %v1118, 5
      %v1121 = vsel %vm1097, %v1116, %v1120
      %v1123 = vshrl.u32 %v1050, 16
      %v1125 = vrot.slane %v1123, 4
      %v1126 = vshll.u32 %v1050, 16
      %v1128 = vrot.slane %v1126, 5
      %v1129 = vor.u32 %v1125, %v1128
      %v1130 = vrot.slane %v1129, 4
      %v1132 = vshll.u32 %v1051, 16
      %v1134 = vrot.slane %v1132, 5
      %v1135 = vsel %vm1097, %v1130, %v1134
      %v1136 = vshrl.u32 %v1051, 16
      %v1138 = vrot.slane %v1136, 4
      %v1139 = vor.u32 %v1138, %v1134
      %v1140 = vrot.slane %v1139, 4
      %v1142 = vshll.u32 %v1052, 16
      %v1144 = vrot.slane %v1142, 5
      %v1145 = vsel %vm1097, %v1140, %v1144
      %v1147 = vshrl.u32 %v1053, 16
      %v1149 = vrot.slane %v1147, 4
      %v1150 = vshll.u32 %v1053, 16
      %v1152 = vrot.slane %v1150, 5
      %v1153 = vor.u32 %v1149, %v1152
      %v1154 = vrot.slane %v1153, 4
      %v1156 = vshll.u32 %v1054, 16
      %v1158 = vrot.slane %v1156, 5
      %v1159 = vsel %vm1097, %v1154, %v1158
      %v1160 = vshrl.u32 %v1054, 16
      %v1162 = vrot.slane %v1160, 4
      %v1163 = vor.u32 %v1162, %v1158
      %v1164 = vrot.slane %v1163, 4
      %v1166 = vshll.u32 %v1055, 16
      %v1168 = vrot.slane %v1166, 5
      %v1169 = vsel %vm1097, %v1164, %v1168
      %v1171 = vshrl.u32 %v1056, 16
      %v1173 = vrot.slane %v1171, 4
      %v1174 = vshll.u32 %v1056, 16
      %v1176 = vrot.slane %v1174, 5
      %v1177 = vor.u32 %v1173, %v1176
      %v1178 = vrot.slane %v1177, 4
      %v1180 = vshll.u32 %v1057, 16
      %v1182 = vrot.slane %v1180, 5
      %v1183 = vsel %vm1097, %v1178, %v1182
      %v1184 = vshrl.u32 %v1057, 16
      %v1186 = vrot.slane %v1184, 4
      %v1187 = vor.u32 %v1186, %v1182
      %v1188 = vrot.slane %v1187, 4
      %v1190 = vshll.u32 %v1058, 16
      %v1192 = vrot.slane %v1190, 5
      %v1193 = vsel %vm1097, %v1188, %v1192
      %v1195 = vshrl.u32 %v1059, 16
      %v1197 = vrot.slane %v1195, 4
      %v1198 = vshll.u32 %v1059, 16
      %v1200 = vrot.slane %v1198, 5
      %v1201 = vor.u32 %v1197, %v1200
      %v1202 = vrot.slane %v1201, 4
      %v1204 = vshll.u32 %v1060, 16
      %v1206 = vrot.slane %v1204, 5
      %v1207 = vsel %vm1097, %v1202, %v1206
      %v1208 = vshrl.u32 %v1060, 16
      %v1210 = vrot.slane %v1208, 4
      %v1211 = vor.u32 %v1210, %v1206
      %v1212 = vrot.slane %v1211, 4
      %v1214 = vshll.u32 %v1061, 16
      %v1216 = vrot.slane %v1214, 5
      %v1217 = vsel %vm1097, %v1212, %v1216
      %v1219 = vshrl.u32 %v1062, 16
      %v1221 = vrot.slane %v1219, 4
      %v1222 = vshll.u32 %v1062, 16
      %v1224 = vrot.slane %v1222, 5
      %v1225 = vor.u32 %v1221, %v1224
      %v1226 = vrot.slane %v1225, 4
      %v1228 = vshll.u32 %v1063, 16
      %v1230 = vrot.slane %v1228, 5
      %v1231 = vsel %vm1097, %v1226, %v1230
      %v1232 = vshrl.u32 %v1063, 16
      %v1234 = vrot.slane %v1232, 4
      %v1235 = vor.u32 %v1234, %v1230
      %v1236 = vrot.slane %v1235, 4
      %v1238 = vshll.u32 %v1064, 16
      %v1240 = vrot.slane %v1238, 5
      %v1241 = vsel %vm1097, %v1236, %v1240
      %v1243 = vshrl.u32 %v1065, 16
      %v1245 = vrot.slane %v1243, 4
      %v1246 = vshll.u32 %v1065, 16
      %v1248 = vrot.slane %v1246, 5
      %v1249 = vor.u32 %v1245, %v1248
      %v1250 = vrot.slane %v1249, 4
      %v1252 = vshll.u32 %v1066, 16
      %v1254 = vrot.slane %v1252, 5
      %v1255 = vsel %vm1097, %v1250, %v1254
      %v1256 = vshrl.u32 %v1066, 16
      %v1258 = vrot.slane %v1256, 4
      %v1259 = vor.u32 %v1258, %v1254
      %v1260 = vrot.slane %v1259, 4
      %v1262 = vshll.u32 %v1067, 16
      %v1264 = vrot.slane %v1262, 5
      %v1265 = vsel %vm1097, %v1260, %v1264
      %v1267 = vshrl.u32 %v1068, 16
      %v1269 = vrot.slane %v1267, 4
      %v1270 = vshll.u32 %v1068, 16
      %v1272 = vrot.slane %v1270, 5
      %v1273 = vor.u32 %v1269, %v1272
      %v1274 = vrot.slane %v1273, 4
      %v1276 = vshll.u32 %v1069, 16
      %v1278 = vrot.slane %v1276, 5
      %v1279 = vsel %vm1097, %v1274, %v1278
      %v1280 = vshrl.u32 %v1069, 16
      %v1282 = vrot.slane %v1280, 4
      %v1283 = vor.u32 %v1282, %v1278
      %v1284 = vrot.slane %v1283, 4
      %v1286 = vshll.u32 %v1070, 16
      %v1288 = vrot.slane %v1286, 5
      %v1289 = vsel %vm1097, %v1284, %v1288
      %v1291 = vshrl.u32 %v1071, 16
      %v1293 = vrot.slane %v1291, 4
      %v1294 = vshll.u32 %v1071, 16
      %v1296 = vrot.slane %v1294, 5
      %v1297 = vor.u32 %v1293, %v1296
      %v1298 = vrot.slane %v1297, 4
      %v1300 = vshll.u32 %v1072, 16
      %v1302 = vrot.slane %v1300, 5
      %v1303 = vsel %vm1097, %v1298, %v1302
      %v1304 = vshrl.u32 %v1072, 16
      %v1306 = vrot.slane %v1304, 4
      %v1307 = vor.u32 %v1306, %v1302
      %v1308 = vrot.slane %v1307, 4
      %v1310 = vshll.u32 %v1073, 16
      %v1312 = vrot.slane %v1310, 5
      %v1313 = vsel %vm1097, %v1308, %v1312
      %v1315 = vshrl.u32 %v1074, 16
      %v1317 = vrot.slane %v1315, 4
      %v1318 = vshll.u32 %v1074, 16
      %v1320 = vrot.slane %v1318, 5
      %v1321 = vor.u32 %v1317, %v1320
      %v1322 = vrot.slane %v1321, 4
      %v1324 = vshll.u32 %v1075, 16
      %v1326 = vrot.slane %v1324, 5
      %v1327 = vsel %vm1097, %v1322, %v1326
      %v1328 = vshrl.u32 %v1075, 16
      %v1330 = vrot.slane %v1328, 4
      %v1331 = vor.u32 %v1330, %v1326
      %v1332 = vrot.slane %v1331, 4
      %v1334 = vshll.u32 %v1076, 16
      %v1336 = vrot.slane %v1334, 5
      %v1337 = vsel %vm1097, %v1332, %v1336
      %v1339 = vshrl.u32 %v1077, 16
      %v1341 = vrot.slane %v1339, 4
      %v1342 = vshll.u32 %v1077, 16
      %v1344 = vrot.slane %v1342, 5
      %v1345 = vor.u32 %v1341, %v1344
      %v1346 = vrot.slane %v1345, 4
      %v1348 = vshll.u32 %v1078, 16
      %v1350 = vrot.slane %v1348, 5
      %v1351 = vsel %vm1097, %v1346, %v1350
      %v1352 = vshrl.u32 %v1078, 16
      %v1354 = vrot.slane %v1352, 4
      %v1355 = vor.u32 %v1354, %v1350
      %v1356 = vrot.slane %v1355, 4
      %v1358 = vshll.u32 %v1079, 16
      %v1360 = vrot.slane %v1358, 5
      %v1361 = vsel %vm1097, %v1356, %v1360
      %v1363 = vshrl.u32 %v1080, 16
      %v1365 = vrot.slane %v1363, 4
      %v1366 = vshll.u32 %v1080, 16
      %v1368 = vrot.slane %v1366, 5
      %v1369 = vor.u32 %v1365, %v1368
      %v1370 = vrot.slane %v1369, 4
      %v1372 = vshll.u32 %v1081, 16
      %v1374 = vrot.slane %v1372, 5
      %v1375 = vsel %vm1097, %v1370, %v1374
      %v1376 = vshrl.u32 %v1081, 16
      %v1378 = vrot.slane %v1376, 4
      %v1379 = vor.u32 %v1378, %v1374
      %v1380 = vrot.slane %v1379, 4
      %v1382 = vshll.u32 %v1082, 16
      %v1384 = vrot.slane %v1382, 5
      %v1385 = vsel %vm1097, %v1380, %v1384
      %v1387 = vshrl.u32 %v1083, 16
      %v1389 = vrot.slane %v1387, 4
      %v1390 = vshll.u32 %v1083, 16
      %v1392 = vrot.slane %v1390, 5
      %v1393 = vor.u32 %v1389, %v1392
      %v1394 = vrot.slane %v1393, 4
      %v1396 = vshll.u32 %v1084, 16
      %v1398 = vrot.slane %v1396, 5
      %v1399 = vsel %vm1097, %v1394, %v1398
      %v1400 = vshrl.u32 %v1084, 16
      %v1402 = vrot.slane %v1400, 4
      %v1403 = vor.u32 %v1402, %v1398
      %v1404 = vrot.slane %v1403, 4
      %v1406 = vshll.u32 %v1085, 16
      %v1408 = vrot.slane %v1406, 5
      %v1409 = vsel %vm1097, %v1404, %v1408
      %v1411 = vshrl.u32 %v1086, 16
      %v1413 = vrot.slane %v1411, 4
      %v1414 = vshll.u32 %v1086, 16
      %v1416 = vrot.slane %v1414, 5
      %v1417 = vor.u32 %v1413, %v1416
      %v1418 = vrot.slane %v1417, 4
      %v1420 = vshll.u32 %v1087, 16
      %v1422 = vrot.slane %v1420, 5
      %v1423 = vsel %vm1097, %v1418, %v1422
      %v1424 = vshrl.u32 %v1087, 16
      %v1426 = vrot.slane %v1424, 4
      %v1427 = vor.u32 %v1426, %v1422
      %v1428 = vrot.slane %v1427, 4
      %v1430 = vshll.u32 %v1088, 16
      %v1432 = vrot.slane %v1430, 5
      %v1433 = vsel %vm1097, %v1428, %v1432
      %v1435 = vshrl.u32 %v1089, 16
      %v1437 = vrot.slane %v1435, 4
      %v1438 = vshll.u32 %v1089, 16
      %v1440 = vrot.slane %v1438, 5
      %v1441 = vor.u32 %v1437, %v1440
      %v1442 = vrot.slane %v1441, 4
      %v1444 = vshll.u32 %v1090, 16
      %v1446 = vrot.slane %v1444, 5
      %v1447 = vsel %vm1097, %v1442, %v1446
      %v1448 = vshrl.u32 %v1090, 16
      %v1450 = vrot.slane %v1448, 4
      %v1451 = vor.u32 %v1450, %v1446
      %v1452 = vrot.slane %v1451, 4
      %v1454 = vshll.u32 %v1091, 16
      %v1456 = vrot.slane %v1454, 5
      %v1457 = vsel %vm1097, %v1452, %v1456
      %v1459 = vshrl.u32 %v1092, 16
      %v1461 = vrot.slane %v1459, 4
      %v1462 = vshll.u32 %v1092, 16
      %v1464 = vrot.slane %v1462, 5
      %v1465 = vor.u32 %v1461, %v1464
      %v1466 = vrot.slane %v1465, 4
      %v1468 = vshll.u32 %v1093, 16
      %v1470 = vrot.slane %v1468, 5
      %v1471 = vsel %vm1097, %v1466, %v1470
      %v1472 = vshrl.u32 %v1093, 16
      %v1474 = vrot.slane %v1472, 4
      %v1475 = vor.u32 %v1474, %v1470
      %v1476 = vrot.slane %v1475, 4
      %v1478 = vshll.u32 %v1094, 16
      %v1480 = vrot.slane %v1478, 5
      %v1481 = vsel %vm1097, %v1476, %v1480
      %1514 = vst [vmem:[#allocation3 + $0x4] sm:$0xf] %v1111
      %1515 = vst [vmem:[#allocation3 + $0x28] sm:$0xf] %v1121
      %1516 = vst [vmem:[#allocation3 + $0x4c] sm:$0xf] %v1135
      %1517 = vst [vmem:[#allocation3 + $0x70] sm:$0xf] %v1145
      %1518 = vst [vmem:[#allocation3 + $0x94] sm:$0xf] %v1159
      %1519 = vst [vmem:[#allocation3 + $0xb8] sm:$0xf] %v1169
      %1520 = vst [vmem:[#allocation3 + $0xdc] sm:$0xf] %v1183
      %1521 = vst [vmem:[#allocation3 + $0x100] sm:$0xf] %v1193
      %1522 = vst [vmem:[#allocation3 + $0x124] sm:$0xf] %v1207
      %1523 = vst [vmem:[#allocation3 + $0x148] sm:$0xf] %v1217
      %1524 = vst [vmem:[#allocation3 + $0x16c] sm:$0xf] %v1231
      %1525 = vst [vmem:[#allocation3 + $0x190] sm:$0xf] %v1241
      %1526 = vst [vmem:[#allocation3 + $0x1b4] sm:$0xf] %v1255
      %1527 = vst [vmem:[#allocation3 + $0x1d8] sm:$0xf] %v1265
      %1528 = vst [vmem:[#allocation3 + $0x1fc] sm:$0xf] %v1279
      %1529 = vst [vmem:[#allocation3 + $0x220] sm:$0xf] %v1289
      %1530 = vst [vmem:[#allocation3 + $0x244] sm:$0xf] %v1303
      %1531 = vst [vmem:[#allocation3 + $0x268] sm:$0xf] %v1313
      %1532 = vst [vmem:[#allocation3 + $0x28c] sm:$0xf] %v1327
      %1533 = vst [vmem:[#allocation3 + $0x2b0] sm:$0xf] %v1337
      %1534 = vst [vmem:[#allocation3 + $0x2d4] sm:$0xf] %v1351
      %1535 = vst [vmem:[#allocation3 + $0x2f8] sm:$0xf] %v1361
      %1536 = vst [vmem:[#allocation3 + $0x31c] sm:$0xf] %v1375
      %1537 = vst [vmem:[#allocation3 + $0x340] sm:$0xf] %v1385
      %1538 = vst [vmem:[#allocation3 + $0x364] sm:$0xf] %v1399
      %1539 = vst [vmem:[#allocation3 + $0x388] sm:$0xf] %v1409
      %1540 = vst [vmem:[#allocation3 + $0x3ac] sm:$0xf] %v1423
      %1541 = vst [vmem:[#allocation3 + $0x3d0] sm:$0xf] %v1433
      %1542 = vst [vmem:[#allocation3 + $0x3f4] sm:$0xf] %v1447
      %1543 = vst [vmem:[#allocation3 + $0x418] sm:$0xf] %v1457
      %1544 = vst [vmem:[#allocation3 + $0x43c] sm:$0xf] %v1471
      %1545 = vst [vmem:[#allocation3 + $0x460] sm:$0xf] %v1481
      %v1546 = vld [vmem:[#allocation2] sm:$0xe]
      %v1547 = vld [vmem:[#allocation2 + $0x4] sm:$0xf]
      %v1548 = vld [vmem:[#allocation2 + $0x8] sm:$0x1]
      %v1549 = vld [vmem:[#allocation2 + $0xc] sm:$0xe]
      %v1550 = vld [vmem:[#allocation2 + $0x10] sm:$0xf]
      %v1551 = vld [vmem:[#allocation2 + $0x14] sm:$0x1]
      %v1552 = vld [vmem:[#allocation2 + $0x18] sm:$0xe]
      %v1553 = vld [vmem:[#allocation2 + $0x1c] sm:$0xf]
      %v1554 = vld [vmem:[#allocation2 + $0x20] sm:$0x1]
      %v1555 = vld [vmem:[#allocation2 + $0x24] sm:$0xe]
      %v1556 = vld [vmem:[#allocation2 + $0x28] sm:$0xf]
      %v1557 = vld [vmem:[#allocation2 + $0x2c] sm:$0x1]
      %v1558 = vld [vmem:[#allocation2 + $0x30] sm:$0xe]
      %v1559 = vld [vmem:[#allocation2 + $0x34] sm:$0xf]
      %v1560 = vld [vmem:[#allocation2 + $0x38] sm:$0x1]
      %v1561 = vld [vmem:[#allocation2 + $0x3c] sm:$0xe]
      %v1562 = vld [vmem:[#allocation2 + $0x40] sm:$0xf]
      %v1563 = vld [vmem:[#allocation2 + $0x44] sm:$0x1]
      %v1564 = vld [vmem:[#allocation2 + $0x48] sm:$0xe]
      %v1565 = vld [vmem:[#allocation2 + $0x4c] sm:$0xf]
      %v1566 = vld [vmem:[#allocation2 + $0x50] sm:$0x1]
      %v1567 = vld [vmem:[#allocation2 + $0x54] sm:$0xe]
      %v1568 = vld [vmem:[#allocation2 + $0x58] sm:$0xf]
      %v1569 = vld [vmem:[#allocation2 + $0x5c] sm:$0x1]
      %v1570 = vld [vmem:[#allocation2 + $0x60] sm:$0xe]
      %v1571 = vld [vmem:[#allocation2 + $0x64] sm:$0xf]
      %v1572 = vld [vmem:[#allocation2 + $0x68] sm:$0x1]
      %v1573 = vld [vmem:[#allocation2 + $0x6c] sm:$0xe]
      %v1574 = vld [vmem:[#allocation2 + $0x70] sm:$0xf]
      %v1575 = vld [vmem:[#allocation2 + $0x74] sm:$0x1]
      %v1576 = vld [vmem:[#allocation2 + $0x78] sm:$0xe]
      %v1577 = vld [vmem:[#allocation2 + $0x7c] sm:$0xf]
      %v1578 = vld [vmem:[#allocation2 + $0x80] sm:$0x1]
      %v1579 = vld [vmem:[#allocation2 + $0x84] sm:$0xe]
      %v1580 = vld [vmem:[#allocation2 + $0x88] sm:$0xf]
      %v1581 = vld [vmem:[#allocation2 + $0x8c] sm:$0x1]
      %v1582 = vld [vmem:[#allocation2 + $0x90] sm:$0xe]
      %v1583 = vld [vmem:[#allocation2 + $0x94] sm:$0xf]
      %v1584 = vld [vmem:[#allocation2 + $0x98] sm:$0x1]
      %v1585 = vld [vmem:[#allocation2 + $0x9c] sm:$0xe]
      %v1586 = vld [vmem:[#allocation2 + $0xa0] sm:$0xf]
      %v1587 = vld [vmem:[#allocation2 + $0xa4] sm:$0x1]
      %v1588 = vld [vmem:[#allocation2 + $0xa8] sm:$0xe]
      %v1589 = vld [vmem:[#allocation2 + $0xac] sm:$0xf]
      %v1590 = vld [vmem:[#allocation2 + $0xb0] sm:$0x1]
      %v1591 = vld [vmem:[#allocation2 + $0xb4] sm:$0xe]
      %v1592 = vld [vmem:[#allocation2 + $0xb8] sm:$0xf]
      %v1593 = vld [vmem:[#allocation2 + $0xbc] sm:$0x1]
      %vm1642 = vcmask 1042432
      %vm1643 = vcmask 1046532
      %vm1644 = vmor %vm1642, %vm1643
      %v1645 = vrot.slane %v1546, 5
      %v1646 = vrot.slane %v1645, 4
      %v1647 = vrot.slane %v1547, 5
      %v1648 = vsel %vm1644, %v1646, %v1647
      %v1649 = vrot.slane %v1647, 4
      %v1650 = vrot.slane %v1548, 5
      %v1651 = vsel %vm1644, %v1649, %v1650
      %v1652 = vrot.slane %v1549, 5
      %v1653 = vrot.slane %v1652, 4
      %v1654 = vrot.slane %v1550, 5
      %v1655 = vsel %vm1644, %v1653, %v1654
      %v1656 = vrot.slane %v1654, 4
      %v1657 = vrot.slane %v1551, 5
      %v1658 = vsel %vm1644, %v1656, %v1657
      %v1659 = vrot.slane %v1552, 5
      %v1660 = vrot.slane %v1659, 4
      %v1661 = vrot.slane %v1553, 5
      %v1662 = vsel %vm1644, %v1660, %v1661
      %v1663 = vrot.slane %v1661, 4
      %v1664 = vrot.slane %v1554, 5
      %v1665 = vsel %vm1644, %v1663, %v1664
      %v1666 = vrot.slane %v1555, 5
      %v1667 = vrot.slane %v1666, 4
      %v1668 = vrot.slane %v1556, 5
      %v1669 = vsel %vm1644, %v1667, %v1668
      %v1670 = vrot.slane %v1668, 4
      %v1671 = vrot.slane %v1557, 5
      %v1672 = vsel %vm1644, %v1670, %v1671
      %v1673 = vrot.slane %v1558, 5
      %v1674 = vrot.slane %v1673, 4
      %v1675 = vrot.slane %v1559, 5
      %v1676 = vsel %vm1644, %v1674, %v1675
      %v1677 = vrot.slane %v1675, 4
      %v1678 = vrot.slane %v1560, 5
      %v1679 = vsel %vm1644, %v1677, %v1678
      %v1680 = vrot.slane %v1561, 5
      %v1681 = vrot.slane %v1680, 4
      %v1682 = vrot.slane %v1562, 5
      %v1683 = vsel %vm1644, %v1681, %v1682
      %v1684 = vrot.slane %v1682, 4
      %v1685 = vrot.slane %v1563, 5
      %v1686 = vsel %vm1644, %v1684, %v1685
      %v1687 = vrot.slane %v1564, 5
      %v1688 = vrot.slane %v1687, 4
      %v1689 = vrot.slane %v1565, 5
      %v1690 = vsel %vm1644, %v1688, %v1689
      %v1691 = vrot.slane %v1689, 4
      %v1692 = vrot.slane %v1566, 5
      %v1693 = vsel %vm1644, %v1691, %v1692
      %v1694 = vrot.slane %v1567, 5
      %v1695 = vrot.slane %v1694, 4
      %v1696 = vrot.slane %v1568, 5
      %v1697 = vsel %vm1644, %v1695, %v1696
      %v1698 = vrot.slane %v1696, 4
      %v1699 = vrot.slane %v1569, 5
      %v1700 = vsel %vm1644, %v1698, %v1699
      %v1701 = vrot.slane %v1570, 5
      %v1702 = vrot.slane %v1701, 4
      %v1703 = vrot.slane %v1571, 5
      %v1704 = vsel %vm1644, %v1702, %v1703
      %v1705 = vrot.slane %v1703, 4
      %v1706 = vrot.slane %v1572, 5
      %v1707 = vsel %vm1644, %v1705, %v1706
      %v1708 = vrot.slane %v1573, 5
      %v1709 = vrot.slane %v1708, 4
      %v1710 = vrot.slane %v1574, 5
      %v1711 = vsel %vm1644, %v1709, %v1710
      %v1712 = vrot.slane %v1710, 4
      %v1713 = vrot.slane %v1575, 5
      %v1714 = vsel %vm1644, %v1712, %v1713
      %v1715 = vrot.slane %v1576, 5
      %v1716 = vrot.slane %v1715, 4
      %v1717 = vrot.slane %v1577, 5
      %v1718 = vsel %vm1644, %v1716, %v1717
      %v1719 = vrot.slane %v1717, 4
      %v1720 = vrot.slane %v1578, 5
      %v1721 = vsel %vm1644, %v1719, %v1720
      %v1722 = vrot.slane %v1579, 5
      %v1723 = vrot.slane %v1722, 4
      %v1724 = vrot.slane %v1580, 5
      %v1725 = vsel %vm1644, %v1723, %v1724
      %v1726 = vrot.slane %v1724, 4
      %v1727 = vrot.slane %v1581, 5
      %v1728 = vsel %vm1644, %v1726, %v1727
      %v1729 = vrot.slane %v1582, 5
      %v1730 = vrot.slane %v1729, 4
      %v1731 = vrot.slane %v1583, 5
      %v1732 = vsel %vm1644, %v1730, %v1731
      %v1733 = vrot.slane %v1731, 4
      %v1734 = vrot.slane %v1584, 5
      %v1735 = vsel %vm1644, %v1733, %v1734
      %v1736 = vrot.slane %v1585, 5
      %v1737 = vrot.slane %v1736, 4
      %v1738 = vrot.slane %v1586, 5
      %v1739 = vsel %vm1644, %v1737, %v1738
      %v1740 = vrot.slane %v1738, 4
      %v1741 = vrot.slane %v1587, 5
      %v1742 = vsel %vm1644, %v1740, %v1741
      %v1743 = vrot.slane %v1588, 5
      %v1744 = vrot.slane %v1743, 4
      %v1745 = vrot.slane %v1589, 5
      %v1746 = vsel %vm1644, %v1744, %v1745
      %v1747 = vrot.slane %v1745, 4
      %v1748 = vrot.slane %v1590, 5
      %v1749 = vsel %vm1644, %v1747, %v1748
      %v1750 = vrot.slane %v1591, 5
      %v1751 = vrot.slane %v1750, 4
      %v1752 = vrot.slane %v1592, 5
      %v1753 = vsel %vm1644, %v1751, %v1752
      %v1754 = vrot.slane %v1752, 4
      %v1755 = vrot.slane %v1593, 5
      %v1756 = vsel %vm1644, %v1754, %v1755
      %1789 = vst [vmem:[#allocation3 + $0x8] sm:$0xf] %v1648
      %1790 = vst [vmem:[#allocation3 + $0x2c] sm:$0xf] %v1651
      %1791 = vst [vmem:[#allocation3 + $0x50] sm:$0xf] %v1655
      %1792 = vst [vmem:[#allocation3 + $0x74] sm:$0xf] %v1658
      %1793 = vst [vmem:[#allocation3 + $0x98] sm:$0xf] %v1662
      %1794 = vst [vmem:[#allocation3 + $0xbc] sm:$0xf] %v1665
      %1795 = vst [vmem:[#allocation3 + $0xe0] sm:$0xf] %v1669
      %1796 = vst [vmem:[#allocation3 + $0x104] sm:$0xf] %v1672
      %1797 = vst [vmem:[#allocation3 + $0x128] sm:$0xf] %v1676
      %1798 = vst [vmem:[#allocation3 + $0x14c] sm:$0xf] %v1679
      %1799 = vst [vmem:[#allocation3 + $0x170] sm:$0xf] %v1683
      %1800 = vst [vmem:[#allocation3 + $0x194] sm:$0xf] %v1686
      %1801 = vst [vmem:[#allocation3 + $0x1b8] sm:$0xf] %v1690
      %1802 = vst [vmem:[#allocation3 + $0x1dc] sm:$0xf] %v1693
      %1803 = vst [vmem:[#allocation3 + $0x200] sm:$0xf] %v1697
      %1804 = vst [vmem:[#allocation3 + $0x224] sm:$0xf] %v1700
      %1805 = vst [vmem:[#allocation3 + $0x248] sm:$0xf] %v1704
      %1806 = vst [vmem:[#allocation3 + $0x26c] sm:$0xf] %v1707
      %1807 = vst [vmem:[#allocation3 + $0x290] sm:$0xf] %v1711
      %1808 = vst [vmem:[#allocation3 + $0x2b4] sm:$0xf] %v1714
      %1809 = vst [vmem:[#allocation3 + $0x2d8] sm:$0xf] %v1718
      %1810 = vst [vmem:[#allocation3 + $0x2fc] sm:$0xf] %v1721
      %1811 = vst [vmem:[#allocation3 + $0x320] sm:$0xf] %v1725
      %1812 = vst [vmem:[#allocation3 + $0x344] sm:$0xf] %v1728
      %1813 = vst [vmem:[#allocation3 + $0x368] sm:$0xf] %v1732
      %1814 = vst [vmem:[#allocation3 + $0x38c] sm:$0xf] %v1735
      %1815 = vst [vmem:[#allocation3 + $0x3b0] sm:$0xf] %v1739
      %1816 = vst [vmem:[#allocation3 + $0x3d4] sm:$0xf] %v1742
      %1817 = vst [vmem:[#allocation3 + $0x3f8] sm:$0xf] %v1746
      %1818 = vst [vmem:[#allocation3 + $0x41c] sm:$0xf] %v1749
      %1819 = vst [vmem:[#allocation3 + $0x440] sm:$0xf] %v1753
      %1820 = vst [vmem:[#allocation3 + $0x464] sm:$0xf] %v1756
      %v1821 = vld [vmem:[%s445] sm:$0xf]
      %v1822 = vld [vmem:[%s445 + $0x4] sm:$0xf]
      %v1823 = vld [vmem:[%s445 + $0xc] sm:$0xf]
      %v1824 = vld [vmem:[%s445 + $0x10] sm:$0xf]
      %v1825 = vld [vmem:[%s445 + $0x18] sm:$0xf]
      %v1826 = vld [vmem:[%s445 + $0x1c] sm:$0xf]
      %v1827 = vld [vmem:[%s445 + $0x24] sm:$0xf]
      %v1828 = vld [vmem:[%s445 + $0x28] sm:$0xf]
      %v1829 = vld [vmem:[%s445 + $0x30] sm:$0xf]
      %v1830 = vld [vmem:[%s445 + $0x34] sm:$0xf]
      %v1831 = vld [vmem:[%s445 + $0x3c] sm:$0xf]
      %v1832 = vld [vmem:[%s445 + $0x40] sm:$0xf]
      %v1833 = vld [vmem:[%s445 + $0x48] sm:$0xf]
      %v1834 = vld [vmem:[%s445 + $0x4c] sm:$0xf]
      %v1835 = vld [vmem:[%s445 + $0x54] sm:$0xf]
      %v1836 = vld [vmem:[%s445 + $0x58] sm:$0xf]
      %v1837 = vld [vmem:[%s445 + $0x60] sm:$0xf]
      %v1838 = vld [vmem:[%s445 + $0x64] sm:$0xf]
      %v1839 = vld [vmem:[%s445 + $0x6c] sm:$0xf]
      %v1840 = vld [vmem:[%s445 + $0x70] sm:$0xf]
      %v1841 = vld [vmem:[%s445 + $0x78] sm:$0xf]
      %v1842 = vld [vmem:[%s445 + $0x7c] sm:$0xf]
      %v1843 = vld [vmem:[%s445 + $0x84] sm:$0xf]
      %v1844 = vld [vmem:[%s445 + $0x88] sm:$0xf]
      %v1845 = vld [vmem:[%s445 + $0x90] sm:$0xf]
      %v1846 = vld [vmem:[%s445 + $0x94] sm:$0xf]
      %v1847 = vld [vmem:[%s445 + $0x9c] sm:$0xf]
      %v1848 = vld [vmem:[%s445 + $0xa0] sm:$0xf]
      %v1849 = vld [vmem:[%s445 + $0xa8] sm:$0xf]
      %v1850 = vld [vmem:[%s445 + $0xac] sm:$0xf]
      %v1851 = vld [vmem:[%s445 + $0xb4] sm:$0xf]
      %v1852 = vld [vmem:[%s445 + $0xb8] sm:$0xf]
      %1853 = vst [vmem:[#allocation3 + $0xc] sm:$0xf] %v1821
      %1854 = vst [vmem:[#allocation3 + $0x30] sm:$0xf] %v1822
      %1855 = vst [vmem:[#allocation3 + $0x54] sm:$0xf] %v1823
      %1856 = vst [vmem:[#allocation3 + $0x78] sm:$0xf] %v1824
      %1857 = vst [vmem:[#allocation3 + $0x9c] sm:$0xf] %v1825
      %1858 = vst [vmem:[#allocation3 + $0xc0] sm:$0xf] %v1826
      %1859 = vst [vmem:[#allocation3 + $0xe4] sm:$0xf] %v1827
      %1860 = vst [vmem:[#allocation3 + $0x108] sm:$0xf] %v1828
      %1861 = vst [vmem:[#allocation3 + $0x12c] sm:$0xf] %v1829
      %1862 = vst [vmem:[#allocation3 + $0x150] sm:$0xf] %v1830
      %1863 = vst [vmem:[#allocation3 + $0x174] sm:$0xf] %v1831
      %1864 = vst [vmem:[#allocation3 + $0x198] sm:$0xf] %v1832
      %1865 = vst [vmem:[#allocation3 + $0x1bc] sm:$0xf] %v1833
      %1866 = vst [vmem:[#allocation3 + $0x1e0] sm:$0xf] %v1834
      %1867 = vst [vmem:[#allocation3 + $0x204] sm:$0xf] %v1835
      %1868 = vst [vmem:[#allocation3 + $0x228] sm:$0xf] %v1836
      %1869 = vst [vmem:[#allocation3 + $0x24c] sm:$0xf] %v1837
      %1870 = vst [vmem:[#allocation3 + $0x270] sm:$0xf] %v1838
      %1871 = vst [vmem:[#allocation3 + $0x294] sm:$0xf] %v1839
      %1872 = vst [vmem:[#allocation3 + $0x2b8] sm:$0xf] %v1840
      %1873 = vst [vmem:[#allocation3 + $0x2dc] sm:$0xf] %v1841
      %1874 = vst [vmem:[#allocation3 + $0x300] sm:$0xf] %v1842
      %1875 = vst [vmem:[#allocation3 + $0x324] sm:$0xf] %v1843
      %1876 = vst [vmem:[#allocation3 + $0x348] sm:$0xf] %v1844
      %1877 = vst [vmem:[#allocation3 + $0x36c] sm:$0xf] %v1845
      %1878 = vst [vmem:[#allocation3 + $0x390] sm:$0xf] %v1846
      %1879 = vst [vmem:[#allocation3 + $0x3b4] sm:$0xf] %v1847
      %1880 = vst [vmem:[#allocation3 + $0x3d8] sm:$0xf] %v1848
      %1881 = vst [vmem:[#allocation3 + $0x3fc] sm:$0xf] %v1849
      %1882 = vst [vmem:[#allocation3 + $0x420] sm:$0xf] %v1850
      %1883 = vst [vmem:[#allocation3 + $0x444] sm:$0xf] %v1851
      %1884 = vst [vmem:[#allocation3 + $0x468] sm:$0xf] %v1852
      %v1885 = vld [vmem:[%s445] sm:$0xf]
      %v1886 = vld [vmem:[%s445 + $0x4] sm:$0xf]
      %v1887 = vld [vmem:[%s445 + $0x8] sm:$0x1]
      %v1888 = vld [vmem:[%s445 + $0xc] sm:$0xf]
      %v1889 = vld [vmem:[%s445 + $0x10] sm:$0xf]
      %v1890 = vld [vmem:[%s445 + $0x14] sm:$0x1]
      %v1891 = vld [vmem:[%s445 + $0x18] sm:$0xf]
      %v1892 = vld [vmem:[%s445 + $0x1c] sm:$0xf]
      %v1893 = vld [vmem:[%s445 + $0x20] sm:$0x1]
      %v1894 = vld [vmem:[%s445 + $0x24] sm:$0xf]
      %v1895 = vld [vmem:[%s445 + $0x28] sm:$0xf]
      %v1896 = vld [vmem:[%s445 + $0x2c] sm:$0x1]
      %v1897 = vld [vmem:[%s445 + $0x30] sm:$0xf]
      %v1898 = vld [vmem:[%s445 + $0x34] sm:$0xf]
      %v1899 = vld [vmem:[%s445 + $0x38] sm:$0x1]
      %v1900 = vld [vmem:[%s445 + $0x3c] sm:$0xf]
      %v1901 = vld [vmem:[%s445 + $0x40] sm:$0xf]
      %v1902 = vld [vmem:[%s445 + $0x44] sm:$0x1]
      %v1903 = vld [vmem:[%s445 + $0x48] sm:$0xf]
      %v1904 = vld [vmem:[%s445 + $0x4c] sm:$0xf]
      %v1905 = vld [vmem:[%s445 + $0x50] sm:$0x1]
      %v1906 = vld [vmem:[%s445 + $0x54] sm:$0xf]
      %v1907 = vld [vmem:[%s445 + $0x58] sm:$0xf]
      %v1908 = vld [vmem:[%s445 + $0x5c] sm:$0x1]
      %v1909 = vld [vmem:[%s445 + $0x60] sm:$0xf]
      %v1910 = vld [vmem:[%s445 + $0x64] sm:$0xf]
      %v1911 = vld [vmem:[%s445 + $0x68] sm:$0x1]
      %v1912 = vld [vmem:[%s445 + $0x6c] sm:$0xf]
      %v1913 = vld [vmem:[%s445 + $0x70] sm:$0xf]
      %v1914 = vld [vmem:[%s445 + $0x74] sm:$0x1]
      %v1915 = vld [vmem:[%s445 + $0x78] sm:$0xf]
      %v1916 = vld [vmem:[%s445 + $0x7c] sm:$0xf]
      %v1917 = vld [vmem:[%s445 + $0x80] sm:$0x1]
      %v1918 = vld [vmem:[%s445 + $0x84] sm:$0xf]
      %v1919 = vld [vmem:[%s445 + $0x88] sm:$0xf]
      %v1920 = vld [vmem:[%s445 + $0x8c] sm:$0x1]
      %v1921 = vld [vmem:[%s445 + $0x90] sm:$0xf]
      %v1922 = vld [vmem:[%s445 + $0x94] sm:$0xf]
      %v1923 = vld [vmem:[%s445 + $0x98] sm:$0x1]
      %v1924 = vld [vmem:[%s445 + $0x9c] sm:$0xf]
      %v1925 = vld [vmem:[%s445 + $0xa0] sm:$0xf]
      %v1926 = vld [vmem:[%s445 + $0xa4] sm:$0x1]
      %v1927 = vld [vmem:[%s445 + $0xa8] sm:$0xf]
      %v1928 = vld [vmem:[%s445 + $0xac] sm:$0xf]
      %v1929 = vld [vmem:[%s445 + $0xb0] sm:$0x1]
      %v1930 = vld [vmem:[%s445 + $0xb4] sm:$0xf]
      %v1931 = vld [vmem:[%s445 + $0xb8] sm:$0xf]
      %v1932 = vld [vmem:[%s445 + $0xbc] sm:$0x1]
      %v1934 = vshrl.u32 %v1885, 16
      %v1936 = vrot.slane %v1934, 4
      %v1937 = vshll.u32 %v1885, 16
      %v1939 = vrot.slane %v1937, 5
      %v1940 = vor.u32 %v1936, %v1939
      %v1941 = vrot.slane %v1940, 4
      %v1943 = vshll.u32 %v1886, 16
      %v1945 = vrot.slane %v1943, 5
      %v1946 = vsel %vm1097, %v1941, %v1945
      %v1947 = vshrl.u32 %v1886, 16
      %v1949 = vrot.slane %v1947, 4
      %v1950 = vor.u32 %v1949, %v1945
      %v1951 = vrot.slane %v1950, 4
      %v1953 = vshll.u32 %v1887, 16
      %v1955 = vrot.slane %v1953, 5
      %v1956 = vsel %vm1097, %v1951, %v1955
      %v1958 = vshrl.u32 %v1888, 16
      %v1960 = vrot.slane %v1958, 4
      %v1961 = vshll.u32 %v1888, 16
      %v1963 = vrot.slane %v1961, 5
      %v1964 = vor.u32 %v1960, %v1963
      %v1965 = vrot.slane %v1964, 4
      %v1967 = vshll.u32 %v1889, 16
      %v1969 = vrot.slane %v1967, 5
      %v1970 = vsel %vm1097, %v1965, %v1969
      %v1971 = vshrl.u32 %v1889, 16
      %v1973 = vrot.slane %v1971, 4
      %v1974 = vor.u32 %v1973, %v1969
      %v1975 = vrot.slane %v1974, 4
      %v1977 = vshll.u32 %v1890, 16
      %v1979 = vrot.slane %v1977, 5
      %v1980 = vsel %vm1097, %v1975, %v1979
      %v1982 = vshrl.u32 %v1891, 16
      %v1984 = vrot.slane %v1982, 4
      %v1985 = vshll.u32 %v1891, 16
      %v1987 = vrot.slane %v1985, 5
      %v1988 = vor.u32 %v1984, %v1987
      %v1989 = vrot.slane %v1988, 4
      %v1991 = vshll.u32 %v1892, 16
      %v1993 = vrot.slane %v1991, 5
      %v1994 = vsel %vm1097, %v1989, %v1993
      %v1995 = vshrl.u32 %v1892, 16
      %v1997 = vrot.slane %v1995, 4
      %v1998 = vor.u32 %v1997, %v1993
      %v1999 = vrot.slane %v1998, 4
      %v2001 = vshll.u32 %v1893, 16
      %v2003 = vrot.slane %v2001, 5
      %v2004 = vsel %vm1097, %v1999, %v2003
      %v2006 = vshrl.u32 %v1894, 16
      %v2008 = vrot.slane %v2006, 4
      %v2009 = vshll.u32 %v1894, 16
      %v2011 = vrot.slane %v2009, 5
      %v2012 = vor.u32 %v2008, %v2011
      %v2013 = vrot.slane %v2012, 4
      %v2015 = vshll.u32 %v1895, 16
      %v2017 = vrot.slane %v2015, 5
      %v2018 = vsel %vm1097, %v2013, %v2017
      %v2019 = vshrl.u32 %v1895, 16
      %v2021 = vrot.slane %v2019, 4
      %v2022 = vor.u32 %v2021, %v2017
      %v2023 = vrot.slane %v2022, 4
      %v2025 = vshll.u32 %v1896, 16
      %v2027 = vrot.slane %v2025, 5
      %v2028 = vsel %vm1097, %v2023, %v2027
      %v2030 = vshrl.u32 %v1897, 16
      %v2032 = vrot.slane %v2030, 4
      %v2033 = vshll.u32 %v1897, 16
      %v2035 = vrot.slane %v2033, 5
      %v2036 = vor.u32 %v2032, %v2035
      %v2037 = vrot.slane %v2036, 4
      %v2039 = vshll.u32 %v1898, 16
      %v2041 = vrot.slane %v2039, 5
      %v2042 = vsel %vm1097, %v2037, %v2041
      %v2043 = vshrl.u32 %v1898, 16
      %v2045 = vrot.slane %v2043, 4
      %v2046 = vor.u32 %v2045, %v2041
      %v2047 = vrot.slane %v2046, 4
      %v2049 = vshll.u32 %v1899, 16
      %v2051 = vrot.slane %v2049, 5
      %v2052 = vsel %vm1097, %v2047, %v2051
      %v2054 = vshrl.u32 %v1900, 16
      %v2056 = vrot.slane %v2054, 4
      %v2057 = vshll.u32 %v1900, 16
      %v2059 = vrot.slane %v2057, 5
      %v2060 = vor.u32 %v2056, %v2059
      %v2061 = vrot.slane %v2060, 4
      %v2063 = vshll.u32 %v1901, 16
      %v2065 = vrot.slane %v2063, 5
      %v2066 = vsel %vm1097, %v2061, %v2065
      %v2067 = vshrl.u32 %v1901, 16
      %v2069 = vrot.slane %v2067, 4
      %v2070 = vor.u32 %v2069, %v2065
      %v2071 = vrot.slane %v2070, 4
      %v2073 = vshll.u32 %v1902, 16
      %v2075 = vrot.slane %v2073, 5
      %v2076 = vsel %vm1097, %v2071, %v2075
      %v2078 = vshrl.u32 %v1903, 16
      %v2080 = vrot.slane %v2078, 4
      %v2081 = vshll.u32 %v1903, 16
      %v2083 = vrot.slane %v2081, 5
      %v2084 = vor.u32 %v2080, %v2083
      %v2085 = vrot.slane %v2084, 4
      %v2087 = vshll.u32 %v1904, 16
      %v2089 = vrot.slane %v2087, 5
      %v2090 = vsel %vm1097, %v2085, %v2089
      %v2091 = vshrl.u32 %v1904, 16
      %v2093 = vrot.slane %v2091, 4
      %v2094 = vor.u32 %v2093, %v2089
      %v2095 = vrot.slane %v2094, 4
      %v2097 = vshll.u32 %v1905, 16
      %v2099 = vrot.slane %v2097, 5
      %v2100 = vsel %vm1097, %v2095, %v2099
      %v2102 = vshrl.u32 %v1906, 16
      %v2104 = vrot.slane %v2102, 4
      %v2105 = vshll.u32 %v1906, 16
      %v2107 = vrot.slane %v2105, 5
      %v2108 = vor.u32 %v2104, %v2107
      %v2109 = vrot.slane %v2108, 4
      %v2111 = vshll.u32 %v1907, 16
      %v2113 = vrot.slane %v2111, 5
      %v2114 = vsel %vm1097, %v2109, %v2113
      %v2115 = vshrl.u32 %v1907, 16
      %v2117 = vrot.slane %v2115, 4
      %v2118 = vor.u32 %v2117, %v2113
      %v2119 = vrot.slane %v2118, 4
      %v2121 = vshll.u32 %v1908, 16
      %v2123 = vrot.slane %v2121, 5
      %v2124 = vsel %vm1097, %v2119, %v2123
      %v2126 = vshrl.u32 %v1909, 16
      %v2128 = vrot.slane %v2126, 4
      %v2129 = vshll.u32 %v1909, 16
      %v2131 = vrot.slane %v2129, 5
      %v2132 = vor.u32 %v2128, %v2131
      %v2133 = vrot.slane %v2132, 4
      %v2135 = vshll.u32 %v1910, 16
      %v2137 = vrot.slane %v2135, 5
      %v2138 = vsel %vm1097, %v2133, %v2137
      %v2139 = vshrl.u32 %v1910, 16
      %v2141 = vrot.slane %v2139, 4
      %v2142 = vor.u32 %v2141, %v2137
      %v2143 = vrot.slane %v2142, 4
      %v2145 = vshll.u32 %v1911, 16
      %v2147 = vrot.slane %v2145, 5
      %v2148 = vsel %vm1097, %v2143, %v2147
      %v2150 = vshrl.u32 %v1912, 16
      %v2152 = vrot.slane %v2150, 4
      %v2153 = vshll.u32 %v1912, 16
      %v2155 = vrot.slane %v2153, 5
      %v2156 = vor.u32 %v2152, %v2155
      %v2157 = vrot.slane %v2156, 4
      %v2159 = vshll.u32 %v1913, 16
      %v2161 = vrot.slane %v2159, 5
      %v2162 = vsel %vm1097, %v2157, %v2161
      %v2163 = vshrl.u32 %v1913, 16
      %v2165 = vrot.slane %v2163, 4
      %v2166 = vor.u32 %v2165, %v2161
      %v2167 = vrot.slane %v2166, 4
      %v2169 = vshll.u32 %v1914, 16
      %v2171 = vrot.slane %v2169, 5
      %v2172 = vsel %vm1097, %v2167, %v2171
      %v2174 = vshrl.u32 %v1915, 16
      %v2176 = vrot.slane %v2174, 4
      %v2177 = vshll.u32 %v1915, 16
      %v2179 = vrot.slane %v2177, 5
      %v2180 = vor.u32 %v2176, %v2179
      %v2181 = vrot.slane %v2180, 4
      %v2183 = vshll.u32 %v1916, 16
      %v2185 = vrot.slane %v2183, 5
      %v2186 = vsel %vm1097, %v2181, %v2185
      %v2187 = vshrl.u32 %v1916, 16
      %v2189 = vrot.slane %v2187, 4
      %v2190 = vor.u32 %v2189, %v2185
      %v2191 = vrot.slane %v2190, 4
      %v2193 = vshll.u32 %v1917, 16
      %v2195 = vrot.slane %v2193, 5
      %v2196 = vsel %vm1097, %v2191, %v2195
      %v2198 = vshrl.u32 %v1918, 16
      %v2200 = vrot.slane %v2198, 4
      %v2201 = vshll.u32 %v1918, 16
      %v2203 = vrot.slane %v2201, 5
      %v2204 = vor.u32 %v2200, %v2203
      %v2205 = vrot.slane %v2204, 4
      %v2207 = vshll.u32 %v1919, 16
      %v2209 = vrot.slane %v2207, 5
      %v2210 = vsel %vm1097, %v2205, %v2209
      %v2211 = vshrl.u32 %v1919, 16
      %v2213 = vrot.slane %v2211, 4
      %v2214 = vor.u32 %v2213, %v2209
      %v2215 = vrot.slane %v2214, 4
      %v2217 = vshll.u32 %v1920, 16
      %v2219 = vrot.slane %v2217, 5
      %v2220 = vsel %vm1097, %v2215, %v2219
      %v2222 = vshrl.u32 %v1921, 16
      %v2224 = vrot.slane %v2222, 4
      %v2225 = vshll.u32 %v1921, 16
      %v2227 = vrot.slane %v2225, 5
      %v2228 = vor.u32 %v2224, %v2227
      %v2229 = vrot.slane %v2228, 4
      %v2231 = vshll.u32 %v1922, 16
      %v2233 = vrot.slane %v2231, 5
      %v2234 = vsel %vm1097, %v2229, %v2233
      %v2235 = vshrl.u32 %v1922, 16
      %v2237 = vrot.slane %v2235, 4
      %v2238 = vor.u32 %v2237, %v2233
      %v2239 = vrot.slane %v2238, 4
      %v2241 = vshll.u32 %v1923, 16
      %v2243 = vrot.slane %v2241, 5
      %v2244 = vsel %vm1097, %v2239, %v2243
      %v2246 = vshrl.u32 %v1924, 16
      %v2248 = vrot.slane %v2246, 4
      %v2249 = vshll.u32 %v1924, 16
      %v2251 = vrot.slane %v2249, 5
      %v2252 = vor.u32 %v2248, %v2251
      %v2253 = vrot.slane %v2252, 4
      %v2255 = vshll.u32 %v1925, 16
      %v2257 = vrot.slane %v2255, 5
      %v2258 = vsel %vm1097, %v2253, %v2257
      %v2259 = vshrl.u32 %v1925, 16
      %v2261 = vrot.slane %v2259, 4
      %v2262 = vor.u32 %v2261, %v2257
      %v2263 = vrot.slane %v2262, 4
      %v2265 = vshll.u32 %v1926, 16
      %v2267 = vrot.slane %v2265, 5
      %v2268 = vsel %vm1097, %v2263, %v2267
      %v2270 = vshrl.u32 %v1927, 16
      %v2272 = vrot.slane %v2270, 4
      %v2273 = vshll.u32 %v1927, 16
      %v2275 = vrot.slane %v2273, 5
      %v2276 = vor.u32 %v2272, %v2275
      %v2277 = vrot.slane %v2276, 4
      %v2279 = vshll.u32 %v1928, 16
      %v2281 = vrot.slane %v2279, 5
      %v2282 = vsel %vm1097, %v2277, %v2281
      %v2283 = vshrl.u32 %v1928, 16
      %v2285 = vrot.slane %v2283, 4
      %v2286 = vor.u32 %v2285, %v2281
      %v2287 = vrot.slane %v2286, 4
      %v2289 = vshll.u32 %v1929, 16
      %v2291 = vrot.slane %v2289, 5
      %v2292 = vsel %vm1097, %v2287, %v2291
      %v2294 = vshrl.u32 %v1930, 16
      %v2296 = vrot.slane %v2294, 4
      %v2297 = vshll.u32 %v1930, 16
      %v2299 = vrot.slane %v2297, 5
      %v2300 = vor.u32 %v2296, %v2299
      %v2301 = vrot.slane %v2300, 4
      %v2303 = vshll.u32 %v1931, 16
      %v2305 = vrot.slane %v2303, 5
      %v2306 = vsel %vm1097, %v2301, %v2305
      %v2307 = vshrl.u32 %v1931, 16
      %v2309 = vrot.slane %v2307, 4
      %v2310 = vor.u32 %v2309, %v2305
      %v2311 = vrot.slane %v2310, 4
      %v2313 = vshll.u32 %v1932, 16
      %v2315 = vrot.slane %v2313, 5
      %v2316 = vsel %vm1097, %v2311, %v2315
      %2349 = vst [vmem:[#allocation3 + $0x10] sm:$0xf] %v1946
      %2350 = vst [vmem:[#allocation3 + $0x34] sm:$0xf] %v1956
      %2351 = vst [vmem:[#allocation3 + $0x58] sm:$0xf] %v1970
      %2352 = vst [vmem:[#allocation3 + $0x7c] sm:$0xf] %v1980
      %2353 = vst [vmem:[#allocation3 + $0xa0] sm:$0xf] %v1994
      %2354 = vst [vmem:[#allocation3 + $0xc4] sm:$0xf] %v2004
      %2355 = vst [vmem:[#allocation3 + $0xe8] sm:$0xf] %v2018
      %2356 = vst [vmem:[#allocation3 + $0x10c] sm:$0xf] %v2028
      %2357 = vst [vmem:[#allocation3 + $0x130] sm:$0xf] %v2042
      %2358 = vst [vmem:[#allocation3 + $0x154] sm:$0xf] %v2052
      %2359 = vst [vmem:[#allocation3 + $0x178] sm:$0xf] %v2066
      %2360 = vst [vmem:[#allocation3 + $0x19c] sm:$0xf] %v2076
      %2361 = vst [vmem:[#allocation3 + $0x1c0] sm:$0xf] %v2090
      %2362 = vst [vmem:[#allocation3 + $0x1e4] sm:$0xf] %v2100
      %2363 = vst [vmem:[#allocation3 + $0x208] sm:$0xf] %v2114
      %2364 = vst [vmem:[#allocation3 + $0x22c] sm:$0xf] %v2124
      %2365 = vst [vmem:[#allocation3 + $0x250] sm:$0xf] %v2138
      %2366 = vst [vmem:[#allocation3 + $0x274] sm:$0xf] %v2148
      %2367 = vst [vmem:[#allocation3 + $0x298] sm:$0xf] %v2162
      %2368 = vst [vmem:[#allocation3 + $0x2bc] sm:$0xf] %v2172
      %2369 = vst [vmem:[#allocation3 + $0x2e0] sm:$0xf] %v2186
      %2370 = vst [vmem:[#allocation3 + $0x304] sm:$0xf] %v2196
      %2371 = vst [vmem:[#allocation3 + $0x328] sm:$0xf] %v2210
      %2372 = vst [vmem:[#allocation3 + $0x34c] sm:$0xf] %v2220
      %2373 = vst [vmem:[#allocation3 + $0x370] sm:$0xf] %v2234
      %2374 = vst [vmem:[#allocation3 + $0x394] sm:$0xf] %v2244
      %2375 = vst [vmem:[#allocation3 + $0x3b8] sm:$0xf] %v2258
      %2376 = vst [vmem:[#allocation3 + $0x3dc] sm:$0xf] %v2268
      %2377 = vst [vmem:[#allocation3 + $0x400] sm:$0xf] %v2282
      %2378 = vst [vmem:[#allocation3 + $0x424] sm:$0xf] %v2292
      %2379 = vst [vmem:[#allocation3 + $0x448] sm:$0xf] %v2306
      %2380 = vst [vmem:[#allocation3 + $0x46c] sm:$0xf] %v2316
      %v2381 = vld [vmem:[%s445] sm:$0xe]
      %v2382 = vld [vmem:[%s445 + $0x4] sm:$0xf]
      %v2383 = vld [vmem:[%s445 + $0x8] sm:$0x1]
      %v2384 = vld [vmem:[%s445 + $0xc] sm:$0xe]
      %v2385 = vld [vmem:[%s445 + $0x10] sm:$0xf]
      %v2386 = vld [vmem:[%s445 + $0x14] sm:$0x1]
      %v2387 = vld [vmem:[%s445 + $0x18] sm:$0xe]
      %v2388 = vld [vmem:[%s445 + $0x1c] sm:$0xf]
      %v2389 = vld [vmem:[%s445 + $0x20] sm:$0x1]
      %v2390 = vld [vmem:[%s445 + $0x24] sm:$0xe]
      %v2391 = vld [vmem:[%s445 + $0x28] sm:$0xf]
      %v2392 = vld [vmem:[%s445 + $0x2c] sm:$0x1]
      %v2393 = vld [vmem:[%s445 + $0x30] sm:$0xe]
      %v2394 = vld [vmem:[%s445 + $0x34] sm:$0xf]
      %v2395 = vld [vmem:[%s445 + $0x38] sm:$0x1]
      %v2396 = vld [vmem:[%s445 + $0x3c] sm:$0xe]
      %v2397 = vld [vmem:[%s445 + $0x40] sm:$0xf]
      %v2398 = vld [vmem:[%s445 + $0x44] sm:$0x1]
      %v2399 = vld [vmem:[%s445 + $0x48] sm:$0xe]
      %v2400 = vld [vmem:[%s445 + $0x4c] sm:$0xf]
      %v2401 = vld [vmem:[%s445 + $0x50] sm:$0x1]
      %v2402 = vld [vmem:[%s445 + $0x54] sm:$0xe]
      %v2403 = vld [vmem:[%s445 + $0x58] sm:$0xf]
      %v2404 = vld [vmem:[%s445 + $0x5c] sm:$0x1]
      %v2405 = vld [vmem:[%s445 + $0x60] sm:$0xe]
      %v2406 = vld [vmem:[%s445 + $0x64] sm:$0xf]
      %v2407 = vld [vmem:[%s445 + $0x68] sm:$0x1]
      %v2408 = vld [vmem:[%s445 + $0x6c] sm:$0xe]
      %v2409 = vld [vmem:[%s445 + $0x70] sm:$0xf]
      %v2410 = vld [vmem:[%s445 + $0x74] sm:$0x1]
      %v2411 = vld [vmem:[%s445 + $0x78] sm:$0xe]
      %v2412 = vld [vmem:[%s445 + $0x7c] sm:$0xf]
      %v2413 = vld [vmem:[%s445 + $0x80] sm:$0x1]
      %v2414 = vld [vmem:[%s445 + $0x84] sm:$0xe]
      %v2415 = vld [vmem:[%s445 + $0x88] sm:$0xf]
      %v2416 = vld [vmem:[%s445 + $0x8c] sm:$0x1]
      %v2417 = vld [vmem:[%s445 + $0x90] sm:$0xe]
      %v2418 = vld [vmem:[%s445 + $0x94] sm:$0xf]
      %v2419 = vld [vmem:[%s445 + $0x98] sm:$0x1]
      %v2420 = vld [vmem:[%s445 + $0x9c] sm:$0xe]
      %v2421 = vld [vmem:[%s445 + $0xa0] sm:$0xf]
      %v2422 = vld [vmem:[%s445 + $0xa4] sm:$0x1]
      %v2423 = vld [vmem:[%s445 + $0xa8] sm:$0xe]
      %v2424 = vld [vmem:[%s445 + $0xac] sm:$0xf]
      %v2425 = vld [vmem:[%s445 + $0xb0] sm:$0x1]
      %v2426 = vld [vmem:[%s445 + $0xb4] sm:$0xe]
      %v2427 = vld [vmem:[%s445 + $0xb8] sm:$0xf]
      %v2428 = vld [vmem:[%s445 + $0xbc] sm:$0x1]
      %v2477 = vrot.slane %v2381, 5
      %v2478 = vrot.slane %v2477, 4
      %v2479 = vrot.slane %v2382, 5
      %v2480 = vsel %vm1644, %v2478, %v2479
      %v2481 = vrot.slane %v2479, 4
      %v2482 = vrot.slane %v2383, 5
      %v2483 = vsel %vm1644, %v2481, %v2482
      %v2484 = vrot.slane %v2384, 5
      %v2485 = vrot.slane %v2484, 4
      %v2486 = vrot.slane %v2385, 5
      %v2487 = vsel %vm1644, %v2485, %v2486
      %v2488 = vrot.slane %v2486, 4
      %v2489 = vrot.slane %v2386, 5
      %v2490 = vsel %vm1644, %v2488, %v2489
      %v2491 = vrot.slane %v2387, 5
      %v2492 = vrot.slane %v2491, 4
      %v2493 = vrot.slane %v2388, 5
      %v2494 = vsel %vm1644, %v2492, %v2493
      %v2495 = vrot.slane %v2493, 4
      %v2496 = vrot.slane %v2389, 5
      %v2497 = vsel %vm1644, %v2495, %v2496
      %v2498 = vrot.slane %v2390, 5
      %v2499 = vrot.slane %v2498, 4
      %v2500 = vrot.slane %v2391, 5
      %v2501 = vsel %vm1644, %v2499, %v2500
      %v2502 = vrot.slane %v2500, 4
      %v2503 = vrot.slane %v2392, 5
      %v2504 = vsel %vm1644, %v2502, %v2503
      %v2505 = vrot.slane %v2393, 5
      %v2506 = vrot.slane %v2505, 4
      %v2507 = vrot.slane %v2394, 5
      %v2508 = vsel %vm1644, %v2506, %v2507
      %v2509 = vrot.slane %v2507, 4
      %v2510 = vrot.slane %v2395, 5
      %v2511 = vsel %vm1644, %v2509, %v2510
      %v2512 = vrot.slane %v2396, 5
      %v2513 = vrot.slane %v2512, 4
      %v2514 = vrot.slane %v2397, 5
      %v2515 = vsel %vm1644, %v2513, %v2514
      %v2516 = vrot.slane %v2514, 4
      %v2517 = vrot.slane %v2398, 5
      %v2518 = vsel %vm1644, %v2516, %v2517
      %v2519 = vrot.slane %v2399, 5
      %v2520 = vrot.slane %v2519, 4
      %v2521 = vrot.slane %v2400, 5
      %v2522 = vsel %vm1644, %v2520, %v2521
      %v2523 = vrot.slane %v2521, 4
      %v2524 = vrot.slane %v2401, 5
      %v2525 = vsel %vm1644, %v2523, %v2524
      %v2526 = vrot.slane %v2402, 5
      %v2527 = vrot.slane %v2526, 4
      %v2528 = vrot.slane %v2403, 5
      %v2529 = vsel %vm1644, %v2527, %v2528
      %v2530 = vrot.slane %v2528, 4
      %v2531 = vrot.slane %v2404, 5
      %v2532 = vsel %vm1644, %v2530, %v2531
      %v2533 = vrot.slane %v2405, 5
      %v2534 = vrot.slane %v2533, 4
      %v2535 = vrot.slane %v2406, 5
      %v2536 = vsel %vm1644, %v2534, %v2535
      %v2537 = vrot.slane %v2535, 4
      %v2538 = vrot.slane %v2407, 5
      %v2539 = vsel %vm1644, %v2537, %v2538
      %v2540 = vrot.slane %v2408, 5
      %v2541 = vrot.slane %v2540, 4
      %v2542 = vrot.slane %v2409, 5
      %v2543 = vsel %vm1644, %v2541, %v2542
      %v2544 = vrot.slane %v2542, 4
      %v2545 = vrot.slane %v2410, 5
      %v2546 = vsel %vm1644, %v2544, %v2545
      %v2547 = vrot.slane %v2411, 5
      %v2548 = vrot.slane %v2547, 4
      %v2549 = vrot.slane %v2412, 5
      %v2550 = vsel %vm1644, %v2548, %v2549
      %v2551 = vrot.slane %v2549, 4
      %v2552 = vrot.slane %v2413, 5
      %v2553 = vsel %vm1644, %v2551, %v2552
      %v2554 = vrot.slane %v2414, 5
      %v2555 = vrot.slane %v2554, 4
      %v2556 = vrot.slane %v2415, 5
      %v2557 = vsel %vm1644, %v2555, %v2556
      %v2558 = vrot.slane %v2556, 4
      %v2559 = vrot.slane %v2416, 5
      %v2560 = vsel %vm1644, %v2558, %v2559
      %v2561 = vrot.slane %v2417, 5
      %v2562 = vrot.slane %v2561, 4
      %v2563 = vrot.slane %v2418, 5
      %v2564 = vsel %vm1644, %v2562, %v2563
      %v2565 = vrot.slane %v2563, 4
      %v2566 = vrot.slane %v2419, 5
      %v2567 = vsel %vm1644, %v2565, %v2566
      %v2568 = vrot.slane %v2420, 5
      %v2569 = vrot.slane %v2568, 4
      %v2570 = vrot.slane %v2421, 5
      %v2571 = vsel %vm1644, %v2569, %v2570
      %v2572 = vrot.slane %v2570, 4
      %v2573 = vrot.slane %v2422, 5
      %v2574 = vsel %vm1644, %v2572, %v2573
      %v2575 = vrot.slane %v2423, 5
      %v2576 = vrot.slane %v2575, 4
      %v2577 = vrot.slane %v2424, 5
      %v2578 = vsel %vm1644, %v2576, %v2577
      %v2579 = vrot.slane %v2577, 4
      %v2580 = vrot.slane %v2425, 5
      %v2581 = vsel %vm1644, %v2579, %v2580
      %v2582 = vrot.slane %v2426, 5
      %v2583 = vrot.slane %v2582, 4
      %v2584 = vrot.slane %v2427, 5
      %v2585 = vsel %vm1644, %v2583, %v2584
      %v2586 = vrot.slane %v2584, 4
      %v2587 = vrot.slane %v2428, 5
      %v2588 = vsel %vm1644, %v2586, %v2587
      %2621 = vst [vmem:[#allocation3 + $0x14] sm:$0xf] %v2480
      %2622 = vst [vmem:[#allocation3 + $0x38] sm:$0xf] %v2483
      %2623 = vst [vmem:[#allocation3 + $0x5c] sm:$0xf] %v2487
      %2624 = vst [vmem:[#allocation3 + $0x80] sm:$0xf] %v2490
      %2625 = vst [vmem:[#allocation3 + $0xa4] sm:$0xf] %v2494
      %2626 = vst [vmem:[#allocation3 + $0xc8] sm:$0xf] %v2497
      %2627 = vst [vmem:[#allocation3 + $0xec] sm:$0xf] %v2501
      %2628 = vst [vmem:[#allocation3 + $0x110] sm:$0xf] %v2504
      %2629 = vst [vmem:[#allocation3 + $0x134] sm:$0xf] %v2508
      %2630 = vst [vmem:[#allocation3 + $0x158] sm:$0xf] %v2511
      %2631 = vst [vmem:[#allocation3 + $0x17c] sm:$0xf] %v2515
      %2632 = vst [vmem:[#allocation3 + $0x1a0] sm:$0xf] %v2518
      %2633 = vst [vmem:[#allocation3 + $0x1c4] sm:$0xf] %v2522
      %2634 = vst [vmem:[#allocation3 + $0x1e8] sm:$0xf] %v2525
      %2635 = vst [vmem:[#allocation3 + $0x20c] sm:$0xf] %v2529
      %2636 = vst [vmem:[#allocation3 + $0x230] sm:$0xf] %v2532
      %2637 = vst [vmem:[#allocation3 + $0x254] sm:$0xf] %v2536
      %2638 = vst [vmem:[#allocation3 + $0x278] sm:$0xf] %v2539
      %2639 = vst [vmem:[#allocation3 + $0x29c] sm:$0xf] %v2543
      %2640 = vst [vmem:[#allocation3 + $0x2c0] sm:$0xf] %v2546
      %2641 = vst [vmem:[#allocation3 + $0x2e4] sm:$0xf] %v2550
      %2642 = vst [vmem:[#allocation3 + $0x308] sm:$0xf] %v2553
      %2643 = vst [vmem:[#allocation3 + $0x32c] sm:$0xf] %v2557
      %2644 = vst [vmem:[#allocation3 + $0x350] sm:$0xf] %v2560
      %2645 = vst [vmem:[#allocation3 + $0x374] sm:$0xf] %v2564
      %2646 = vst [vmem:[#allocation3 + $0x398] sm:$0xf] %v2567
      %2647 = vst [vmem:[#allocation3 + $0x3bc] sm:$0xf] %v2571
      %2648 = vst [vmem:[#allocation3 + $0x3e0] sm:$0xf] %v2574
      %2649 = vst [vmem:[#allocation3 + $0x404] sm:$0xf] %v2578
      %2650 = vst [vmem:[#allocation3 + $0x428] sm:$0xf] %v2581
      %2651 = vst [vmem:[#allocation3 + $0x44c] sm:$0xf] %v2585
      %2652 = vst [vmem:[#allocation3 + $0x470] sm:$0xf] %v2588
      %s2653 = scalar_lea.vmem [#allocation2], 24
      %v2654 = vld [vmem:[%s2653] sm:$0xf]
      %v2655 = vld [vmem:[%s2653 + $0x4] sm:$0xf]
      %v2656 = vld [vmem:[%s2653 + $0xc] sm:$0xf]
      %v2657 = vld [vmem:[%s2653 + $0x10] sm:$0xf]
      %v2658 = vld [vmem:[%s2653 + $0x18] sm:$0xf]
      %v2659 = vld [vmem:[%s2653 + $0x1c] sm:$0xf]
      %v2660 = vld [vmem:[%s2653 + $0x24] sm:$0xf]
      %v2661 = vld [vmem:[%s2653 + $0x28] sm:$0xf]
      %v2662 = vld [vmem:[%s2653 + $0x30] sm:$0xf]
      %v2663 = vld [vmem:[%s2653 + $0x34] sm:$0xf]
      %v2664 = vld [vmem:[%s2653 + $0x3c] sm:$0xf]
      %v2665 = vld [vmem:[%s2653 + $0x40] sm:$0xf]
      %v2666 = vld [vmem:[%s2653 + $0x48] sm:$0xf]
      %v2667 = vld [vmem:[%s2653 + $0x4c] sm:$0xf]
      %v2668 = vld [vmem:[%s2653 + $0x54] sm:$0xf]
      %v2669 = vld [vmem:[%s2653 + $0x58] sm:$0xf]
      %v2670 = vld [vmem:[%s2653 + $0x60] sm:$0xf]
      %v2671 = vld [vmem:[%s2653 + $0x64] sm:$0xf]
      %v2672 = vld [vmem:[%s2653 + $0x6c] sm:$0xf]
      %v2673 = vld [vmem:[%s2653 + $0x70] sm:$0xf]
      %v2674 = vld [vmem:[%s2653 + $0x78] sm:$0xf]
      %v2675 = vld [vmem:[%s2653 + $0x7c] sm:$0xf]
      %v2676 = vld [vmem:[%s2653 + $0x84] sm:$0xf]
      %v2677 = vld [vmem:[%s2653 + $0x88] sm:$0xf]
      %v2678 = vld [vmem:[%s2653 + $0x90] sm:$0xf]
      %v2679 = vld [vmem:[%s2653 + $0x94] sm:$0xf]
      %v2680 = vld [vmem:[%s2653 + $0x9c] sm:$0xf]
      %v2681 = vld [vmem:[%s2653 + $0xa0] sm:$0xf]
      %v2682 = vld [vmem:[%s2653 + $0xa8] sm:$0xf]
      %v2683 = vld [vmem:[%s2653 + $0xac] sm:$0xf]
      %v2684 = vld [vmem:[%s2653 + $0xb4] sm:$0xf]
      %v2685 = vld [vmem:[%s2653 + $0xb8] sm:$0xf]
      %2686 = vst [vmem:[#allocation3 + $0x18] sm:$0xf] %v2654
      %2687 = vst [vmem:[#allocation3 + $0x3c] sm:$0xf] %v2655
      %2688 = vst [vmem:[#allocation3 + $0x60] sm:$0xf] %v2656
      %2689 = vst [vmem:[#allocation3 + $0x84] sm:$0xf] %v2657
      %2690 = vst [vmem:[#allocation3 + $0xa8] sm:$0xf] %v2658
      %2691 = vst [vmem:[#allocation3 + $0xcc] sm:$0xf] %v2659
      %2692 = vst [vmem:[#allocation3 + $0xf0] sm:$0xf] %v2660
      %2693 = vst [vmem:[#allocation3 + $0x114] sm:$0xf] %v2661
      %2694 = vst [vmem:[#allocation3 + $0x138] sm:$0xf] %v2662
      %2695 = vst [vmem:[#allocation3 + $0x15c] sm:$0xf] %v2663
      %2696 = vst [vmem:[#allocation3 + $0x180] sm:$0xf] %v2664
      %2697 = vst [vmem:[#allocation3 + $0x1a4] sm:$0xf] %v2665
      %2698 = vst [vmem:[#allocation3 + $0x1c8] sm:$0xf] %v2666
      %2699 = vst [vmem:[#allocation3 + $0x1ec] sm:$0xf] %v2667
      %2700 = vst [vmem:[#allocation3 + $0x210] sm:$0xf] %v2668
      %2701 = vst [vmem:[#allocation3 + $0x234] sm:$0xf] %v2669
      %2702 = vst [vmem:[#allocation3 + $0x258] sm:$0xf] %v2670
      %2703 = vst [vmem:[#allocation3 + $0x27c] sm:$0xf] %v2671
      %2704 = vst [vmem:[#allocation3 + $0x2a0] sm:$0xf] %v2672
      %2705 = vst [vmem:[#allocation3 + $0x2c4] sm:$0xf] %v2673
      %2706 = vst [vmem:[#allocation3 + $0x2e8] sm:$0xf] %v2674
      %2707 = vst [vmem:[#allocation3 + $0x30c] sm:$0xf] %v2675
      %2708 = vst [vmem:[#allocation3 + $0x330] sm:$0xf] %v2676
      %2709 = vst [vmem:[#allocation3 + $0x354] sm:$0xf] %v2677
      %2710 = vst [vmem:[#allocation3 + $0x378] sm:$0xf] %v2678
      %2711 = vst [vmem:[#allocation3 + $0x39c] sm:$0xf] %v2679
      %2712 = vst [vmem:[#allocation3 + $0x3c0] sm:$0xf] %v2680
      %2713 = vst [vmem:[#allocation3 + $0x3e4] sm:$0xf] %v2681
      %2714 = vst [vmem:[#allocation3 + $0x408] sm:$0xf] %v2682
      %2715 = vst [vmem:[#allocation3 + $0x42c] sm:$0xf] %v2683
      %2716 = vst [vmem:[#allocation3 + $0x450] sm:$0xf] %v2684
      %2717 = vst [vmem:[#allocation3 + $0x474] sm:$0xf] %v2685
      %v2718 = vld [vmem:[%s2653] sm:$0xf]
      %v2719 = vld [vmem:[%s2653 + $0x4] sm:$0xf]
      %v2720 = vld [vmem:[%s2653 + $0x8] sm:$0x1]
      %v2721 = vld [vmem:[%s2653 + $0xc] sm:$0xf]
      %v2722 = vld [vmem:[%s2653 + $0x10] sm:$0xf]
      %v2723 = vld [vmem:[%s2653 + $0x14] sm:$0x1]
      %v2724 = vld [vmem:[%s2653 + $0x18] sm:$0xf]
      %v2725 = vld [vmem:[%s2653 + $0x1c] sm:$0xf]
      %v2726 = vld [vmem:[%s2653 + $0x20] sm:$0x1]
      %v2727 = vld [vmem:[%s2653 + $0x24] sm:$0xf]
      %v2728 = vld [vmem:[%s2653 + $0x28] sm:$0xf]
      %v2729 = vld [vmem:[%s2653 + $0x2c] sm:$0x1]
      %v2730 = vld [vmem:[%s2653 + $0x30] sm:$0xf]
      %v2731 = vld [vmem:[%s2653 + $0x34] sm:$0xf]
      %v2732 = vld [vmem:[%s2653 + $0x38] sm:$0x1]
      %v2733 = vld [vmem:[%s2653 + $0x3c] sm:$0xf]
      %v2734 = vld [vmem:[%s2653 + $0x40] sm:$0xf]
      %v2735 = vld [vmem:[%s2653 + $0x44] sm:$0x1]
      %v2736 = vld [vmem:[%s2653 + $0x48] sm:$0xf]
      %v2737 = vld [vmem:[%s2653 + $0x4c] sm:$0xf]
      %v2738 = vld [vmem:[%s2653 + $0x50] sm:$0x1]
      %v2739 = vld [vmem:[%s2653 + $0x54] sm:$0xf]
      %v2740 = vld [vmem:[%s2653 + $0x58] sm:$0xf]
      %v2741 = vld [vmem:[%s2653 + $0x5c] sm:$0x1]
      %v2742 = vld [vmem:[%s2653 + $0x60] sm:$0xf]
      %v2743 = vld [vmem:[%s2653 + $0x64] sm:$0xf]
      %v2744 = vld [vmem:[%s2653 + $0x68] sm:$0x1]
      %v2745 = vld [vmem:[%s2653 + $0x6c] sm:$0xf]
      %v2746 = vld [vmem:[%s2653 + $0x70] sm:$0xf]
      %v2747 = vld [vmem:[%s2653 + $0x74] sm:$0x1]
      %v2748 = vld [vmem:[%s2653 + $0x78] sm:$0xf]
      %v2749 = vld [vmem:[%s2653 + $0x7c] sm:$0xf]
      %v2750 = vld [vmem:[%s2653 + $0x80] sm:$0x1]
      %v2751 = vld [vmem:[%s2653 + $0x84] sm:$0xf]
      %v2752 = vld [vmem:[%s2653 + $0x88] sm:$0xf]
      %v2753 = vld [vmem:[%s2653 + $0x8c] sm:$0x1]
      %v2754 = vld [vmem:[%s2653 + $0x90] sm:$0xf]
      %v2755 = vld [vmem:[%s2653 + $0x94] sm:$0xf]
      %v2756 = vld [vmem:[%s2653 + $0x98] sm:$0x1]
      %v2757 = vld [vmem:[%s2653 + $0x9c] sm:$0xf]
      %v2758 = vld [vmem:[%s2653 + $0xa0] sm:$0xf]
      %v2759 = vld [vmem:[%s2653 + $0xa4] sm:$0x1]
      %v2760 = vld [vmem:[%s2653 + $0xa8] sm:$0xf]
      %v2761 = vld [vmem:[%s2653 + $0xac] sm:$0xf]
      %v2762 = vld [vmem:[%s2653 + $0xb0] sm:$0x1]
      %v2763 = vld [vmem:[%s2653 + $0xb4] sm:$0xf]
      %v2764 = vld [vmem:[%s2653 + $0xb8] sm:$0xf]
      %v2765 = vld [vmem:[%s2653 + $0xbc] sm:$0x1]
      %v2767 = vshrl.u32 %v2718, 16
      %v2769 = vrot.slane %v2767, 4
      %v2770 = vshll.u32 %v2718, 16
      %v2772 = vrot.slane %v2770, 5
      %v2773 = vor.u32 %v2769, %v2772
      %v2774 = vrot.slane %v2773, 4
      %v2776 = vshll.u32 %v2719, 16
      %v2778 = vrot.slane %v2776, 5
      %v2779 = vsel %vm1097, %v2774, %v2778
      %v2780 = vshrl.u32 %v2719, 16
      %v2782 = vrot.slane %v2780, 4
      %v2783 = vor.u32 %v2782, %v2778
      %v2784 = vrot.slane %v2783, 4
      %v2786 = vshll.u32 %v2720, 16
      %v2788 = vrot.slane %v2786, 5
      %v2789 = vsel %vm1097, %v2784, %v2788
      %v2791 = vshrl.u32 %v2721, 16
      %v2793 = vrot.slane %v2791, 4
      %v2794 = vshll.u32 %v2721, 16
      %v2796 = vrot.slane %v2794, 5
      %v2797 = vor.u32 %v2793, %v2796
      %v2798 = vrot.slane %v2797, 4
      %v2800 = vshll.u32 %v2722, 16
      %v2802 = vrot.slane %v2800, 5
      %v2803 = vsel %vm1097, %v2798, %v2802
      %v2804 = vshrl.u32 %v2722, 16
      %v2806 = vrot.slane %v2804, 4
      %v2807 = vor.u32 %v2806, %v2802
      %v2808 = vrot.slane %v2807, 4
      %v2810 = vshll.u32 %v2723, 16
      %v2812 = vrot.slane %v2810, 5
      %v2813 = vsel %vm1097, %v2808, %v2812
      %v2815 = vshrl.u32 %v2724, 16
      %v2817 = vrot.slane %v2815, 4
      %v2818 = vshll.u32 %v2724, 16
      %v2820 = vrot.slane %v2818, 5
      %v2821 = vor.u32 %v2817, %v2820
      %v2822 = vrot.slane %v2821, 4
      %v2824 = vshll.u32 %v2725, 16
      %v2826 = vrot.slane %v2824, 5
      %v2827 = vsel %vm1097, %v2822, %v2826
      %v2828 = vshrl.u32 %v2725, 16
      %v2830 = vrot.slane %v2828, 4
      %v2831 = vor.u32 %v2830, %v2826
      %v2832 = vrot.slane %v2831, 4
      %v2834 = vshll.u32 %v2726, 16
      %v2836 = vrot.slane %v2834, 5
      %v2837 = vsel %vm1097, %v2832, %v2836
      %v2839 = vshrl.u32 %v2727, 16
      %v2841 = vrot.slane %v2839, 4
      %v2842 = vshll.u32 %v2727, 16
      %v2844 = vrot.slane %v2842, 5
      %v2845 = vor.u32 %v2841, %v2844
      %v2846 = vrot.slane %v2845, 4
      %v2848 = vshll.u32 %v2728, 16
      %v2850 = vrot.slane %v2848, 5
      %v2851 = vsel %vm1097, %v2846, %v2850
      %v2852 = vshrl.u32 %v2728, 16
      %v2854 = vrot.slane %v2852, 4
      %v2855 = vor.u32 %v2854, %v2850
      %v2856 = vrot.slane %v2855, 4
      %v2858 = vshll.u32 %v2729, 16
      %v2860 = vrot.slane %v2858, 5
      %v2861 = vsel %vm1097, %v2856, %v2860
      %v2863 = vshrl.u32 %v2730, 16
      %v2865 = vrot.slane %v2863, 4
      %v2866 = vshll.u32 %v2730, 16
      %v2868 = vrot.slane %v2866, 5
      %v2869 = vor.u32 %v2865, %v2868
      %v2870 = vrot.slane %v2869, 4
      %v2872 = vshll.u32 %v2731, 16
      %v2874 = vrot.slane %v2872, 5
      %v2875 = vsel %vm1097, %v2870, %v2874
      %v2876 = vshrl.u32 %v2731, 16
      %v2878 = vrot.slane %v2876, 4
      %v2879 = vor.u32 %v2878, %v2874
      %v2880 = vrot.slane %v2879, 4
      %v2882 = vshll.u32 %v2732, 16
      %v2884 = vrot.slane %v2882, 5
      %v2885 = vsel %vm1097, %v2880, %v2884
      %v2887 = vshrl.u32 %v2733, 16
      %v2889 = vrot.slane %v2887, 4
      %v2890 = vshll.u32 %v2733, 16
      %v2892 = vrot.slane %v2890, 5
      %v2893 = vor.u32 %v2889, %v2892
      %v2894 = vrot.slane %v2893, 4
      %v2896 = vshll.u32 %v2734, 16
      %v2898 = vrot.slane %v2896, 5
      %v2899 = vsel %vm1097, %v2894, %v2898
      %v2900 = vshrl.u32 %v2734, 16
      %v2902 = vrot.slane %v2900, 4
      %v2903 = vor.u32 %v2902, %v2898
      %v2904 = vrot.slane %v2903, 4
      %v2906 = vshll.u32 %v2735, 16
      %v2908 = vrot.slane %v2906, 5
      %v2909 = vsel %vm1097, %v2904, %v2908
      %v2911 = vshrl.u32 %v2736, 16
      %v2913 = vrot.slane %v2911, 4
      %v2914 = vshll.u32 %v2736, 16
      %v2916 = vrot.slane %v2914, 5
      %v2917 = vor.u32 %v2913, %v2916
      %v2918 = vrot.slane %v2917, 4
      %v2920 = vshll.u32 %v2737, 16
      %v2922 = vrot.slane %v2920, 5
      %v2923 = vsel %vm1097, %v2918, %v2922
      %v2924 = vshrl.u32 %v2737, 16
      %v2926 = vrot.slane %v2924, 4
      %v2927 = vor.u32 %v2926, %v2922
      %v2928 = vrot.slane %v2927, 4
      %v2930 = vshll.u32 %v2738, 16
      %v2932 = vrot.slane %v2930, 5
      %v2933 = vsel %vm1097, %v2928, %v2932
      %v2935 = vshrl.u32 %v2739, 16
      %v2937 = vrot.slane %v2935, 4
      %v2938 = vshll.u32 %v2739, 16
      %v2940 = vrot.slane %v2938, 5
      %v2941 = vor.u32 %v2937, %v2940
      %v2942 = vrot.slane %v2941, 4
      %v2944 = vshll.u32 %v2740, 16
      %v2946 = vrot.slane %v2944, 5
      %v2947 = vsel %vm1097, %v2942, %v2946
      %v2948 = vshrl.u32 %v2740, 16
      %v2950 = vrot.slane %v2948, 4
      %v2951 = vor.u32 %v2950, %v2946
      %v2952 = vrot.slane %v2951, 4
      %v2954 = vshll.u32 %v2741, 16
      %v2956 = vrot.slane %v2954, 5
      %v2957 = vsel %vm1097, %v2952, %v2956
      %v2959 = vshrl.u32 %v2742, 16
      %v2961 = vrot.slane %v2959, 4
      %v2962 = vshll.u32 %v2742, 16
      %v2964 = vrot.slane %v2962, 5
      %v2965 = vor.u32 %v2961, %v2964
      %v2966 = vrot.slane %v2965, 4
      %v2968 = vshll.u32 %v2743, 16
      %v2970 = vrot.slane %v2968, 5
      %v2971 = vsel %vm1097, %v2966, %v2970
      %v2972 = vshrl.u32 %v2743, 16
      %v2974 = vrot.slane %v2972, 4
      %v2975 = vor.u32 %v2974, %v2970
      %v2976 = vrot.slane %v2975, 4
      %v2978 = vshll.u32 %v2744, 16
      %v2980 = vrot.slane %v2978, 5
      %v2981 = vsel %vm1097, %v2976, %v2980
      %v2983 = vshrl.u32 %v2745, 16
      %v2985 = vrot.slane %v2983, 4
      %v2986 = vshll.u32 %v2745, 16
      %v2988 = vrot.slane %v2986, 5
      %v2989 = vor.u32 %v2985, %v2988
      %v2990 = vrot.slane %v2989, 4
      %v2992 = vshll.u32 %v2746, 16
      %v2994 = vrot.slane %v2992, 5
      %v2995 = vsel %vm1097, %v2990, %v2994
      %v2996 = vshrl.u32 %v2746, 16
      %v2998 = vrot.slane %v2996, 4
      %v2999 = vor.u32 %v2998, %v2994
      %v3000 = vrot.slane %v2999, 4
      %v3002 = vshll.u32 %v2747, 16
      %v3004 = vrot.slane %v3002, 5
      %v3005 = vsel %vm1097, %v3000, %v3004
      %v3007 = vshrl.u32 %v2748, 16
      %v3009 = vrot.slane %v3007, 4
      %v3010 = vshll.u32 %v2748, 16
      %v3012 = vrot.slane %v3010, 5
      %v3013 = vor.u32 %v3009, %v3012
      %v3014 = vrot.slane %v3013, 4
      %v3016 = vshll.u32 %v2749, 16
      %v3018 = vrot.slane %v3016, 5
      %v3019 = vsel %vm1097, %v3014, %v3018
      %v3020 = vshrl.u32 %v2749, 16
      %v3022 = vrot.slane %v3020, 4
      %v3023 = vor.u32 %v3022, %v3018
      %v3024 = vrot.slane %v3023, 4
      %v3026 = vshll.u32 %v2750, 16
      %v3028 = vrot.slane %v3026, 5
      %v3029 = vsel %vm1097, %v3024, %v3028
      %v3031 = vshrl.u32 %v2751, 16
      %v3033 = vrot.slane %v3031, 4
      %v3034 = vshll.u32 %v2751, 16
      %v3036 = vrot.slane %v3034, 5
      %v3037 = vor.u32 %v3033, %v3036
      %v3038 = vrot.slane %v3037, 4
      %v3040 = vshll.u32 %v2752, 16
      %v3042 = vrot.slane %v3040, 5
      %v3043 = vsel %vm1097, %v3038, %v3042
      %v3044 = vshrl.u32 %v2752, 16
      %v3046 = vrot.slane %v3044, 4
      %v3047 = vor.u32 %v3046, %v3042
      %v3048 = vrot.slane %v3047, 4
      %v3050 = vshll.u32 %v2753, 16
      %v3052 = vrot.slane %v3050, 5
      %v3053 = vsel %vm1097, %v3048, %v3052
      %v3055 = vshrl.u32 %v2754, 16
      %v3057 = vrot.slane %v3055, 4
      %v3058 = vshll.u32 %v2754, 16
      %v3060 = vrot.slane %v3058, 5
      %v3061 = vor.u32 %v3057, %v3060
      %v3062 = vrot.slane %v3061, 4
      %v3064 = vshll.u32 %v2755, 16
      %v3066 = vrot.slane %v3064, 5
      %v3067 = vsel %vm1097, %v3062, %v3066
      %v3068 = vshrl.u32 %v2755, 16
      %v3070 = vrot.slane %v3068, 4
      %v3071 = vor.u32 %v3070, %v3066
      %v3072 = vrot.slane %v3071, 4
      %v3074 = vshll.u32 %v2756, 16
      %v3076 = vrot.slane %v3074, 5
      %v3077 = vsel %vm1097, %v3072, %v3076
      %v3079 = vshrl.u32 %v2757, 16
      %v3081 = vrot.slane %v3079, 4
      %v3082 = vshll.u32 %v2757, 16
      %v3084 = vrot.slane %v3082, 5
      %v3085 = vor.u32 %v3081, %v3084
      %v3086 = vrot.slane %v3085, 4
      %v3088 = vshll.u32 %v2758, 16
      %v3090 = vrot.slane %v3088, 5
      %v3091 = vsel %vm1097, %v3086, %v3090
      %v3092 = vshrl.u32 %v2758, 16
      %v3094 = vrot.slane %v3092, 4
      %v3095 = vor.u32 %v3094, %v3090
      %v3096 = vrot.slane %v3095, 4
      %v3098 = vshll.u32 %v2759, 16
      %v3100 = vrot.slane %v3098, 5
      %v3101 = vsel %vm1097, %v3096, %v3100
      %v3103 = vshrl.u32 %v2760, 16
      %v3105 = vrot.slane %v3103, 4
      %v3106 = vshll.u32 %v2760, 16
      %v3108 = vrot.slane %v3106, 5
      %v3109 = vor.u32 %v3105, %v3108
      %v3110 = vrot.slane %v3109, 4
      %v3112 = vshll.u32 %v2761, 16
      %v3114 = vrot.slane %v3112, 5
      %v3115 = vsel %vm1097, %v3110, %v3114
      %v3116 = vshrl.u32 %v2761, 16
      %v3118 = vrot.slane %v3116, 4
      %v3119 = vor.u32 %v3118, %v3114
      %v3120 = vrot.slane %v3119, 4
      %v3122 = vshll.u32 %v2762, 16
      %v3124 = vrot.slane %v3122, 5
      %v3125 = vsel %vm1097, %v3120, %v3124
      %v3127 = vshrl.u32 %v2763, 16
      %v3129 = vrot.slane %v3127, 4
      %v3130 = vshll.u32 %v2763, 16
      %v3132 = vrot.slane %v3130, 5
      %v3133 = vor.u32 %v3129, %v3132
      %v3134 = vrot.slane %v3133, 4
      %v3136 = vshll.u32 %v2764, 16
      %v3138 = vrot.slane %v3136, 5
      %v3139 = vsel %vm1097, %v3134, %v3138
      %v3140 = vshrl.u32 %v2764, 16
      %v3142 = vrot.slane %v3140, 4
      %v3143 = vor.u32 %v3142, %v3138
      %v3144 = vrot.slane %v3143, 4
      %v3146 = vshll.u32 %v2765, 16
      %v3148 = vrot.slane %v3146, 5
      %v3149 = vsel %vm1097, %v3144, %v3148
      %3182 = vst [vmem:[#allocation3 + $0x1c] sm:$0xf] %v2779
      %3183 = vst [vmem:[#allocation3 + $0x40] sm:$0xf] %v2789
      %3184 = vst [vmem:[#allocation3 + $0x64] sm:$0xf] %v2803
      %3185 = vst [vmem:[#allocation3 + $0x88] sm:$0xf] %v2813
      %3186 = vst [vmem:[#allocation3 + $0xac] sm:$0xf] %v2827
      %3187 = vst [vmem:[#allocation3 + $0xd0] sm:$0xf] %v2837
      %3188 = vst [vmem:[#allocation3 + $0xf4] sm:$0xf] %v2851
      %3189 = vst [vmem:[#allocation3 + $0x118] sm:$0xf] %v2861
      %3190 = vst [vmem:[#allocation3 + $0x13c] sm:$0xf] %v2875
      %3191 = vst [vmem:[#allocation3 + $0x160] sm:$0xf] %v2885
      %3192 = vst [vmem:[#allocation3 + $0x184] sm:$0xf] %v2899
      %3193 = vst [vmem:[#allocation3 + $0x1a8] sm:$0xf] %v2909
      %3194 = vst [vmem:[#allocation3 + $0x1cc] sm:$0xf] %v2923
      %3195 = vst [vmem:[#allocation3 + $0x1f0] sm:$0xf] %v2933
      %3196 = vst [vmem:[#allocation3 + $0x214] sm:$0xf] %v2947
      %3197 = vst [vmem:[#allocation3 + $0x238] sm:$0xf] %v2957
      %3198 = vst [vmem:[#allocation3 + $0x25c] sm:$0xf] %v2971
      %3199 = vst [vmem:[#allocation3 + $0x280] sm:$0xf] %v2981
      %3200 = vst [vmem:[#allocation3 + $0x2a4] sm:$0xf] %v2995
      %3201 = vst [vmem:[#allocation3 + $0x2c8] sm:$0xf] %v3005
      %3202 = vst [vmem:[#allocation3 + $0x2ec] sm:$0xf] %v3019
      %3203 = vst [vmem:[#allocation3 + $0x310] sm:$0xf] %v3029
      %3204 = vst [vmem:[#allocation3 + $0x334] sm:$0xf] %v3043
      %3205 = vst [vmem:[#allocation3 + $0x358] sm:$0xf] %v3053
      %3206 = vst [vmem:[#allocation3 + $0x37c] sm:$0xf] %v3067
      %3207 = vst [vmem:[#allocation3 + $0x3a0] sm:$0xf] %v3077
      %3208 = vst [vmem:[#allocation3 + $0x3c4] sm:$0xf] %v3091
      %3209 = vst [vmem:[#allocation3 + $0x3e8] sm:$0xf] %v3101
      %3210 = vst [vmem:[#allocation3 + $0x40c] sm:$0xf] %v3115
      %3211 = vst [vmem:[#allocation3 + $0x430] sm:$0xf] %v3125
      %3212 = vst [vmem:[#allocation3 + $0x454] sm:$0xf] %v3139
      %3213 = vst [vmem:[#allocation3 + $0x478] sm:$0xf] %v3149
      %v3214 = vld [vmem:[%s2653] sm:$0xe]
      %v3215 = vld [vmem:[%s2653 + $0x4] sm:$0xf]
      %v3216 = vld [vmem:[%s2653 + $0x8] sm:$0x1]
      %v3217 = vld [vmem:[%s2653 + $0xc] sm:$0xe]
      %v3218 = vld [vmem:[%s2653 + $0x10] sm:$0xf]
      %v3219 = vld [vmem:[%s2653 + $0x14] sm:$0x1]
      %v3220 = vld [vmem:[%s2653 + $0x18] sm:$0xe]
      %v3221 = vld [vmem:[%s2653 + $0x1c] sm:$0xf]
      %v3222 = vld [vmem:[%s2653 + $0x20] sm:$0x1]
      %v3223 = vld [vmem:[%s2653 + $0x24] sm:$0xe]
      %v3224 = vld [vmem:[%s2653 + $0x28] sm:$0xf]
      %v3225 = vld [vmem:[%s2653 + $0x2c] sm:$0x1]
      %v3226 = vld [vmem:[%s2653 + $0x30] sm:$0xe]
      %v3227 = vld [vmem:[%s2653 + $0x34] sm:$0xf]
      %v3228 = vld [vmem:[%s2653 + $0x38] sm:$0x1]
      %v3229 = vld [vmem:[%s2653 + $0x3c] sm:$0xe]
      %v3230 = vld [vmem:[%s2653 + $0x40] sm:$0xf]
      %v3231 = vld [vmem:[%s2653 + $0x44] sm:$0x1]
      %v3232 = vld [vmem:[%s2653 + $0x48] sm:$0xe]
      %v3233 = vld [vmem:[%s2653 + $0x4c] sm:$0xf]
      %v3234 = vld [vmem:[%s2653 + $0x50] sm:$0x1]
      %v3235 = vld [vmem:[%s2653 + $0x54] sm:$0xe]
      %v3236 = vld [vmem:[%s2653 + $0x58] sm:$0xf]
      %v3237 = vld [vmem:[%s2653 + $0x5c] sm:$0x1]
      %v3238 = vld [vmem:[%s2653 + $0x60] sm:$0xe]
      %v3239 = vld [vmem:[%s2653 + $0x64] sm:$0xf]
      %v3240 = vld [vmem:[%s2653 + $0x68] sm:$0x1]
      %v3241 = vld [vmem:[%s2653 + $0x6c] sm:$0xe]
      %v3242 = vld [vmem:[%s2653 + $0x70] sm:$0xf]
      %v3243 = vld [vmem:[%s2653 + $0x74] sm:$0x1]
      %v3244 = vld [vmem:[%s2653 + $0x78] sm:$0xe]
      %v3245 = vld [vmem:[%s2653 + $0x7c] sm:$0xf]
      %v3246 = vld [vmem:[%s2653 + $0x80] sm:$0x1]
      %v3247 = vld [vmem:[%s2653 + $0x84] sm:$0xe]
      %v3248 = vld [vmem:[%s2653 + $0x88] sm:$0xf]
      %v3249 = vld [vmem:[%s2653 + $0x8c] sm:$0x1]
      %v3250 = vld [vmem:[%s2653 + $0x90] sm:$0xe]
      %v3251 = vld [vmem:[%s2653 + $0x94] sm:$0xf]
      %v3252 = vld [vmem:[%s2653 + $0x98] sm:$0x1]
      %v3253 = vld [vmem:[%s2653 + $0x9c] sm:$0xe]
      %v3254 = vld [vmem:[%s2653 + $0xa0] sm:$0xf]
      %v3255 = vld [vmem:[%s2653 + $0xa4] sm:$0x1]
      %v3256 = vld [vmem:[%s2653 + $0xa8] sm:$0xe]
      %v3257 = vld [vmem:[%s2653 + $0xac] sm:$0xf]
      %v3258 = vld [vmem:[%s2653 + $0xb0] sm:$0x1]
      %v3259 = vld [vmem:[%s2653 + $0xb4] sm:$0xe]
      %v3260 = vld [vmem:[%s2653 + $0xb8] sm:$0xf]
      %v3261 = vld [vmem:[%s2653 + $0xbc] sm:$0x1]
      %v3310 = vrot.slane %v3214, 5
      %v3311 = vrot.slane %v3310, 4
      %v3312 = vrot.slane %v3215, 5
      %v3313 = vsel %vm1644, %v3311, %v3312
      %v3314 = vrot.slane %v3312, 4
      %v3315 = vrot.slane %v3216, 5
      %v3316 = vsel %vm1644, %v3314, %v3315
      %v3317 = vrot.slane %v3217, 5
      %v3318 = vrot.slane %v3317, 4
      %v3319 = vrot.slane %v3218, 5
      %v3320 = vsel %vm1644, %v3318, %v3319
      %v3321 = vrot.slane %v3319, 4
      %v3322 = vrot.slane %v3219, 5
      %v3323 = vsel %vm1644, %v3321, %v3322
      %v3324 = vrot.slane %v3220, 5
      %v3325 = vrot.slane %v3324, 4
      %v3326 = vrot.slane %v3221, 5
      %v3327 = vsel %vm1644, %v3325, %v3326
      %v3328 = vrot.slane %v3326, 4
      %v3329 = vrot.slane %v3222, 5
      %v3330 = vsel %vm1644, %v3328, %v3329
      %v3331 = vrot.slane %v3223, 5
      %v3332 = vrot.slane %v3331, 4
      %v3333 = vrot.slane %v3224, 5
      %v3334 = vsel %vm1644, %v3332, %v3333
      %v3335 = vrot.slane %v3333, 4
      %v3336 = vrot.slane %v3225, 5
      %v3337 = vsel %vm1644, %v3335, %v3336
      %v3338 = vrot.slane %v3226, 5
      %v3339 = vrot.slane %v3338, 4
      %v3340 = vrot.slane %v3227, 5
      %v3341 = vsel %vm1644, %v3339, %v3340
      %v3342 = vrot.slane %v3340, 4
      %v3343 = vrot.slane %v3228, 5
      %v3344 = vsel %vm1644, %v3342, %v3343
      %v3345 = vrot.slane %v3229, 5
      %v3346 = vrot.slane %v3345, 4
      %v3347 = vrot.slane %v3230, 5
      %v3348 = vsel %vm1644, %v3346, %v3347
      %v3349 = vrot.slane %v3347, 4
      %v3350 = vrot.slane %v3231, 5
      %v3351 = vsel %vm1644, %v3349, %v3350
      %v3352 = vrot.slane %v3232, 5
      %v3353 = vrot.slane %v3352, 4
      %v3354 = vrot.slane %v3233, 5
      %v3355 = vsel %vm1644, %v3353, %v3354
      %v3356 = vrot.slane %v3354, 4
      %v3357 = vrot.slane %v3234, 5
      %v3358 = vsel %vm1644, %v3356, %v3357
      %v3359 = vrot.slane %v3235, 5
      %v3360 = vrot.slane %v3359, 4
      %v3361 = vrot.slane %v3236, 5
      %v3362 = vsel %vm1644, %v3360, %v3361
      %v3363 = vrot.slane %v3361, 4
      %v3364 = vrot.slane %v3237, 5
      %v3365 = vsel %vm1644, %v3363, %v3364
      %v3366 = vrot.slane %v3238, 5
      %v3367 = vrot.slane %v3366, 4
      %v3368 = vrot.slane %v3239, 5
      %v3369 = vsel %vm1644, %v3367, %v3368
      %v3370 = vrot.slane %v3368, 4
      %v3371 = vrot.slane %v3240, 5
      %v3372 = vsel %vm1644, %v3370, %v3371
      %v3373 = vrot.slane %v3241, 5
      %v3374 = vrot.slane %v3373, 4
      %v3375 = vrot.slane %v3242, 5
      %v3376 = vsel %vm1644, %v3374, %v3375
      %v3377 = vrot.slane %v3375, 4
      %v3378 = vrot.slane %v3243, 5
      %v3379 = vsel %vm1644, %v3377, %v3378
      %v3380 = vrot.slane %v3244, 5
      %v3381 = vrot.slane %v3380, 4
      %v3382 = vrot.slane %v3245, 5
      %v3383 = vsel %vm1644, %v3381, %v3382
      %v3384 = vrot.slane %v3382, 4
      %v3385 = vrot.slane %v3246, 5
      %v3386 = vsel %vm1644, %v3384, %v3385
      %v3387 = vrot.slane %v3247, 5
      %v3388 = vrot.slane %v3387, 4
      %v3389 = vrot.slane %v3248, 5
      %v3390 = vsel %vm1644, %v3388, %v3389
      %v3391 = vrot.slane %v3389, 4
      %v3392 = vrot.slane %v3249, 5
      %v3393 = vsel %vm1644, %v3391, %v3392
      %v3394 = vrot.slane %v3250, 5
      %v3395 = vrot.slane %v3394, 4
      %v3396 = vrot.slane %v3251, 5
      %v3397 = vsel %vm1644, %v3395, %v3396
      %v3398 = vrot.slane %v3396, 4
      %v3399 = vrot.slane %v3252, 5
      %v3400 = vsel %vm1644, %v3398, %v3399
      %v3401 = vrot.slane %v3253, 5
      %v3402 = vrot.slane %v3401, 4
      %v3403 = vrot.slane %v3254, 5
      %v3404 = vsel %vm1644, %v3402, %v3403
      %v3405 = vrot.slane %v3403, 4
      %v3406 = vrot.slane %v3255, 5
      %v3407 = vsel %vm1644, %v3405, %v3406
      %v3408 = vrot.slane %v3256, 5
      %v3409 = vrot.slane %v3408, 4
      %v3410 = vrot.slane %v3257, 5
      %v3411 = vsel %vm1644, %v3409, %v3410
      %v3412 = vrot.slane %v3410, 4
      %v3413 = vrot.slane %v3258, 5
      %v3414 = vsel %vm1644, %v3412, %v3413
      %v3415 = vrot.slane %v3259, 5
      %v3416 = vrot.slane %v3415, 4
      %v3417 = vrot.slane %v3260, 5
      %v3418 = vsel %vm1644, %v3416, %v3417
      %v3419 = vrot.slane %v3417, 4
      %v3420 = vrot.slane %v3261, 5
      %v3421 = vsel %vm1644, %v3419, %v3420
      %3454 = vst [vmem:[#allocation3 + $0x20] sm:$0xf] %v3313
      %3455 = vst [vmem:[#allocation3 + $0x44] sm:$0xf] %v3316
      %3456 = vst [vmem:[#allocation3 + $0x68] sm:$0xf] %v3320
      %3457 = vst [vmem:[#allocation3 + $0x8c] sm:$0xf] %v3323
      %3458 = vst [vmem:[#allocation3 + $0xb0] sm:$0xf] %v3327
      %3459 = vst [vmem:[#allocation3 + $0xd4] sm:$0xf] %v3330
      %3460 = vst [vmem:[#allocation3 + $0xf8] sm:$0xf] %v3334
      %3461 = vst [vmem:[#allocation3 + $0x11c] sm:$0xf] %v3337
      %3462 = vst [vmem:[#allocation3 + $0x140] sm:$0xf] %v3341
      %3463 = vst [vmem:[#allocation3 + $0x164] sm:$0xf] %v3344
      %3464 = vst [vmem:[#allocation3 + $0x188] sm:$0xf] %v3348
      %3465 = vst [vmem:[#allocation3 + $0x1ac] sm:$0xf] %v3351
      %3466 = vst [vmem:[#allocation3 + $0x1d0] sm:$0xf] %v3355
      %3467 = vst [vmem:[#allocation3 + $0x1f4] sm:$0xf] %v3358
      %3468 = vst [vmem:[#allocation3 + $0x218] sm:$0xf] %v3362
      %3469 = vst [vmem:[#allocation3 + $0x23c] sm:$0xf] %v3365
      %3470 = vst [vmem:[#allocation3 + $0x260] sm:$0xf] %v3369
      %3471 = vst [vmem:[#allocation3 + $0x284] sm:$0xf] %v3372
      %3472 = vst [vmem:[#allocation3 + $0x2a8] sm:$0xf] %v3376
      %3473 = vst [vmem:[#allocation3 + $0x2cc] sm:$0xf] %v3379
      %3474 = vst [vmem:[#allocation3 + $0x2f0] sm:$0xf] %v3383
      %3475 = vst [vmem:[#allocation3 + $0x314] sm:$0xf] %v3386
      %3476 = vst [vmem:[#allocation3 + $0x338] sm:$0xf] %v3390
      %3477 = vst [vmem:[#allocation3 + $0x35c] sm:$0xf] %v3393
      %3478 = vst [vmem:[#allocation3 + $0x380] sm:$0xf] %v3397
      %3479 = vst [vmem:[#allocation3 + $0x3a4] sm:$0xf] %v3400
      %3480 = vst [vmem:[#allocation3 + $0x3c8] sm:$0xf] %v3404
      %3481 = vst [vmem:[#allocation3 + $0x3ec] sm:$0xf] %v3407
      %3482 = vst [vmem:[#allocation3 + $0x410] sm:$0xf] %v3411
      %3483 = vst [vmem:[#allocation3 + $0x434] sm:$0xf] %v3414
      %3484 = vst [vmem:[#allocation3 + $0x458] sm:$0xf] %v3418
      %3485 = vst [vmem:[#allocation3 + $0x47c] sm:$0xf] %v3421
      %v3486 = vld [vmem:[#allocation3] sm:$0xff]
      %v3487 = vld [vmem:[#allocation3 + $0x8] sm:$0xff]
      %v3488 = vld [vmem:[#allocation3 + $0x10] sm:$0xff]
      %v3489 = vld [vmem:[#allocation3 + $0x18] sm:$0xff]
      %v3490 = vld [vmem:[#allocation3 + $0x20] sm:$0xf]
      %v3491 = vld [vmem:[#allocation3 + $0x24] sm:$0xff]
      %v3492 = vld [vmem:[#allocation3 + $0x2c] sm:$0xff]
      %v3493 = vld [vmem:[#allocation3 + $0x34] sm:$0xff]
      %v3494 = vld [vmem:[#allocation3 + $0x3c] sm:$0xff]
      %v3495 = vld [vmem:[#allocation3 + $0x44] sm:$0xf]
      %v3496 = vld [vmem:[#allocation3 + $0x48] sm:$0xff]
      %v3497 = vld [vmem:[#allocation3 + $0x50] sm:$0xff]
      %v3498 = vld [vmem:[#allocation3 + $0x58] sm:$0xff]
      %v3499 = vld [vmem:[#allocation3 + $0x60] sm:$0xff]
      %v3500 = vld [vmem:[#allocation3 + $0x68] sm:$0xf]
      %v3501 = vld [vmem:[#allocation3 + $0x6c] sm:$0xff]
      %v3502 = vld [vmem:[#allocation3 + $0x74] sm:$0xff]
      %v3503 = vld [vmem:[#allocation3 + $0x7c] sm:$0xff]
      %v3504 = vld [vmem:[#allocation3 + $0x84] sm:$0xff]
      %v3505 = vld [vmem:[#allocation3 + $0x8c] sm:$0xf]
      %v3506 = vld [vmem:[#allocation3 + $0x90] sm:$0xff]
      %v3507 = vld [vmem:[#allocation3 + $0x98] sm:$0xff]
      %v3508 = vld [vmem:[#allocation3 + $0xa0] sm:$0xff]
      %v3509 = vld [vmem:[#allocation3 + $0xa8] sm:$0xff]
      %v3510 = vld [vmem:[#allocation3 + $0xb0] sm:$0xf]
      %v3511 = vld [vmem:[#allocation3 + $0xb4] sm:$0xff]
      %v3512 = vld [vmem:[#allocation3 + $0xbc] sm:$0xff]
      %v3513 = vld [vmem:[#allocation3 + $0xc4] sm:$0xff]
      %v3514 = vld [vmem:[#allocation3 + $0xcc] sm:$0xff]
      %v3515 = vld [vmem:[#allocation3 + $0xd4] sm:$0xf]
      %v3516 = vld [vmem:[#allocation3 + $0xd8] sm:$0xff]
      %v3517 = vld [vmem:[#allocation3 + $0xe0] sm:$0xff]
      %v3518 = vld [vmem:[#allocation3 + $0xe8] sm:$0xff]
      %v3519 = vld [vmem:[#allocation3 + $0xf0] sm:$0xff]
      %v3520 = vld [vmem:[#allocation3 + $0xf8] sm:$0xf]
      %v3521 = vld [vmem:[#allocation3 + $0xfc] sm:$0xff]
      %v3522 = vld [vmem:[#allocation3 + $0x104] sm:$0xff]
      %v3523 = vld [vmem:[#allocation3 + $0x10c] sm:$0xff]
      %v3524 = vld [vmem:[#allocation3 + $0x114] sm:$0xff]
      %v3525 = vld [vmem:[#allocation3 + $0x11c] sm:$0xf]
      %v3526 = vld [vmem:[#allocation3 + $0x120] sm:$0xff]
      %v3527 = vld [vmem:[#allocation3 + $0x128] sm:$0xff]
      %v3528 = vld [vmem:[#allocation3 + $0x130] sm:$0xff]
      %v3529 = vld [vmem:[#allocation3 + $0x138] sm:$0xff]
      %v3530 = vld [vmem:[#allocation3 + $0x140] sm:$0xf]
      %v3531 = vld [vmem:[#allocation3 + $0x144] sm:$0xff]
      %v3532 = vld [vmem:[#allocation3 + $0x14c] sm:$0xff]
      %v3533 = vld [vmem:[#allocation3 + $0x154] sm:$0xff]
      %v3534 = vld [vmem:[#allocation3 + $0x15c] sm:$0xff]
      %v3535 = vld [vmem:[#allocation3 + $0x164] sm:$0xf]
      %v3536 = vld [vmem:[#allocation3 + $0x168] sm:$0xff]
      %v3537 = vld [vmem:[#allocation3 + $0x170] sm:$0xff]
      %v3538 = vld [vmem:[#allocation3 + $0x178] sm:$0xff]
      %v3539 = vld [vmem:[#allocation3 + $0x180] sm:$0xff]
      %v3540 = vld [vmem:[#allocation3 + $0x188] sm:$0xf]
      %v3541 = vld [vmem:[#allocation3 + $0x18c] sm:$0xff]
      %v3542 = vld [vmem:[#allocation3 + $0x194] sm:$0xff]
      %v3543 = vld [vmem:[#allocation3 + $0x19c] sm:$0xff]
      %v3544 = vld [vmem:[#allocation3 + $0x1a4] sm:$0xff]
      %v3545 = vld [vmem:[#allocation3 + $0x1ac] sm:$0xf]
      %v3546 = vld [vmem:[#allocation3 + $0x1b0] sm:$0xff]
      %v3547 = vld [vmem:[#allocation3 + $0x1b8] sm:$0xff]
      %v3548 = vld [vmem:[#allocation3 + $0x1c0] sm:$0xff]
      %v3549 = vld [vmem:[#allocation3 + $0x1c8] sm:$0xff]
      %v3550 = vld [vmem:[#allocation3 + $0x1d0] sm:$0xf]
      %v3551 = vld [vmem:[#allocation3 + $0x1d4] sm:$0xff]
      %v3552 = vld [vmem:[#allocation3 + $0x1dc] sm:$0xff]
      %v3553 = vld [vmem:[#allocation3 + $0x1e4] sm:$0xff]
      %v3554 = vld [vmem:[#allocation3 + $0x1ec] sm:$0xff]
      %v3555 = vld [vmem:[#allocation3 + $0x1f4] sm:$0xf]
      %v3556 = vld [vmem:[#allocation3 + $0x1f8] sm:$0xff]
      %v3557 = vld [vmem:[#allocation3 + $0x200] sm:$0xff]
      %v3558 = vld [vmem:[#allocation3 + $0x208] sm:$0xff]
      %v3559 = vld [vmem:[#allocation3 + $0x210] sm:$0xff]
      %v3560 = vld [vmem:[#allocation3 + $0x218] sm:$0xf]
      %v3561 = vld [vmem:[#allocation3 + $0x21c] sm:$0xff]
      %v3562 = vld [vmem:[#allocation3 + $0x224] sm:$0xff]
      %v3563 = vld [vmem:[#allocation3 + $0x22c] sm:$0xff]
      %v3564 = vld [vmem:[#allocation3 + $0x234] sm:$0xff]
      %v3565 = vld [vmem:[#allocation3 + $0x23c] sm:$0xf]
      %v3566 = vld [vmem:[#allocation3 + $0x240] sm:$0xff]
      %v3567 = vld [vmem:[#allocation3 + $0x248] sm:$0xff]
      %v3568 = vld [vmem:[#allocation3 + $0x250] sm:$0xff]
      %v3569 = vld [vmem:[#allocation3 + $0x258] sm:$0xff]
      %v3570 = vld [vmem:[#allocation3 + $0x260] sm:$0xf]
      %v3571 = vld [vmem:[#allocation3 + $0x264] sm:$0xff]
      %v3572 = vld [vmem:[#allocation3 + $0x26c] sm:$0xff]
      %v3573 = vld [vmem:[#allocation3 + $0x274] sm:$0xff]
      %v3574 = vld [vmem:[#allocation3 + $0x27c] sm:$0xff]
      %v3575 = vld [vmem:[#allocation3 + $0x284] sm:$0xf]
      %v3576 = vld [vmem:[#allocation3 + $0x288] sm:$0xff]
      %v3577 = vld [vmem:[#allocation3 + $0x290] sm:$0xff]
      %v3578 = vld [vmem:[#allocation3 + $0x298] sm:$0xff]
      %v3579 = vld [vmem:[#allocation3 + $0x2a0] sm:$0xff]
      %v3580 = vld [vmem:[#allocation3 + $0x2a8] sm:$0xf]
      %v3581 = vld [vmem:[#allocation3 + $0x2ac] sm:$0xff]
      %v3582 = vld [vmem:[#allocation3 + $0x2b4] sm:$0xff]
      %v3583 = vld [vmem:[#allocation3 + $0x2bc] sm:$0xff]
      %v3584 = vld [vmem:[#allocation3 + $0x2c4] sm:$0xff]
      %v3585 = vld [vmem:[#allocation3 + $0x2cc] sm:$0xf]
      %v3586 = vld [vmem:[#allocation3 + $0x2d0] sm:$0xff]
      %v3587 = vld [vmem:[#allocation3 + $0x2d8] sm:$0xff]
      %v3588 = vld [vmem:[#allocation3 + $0x2e0] sm:$0xff]
      %v3589 = vld [vmem:[#allocation3 + $0x2e8] sm:$0xff]
      %v3590 = vld [vmem:[#allocation3 + $0x2f0] sm:$0xf]
      %v3591 = vld [vmem:[#allocation3 + $0x2f4] sm:$0xff]
      %v3592 = vld [vmem:[#allocation3 + $0x2fc] sm:$0xff]
      %v3593 = vld [vmem:[#allocation3 + $0x304] sm:$0xff]
      %v3594 = vld [vmem:[#allocation3 + $0x30c] sm:$0xff]
      %v3595 = vld [vmem:[#allocation3 + $0x314] sm:$0xf]
      %v3596 = vld [vmem:[#allocation3 + $0x318] sm:$0xff]
      %v3597 = vld [vmem:[#allocation3 + $0x320] sm:$0xff]
      %v3598 = vld [vmem:[#allocation3 + $0x328] sm:$0xff]
      %v3599 = vld [vmem:[#allocation3 + $0x330] sm:$0xff]
      %v3600 = vld [vmem:[#allocation3 + $0x338] sm:$0xf]
      %v3601 = vld [vmem:[#allocation3 + $0x33c] sm:$0xff]
      %v3602 = vld [vmem:[#allocation3 + $0x344] sm:$0xff]
      %v3603 = vld [vmem:[#allocation3 + $0x34c] sm:$0xff]
      %v3604 = vld [vmem:[#allocation3 + $0x354] sm:$0xff]
      %v3605 = vld [vmem:[#allocation3 + $0x35c] sm:$0xf]
      %v3606 = vld [vmem:[#allocation3 + $0x360] sm:$0xff]
      %v3607 = vld [vmem:[#allocation3 + $0x368] sm:$0xff]
      %v3608 = vld [vmem:[#allocation3 + $0x370] sm:$0xff]
      %v3609 = vld [vmem:[#allocation3 + $0x378] sm:$0xff]
      %v3610 = vld [vmem:[#allocation3 + $0x380] sm:$0xf]
      %v3611 = vld [vmem:[#allocation3 + $0x384] sm:$0xff]
      %v3612 = vld [vmem:[#allocation3 + $0x38c] sm:$0xff]
      %v3613 = vld [vmem:[#allocation3 + $0x394] sm:$0xff]
      %v3614 = vld [vmem:[#allocation3 + $0x39c] sm:$0xff]
      %v3615 = vld [vmem:[#allocation3 + $0x3a4] sm:$0xf]
      %v3616 = vld [vmem:[#allocation3 + $0x3a8] sm:$0xff]
      %v3617 = vld [vmem:[#allocation3 + $0x3b0] sm:$0xff]
      %v3618 = vld [vmem:[#allocation3 + $0x3b8] sm:$0xff]
      %v3619 = vld [vmem:[#allocation3 + $0x3c0] sm:$0xff]
      %v3620 = vld [vmem:[#allocation3 + $0x3c8] sm:$0xf]
      %v3621 = vld [vmem:[#allocation3 + $0x3cc] sm:$0xff]
      %v3622 = vld [vmem:[#allocation3 + $0x3d4] sm:$0xff]
      %v3623 = vld [vmem:[#allocation3 + $0x3dc] sm:$0xff]
      %v3624 = vld [vmem:[#allocation3 + $0x3e4] sm:$0xff]
      %v3625 = vld [vmem:[#allocation3 + $0x3ec] sm:$0xf]
      %v3626 = vld [vmem:[#allocation3 + $0x3f0] sm:$0xff]
      %v3627 = vld [vmem:[#allocation3 + $0x3f8] sm:$0xff]
      %v3628 = vld [vmem:[#allocation3 + $0x400] sm:$0xff]
      %v3629 = vld [vmem:[#allocation3 + $0x408] sm:$0xff]
      %v3630 = vld [vmem:[#allocation3 + $0x410] sm:$0xf]
      %v3631 = vld [vmem:[#allocation3 + $0x414] sm:$0xff]
      %v3632 = vld [vmem:[#allocation3 + $0x41c] sm:$0xff]
      %v3633 = vld [vmem:[#allocation3 + $0x424] sm:$0xff]
      %v3634 = vld [vmem:[#allocation3 + $0x42c] sm:$0xff]
      %v3635 = vld [vmem:[#allocation3 + $0x434] sm:$0xf]
      %v3636 = vld [vmem:[#allocation3 + $0x438] sm:$0xff]
      %v3637 = vld [vmem:[#allocation3 + $0x440] sm:$0xff]
      %v3638 = vld [vmem:[#allocation3 + $0x448] sm:$0xff]
      %v3639 = vld [vmem:[#allocation3 + $0x450] sm:$0xff]
      %v3640 = vld [vmem:[#allocation3 + $0x458] sm:$0xf]
      %v3641 = vld [vmem:[#allocation3 + $0x45c] sm:$0xff]
      %v3642 = vld [vmem:[#allocation3 + $0x464] sm:$0xff]
      %v3643 = vld [vmem:[#allocation3 + $0x46c] sm:$0xff]
      %v3644 = vld [vmem:[#allocation3 + $0x474] sm:$0xff]
      %v3645 = vld [vmem:[#allocation3 + $0x47c] sm:$0xf]
      %v3646 = vld [vmem:[%s3] sm:$0xf]
      %v3647 = vld [vmem:[%s3 + $0x4] sm:$0xf]
      %v3648 = vld [vmem:[%s3 + $0x8] sm:$0xf]
      %v3649 = vld [vmem:[%s3 + $0xc] sm:$0xf]
      %v3650 = vld [vmem:[%s3 + $0x10] sm:$0xf]
      %v3651 = vld [vmem:[%s3 + $0x14] sm:$0xf]
      %v3652 = vld [vmem:[%s3 + $0x18] sm:$0xf]
      %v3653 = vld [vmem:[%s3 + $0x1c] sm:$0xf]
      %v3654 = vld [vmem:[%s3 + $0x20] sm:$0xf]
      %v3655 = vld [vmem:[%s3 + $0x24] sm:$0xf]
      %v3656 = vld [vmem:[%s3 + $0x28] sm:$0xf]
      %v3657 = vld [vmem:[%s3 + $0x2c] sm:$0xf]
      %v3658 = vld [vmem:[%s3 + $0x30] sm:$0xf]
      %v3659 = vld [vmem:[%s3 + $0x34] sm:$0xf]
      %v3660 = vld [vmem:[%s3 + $0x38] sm:$0xf]
      %v3661 = vld [vmem:[%s3 + $0x3c] sm:$0xf]
      %v3662 = vld [vmem:[%s3 + $0x40] sm:$0xf]
      %v3663 = vld [vmem:[%s3 + $0x44] sm:$0xf]
      %v3664 = vld [vmem:[%s3 + $0x48] sm:$0xf]
      %v3665 = vld [vmem:[%s3 + $0x4c] sm:$0xf]
      %v3666 = vld [vmem:[%s3 + $0x50] sm:$0xf]
      %v3667 = vld [vmem:[%s3 + $0x54] sm:$0xf]
      %v3668 = vld [vmem:[%s3 + $0x58] sm:$0xf]
      %v3669 = vld [vmem:[%s3 + $0x5c] sm:$0xf]
      %v3670 = vld [vmem:[%s3 + $0x60] sm:$0xf]
      %v3671 = vld [vmem:[%s3 + $0x64] sm:$0xf]
      %v3672 = vld [vmem:[%s3 + $0x68] sm:$0xf]
      %v3673 = vld [vmem:[%s3 + $0x6c] sm:$0xf]
      %v3674 = vld [vmem:[%s3 + $0x70] sm:$0xf]
      %v3675 = vld [vmem:[%s3 + $0x74] sm:$0xf]
      %v3676 = vld [vmem:[%s3 + $0x78] sm:$0xf]
      %v3677 = vld [vmem:[%s3 + $0x7c] sm:$0xf]
      %v3678 = vld [vmem:[%s3 + $0x80] sm:$0xf]
      %v3679 = vld [vmem:[%s3 + $0x84] sm:$0xf]
      %v3680 = vld [vmem:[%s3 + $0x88] sm:$0xf]
      %v3681 = vld [vmem:[%s3 + $0x8c] sm:$0xf]
      %v3682 = vld [vmem:[%s3 + $0x90] sm:$0xf]
      %v3683 = vld [vmem:[%s3 + $0x94] sm:$0xf]
      %v3684 = vld [vmem:[%s3 + $0x98] sm:$0xf]
      %v3685 = vld [vmem:[%s3 + $0x9c] sm:$0xf]
      %v3686 = vld [vmem:[%s3 + $0xa0] sm:$0xf]
      %v3687 = vld [vmem:[%s3 + $0xa4] sm:$0xf]
      %v3688 = vld [vmem:[%s3 + $0xa8] sm:$0xf]
      %v3689 = vld [vmem:[%s3 + $0xac] sm:$0xf]
      %v3690 = vld [vmem:[%s3 + $0xb0] sm:$0xf]
      %v3691 = vld [vmem:[%s3 + $0xb4] sm:$0xf]
      %v3692 = vld [vmem:[%s3 + $0xb8] sm:$0xf]
      %v3693 = vld [vmem:[%s3 + $0xbc] sm:$0xf]
      %v3694 = vld [vmem:[%s3 + $0xc0] sm:$0xf]
      %v3695 = vld [vmem:[%s3 + $0xc4] sm:$0xf]
      %v3696 = vld [vmem:[%s3 + $0xc8] sm:$0xf]
      %v3697 = vld [vmem:[%s3 + $0xcc] sm:$0xf]
      %v3698 = vld [vmem:[%s3 + $0xd0] sm:$0xf]
      %v3699 = vld [vmem:[%s3 + $0xd4] sm:$0xf]
      %v3700 = vld [vmem:[%s3 + $0xd8] sm:$0xf]
      %v3701 = vld [vmem:[%s3 + $0xdc] sm:$0xf]
      %v3702 = vld [vmem:[%s3 + $0xe0] sm:$0xf]
      %v3703 = vld [vmem:[%s3 + $0xe4] sm:$0xf]
      %v3704 = vld [vmem:[%s3 + $0xe8] sm:$0xf]
      %v3705 = vld [vmem:[%s3 + $0xec] sm:$0xf]
      %v3706 = vld [vmem:[%s3 + $0xf0] sm:$0xf]
      %v3707 = vld [vmem:[%s3 + $0xf4] sm:$0xf]
      %v3708 = vld [vmem:[%s3 + $0xf8] sm:$0xf]
      %v3709 = vld [vmem:[%s3 + $0xfc] sm:$0xf]
      %v3710 = vld [vmem:[%s3 + $0x100] sm:$0xf]
      %v3711 = vld [vmem:[%s3 + $0x104] sm:$0xf]
      %v3712 = vld [vmem:[%s3 + $0x108] sm:$0xf]
      %v3713 = vld [vmem:[%s3 + $0x10c] sm:$0xf]
      %v3714 = vld [vmem:[%s3 + $0x110] sm:$0xf]
      %v3715 = vld [vmem:[%s3 + $0x114] sm:$0xf]
      %v3716 = vld [vmem:[%s3 + $0x118] sm:$0xf]
      %v3717 = vld [vmem:[%s3 + $0x11c] sm:$0xf]
      %v3718 = vld [vmem:[%s3 + $0x120] sm:$0xf]
      %v3719 = vld [vmem:[%s3 + $0x124] sm:$0xf]
      %v3720 = vld [vmem:[%s3 + $0x128] sm:$0xf]
      %v3721 = vld [vmem:[%s3 + $0x12c] sm:$0xf]
      %v3722 = vld [vmem:[%s3 + $0x130] sm:$0xf]
      %v3723 = vld [vmem:[%s3 + $0x134] sm:$0xf]
      %v3724 = vld [vmem:[%s3 + $0x138] sm:$0xf]
      %v3725 = vld [vmem:[%s3 + $0x13c] sm:$0xf]
      %v3726 = vld [vmem:[%s3 + $0x140] sm:$0xf]
      %v3727 = vld [vmem:[%s3 + $0x144] sm:$0xf]
      %v3728 = vld [vmem:[%s3 + $0x148] sm:$0xf]
      %v3729 = vld [vmem:[%s3 + $0x14c] sm:$0xf]
      %v3730 = vld [vmem:[%s3 + $0x150] sm:$0xf]
      %v3731 = vld [vmem:[%s3 + $0x154] sm:$0xf]
      %v3732 = vld [vmem:[%s3 + $0x158] sm:$0xf]
      %v3733 = vld [vmem:[%s3 + $0x15c] sm:$0xf]
      %v3734 = vld [vmem:[%s3 + $0x160] sm:$0xf]
      %v3735 = vld [vmem:[%s3 + $0x164] sm:$0xf]
      %v3736 = vld [vmem:[%s3 + $0x168] sm:$0xf]
      %v3737 = vld [vmem:[%s3 + $0x16c] sm:$0xf]
      %v3738 = vld [vmem:[%s3 + $0x170] sm:$0xf]
      %v3739 = vld [vmem:[%s3 + $0x174] sm:$0xf]
      %v3740 = vld [vmem:[%s3 + $0x178] sm:$0xf]
      %v3741 = vld [vmem:[%s3 + $0x17c] sm:$0xf]
      %v3742 = vld [vmem:[%s3 + $0x180] sm:$0xf]
      %v3743 = vld [vmem:[%s3 + $0x184] sm:$0xf]
      %v3744 = vld [vmem:[%s3 + $0x188] sm:$0xf]
      %v3745 = vld [vmem:[%s3 + $0x18c] sm:$0xf]
      %v3746 = vld [vmem:[%s3 + $0x190] sm:$0xf]
      %v3747 = vld [vmem:[%s3 + $0x194] sm:$0xf]
      %v3748 = vld [vmem:[%s3 + $0x198] sm:$0xf]
      %v3749 = vld [vmem:[%s3 + $0x19c] sm:$0xf]
      %v3750 = vld [vmem:[%s3 + $0x1a0] sm:$0xf]
      %v3751 = vld [vmem:[%s3 + $0x1a4] sm:$0xf]
      %v3752 = vld [vmem:[%s3 + $0x1a8] sm:$0xf]
      %v3753 = vld [vmem:[%s3 + $0x1ac] sm:$0xf]
      %v3754 = vld [vmem:[%s3 + $0x1b0] sm:$0xf]
      %v3755 = vld [vmem:[%s3 + $0x1b4] sm:$0xf]
      %v3756 = vld [vmem:[%s3 + $0x1b8] sm:$0xf]
      %v3757 = vld [vmem:[%s3 + $0x1bc] sm:$0xf]
      %v3758 = vld [vmem:[%s3 + $0x1c0] sm:$0xf]
      %v3759 = vld [vmem:[%s3 + $0x1c4] sm:$0xf]
      %v3760 = vld [vmem:[%s3 + $0x1c8] sm:$0xf]
      %v3761 = vld [vmem:[%s3 + $0x1cc] sm:$0xf]
      %v3762 = vld [vmem:[%s3 + $0x1d0] sm:$0xf]
      %v3763 = vld [vmem:[%s3 + $0x1d4] sm:$0xf]
      %v3764 = vld [vmem:[%s3 + $0x1d8] sm:$0xf]
      %v3765 = vld [vmem:[%s3 + $0x1dc] sm:$0xf]
      %v3766 = vld [vmem:[%s3 + $0x1e0] sm:$0xf]
      %v3767 = vld [vmem:[%s3 + $0x1e4] sm:$0xf]
      %v3768 = vld [vmem:[%s3 + $0x1e8] sm:$0xf]
      %v3769 = vld [vmem:[%s3 + $0x1ec] sm:$0xf]
      %v3770 = vld [vmem:[%s3 + $0x1f0] sm:$0xf]
      %v3771 = vld [vmem:[%s3 + $0x1f4] sm:$0xf]
      %v3772 = vld [vmem:[%s3 + $0x1f8] sm:$0xf]
      %v3773 = vld [vmem:[%s3 + $0x1fc] sm:$0xf]
      %v3774 = vld [vmem:[%s3 + $0x200] sm:$0xf]
      %v3775 = vld [vmem:[%s3 + $0x204] sm:$0xf]
      %v3776 = vld [vmem:[%s3 + $0x208] sm:$0xf]
      %v3777 = vld [vmem:[%s3 + $0x20c] sm:$0xf]
      %v3778 = vld [vmem:[%s3 + $0x210] sm:$0xf]
      %v3779 = vld [vmem:[%s3 + $0x214] sm:$0xf]
      %v3780 = vld [vmem:[%s3 + $0x218] sm:$0xf]
      %v3781 = vld [vmem:[%s3 + $0x21c] sm:$0xf]
      %v3782 = vld [vmem:[%s3 + $0x220] sm:$0xf]
      %v3783 = vld [vmem:[%s3 + $0x224] sm:$0xf]
      %v3784 = vld [vmem:[%s3 + $0x228] sm:$0xf]
      %v3785 = vld [vmem:[%s3 + $0x22c] sm:$0xf]
      %v3786 = vld [vmem:[%s3 + $0x230] sm:$0xf]
      %v3787 = vld [vmem:[%s3 + $0x234] sm:$0xf]
      %v3788 = vld [vmem:[%s3 + $0x238] sm:$0xf]
      %v3789 = vld [vmem:[%s3 + $0x23c] sm:$0xf]
      %v3950 = vunpack.c.l.b16 %v3486
      %v3951 = vunpack.c.h.b16 %v3486
      %v3952 = vunpack.c.l.b16 %v3487
      %v3953 = vunpack.c.h.b16 %v3487
      %v3954 = vunpack.c.l.b16 %v3488
      %v3955 = vunpack.c.h.b16 %v3488
      %v3956 = vunpack.c.l.b16 %v3489
      %v3957 = vunpack.c.h.b16 %v3489
      %v3958 = vunpack.c.l.b16 %v3490
      %v3959 = vunpack.c.l.b16 %v3491
      %v3960 = vunpack.c.h.b16 %v3491
      %v3961 = vunpack.c.l.b16 %v3492
      %v3962 = vunpack.c.h.b16 %v3492
      %v3963 = vunpack.c.l.b16 %v3493
      %v3964 = vunpack.c.h.b16 %v3493
      %v3965 = vunpack.c.l.b16 %v3494
      %v3966 = vunpack.c.h.b16 %v3494
      %v3967 = vunpack.c.l.b16 %v3495
      %v3968 = vunpack.c.l.b16 %v3496
      %v3969 = vunpack.c.h.b16 %v3496
      %v3970 = vunpack.c.l.b16 %v3497
      %v3971 = vunpack.c.h.b16 %v3497
      %v3972 = vunpack.c.l.b16 %v3498
      %v3973 = vunpack.c.h.b16 %v3498
      %v3974 = vunpack.c.l.b16 %v3499
      %v3975 = vunpack.c.h.b16 %v3499
      %v3976 = vunpack.c.l.b16 %v3500
      %v3977 = vunpack.c.l.b16 %v3501
      %v3978 = vunpack.c.h.b16 %v3501
      %v3979 = vunpack.c.l.b16 %v3502
      %v3980 = vunpack.c.h.b16 %v3502
      %v3981 = vunpack.c.l.b16 %v3503
      %v3982 = vunpack.c.h.b16 %v3503
      %v3983 = vunpack.c.l.b16 %v3504
      %v3984 = vunpack.c.h.b16 %v3504
      %v3985 = vunpack.c.l.b16 %v3505
      %v3986 = vunpack.c.l.b16 %v3506
      %v3987 = vunpack.c.h.b16 %v3506
      %v3988 = vunpack.c.l.b16 %v3507
      %v3989 = vunpack.c.h.b16 %v3507
      %v3990 = vunpack.c.l.b16 %v3508
      %v3991 = vunpack.c.h.b16 %v3508
      %v3992 = vunpack.c.l.b16 %v3509
      %v3993 = vunpack.c.h.b16 %v3509
      %v3994 = vunpack.c.l.b16 %v3510
      %v3995 = vunpack.c.l.b16 %v3511
      %v3996 = vunpack.c.h.b16 %v3511
      %v3997 = vunpack.c.l.b16 %v3512
      %v3998 = vunpack.c.h.b16 %v3512
      %v3999 = vunpack.c.l.b16 %v3513
      %v4000 = vunpack.c.h.b16 %v3513
      %v4001 = vunpack.c.l.b16 %v3514
      %v4002 = vunpack.c.h.b16 %v3514
      %v4003 = vunpack.c.l.b16 %v3515
      %v4004 = vunpack.c.l.b16 %v3516
      %v4005 = vunpack.c.h.b16 %v3516
      %v4006 = vunpack.c.l.b16 %v3517
      %v4007 = vunpack.c.h.b16 %v3517
      %v4008 = vunpack.c.l.b16 %v3518
      %v4009 = vunpack.c.h.b16 %v3518
      %v4010 = vunpack.c.l.b16 %v3519
      %v4011 = vunpack.c.h.b16 %v3519
      %v4012 = vunpack.c.l.b16 %v3520
      %v4013 = vunpack.c.l.b16 %v3521
      %v4014 = vunpack.c.h.b16 %v3521
      %v4015 = vunpack.c.l.b16 %v3522
      %v4016 = vunpack.c.h.b16 %v3522
      %v4017 = vunpack.c.l.b16 %v3523
      %v4018 = vunpack.c.h.b16 %v3523
      %v4019 = vunpack.c.l.b16 %v3524
      %v4020 = vunpack.c.h.b16 %v3524
      %v4021 = vunpack.c.l.b16 %v3525
      %v4022 = vunpack.c.l.b16 %v3526
      %v4023 = vunpack.c.h.b16 %v3526
      %v4024 = vunpack.c.l.b16 %v3527
      %v4025 = vunpack.c.h.b16 %v3527
      %v4026 = vunpack.c.l.b16 %v3528
      %v4027 = vunpack.c.h.b16 %v3528
      %v4028 = vunpack.c.l.b16 %v3529
      %v4029 = vunpack.c.h.b16 %v3529
      %v4030 = vunpack.c.l.b16 %v3530
      %v4031 = vunpack.c.l.b16 %v3531
      %v4032 = vunpack.c.h.b16 %v3531
      %v4033 = vunpack.c.l.b16 %v3532
      %v4034 = vunpack.c.h.b16 %v3532
      %v4035 = vunpack.c.l.b16 %v3533
      %v4036 = vunpack.c.h.b16 %v3533
      %v4037 = vunpack.c.l.b16 %v3534
      %v4038 = vunpack.c.h.b16 %v3534
      %v4039 = vunpack.c.l.b16 %v3535
      %v4040 = vunpack.c.l.b16 %v3536
      %v4041 = vunpack.c.h.b16 %v3536
      %v4042 = vunpack.c.l.b16 %v3537
      %v4043 = vunpack.c.h.b16 %v3537
      %v4044 = vunpack.c.l.b16 %v3538
      %v4045 = vunpack.c.h.b16 %v3538
      %v4046 = vunpack.c.l.b16 %v3539
      %v4047 = vunpack.c.h.b16 %v3539
      %v4048 = vunpack.c.l.b16 %v3540
      %v4049 = vunpack.c.l.b16 %v3541
      %v4050 = vunpack.c.h.b16 %v3541
      %v4051 = vunpack.c.l.b16 %v3542
      %v4052 = vunpack.c.h.b16 %v3542
      %v4053 = vunpack.c.l.b16 %v3543
      %v4054 = vunpack.c.h.b16 %v3543
      %v4055 = vunpack.c.l.b16 %v3544
      %v4056 = vunpack.c.h.b16 %v3544
      %v4057 = vunpack.c.l.b16 %v3545
      %v4058 = vunpack.c.l.b16 %v3546
      %v4059 = vunpack.c.h.b16 %v3546
      %v4060 = vunpack.c.l.b16 %v3547
      %v4061 = vunpack.c.h.b16 %v3547
      %v4062 = vunpack.c.l.b16 %v3548
      %v4063 = vunpack.c.h.b16 %v3548
      %v4064 = vunpack.c.l.b16 %v3549
      %v4065 = vunpack.c.h.b16 %v3549
      %v4066 = vunpack.c.l.b16 %v3550
      %v4067 = vunpack.c.l.b16 %v3551
      %v4068 = vunpack.c.h.b16 %v3551
      %v4069 = vunpack.c.l.b16 %v3552
      %v4070 = vunpack.c.h.b16 %v3552
      %v4071 = vunpack.c.l.b16 %v3553
      %v4072 = vunpack.c.h.b16 %v3553
      %v4073 = vunpack.c.l.b16 %v3554
      %v4074 = vunpack.c.h.b16 %v3554
      %v4075 = vunpack.c.l.b16 %v3555
      %v4076 = vunpack.c.l.b16 %v3556
      %v4077 = vunpack.c.h.b16 %v3556
      %v4078 = vunpack.c.l.b16 %v3557
      %v4079 = vunpack.c.h.b16 %v3557
      %v4080 = vunpack.c.l.b16 %v3558
      %v4081 = vunpack.c.h.b16 %v3558
      %v4082 = vunpack.c.l.b16 %v3559
      %v4083 = vunpack.c.h.b16 %v3559
      %v4084 = vunpack.c.l.b16 %v3560
      %v4085 = vunpack.c.l.b16 %v3561
      %v4086 = vunpack.c.h.b16 %v3561
      %v4087 = vunpack.c.l.b16 %v3562
      %v4088 = vunpack.c.h.b16 %v3562
      %v4089 = vunpack.c.l.b16 %v3563
      %v4090 = vunpack.c.h.b16 %v3563
      %v4091 = vunpack.c.l.b16 %v3564
      %v4092 = vunpack.c.h.b16 %v3564
      %v4093 = vunpack.c.l.b16 %v3565
      %v4094 = vunpack.c.l.b16 %v3566
      %v4095 = vunpack.c.h.b16 %v3566
      %v4096 = vunpack.c.l.b16 %v3567
      %v4097 = vunpack.c.h.b16 %v3567
      %v4098 = vunpack.c.l.b16 %v3568
      %v4099 = vunpack.c.h.b16 %v3568
      %v4100 = vunpack.c.l.b16 %v3569
      %v4101 = vunpack.c.h.b16 %v3569
      %v4102 = vunpack.c.l.b16 %v3570
      %v4103 = vunpack.c.l.b16 %v3571
      %v4104 = vunpack.c.h.b16 %v3571
      %v4105 = vunpack.c.l.b16 %v3572
      %v4106 = vunpack.c.h.b16 %v3572
      %v4107 = vunpack.c.l.b16 %v3573
      %v4108 = vunpack.c.h.b16 %v3573
      %v4109 = vunpack.c.l.b16 %v3574
      %v4110 = vunpack.c.h.b16 %v3574
      %v4111 = vunpack.c.l.b16 %v3575
      %v4112 = vunpack.c.l.b16 %v3576
      %v4113 = vunpack.c.h.b16 %v3576
      %v4114 = vunpack.c.l.b16 %v3577
      %v4115 = vunpack.c.h.b16 %v3577
      %v4116 = vunpack.c.l.b16 %v3578
      %v4117 = vunpack.c.h.b16 %v3578
      %v4118 = vunpack.c.l.b16 %v3579
      %v4119 = vunpack.c.h.b16 %v3579
      %v4120 = vunpack.c.l.b16 %v3580
      %v4121 = vunpack.c.l.b16 %v3581
      %v4122 = vunpack.c.h.b16 %v3581
      %v4123 = vunpack.c.l.b16 %v3582
      %v4124 = vunpack.c.h.b16 %v3582
      %v4125 = vunpack.c.l.b16 %v3583
      %v4126 = vunpack.c.h.b16 %v3583
      %v4127 = vunpack.c.l.b16 %v3584
      %v4128 = vunpack.c.h.b16 %v3584
      %v4129 = vunpack.c.l.b16 %v3585
      %v4130 = vunpack.c.l.b16 %v3586
      %v4131 = vunpack.c.h.b16 %v3586
      %v4132 = vunpack.c.l.b16 %v3587
      %v4133 = vunpack.c.h.b16 %v3587
      %v4134 = vunpack.c.l.b16 %v3588
      %v4135 = vunpack.c.h.b16 %v3588
      %v4136 = vunpack.c.l.b16 %v3589
      %v4137 = vunpack.c.h.b16 %v3589
      %v4138 = vunpack.c.l.b16 %v3590
      %v4139 = vunpack.c.l.b16 %v3591
      %v4140 = vunpack.c.h.b16 %v3591
      %v4141 = vunpack.c.l.b16 %v3592
      %v4142 = vunpack.c.h.b16 %v3592
      %v4143 = vunpack.c.l.b16 %v3593
      %v4144 = vunpack.c.h.b16 %v3593
      %v4145 = vunpack.c.l.b16 %v3594
      %v4146 = vunpack.c.h.b16 %v3594
      %v4147 = vunpack.c.l.b16 %v3595
      %v4148 = vunpack.c.l.b16 %v3596
      %v4149 = vunpack.c.h.b16 %v3596
      %v4150 = vunpack.c.l.b16 %v3597
      %v4151 = vunpack.c.h.b16 %v3597
      %v4152 = vunpack.c.l.b16 %v3598
      %v4153 = vunpack.c.h.b16 %v3598
      %v4154 = vunpack.c.l.b16 %v3599
      %v4155 = vunpack.c.h.b16 %v3599
      %v4156 = vunpack.c.l.b16 %v3600
      %v4157 = vunpack.c.l.b16 %v3601
      %v4158 = vunpack.c.h.b16 %v3601
      %v4159 = vunpack.c.l.b16 %v3602
      %v4160 = vunpack.c.h.b16 %v3602
      %v4161 = vunpack.c.l.b16 %v3603
      %v4162 = vunpack.c.h.b16 %v3603
      %v4163 = vunpack.c.l.b16 %v3604
      %v4164 = vunpack.c.h.b16 %v3604
      %v4165 = vunpack.c.l.b16 %v3605
      %v4166 = vunpack.c.l.b16 %v3606
      %v4167 = vunpack.c.h.b16 %v3606
      %v4168 = vunpack.c.l.b16 %v3607
      %v4169 = vunpack.c.h.b16 %v3607
      %v4170 = vunpack.c.l.b16 %v3608
      %v4171 = vunpack.c.h.b16 %v3608
      %v4172 = vunpack.c.l.b16 %v3609
      %v4173 = vunpack.c.h.b16 %v3609
      %v4174 = vunpack.c.l.b16 %v3610
      %v4175 = vunpack.c.l.b16 %v3611
      %v4176 = vunpack.c.h.b16 %v3611
      %v4177 = vunpack.c.l.b16 %v3612
      %v4178 = vunpack.c.h.b16 %v3612
      %v4179 = vunpack.c.l.b16 %v3613
      %v4180 = vunpack.c.h.b16 %v3613
      %v4181 = vunpack.c.l.b16 %v3614
      %v4182 = vunpack.c.h.b16 %v3614
      %v4183 = vunpack.c.l.b16 %v3615
      %v4184 = vunpack.c.l.b16 %v3616
      %v4185 = vunpack.c.h.b16 %v3616
      %v4186 = vunpack.c.l.b16 %v3617
      %v4187 = vunpack.c.h.b16 %v3617
      %v4188 = vunpack.c.l.b16 %v3618
      %v4189 = vunpack.c.h.b16 %v3618
      %v4190 = vunpack.c.l.b16 %v3619
      %v4191 = vunpack.c.h.b16 %v3619
      %v4192 = vunpack.c.l.b16 %v3620
      %v4193 = vunpack.c.l.b16 %v3621
      %v4194 = vunpack.c.h.b16 %v3621
      %v4195 = vunpack.c.l.b16 %v3622
      %v4196 = vunpack.c.h.b16 %v3622
      %v4197 = vunpack.c.l.b16 %v3623
      %v4198 = vunpack.c.h.b16 %v3623
      %v4199 = vunpack.c.l.b16 %v3624
      %v4200 = vunpack.c.h.b16 %v3624
      %v4201 = vunpack.c.l.b16 %v3625
      %v4202 = vunpack.c.l.b16 %v3626
      %v4203 = vunpack.c.h.b16 %v3626
      %v4204 = vunpack.c.l.b16 %v3627
      %v4205 = vunpack.c.h.b16 %v3627
      %v4206 = vunpack.c.l.b16 %v3628
      %v4207 = vunpack.c.h.b16 %v3628
      %v4208 = vunpack.c.l.b16 %v3629
      %v4209 = vunpack.c.h.b16 %v3629
      %v4210 = vunpack.c.l.b16 %v3630
      %v4211 = vunpack.c.l.b16 %v3631
      %v4212 = vunpack.c.h.b16 %v3631
      %v4213 = vunpack.c.l.b16 %v3632
      %v4214 = vunpack.c.h.b16 %v3632
      %v4215 = vunpack.c.l.b16 %v3633
      %v4216 = vunpack.c.h.b16 %v3633
      %v4217 = vunpack.c.l.b16 %v3634
      %v4218 = vunpack.c.h.b16 %v3634
      %v4219 = vunpack.c.l.b16 %v3635
      %v4220 = vunpack.c.l.b16 %v3636
      %v4221 = vunpack.c.h.b16 %v3636
      %v4222 = vunpack.c.l.b16 %v3637
      %v4223 = vunpack.c.h.b16 %v3637
      %v4224 = vunpack.c.l.b16 %v3638
      %v4225 = vunpack.c.h.b16 %v3638
      %v4226 = vunpack.c.l.b16 %v3639
      %v4227 = vunpack.c.h.b16 %v3639
      %v4228 = vunpack.c.l.b16 %v3640
      %v4229 = vunpack.c.l.b16 %v3641
      %v4230 = vunpack.c.h.b16 %v3641
      %v4231 = vunpack.c.l.b16 %v3642
      %v4232 = vunpack.c.h.b16 %v3642
      %v4233 = vunpack.c.l.b16 %v3643
      %v4234 = vunpack.c.h.b16 %v3643
      %v4235 = vunpack.c.l.b16 %v3644
      %v4236 = vunpack.c.h.b16 %v3644
      %v4237 = vunpack.c.l.b16 %v3645
      %v4238 = vpack.c.b16 %v3959, %v3950
      %v4239 = vpack.c.b16 %v3960, %v3951
      %v4240 = vpack.c.b16 %v3961, %v3952
      %v4241 = vpack.c.b16 %v3962, %v3953
      %v4242 = vpack.c.b16 %v3963, %v3954
      %v4243 = vpack.c.b16 %v3964, %v3955
      %v4244 = vpack.c.b16 %v3965, %v3956
      %v4245 = vpack.c.b16 %v3966, %v3957
      %v4246 = vpack.c.b16 %v3967, %v3958
      %v4247 = vpack.c.b16 %v3977, %v3968
      %v4248 = vpack.c.b16 %v3978, %v3969
      %v4249 = vpack.c.b16 %v3979, %v3970
      %v4250 = vpack.c.b16 %v3980, %v3971
      %v4251 = vpack.c.b16 %v3981, %v3972
      %v4252 = vpack.c.b16 %v3982, %v3973
      %v4253 = vpack.c.b16 %v3983, %v3974
      %v4254 = vpack.c.b16 %v3984, %v3975
      %v4255 = vpack.c.b16 %v3985, %v3976
      %v4256 = vpack.c.b16 %v3995, %v3986
      %v4257 = vpack.c.b16 %v3996, %v3987
      %v4258 = vpack.c.b16 %v3997, %v3988
      %v4259 = vpack.c.b16 %v3998, %v3989
      %v4260 = vpack.c.b16 %v3999, %v3990
      %v4261 = vpack.c.b16 %v4000, %v3991
      %v4262 = vpack.c.b16 %v4001, %v3992
      %v4263 = vpack.c.b16 %v4002, %v3993
      %v4264 = vpack.c.b16 %v4003, %v3994
      %v4265 = vpack.c.b16 %v4013, %v4004
      %v4266 = vpack.c.b16 %v4014, %v4005
      %v4267 = vpack.c.b16 %v4015, %v4006
      %v4268 = vpack.c.b16 %v4016, %v4007
      %v4269 = vpack.c.b16 %v4017, %v4008
      %v4270 = vpack.c.b16 %v4018, %v4009
      %v4271 = vpack.c.b16 %v4019, %v4010
      %v4272 = vpack.c.b16 %v4020, %v4011
      %v4273 = vpack.c.b16 %v4021, %v4012
      %v4274 = vpack.c.b16 %v4031, %v4022
      %v4275 = vpack.c.b16 %v4032, %v4023
      %v4276 = vpack.c.b16 %v4033, %v4024
      %v4277 = vpack.c.b16 %v4034, %v4025
      %v4278 = vpack.c.b16 %v4035, %v4026
      %v4279 = vpack.c.b16 %v4036, %v4027
      %v4280 = vpack.c.b16 %v4037, %v4028
      %v4281 = vpack.c.b16 %v4038, %v4029
      %v4282 = vpack.c.b16 %v4039, %v4030
      %v4283 = vpack.c.b16 %v4049, %v4040
      %v4284 = vpack.c.b16 %v4050, %v4041
      %v4285 = vpack.c.b16 %v4051, %v4042
      %v4286 = vpack.c.b16 %v4052, %v4043
      %v4287 = vpack.c.b16 %v4053, %v4044
      %v4288 = vpack.c.b16 %v4054, %v4045
      %v4289 = vpack.c.b16 %v4055, %v4046
      %v4290 = vpack.c.b16 %v4056, %v4047
      %v4291 = vpack.c.b16 %v4057, %v4048
      %v4292 = vpack.c.b16 %v4067, %v4058
      %v4293 = vpack.c.b16 %v4068, %v4059
      %v4294 = vpack.c.b16 %v4069, %v4060
      %v4295 = vpack.c.b16 %v4070, %v4061
      %v4296 = vpack.c.b16 %v4071, %v4062
      %v4297 = vpack.c.b16 %v4072, %v4063
      %v4298 = vpack.c.b16 %v4073, %v4064
      %v4299 = vpack.c.b16 %v4074, %v4065
      %v4300 = vpack.c.b16 %v4075, %v4066
      %v4301 = vpack.c.b16 %v4085, %v4076
      %v4302 = vpack.c.b16 %v4086, %v4077
      %v4303 = vpack.c.b16 %v4087, %v4078
      %v4304 = vpack.c.b16 %v4088, %v4079
      %v4305 = vpack.c.b16 %v4089, %v4080
      %v4306 = vpack.c.b16 %v4090, %v4081
      %v4307 = vpack.c.b16 %v4091, %v4082
      %v4308 = vpack.c.b16 %v4092, %v4083
      %v4309 = vpack.c.b16 %v4093, %v4084
      %v4310 = vpack.c.b16 %v4103, %v4094
      %v4311 = vpack.c.b16 %v4104, %v4095
      %v4312 = vpack.c.b16 %v4105, %v4096
      %v4313 = vpack.c.b16 %v4106, %v4097
      %v4314 = vpack.c.b16 %v4107, %v4098
      %v4315 = vpack.c.b16 %v4108, %v4099
      %v4316 = vpack.c.b16 %v4109, %v4100
      %v4317 = vpack.c.b16 %v4110, %v4101
      %v4318 = vpack.c.b16 %v4111, %v4102
      %v4319 = vpack.c.b16 %v4121, %v4112
      %v4320 = vpack.c.b16 %v4122, %v4113
      %v4321 = vpack.c.b16 %v4123, %v4114
      %v4322 = vpack.c.b16 %v4124, %v4115
      %v4323 = vpack.c.b16 %v4125, %v4116
      %v4324 = vpack.c.b16 %v4126, %v4117
      %v4325 = vpack.c.b16 %v4127, %v4118
      %v4326 = vpack.c.b16 %v4128, %v4119
      %v4327 = vpack.c.b16 %v4129, %v4120
      %v4328 = vpack.c.b16 %v4139, %v4130
      %v4329 = vpack.c.b16 %v4140, %v4131
      %v4330 = vpack.c.b16 %v4141, %v4132
      %v4331 = vpack.c.b16 %v4142, %v4133
      %v4332 = vpack.c.b16 %v4143, %v4134
      %v4333 = vpack.c.b16 %v4144, %v4135
      %v4334 = vpack.c.b16 %v4145, %v4136
      %v4335 = vpack.c.b16 %v4146, %v4137
      %v4336 = vpack.c.b16 %v4147, %v4138
      %v4337 = vpack.c.b16 %v4157, %v4148
      %v4338 = vpack.c.b16 %v4158, %v4149
      %v4339 = vpack.c.b16 %v4159, %v4150
      %v4340 = vpack.c.b16 %v4160, %v4151
      %v4341 = vpack.c.b16 %v4161, %v4152
      %v4342 = vpack.c.b16 %v4162, %v4153
      %v4343 = vpack.c.b16 %v4163, %v4154
      %v4344 = vpack.c.b16 %v4164, %v4155
      %v4345 = vpack.c.b16 %v4165, %v4156
      %v4346 = vpack.c.b16 %v4175, %v4166
      %v4347 = vpack.c.b16 %v4176, %v4167
      %v4348 = vpack.c.b16 %v4177, %v4168
      %v4349 = vpack.c.b16 %v4178, %v4169
      %v4350 = vpack.c.b16 %v4179, %v4170
      %v4351 = vpack.c.b16 %v4180, %v4171
      %v4352 = vpack.c.b16 %v4181, %v4172
      %v4353 = vpack.c.b16 %v4182, %v4173
      %v4354 = vpack.c.b16 %v4183, %v4174
      %v4355 = vpack.c.b16 %v4193, %v4184
      %v4356 = vpack.c.b16 %v4194, %v4185
      %v4357 = vpack.c.b16 %v4195, %v4186
      %v4358 = vpack.c.b16 %v4196, %v4187
      %v4359 = vpack.c.b16 %v4197, %v4188
      %v4360 = vpack.c.b16 %v4198, %v4189
      %v4361 = vpack.c.b16 %v4199, %v4190
      %v4362 = vpack.c.b16 %v4200, %v4191
      %v4363 = vpack.c.b16 %v4201, %v4192
      %v4364 = vpack.c.b16 %v4211, %v4202
      %v4365 = vpack.c.b16 %v4212, %v4203
      %v4366 = vpack.c.b16 %v4213, %v4204
      %v4367 = vpack.c.b16 %v4214, %v4205
      %v4368 = vpack.c.b16 %v4215, %v4206
      %v4369 = vpack.c.b16 %v4216, %v4207
      %v4370 = vpack.c.b16 %v4217, %v4208
      %v4371 = vpack.c.b16 %v4218, %v4209
      %v4372 = vpack.c.b16 %v4219, %v4210
      %v4373 = vpack.c.b16 %v4229, %v4220
      %v4374 = vpack.c.b16 %v4230, %v4221
      %v4375 = vpack.c.b16 %v4231, %v4222
      %v4376 = vpack.c.b16 %v4232, %v4223
      %v4377 = vpack.c.b16 %v4233, %v4224
      %v4378 = vpack.c.b16 %v4234, %v4225
      %v4379 = vpack.c.b16 %v4235, %v4226
      %v4380 = vpack.c.b16 %v4236, %v4227
      %v4381 = vpack.c.b16 %v4237, %v4228
      %v4670 = vunpack.c.l.b16 %v3646
      %v4671 = vunpack.c.l.b16 %v3647
      %v4672 = vunpack.c.l.b16 %v3648
      %v4673 = vunpack.c.l.b16 %v3649
      %v4674 = vunpack.c.l.b16 %v3650
      %v4675 = vunpack.c.l.b16 %v3651
      %v4676 = vunpack.c.l.b16 %v3652
      %v4677 = vunpack.c.l.b16 %v3653
      %v4678 = vunpack.c.l.b16 %v3654
      %v4679 = vunpack.c.l.b16 %v3655
      %v4680 = vunpack.c.l.b16 %v3656
      %v4681 = vunpack.c.l.b16 %v3657
      %v4682 = vunpack.c.l.b16 %v3658
      %v4683 = vunpack.c.l.b16 %v3659
      %v4684 = vunpack.c.l.b16 %v3660
      %v4685 = vunpack.c.l.b16 %v3661
      %v4686 = vunpack.c.l.b16 %v3662
      %v4687 = vunpack.c.l.b16 %v3663
      %v4688 = vunpack.c.l.b16 %v3664
      %v4689 = vunpack.c.l.b16 %v3665
      %v4690 = vunpack.c.l.b16 %v3666
      %v4691 = vunpack.c.l.b16 %v3667
      %v4692 = vunpack.c.l.b16 %v3668
      %v4693 = vunpack.c.l.b16 %v3669
      %v4694 = vunpack.c.l.b16 %v3670
      %v4695 = vunpack.c.l.b16 %v3671
      %v4696 = vunpack.c.l.b16 %v3672
      %v4697 = vunpack.c.l.b16 %v3673
      %v4698 = vunpack.c.l.b16 %v3674
      %v4699 = vunpack.c.l.b16 %v3675
      %v4700 = vunpack.c.l.b16 %v3676
      %v4701 = vunpack.c.l.b16 %v3677
      %v4702 = vunpack.c.l.b16 %v3678
      %v4703 = vunpack.c.l.b16 %v3679
      %v4704 = vunpack.c.l.b16 %v3680
      %v4705 = vunpack.c.l.b16 %v3681
      %v4706 = vunpack.c.l.b16 %v3682
      %v4707 = vunpack.c.l.b16 %v3683
      %v4708 = vunpack.c.l.b16 %v3684
      %v4709 = vunpack.c.l.b16 %v3685
      %v4710 = vunpack.c.l.b16 %v3686
      %v4711 = vunpack.c.l.b16 %v3687
      %v4712 = vunpack.c.l.b16 %v3688
      %v4713 = vunpack.c.l.b16 %v3689
      %v4714 = vunpack.c.l.b16 %v3690
      %v4715 = vunpack.c.l.b16 %v3691
      %v4716 = vunpack.c.l.b16 %v3692
      %v4717 = vunpack.c.l.b16 %v3693
      %v4718 = vunpack.c.l.b16 %v3694
      %v4719 = vunpack.c.l.b16 %v3695
      %v4720 = vunpack.c.l.b16 %v3696
      %v4721 = vunpack.c.l.b16 %v3697
      %v4722 = vunpack.c.l.b16 %v3698
      %v4723 = vunpack.c.l.b16 %v3699
      %v4724 = vunpack.c.l.b16 %v3700
      %v4725 = vunpack.c.l.b16 %v3701
      %v4726 = vunpack.c.l.b16 %v3702
      %v4727 = vunpack.c.l.b16 %v3703
      %v4728 = vunpack.c.l.b16 %v3704
      %v4729 = vunpack.c.l.b16 %v3705
      %v4730 = vunpack.c.l.b16 %v3706
      %v4731 = vunpack.c.l.b16 %v3707
      %v4732 = vunpack.c.l.b16 %v3708
      %v4733 = vunpack.c.l.b16 %v3709
      %v4734 = vunpack.c.l.b16 %v3710
      %v4735 = vunpack.c.l.b16 %v3711
      %v4736 = vunpack.c.l.b16 %v3712
      %v4737 = vunpack.c.l.b16 %v3713
      %v4738 = vunpack.c.l.b16 %v3714
      %v4739 = vunpack.c.l.b16 %v3715
      %v4740 = vunpack.c.l.b16 %v3716
      %v4741 = vunpack.c.l.b16 %v3717
      %v4742 = vunpack.c.l.b16 %v3718
      %v4743 = vunpack.c.l.b16 %v3719
      %v4744 = vunpack.c.l.b16 %v3720
      %v4745 = vunpack.c.l.b16 %v3721
      %v4746 = vunpack.c.l.b16 %v3722
      %v4747 = vunpack.c.l.b16 %v3723
      %v4748 = vunpack.c.l.b16 %v3724
      %v4749 = vunpack.c.l.b16 %v3725
      %v4750 = vunpack.c.l.b16 %v3726
      %v4751 = vunpack.c.l.b16 %v3727
      %v4752 = vunpack.c.l.b16 %v3728
      %v4753 = vunpack.c.l.b16 %v3729
      %v4754 = vunpack.c.l.b16 %v3730
      %v4755 = vunpack.c.l.b16 %v3731
      %v4756 = vunpack.c.l.b16 %v3732
      %v4757 = vunpack.c.l.b16 %v3733
      %v4758 = vunpack.c.l.b16 %v3734
      %v4759 = vunpack.c.l.b16 %v3735
      %v4760 = vunpack.c.l.b16 %v3736
      %v4761 = vunpack.c.l.b16 %v3737
      %v4762 = vunpack.c.l.b16 %v3738
      %v4763 = vunpack.c.l.b16 %v3739
      %v4764 = vunpack.c.l.b16 %v3740
      %v4765 = vunpack.c.l.b16 %v3741
      %v4766 = vunpack.c.l.b16 %v3742
      %v4767 = vunpack.c.l.b16 %v3743
      %v4768 = vunpack.c.l.b16 %v3744
      %v4769 = vunpack.c.l.b16 %v3745
      %v4770 = vunpack.c.l.b16 %v3746
      %v4771 = vunpack.c.l.b16 %v3747
      %v4772 = vunpack.c.l.b16 %v3748
      %v4773 = vunpack.c.l.b16 %v3749
      %v4774 = vunpack.c.l.b16 %v3750
      %v4775 = vunpack.c.l.b16 %v3751
      %v4776 = vunpack.c.l.b16 %v3752
      %v4777 = vunpack.c.l.b16 %v3753
      %v4778 = vunpack.c.l.b16 %v3754
      %v4779 = vunpack.c.l.b16 %v3755
      %v4780 = vunpack.c.l.b16 %v3756
      %v4781 = vunpack.c.l.b16 %v3757
      %v4782 = vunpack.c.l.b16 %v3758
      %v4783 = vunpack.c.l.b16 %v3759
      %v4784 = vunpack.c.l.b16 %v3760
      %v4785 = vunpack.c.l.b16 %v3761
      %v4786 = vunpack.c.l.b16 %v3762
      %v4787 = vunpack.c.l.b16 %v3763
      %v4788 = vunpack.c.l.b16 %v3764
      %v4789 = vunpack.c.l.b16 %v3765
      %v4790 = vunpack.c.l.b16 %v3766
      %v4791 = vunpack.c.l.b16 %v3767
      %v4792 = vunpack.c.l.b16 %v3768
      %v4793 = vunpack.c.l.b16 %v3769
      %v4794 = vunpack.c.l.b16 %v3770
      %v4795 = vunpack.c.l.b16 %v3771
      %v4796 = vunpack.c.l.b16 %v3772
      %v4797 = vunpack.c.l.b16 %v3773
      %v4798 = vunpack.c.l.b16 %v3774
      %v4799 = vunpack.c.l.b16 %v3775
      %v4800 = vunpack.c.l.b16 %v3776
      %v4801 = vunpack.c.l.b16 %v3777
      %v4802 = vunpack.c.l.b16 %v3778
      %v4803 = vunpack.c.l.b16 %v3779
      %v4804 = vunpack.c.l.b16 %v3780
      %v4805 = vunpack.c.l.b16 %v3781
      %v4806 = vunpack.c.l.b16 %v3782
      %v4807 = vunpack.c.l.b16 %v3783
      %v4808 = vunpack.c.l.b16 %v3784
      %v4809 = vunpack.c.l.b16 %v3785
      %v4810 = vunpack.c.l.b16 %v3786
      %v4811 = vunpack.c.l.b16 %v3787
      %v4812 = vunpack.c.l.b16 %v3788
      %v4813 = vunpack.c.l.b16 %v3789
      %v4814 = vpack.c.b16 %v4671, %v4670
      %v4815 = vpack.c.b16 %v4673, %v4672
      %v4816 = vpack.c.b16 %v4675, %v4674
      %v4817 = vpack.c.b16 %v4677, %v4676
      %v4818 = vpack.c.b16 %v4679, %v4678
      %v4819 = vpack.c.b16 %v4681, %v4680
      %v4820 = vpack.c.b16 %v4683, %v4682
      %v4821 = vpack.c.b16 %v4685, %v4684
      %v4822 = vpack.c.b16 %v4687, %v4686
      %v4823 = vpack.c.b16 %v4689, %v4688
      %v4824 = vpack.c.b16 %v4691, %v4690
      %v4825 = vpack.c.b16 %v4693, %v4692
      %v4826 = vpack.c.b16 %v4695, %v4694
      %v4827 = vpack.c.b16 %v4697, %v4696
      %v4828 = vpack.c.b16 %v4699, %v4698
      %v4829 = vpack.c.b16 %v4701, %v4700
      %v4830 = vpack.c.b16 %v4703, %v4702
      %v4831 = vpack.c.b16 %v4705, %v4704
      %v4832 = vpack.c.b16 %v4707, %v4706
      %v4833 = vpack.c.b16 %v4709, %v4708
      %v4834 = vpack.c.b16 %v4711, %v4710
      %v4835 = vpack.c.b16 %v4713, %v4712
      %v4836 = vpack.c.b16 %v4715, %v4714
      %v4837 = vpack.c.b16 %v4717, %v4716
      %v4838 = vpack.c.b16 %v4719, %v4718
      %v4839 = vpack.c.b16 %v4721, %v4720
      %v4840 = vpack.c.b16 %v4723, %v4722
      %v4841 = vpack.c.b16 %v4725, %v4724
      %v4842 = vpack.c.b16 %v4727, %v4726
      %v4843 = vpack.c.b16 %v4729, %v4728
      %v4844 = vpack.c.b16 %v4731, %v4730
      %v4845 = vpack.c.b16 %v4733, %v4732
      %v4846 = vpack.c.b16 %v4735, %v4734
      %v4847 = vpack.c.b16 %v4737, %v4736
      %v4848 = vpack.c.b16 %v4739, %v4738
      %v4849 = vpack.c.b16 %v4741, %v4740
      %v4850 = vpack.c.b16 %v4743, %v4742
      %v4851 = vpack.c.b16 %v4745, %v4744
      %v4852 = vpack.c.b16 %v4747, %v4746
      %v4853 = vpack.c.b16 %v4749, %v4748
      %v4854 = vpack.c.b16 %v4751, %v4750
      %v4855 = vpack.c.b16 %v4753, %v4752
      %v4856 = vpack.c.b16 %v4755, %v4754
      %v4857 = vpack.c.b16 %v4757, %v4756
      %v4858 = vpack.c.b16 %v4759, %v4758
      %v4859 = vpack.c.b16 %v4761, %v4760
      %v4860 = vpack.c.b16 %v4763, %v4762
      %v4861 = vpack.c.b16 %v4765, %v4764
      %v4862 = vpack.c.b16 %v4767, %v4766
      %v4863 = vpack.c.b16 %v4769, %v4768
      %v4864 = vpack.c.b16 %v4771, %v4770
      %v4865 = vpack.c.b16 %v4773, %v4772
      %v4866 = vpack.c.b16 %v4775, %v4774
      %v4867 = vpack.c.b16 %v4777, %v4776
      %v4868 = vpack.c.b16 %v4779, %v4778
      %v4869 = vpack.c.b16 %v4781, %v4780
      %v4870 = vpack.c.b16 %v4783, %v4782
      %v4871 = vpack.c.b16 %v4785, %v4784
      %v4872 = vpack.c.b16 %v4787, %v4786
      %v4873 = vpack.c.b16 %v4789, %v4788
      %v4874 = vpack.c.b16 %v4791, %v4790
      %v4875 = vpack.c.b16 %v4793, %v4792
      %v4876 = vpack.c.b16 %v4795, %v4794
      %v4877 = vpack.c.b16 %v4797, %v4796
      %v4878 = vpack.c.b16 %v4799, %v4798
      %v4879 = vpack.c.b16 %v4801, %v4800
      %v4880 = vpack.c.b16 %v4803, %v4802
      %v4881 = vpack.c.b16 %v4805, %v4804
      %v4882 = vpack.c.b16 %v4807, %v4806
      %v4883 = vpack.c.b16 %v4809, %v4808
      %v4884 = vpack.c.b16 %v4811, %v4810
      %v4885 = vpack.c.b16 %v4813, %v4812
      %4958 = vmatpush.bf16.msra.mxu0 %v4821
      %4959 = vmatpush.bf16.msra.mxu0 %v4820
      %4960 = vmatpush.bf16.msra.mxu0 %v4819
      %4961 = vmatpush.bf16.msra.mxu0 %v4818
      %4962 = vmatpush.bf16.msra.mxu0 %v4817
      %4963 = vmatpush.bf16.msra.mxu0 %v4816
      %4964 = vmatpush.bf16.msra.mxu0 %v4815
      %4965 = vmatpush.bf16.msra.mxu0 %v4814
      %4966 = vmatmul.bf16.gmra.mxu0 %v4238
      %v4967 = vpop.f32.mrf.mxu0
      %v4968 = vadd.f32 0.0, %v4967
      %v4969 = vpop.f32.mrf.mxu0
      %v4970 = vadd.f32 0.0, %v4969
      %4971 = vmatmul.bf16.gmra.mxu0 %v4247
      %v4972 = vpop.f32.mrf.mxu0
      %v4973 = vadd.f32 0.0, %v4972
      %v4974 = vpop.f32.mrf.mxu0
      %v4975 = vadd.f32 0.0, %v4974
      %4976 = vmatmul.bf16.gmra.mxu0 %v4256
      %v4977 = vpop.f32.mrf.mxu0
      %v4978 = vadd.f32 0.0, %v4977
      %v4979 = vpop.f32.mrf.mxu0
      %v4980 = vadd.f32 0.0, %v4979
      %4981 = vmatmul.bf16.gmra.mxu0 %v4265
      %v4982 = vpop.f32.mrf.mxu0
      %v4983 = vadd.f32 0.0, %v4982
      %v4984 = vpop.f32.mrf.mxu0
      %v4985 = vadd.f32 0.0, %v4984
      %4986 = vmatmul.bf16.gmra.mxu0 %v4274
      %v4987 = vpop.f32.mrf.mxu0
      %v4988 = vadd.f32 0.0, %v4987
      %v4989 = vpop.f32.mrf.mxu0
      %v4990 = vadd.f32 0.0, %v4989
      %4991 = vmatmul.bf16.gmra.mxu0 %v4283
      %v4992 = vpop.f32.mrf.mxu0
      %v4993 = vadd.f32 0.0, %v4992
      %v4994 = vpop.f32.mrf.mxu0
      %v4995 = vadd.f32 0.0, %v4994
      %4996 = vmatmul.bf16.gmra.mxu0 %v4292
      %v4997 = vpop.f32.mrf.mxu0
      %v4998 = vadd.f32 0.0, %v4997
      %v4999 = vpop.f32.mrf.mxu0
      %v5000 = vadd.f32 0.0, %v4999
      %5001 = vmatmul.bf16.gmra.mxu0 %v4301
      %v5002 = vpop.f32.mrf.mxu0
      %v5003 = vadd.f32 0.0, %v5002
      %v5004 = vpop.f32.mrf.mxu0
      %v5005 = vadd.f32 0.0, %v5004
      %5006 = vmatmul.bf16.gmra.mxu0 %v4310
      %v5007 = vpop.f32.mrf.mxu0
      %v5008 = vadd.f32 0.0, %v5007
      %v5009 = vpop.f32.mrf.mxu0
      %v5010 = vadd.f32 0.0, %v5009
      %5011 = vmatmul.bf16.gmra.mxu0 %v4319
      %v5012 = vpop.f32.mrf.mxu0
      %v5013 = vadd.f32 0.0, %v5012
      %v5014 = vpop.f32.mrf.mxu0
      %v5015 = vadd.f32 0.0, %v5014
      %5016 = vmatmul.bf16.gmra.mxu0 %v4328
      %v5017 = vpop.f32.mrf.mxu0
      %v5018 = vadd.f32 0.0, %v5017
      %v5019 = vpop.f32.mrf.mxu0
      %v5020 = vadd.f32 0.0, %v5019
      %5021 = vmatmul.bf16.gmra.mxu0 %v4337
      %v5022 = vpop.f32.mrf.mxu0
      %v5023 = vadd.f32 0.0, %v5022
      %v5024 = vpop.f32.mrf.mxu0
      %v5025 = vadd.f32 0.0, %v5024
      %5026 = vmatmul.bf16.gmra.mxu0 %v4346
      %v5027 = vpop.f32.mrf.mxu0
      %v5028 = vadd.f32 0.0, %v5027
      %v5029 = vpop.f32.mrf.mxu0
      %v5030 = vadd.f32 0.0, %v5029
      %5031 = vmatmul.bf16.gmra.mxu0 %v4355
      %v5032 = vpop.f32.mrf.mxu0
      %v5033 = vadd.f32 0.0, %v5032
      %v5034 = vpop.f32.mrf.mxu0
      %v5035 = vadd.f32 0.0, %v5034
      %5036 = vmatmul.bf16.gmra.mxu0 %v4364
      %v5037 = vpop.f32.mrf.mxu0
      %v5038 = vadd.f32 0.0, %v5037
      %v5039 = vpop.f32.mrf.mxu0
      %v5040 = vadd.f32 0.0, %v5039
      %5041 = vmatmul.bf16.gmra.mxu0 %v4373
      %v5042 = vpop.f32.mrf.mxu0
      %v5043 = vadd.f32 0.0, %v5042
      %v5044 = vpop.f32.mrf.mxu0
      %v5045 = vadd.f32 0.0, %v5044
      %5046 = vdwg.mxu0
      %5047 = vmatpush.bf16.msra.mxu0 %v4829
      %5048 = vmatpush.bf16.msra.mxu0 %v4828
      %5049 = vmatpush.bf16.msra.mxu0 %v4827
      %5050 = vmatpush.bf16.msra.mxu0 %v4826
      %5051 = vmatpush.bf16.msra.mxu0 %v4825
      %5052 = vmatpush.bf16.msra.mxu0 %v4824
      %5053 = vmatpush.bf16.msra.mxu0 %v4823
      %5054 = vmatpush.bf16.msra.mxu0 %v4822
      %5055 = vmatmul.bf16.gmra.mxu0 %v4239
      %v5056 = vpop.f32.mrf.mxu0
      %v5057 = vadd.f32 %v4968, %v5056
      %v5058 = vpop.f32.mrf.mxu0
      %v5059 = vadd.f32 %v4970, %v5058
      %5060 = vmatmul.bf16.gmra.mxu0 %v4248
      %v5061 = vpop.f32.mrf.mxu0
      %v5062 = vadd.f32 %v4973, %v5061
      %v5063 = vpop.f32.mrf.mxu0
      %v5064 = vadd.f32 %v4975, %v5063
      %5065 = vmatmul.bf16.gmra.mxu0 %v4257
      %v5066 = vpop.f32.mrf.mxu0
      %v5067 = vadd.f32 %v4978, %v5066
      %v5068 = vpop.f32.mrf.mxu0
      %v5069 = vadd.f32 %v4980, %v5068
      %5070 = vmatmul.bf16.gmra.mxu0 %v4266
      %v5071 = vpop.f32.mrf.mxu0
      %v5072 = vadd.f32 %v4983, %v5071
      %v5073 = vpop.f32.mrf.mxu0
      %v5074 = vadd.f32 %v4985, %v5073
      %5075 = vmatmul.bf16.gmra.mxu0 %v4275
      %v5076 = vpop.f32.mrf.mxu0
      %v5077 = vadd.f32 %v4988, %v5076
      %v5078 = vpop.f32.mrf.mxu0
      %v5079 = vadd.f32 %v4990, %v5078
      %5080 = vmatmul.bf16.gmra.mxu0 %v4284
      %v5081 = vpop.f32.mrf.mxu0
      %v5082 = vadd.f32 %v4993, %v5081
      %v5083 = vpop.f32.mrf.mxu0
      %v5084 = vadd.f32 %v4995, %v5083
      %5085 = vmatmul.bf16.gmra.mxu0 %v4293
      %v5086 = vpop.f32.mrf.mxu0
      %v5087 = vadd.f32 %v4998, %v5086
      %v5088 = vpop.f32.mrf.mxu0
      %v5089 = vadd.f32 %v5000, %v5088
      %5090 = vmatmul.bf16.gmra.mxu0 %v4302
      %v5091 = vpop.f32.mrf.mxu0
      %v5092 = vadd.f32 %v5003, %v5091
      %v5093 = vpop.f32.mrf.mxu0
      %v5094 = vadd.f32 %v5005, %v5093
      %5095 = vmatmul.bf16.gmra.mxu0 %v4311
      %v5096 = vpop.f32.mrf.mxu0
      %v5097 = vadd.f32 %v5008, %v5096
      %v5098 = vpop.f32.mrf.mxu0
      %v5099 = vadd.f32 %v5010, %v5098
      %5100 = vmatmul.bf16.gmra.mxu0 %v4320
      %v5101 = vpop.f32.mrf.mxu0
      %v5102 = vadd.f32 %v5013, %v5101
      %v5103 = vpop.f32.mrf.mxu0
      %v5104 = vadd.f32 %v5015, %v5103
      %5105 = vmatmul.bf16.gmra.mxu0 %v4329
      %v5106 = vpop.f32.mrf.mxu0
      %v5107 = vadd.f32 %v5018, %v5106
      %v5108 = vpop.f32.mrf.mxu0
      %v5109 = vadd.f32 %v5020, %v5108
      %5110 = vmatmul.bf16.gmra.mxu0 %v4338
      %v5111 = vpop.f32.mrf.mxu0
      %v5112 = vadd.f32 %v5023, %v5111
      %v5113 = vpop.f32.mrf.mxu0
      %v5114 = vadd.f32 %v5025, %v5113
      %5115 = vmatmul.bf16.gmra.mxu0 %v4347
      %v5116 = vpop.f32.mrf.mxu0
      %v5117 = vadd.f32 %v5028, %v5116
      %v5118 = vpop.f32.mrf.mxu0
      %v5119 = vadd.f32 %v5030, %v5118
      %5120 = vmatmul.bf16.gmra.mxu0 %v4356
      %v5121 = vpop.f32.mrf.mxu0
      %v5122 = vadd.f32 %v5033, %v5121
      %v5123 = vpop.f32.mrf.mxu0
      %v5124 = vadd.f32 %v5035, %v5123
      %5125 = vmatmul.bf16.gmra.mxu0 %v4365
      %v5126 = vpop.f32.mrf.mxu0
      %v5127 = vadd.f32 %v5038, %v5126
      %v5128 = vpop.f32.mrf.mxu0
      %v5129 = vadd.f32 %v5040, %v5128
      %5130 = vmatmul.bf16.gmra.mxu0 %v4374
      %v5131 = vpop.f32.mrf.mxu0
      %v5132 = vadd.f32 %v5043, %v5131
      %v5133 = vpop.f32.mrf.mxu0
      %v5134 = vadd.f32 %v5045, %v5133
      %5135 = vdwg.mxu0
      %5136 = vmatpush.bf16.msra.mxu0 %v4837
      %5137 = vmatpush.bf16.msra.mxu0 %v4836
      %5138 = vmatpush.bf16.msra.mxu0 %v4835
      %5139 = vmatpush.bf16.msra.mxu0 %v4834
      %5140 = vmatpush.bf16.msra.mxu0 %v4833
      %5141 = vmatpush.bf16.msra.mxu0 %v4832
      %5142 = vmatpush.bf16.msra.mxu0 %v4831
      %5143 = vmatpush.bf16.msra.mxu0 %v4830
      %5144 = vmatmul.bf16.gmra.mxu0 %v4240
      %v5145 = vpop.f32.mrf.mxu0
      %v5146 = vadd.f32 %v5057, %v5145
      %v5147 = vpop.f32.mrf.mxu0
      %v5148 = vadd.f32 %v5059, %v5147
      %5149 = vmatmul.bf16.gmra.mxu0 %v4249
      %v5150 = vpop.f32.mrf.mxu0
      %v5151 = vadd.f32 %v5062, %v5150
      %v5152 = vpop.f32.mrf.mxu0
      %v5153 = vadd.f32 %v5064, %v5152
      %5154 = vmatmul.bf16.gmra.mxu0 %v4258
      %v5155 = vpop.f32.mrf.mxu0
      %v5156 = vadd.f32 %v5067, %v5155
      %v5157 = vpop.f32.mrf.mxu0
      %v5158 = vadd.f32 %v5069, %v5157
      %5159 = vmatmul.bf16.gmra.mxu0 %v4267
      %v5160 = vpop.f32.mrf.mxu0
      %v5161 = vadd.f32 %v5072, %v5160
      %v5162 = vpop.f32.mrf.mxu0
      %v5163 = vadd.f32 %v5074, %v5162
      %5164 = vmatmul.bf16.gmra.mxu0 %v4276
      %v5165 = vpop.f32.mrf.mxu0
      %v5166 = vadd.f32 %v5077, %v5165
      %v5167 = vpop.f32.mrf.mxu0
      %v5168 = vadd.f32 %v5079, %v5167
      %5169 = vmatmul.bf16.gmra.mxu0 %v4285
      %v5170 = vpop.f32.mrf.mxu0
      %v5171 = vadd.f32 %v5082, %v5170
      %v5172 = vpop.f32.mrf.mxu0
      %v5173 = vadd.f32 %v5084, %v5172
      %5174 = vmatmul.bf16.gmra.mxu0 %v4294
      %v5175 = vpop.f32.mrf.mxu0
      %v5176 = vadd.f32 %v5087, %v5175
      %v5177 = vpop.f32.mrf.mxu0
      %v5178 = vadd.f32 %v5089, %v5177
      %5179 = vmatmul.bf16.gmra.mxu0 %v4303
      %v5180 = vpop.f32.mrf.mxu0
      %v5181 = vadd.f32 %v5092, %v5180
      %v5182 = vpop.f32.mrf.mxu0
      %v5183 = vadd.f32 %v5094, %v5182
      %5184 = vmatmul.bf16.gmra.mxu0 %v4312
      %v5185 = vpop.f32.mrf.mxu0
      %v5186 = vadd.f32 %v5097, %v5185
      %v5187 = vpop.f32.mrf.mxu0
      %v5188 = vadd.f32 %v5099, %v5187
      %5189 = vmatmul.bf16.gmra.mxu0 %v4321
      %v5190 = vpop.f32.mrf.mxu0
      %v5191 = vadd.f32 %v5102, %v5190
      %v5192 = vpop.f32.mrf.mxu0
      %v5193 = vadd.f32 %v5104, %v5192
      %5194 = vmatmul.bf16.gmra.mxu0 %v4330
      %v5195 = vpop.f32.mrf.mxu0
      %v5196 = vadd.f32 %v5107, %v5195
      %v5197 = vpop.f32.mrf.mxu0
      %v5198 = vadd.f32 %v5109, %v5197
      %5199 = vmatmul.bf16.gmra.mxu0 %v4339
      %v5200 = vpop.f32.mrf.mxu0
      %v5201 = vadd.f32 %v5112, %v5200
      %v5202 = vpop.f32.mrf.mxu0
      %v5203 = vadd.f32 %v5114, %v5202
      %5204 = vmatmul.bf16.gmra.mxu0 %v4348
      %v5205 = vpop.f32.mrf.mxu0
      %v5206 = vadd.f32 %v5117, %v5205
      %v5207 = vpop.f32.mrf.mxu0
      %v5208 = vadd.f32 %v5119, %v5207
      %5209 = vmatmul.bf16.gmra.mxu0 %v4357
      %v5210 = vpop.f32.mrf.mxu0
      %v5211 = vadd.f32 %v5122, %v5210
      %v5212 = vpop.f32.mrf.mxu0
      %v5213 = vadd.f32 %v5124, %v5212
      %5214 = vmatmul.bf16.gmra.mxu0 %v4366
      %v5215 = vpop.f32.mrf.mxu0
      %v5216 = vadd.f32 %v5127, %v5215
      %v5217 = vpop.f32.mrf.mxu0
      %v5218 = vadd.f32 %v5129, %v5217
      %5219 = vmatmul.bf16.gmra.mxu0 %v4375
      %v5220 = vpop.f32.mrf.mxu0
      %v5221 = vadd.f32 %v5132, %v5220
      %v5222 = vpop.f32.mrf.mxu0
      %v5223 = vadd.f32 %v5134, %v5222
      %5224 = vdwg.mxu0
      %5225 = vmatpush.bf16.msra.mxu0 %v4845
      %5226 = vmatpush.bf16.msra.mxu0 %v4844
      %5227 = vmatpush.bf16.msra.mxu0 %v4843
      %5228 = vmatpush.bf16.msra.mxu0 %v4842
      %5229 = vmatpush.bf16.msra.mxu0 %v4841
      %5230 = vmatpush.bf16.msra.mxu0 %v4840
      %5231 = vmatpush.bf16.msra.mxu0 %v4839
      %5232 = vmatpush.bf16.msra.mxu0 %v4838
      %5233 = vmatmul.bf16.gmra.mxu0 %v4241
      %v5234 = vpop.f32.mrf.mxu0
      %v5235 = vadd.f32 %v5146, %v5234
      %v5236 = vpop.f32.mrf.mxu0
      %v5237 = vadd.f32 %v5148, %v5236
      %5238 = vmatmul.bf16.gmra.mxu0 %v4250
      %v5239 = vpop.f32.mrf.mxu0
      %v5240 = vadd.f32 %v5151, %v5239
      %v5241 = vpop.f32.mrf.mxu0
      %v5242 = vadd.f32 %v5153, %v5241
      %5243 = vmatmul.bf16.gmra.mxu0 %v4259
      %v5244 = vpop.f32.mrf.mxu0
      %v5245 = vadd.f32 %v5156, %v5244
      %v5246 = vpop.f32.mrf.mxu0
      %v5247 = vadd.f32 %v5158, %v5246
      %5248 = vmatmul.bf16.gmra.mxu0 %v4268
      %v5249 = vpop.f32.mrf.mxu0
      %v5250 = vadd.f32 %v5161, %v5249
      %v5251 = vpop.f32.mrf.mxu0
      %v5252 = vadd.f32 %v5163, %v5251
      %5253 = vmatmul.bf16.gmra.mxu0 %v4277
      %v5254 = vpop.f32.mrf.mxu0
      %v5255 = vadd.f32 %v5166, %v5254
      %v5256 = vpop.f32.mrf.mxu0
      %v5257 = vadd.f32 %v5168, %v5256
      %5258 = vmatmul.bf16.gmra.mxu0 %v4286
      %v5259 = vpop.f32.mrf.mxu0
      %v5260 = vadd.f32 %v5171, %v5259
      %v5261 = vpop.f32.mrf.mxu0
      %v5262 = vadd.f32 %v5173, %v5261
      %5263 = vmatmul.bf16.gmra.mxu0 %v4295
      %v5264 = vpop.f32.mrf.mxu0
      %v5265 = vadd.f32 %v5176, %v5264
      %v5266 = vpop.f32.mrf.mxu0
      %v5267 = vadd.f32 %v5178, %v5266
      %5268 = vmatmul.bf16.gmra.mxu0 %v4304
      %v5269 = vpop.f32.mrf.mxu0
      %v5270 = vadd.f32 %v5181, %v5269
      %v5271 = vpop.f32.mrf.mxu0
      %v5272 = vadd.f32 %v5183, %v5271
      %5273 = vmatmul.bf16.gmra.mxu0 %v4313
      %v5274 = vpop.f32.mrf.mxu0
      %v5275 = vadd.f32 %v5186, %v5274
      %v5276 = vpop.f32.mrf.mxu0
      %v5277 = vadd.f32 %v5188, %v5276
      %5278 = vmatmul.bf16.gmra.mxu0 %v4322
      %v5279 = vpop.f32.mrf.mxu0
      %v5280 = vadd.f32 %v5191, %v5279
      %v5281 = vpop.f32.mrf.mxu0
      %v5282 = vadd.f32 %v5193, %v5281
      %5283 = vmatmul.bf16.gmra.mxu0 %v4331
      %v5284 = vpop.f32.mrf.mxu0
      %v5285 = vadd.f32 %v5196, %v5284
      %v5286 = vpop.f32.mrf.mxu0
      %v5287 = vadd.f32 %v5198, %v5286
      %5288 = vmatmul.bf16.gmra.mxu0 %v4340
      %v5289 = vpop.f32.mrf.mxu0
      %v5290 = vadd.f32 %v5201, %v5289
      %v5291 = vpop.f32.mrf.mxu0
      %v5292 = vadd.f32 %v5203, %v5291
      %5293 = vmatmul.bf16.gmra.mxu0 %v4349
      %v5294 = vpop.f32.mrf.mxu0
      %v5295 = vadd.f32 %v5206, %v5294
      %v5296 = vpop.f32.mrf.mxu0
      %v5297 = vadd.f32 %v5208, %v5296
      %5298 = vmatmul.bf16.gmra.mxu0 %v4358
      %v5299 = vpop.f32.mrf.mxu0
      %v5300 = vadd.f32 %v5211, %v5299
      %v5301 = vpop.f32.mrf.mxu0
      %v5302 = vadd.f32 %v5213, %v5301
      %5303 = vmatmul.bf16.gmra.mxu0 %v4367
      %v5304 = vpop.f32.mrf.mxu0
      %v5305 = vadd.f32 %v5216, %v5304
      %v5306 = vpop.f32.mrf.mxu0
      %v5307 = vadd.f32 %v5218, %v5306
      %5308 = vmatmul.bf16.gmra.mxu0 %v4376
      %v5309 = vpop.f32.mrf.mxu0
      %v5310 = vadd.f32 %v5221, %v5309
      %v5311 = vpop.f32.mrf.mxu0
      %v5312 = vadd.f32 %v5223, %v5311
      %5313 = vdwg.mxu0
      %5314 = vmatpush.bf16.msra.mxu0 %v4853
      %5315 = vmatpush.bf16.msra.mxu0 %v4852
      %5316 = vmatpush.bf16.msra.mxu0 %v4851
      %5317 = vmatpush.bf16.msra.mxu0 %v4850
      %5318 = vmatpush.bf16.msra.mxu0 %v4849
      %5319 = vmatpush.bf16.msra.mxu0 %v4848
      %5320 = vmatpush.bf16.msra.mxu0 %v4847
      %5321 = vmatpush.bf16.msra.mxu0 %v4846
      %5322 = vmatmul.bf16.gmra.mxu0 %v4242
      %v5323 = vpop.f32.mrf.mxu0
      %v5324 = vadd.f32 %v5235, %v5323
      %v5325 = vpop.f32.mrf.mxu0
      %v5326 = vadd.f32 %v5237, %v5325
      %5327 = vmatmul.bf16.gmra.mxu0 %v4251
      %v5328 = vpop.f32.mrf.mxu0
      %v5329 = vadd.f32 %v5240, %v5328
      %v5330 = vpop.f32.mrf.mxu0
      %v5331 = vadd.f32 %v5242, %v5330
      %5332 = vmatmul.bf16.gmra.mxu0 %v4260
      %v5333 = vpop.f32.mrf.mxu0
      %v5334 = vadd.f32 %v5245, %v5333
      %v5335 = vpop.f32.mrf.mxu0
      %v5336 = vadd.f32 %v5247, %v5335
      %5337 = vmatmul.bf16.gmra.mxu0 %v4269
      %v5338 = vpop.f32.mrf.mxu0
      %v5339 = vadd.f32 %v5250, %v5338
      %v5340 = vpop.f32.mrf.mxu0
      %v5341 = vadd.f32 %v5252, %v5340
      %5342 = vmatmul.bf16.gmra.mxu0 %v4278
      %v5343 = vpop.f32.mrf.mxu0
      %v5344 = vadd.f32 %v5255, %v5343
      %v5345 = vpop.f32.mrf.mxu0
      %v5346 = vadd.f32 %v5257, %v5345
      %5347 = vmatmul.bf16.gmra.mxu0 %v4287
      %v5348 = vpop.f32.mrf.mxu0
      %v5349 = vadd.f32 %v5260, %v5348
      %v5350 = vpop.f32.mrf.mxu0
      %v5351 = vadd.f32 %v5262, %v5350
      %5352 = vmatmul.bf16.gmra.mxu0 %v4296
      %v5353 = vpop.f32.mrf.mxu0
      %v5354 = vadd.f32 %v5265, %v5353
      %v5355 = vpop.f32.mrf.mxu0
      %v5356 = vadd.f32 %v5267, %v5355
      %5357 = vmatmul.bf16.gmra.mxu0 %v4305
      %v5358 = vpop.f32.mrf.mxu0
      %v5359 = vadd.f32 %v5270, %v5358
      %v5360 = vpop.f32.mrf.mxu0
      %v5361 = vadd.f32 %v5272, %v5360
      %5362 = vmatmul.bf16.gmra.mxu0 %v4314
      %v5363 = vpop.f32.mrf.mxu0
      %v5364 = vadd.f32 %v5275, %v5363
      %v5365 = vpop.f32.mrf.mxu0
      %v5366 = vadd.f32 %v5277, %v5365
      %5367 = vmatmul.bf16.gmra.mxu0 %v4323
      %v5368 = vpop.f32.mrf.mxu0
      %v5369 = vadd.f32 %v5280, %v5368
      %v5370 = vpop.f32.mrf.mxu0
      %v5371 = vadd.f32 %v5282, %v5370
      %5372 = vmatmul.bf16.gmra.mxu0 %v4332
      %v5373 = vpop.f32.mrf.mxu0
      %v5374 = vadd.f32 %v5285, %v5373
      %v5375 = vpop.f32.mrf.mxu0
      %v5376 = vadd.f32 %v5287, %v5375
      %5377 = vmatmul.bf16.gmra.mxu0 %v4341
      %v5378 = vpop.f32.mrf.mxu0
      %v5379 = vadd.f32 %v5290, %v5378
      %v5380 = vpop.f32.mrf.mxu0
      %v5381 = vadd.f32 %v5292, %v5380
      %5382 = vmatmul.bf16.gmra.mxu0 %v4350
      %v5383 = vpop.f32.mrf.mxu0
      %v5384 = vadd.f32 %v5295, %v5383
      %v5385 = vpop.f32.mrf.mxu0
      %v5386 = vadd.f32 %v5297, %v5385
      %5387 = vmatmul.bf16.gmra.mxu0 %v4359
      %v5388 = vpop.f32.mrf.mxu0
      %v5389 = vadd.f32 %v5300, %v5388
      %v5390 = vpop.f32.mrf.mxu0
      %v5391 = vadd.f32 %v5302, %v5390
      %5392 = vmatmul.bf16.gmra.mxu0 %v4368
      %v5393 = vpop.f32.mrf.mxu0
      %v5394 = vadd.f32 %v5305, %v5393
      %v5395 = vpop.f32.mrf.mxu0
      %v5396 = vadd.f32 %v5307, %v5395
      %5397 = vmatmul.bf16.gmra.mxu0 %v4377
      %v5398 = vpop.f32.mrf.mxu0
      %v5399 = vadd.f32 %v5310, %v5398
      %v5400 = vpop.f32.mrf.mxu0
      %v5401 = vadd.f32 %v5312, %v5400
      %5402 = vdwg.mxu0
      %5403 = vmatpush.bf16.msra.mxu0 %v4861
      %5404 = vmatpush.bf16.msra.mxu0 %v4860
      %5405 = vmatpush.bf16.msra.mxu0 %v4859
      %5406 = vmatpush.bf16.msra.mxu0 %v4858
      %5407 = vmatpush.bf16.msra.mxu0 %v4857
      %5408 = vmatpush.bf16.msra.mxu0 %v4856
      %5409 = vmatpush.bf16.msra.mxu0 %v4855
      %5410 = vmatpush.bf16.msra.mxu0 %v4854
      %5411 = vmatmul.bf16.gmra.mxu0 %v4243
      %v5412 = vpop.f32.mrf.mxu0
      %v5413 = vadd.f32 %v5324, %v5412
      %v5414 = vpop.f32.mrf.mxu0
      %v5415 = vadd.f32 %v5326, %v5414
      %5416 = vmatmul.bf16.gmra.mxu0 %v4252
      %v5417 = vpop.f32.mrf.mxu0
      %v5418 = vadd.f32 %v5329, %v5417
      %v5419 = vpop.f32.mrf.mxu0
      %v5420 = vadd.f32 %v5331, %v5419
      %5421 = vmatmul.bf16.gmra.mxu0 %v4261
      %v5422 = vpop.f32.mrf.mxu0
      %v5423 = vadd.f32 %v5334, %v5422
      %v5424 = vpop.f32.mrf.mxu0
      %v5425 = vadd.f32 %v5336, %v5424
      %5426 = vmatmul.bf16.gmra.mxu0 %v4270
      %v5427 = vpop.f32.mrf.mxu0
      %v5428 = vadd.f32 %v5339, %v5427
      %v5429 = vpop.f32.mrf.mxu0
      %v5430 = vadd.f32 %v5341, %v5429
      %5431 = vmatmul.bf16.gmra.mxu0 %v4279
      %v5432 = vpop.f32.mrf.mxu0
      %v5433 = vadd.f32 %v5344, %v5432
      %v5434 = vpop.f32.mrf.mxu0
      %v5435 = vadd.f32 %v5346, %v5434
      %5436 = vmatmul.bf16.gmra.mxu0 %v4288
      %v5437 = vpop.f32.mrf.mxu0
      %v5438 = vadd.f32 %v5349, %v5437
      %v5439 = vpop.f32.mrf.mxu0
      %v5440 = vadd.f32 %v5351, %v5439
      %5441 = vmatmul.bf16.gmra.mxu0 %v4297
      %v5442 = vpop.f32.mrf.mxu0
      %v5443 = vadd.f32 %v5354, %v5442
      %v5444 = vpop.f32.mrf.mxu0
      %v5445 = vadd.f32 %v5356, %v5444
      %5446 = vmatmul.bf16.gmra.mxu0 %v4306
      %v5447 = vpop.f32.mrf.mxu0
      %v5448 = vadd.f32 %v5359, %v5447
      %v5449 = vpop.f32.mrf.mxu0
      %v5450 = vadd.f32 %v5361, %v5449
      %5451 = vmatmul.bf16.gmra.mxu0 %v4315
      %v5452 = vpop.f32.mrf.mxu0
      %v5453 = vadd.f32 %v5364, %v5452
      %v5454 = vpop.f32.mrf.mxu0
      %v5455 = vadd.f32 %v5366, %v5454
      %5456 = vmatmul.bf16.gmra.mxu0 %v4324
      %v5457 = vpop.f32.mrf.mxu0
      %v5458 = vadd.f32 %v5369, %v5457
      %v5459 = vpop.f32.mrf.mxu0
      %v5460 = vadd.f32 %v5371, %v5459
      %5461 = vmatmul.bf16.gmra.mxu0 %v4333
      %v5462 = vpop.f32.mrf.mxu0
      %v5463 = vadd.f32 %v5374, %v5462
      %v5464 = vpop.f32.mrf.mxu0
      %v5465 = vadd.f32 %v5376, %v5464
      %5466 = vmatmul.bf16.gmra.mxu0 %v4342
      %v5467 = vpop.f32.mrf.mxu0
      %v5468 = vadd.f32 %v5379, %v5467
      %v5469 = vpop.f32.mrf.mxu0
      %v5470 = vadd.f32 %v5381, %v5469
      %5471 = vmatmul.bf16.gmra.mxu0 %v4351
      %v5472 = vpop.f32.mrf.mxu0
      %v5473 = vadd.f32 %v5384, %v5472
      %v5474 = vpop.f32.mrf.mxu0
      %v5475 = vadd.f32 %v5386, %v5474
      %5476 = vmatmul.bf16.gmra.mxu0 %v4360
      %v5477 = vpop.f32.mrf.mxu0
      %v5478 = vadd.f32 %v5389, %v5477
      %v5479 = vpop.f32.mrf.mxu0
      %v5480 = vadd.f32 %v5391, %v5479
      %5481 = vmatmul.bf16.gmra.mxu0 %v4369
      %v5482 = vpop.f32.mrf.mxu0
      %v5483 = vadd.f32 %v5394, %v5482
      %v5484 = vpop.f32.mrf.mxu0
      %v5485 = vadd.f32 %v5396, %v5484
      %5486 = vmatmul.bf16.gmra.mxu0 %v4378
      %v5487 = vpop.f32.mrf.mxu0
      %v5488 = vadd.f32 %v5399, %v5487
      %v5489 = vpop.f32.mrf.mxu0
      %v5490 = vadd.f32 %v5401, %v5489
      %5491 = vdwg.mxu0
      %5492 = vmatpush.bf16.msra.mxu0 %v4869
      %5493 = vmatpush.bf16.msra.mxu0 %v4868
      %5494 = vmatpush.bf16.msra.mxu0 %v4867
      %5495 = vmatpush.bf16.msra.mxu0 %v4866
      %5496 = vmatpush.bf16.msra.mxu0 %v4865
      %5497 = vmatpush.bf16.msra.mxu0 %v4864
      %5498 = vmatpush.bf16.msra.mxu0 %v4863
      %5499 = vmatpush.bf16.msra.mxu0 %v4862
      %5500 = vmatmul.bf16.gmra.mxu0 %v4244
      %v5501 = vpop.f32.mrf.mxu0
      %v5502 = vadd.f32 %v5413, %v5501
      %v5503 = vpop.f32.mrf.mxu0
      %v5504 = vadd.f32 %v5415, %v5503
      %5505 = vmatmul.bf16.gmra.mxu0 %v4253
      %v5506 = vpop.f32.mrf.mxu0
      %v5507 = vadd.f32 %v5418, %v5506
      %v5508 = vpop.f32.mrf.mxu0
      %v5509 = vadd.f32 %v5420, %v5508
      %5510 = vmatmul.bf16.gmra.mxu0 %v4262
      %v5511 = vpop.f32.mrf.mxu0
      %v5512 = vadd.f32 %v5423, %v5511
      %v5513 = vpop.f32.mrf.mxu0
      %v5514 = vadd.f32 %v5425, %v5513
      %5515 = vmatmul.bf16.gmra.mxu0 %v4271
      %v5516 = vpop.f32.mrf.mxu0
      %v5517 = vadd.f32 %v5428, %v5516
      %v5518 = vpop.f32.mrf.mxu0
      %v5519 = vadd.f32 %v5430, %v5518
      %5520 = vmatmul.bf16.gmra.mxu0 %v4280
      %v5521 = vpop.f32.mrf.mxu0
      %v5522 = vadd.f32 %v5433, %v5521
      %v5523 = vpop.f32.mrf.mxu0
      %v5524 = vadd.f32 %v5435, %v5523
      %5525 = vmatmul.bf16.gmra.mxu0 %v4289
      %v5526 = vpop.f32.mrf.mxu0
      %v5527 = vadd.f32 %v5438, %v5526
      %v5528 = vpop.f32.mrf.mxu0
      %v5529 = vadd.f32 %v5440, %v5528
      %5530 = vmatmul.bf16.gmra.mxu0 %v4298
      %v5531 = vpop.f32.mrf.mxu0
      %v5532 = vadd.f32 %v5443, %v5531
      %v5533 = vpop.f32.mrf.mxu0
      %v5534 = vadd.f32 %v5445, %v5533
      %5535 = vmatmul.bf16.gmra.mxu0 %v4307
      %v5536 = vpop.f32.mrf.mxu0
      %v5537 = vadd.f32 %v5448, %v5536
      %v5538 = vpop.f32.mrf.mxu0
      %v5539 = vadd.f32 %v5450, %v5538
      %5540 = vmatmul.bf16.gmra.mxu0 %v4316
      %v5541 = vpop.f32.mrf.mxu0
      %v5542 = vadd.f32 %v5453, %v5541
      %v5543 = vpop.f32.mrf.mxu0
      %v5544 = vadd.f32 %v5455, %v5543
      %5545 = vmatmul.bf16.gmra.mxu0 %v4325
      %v5546 = vpop.f32.mrf.mxu0
      %v5547 = vadd.f32 %v5458, %v5546
      %v5548 = vpop.f32.mrf.mxu0
      %v5549 = vadd.f32 %v5460, %v5548
      %5550 = vmatmul.bf16.gmra.mxu0 %v4334
      %v5551 = vpop.f32.mrf.mxu0
      %v5552 = vadd.f32 %v5463, %v5551
      %v5553 = vpop.f32.mrf.mxu0
      %v5554 = vadd.f32 %v5465, %v5553
      %5555 = vmatmul.bf16.gmra.mxu0 %v4343
      %v5556 = vpop.f32.mrf.mxu0
      %v5557 = vadd.f32 %v5468, %v5556
      %v5558 = vpop.f32.mrf.mxu0
      %v5559 = vadd.f32 %v5470, %v5558
      %5560 = vmatmul.bf16.gmra.mxu0 %v4352
      %v5561 = vpop.f32.mrf.mxu0
      %v5562 = vadd.f32 %v5473, %v5561
      %v5563 = vpop.f32.mrf.mxu0
      %v5564 = vadd.f32 %v5475, %v5563
      %5565 = vmatmul.bf16.gmra.mxu0 %v4361
      %v5566 = vpop.f32.mrf.mxu0
      %v5567 = vadd.f32 %v5478, %v5566
      %v5568 = vpop.f32.mrf.mxu0
      %v5569 = vadd.f32 %v5480, %v5568
      %5570 = vmatmul.bf16.gmra.mxu0 %v4370
      %v5571 = vpop.f32.mrf.mxu0
      %v5572 = vadd.f32 %v5483, %v5571
      %v5573 = vpop.f32.mrf.mxu0
      %v5574 = vadd.f32 %v5485, %v5573
      %5575 = vmatmul.bf16.gmra.mxu0 %v4379
      %v5576 = vpop.f32.mrf.mxu0
      %v5577 = vadd.f32 %v5488, %v5576
      %v5578 = vpop.f32.mrf.mxu0
      %v5579 = vadd.f32 %v5490, %v5578
      %5580 = vdwg.mxu0
      %5581 = vmatpush.bf16.msra.mxu0 %v4877
      %5582 = vmatpush.bf16.msra.mxu0 %v4876
      %5583 = vmatpush.bf16.msra.mxu0 %v4875
      %5584 = vmatpush.bf16.msra.mxu0 %v4874
      %5585 = vmatpush.bf16.msra.mxu0 %v4873
      %5586 = vmatpush.bf16.msra.mxu0 %v4872
      %5587 = vmatpush.bf16.msra.mxu0 %v4871
      %5588 = vmatpush.bf16.msra.mxu0 %v4870
      %5589 = vmatmul.bf16.gmra.mxu0 %v4245
      %v5590 = vpop.f32.mrf.mxu0
      %v5591 = vadd.f32 %v5502, %v5590
      %v5592 = vpop.f32.mrf.mxu0
      %v5593 = vadd.f32 %v5504, %v5592
      %5594 = vmatmul.bf16.gmra.mxu0 %v4254
      %v5595 = vpop.f32.mrf.mxu0
      %v5596 = vadd.f32 %v5507, %v5595
      %v5597 = vpop.f32.mrf.mxu0
      %v5598 = vadd.f32 %v5509, %v5597
      %5599 = vmatmul.bf16.gmra.mxu0 %v4263
      %v5600 = vpop.f32.mrf.mxu0
      %v5601 = vadd.f32 %v5512, %v5600
      %v5602 = vpop.f32.mrf.mxu0
      %v5603 = vadd.f32 %v5514, %v5602
      %5604 = vmatmul.bf16.gmra.mxu0 %v4272
      %v5605 = vpop.f32.mrf.mxu0
      %v5606 = vadd.f32 %v5517, %v5605
      %v5607 = vpop.f32.mrf.mxu0
      %v5608 = vadd.f32 %v5519, %v5607
      %5609 = vmatmul.bf16.gmra.mxu0 %v4281
      %v5610 = vpop.f32.mrf.mxu0
      %v5611 = vadd.f32 %v5522, %v5610
      %v5612 = vpop.f32.mrf.mxu0
      %v5613 = vadd.f32 %v5524, %v5612
      %5614 = vmatmul.bf16.gmra.mxu0 %v4290
      %v5615 = vpop.f32.mrf.mxu0
      %v5616 = vadd.f32 %v5527, %v5615
      %v5617 = vpop.f32.mrf.mxu0
      %v5618 = vadd.f32 %v5529, %v5617
      %5619 = vmatmul.bf16.gmra.mxu0 %v4299
      %v5620 = vpop.f32.mrf.mxu0
      %v5621 = vadd.f32 %v5532, %v5620
      %v5622 = vpop.f32.mrf.mxu0
      %v5623 = vadd.f32 %v5534, %v5622
      %5624 = vmatmul.bf16.gmra.mxu0 %v4308
      %v5625 = vpop.f32.mrf.mxu0
      %v5626 = vadd.f32 %v5537, %v5625
      %v5627 = vpop.f32.mrf.mxu0
      %v5628 = vadd.f32 %v5539, %v5627
      %5629 = vmatmul.bf16.gmra.mxu0 %v4317
      %v5630 = vpop.f32.mrf.mxu0
      %v5631 = vadd.f32 %v5542, %v5630
      %v5632 = vpop.f32.mrf.mxu0
      %v5633 = vadd.f32 %v5544, %v5632
      %5634 = vmatmul.bf16.gmra.mxu0 %v4326
      %v5635 = vpop.f32.mrf.mxu0
      %v5636 = vadd.f32 %v5547, %v5635
      %v5637 = vpop.f32.mrf.mxu0
      %v5638 = vadd.f32 %v5549, %v5637
      %5639 = vmatmul.bf16.gmra.mxu0 %v4335
      %v5640 = vpop.f32.mrf.mxu0
      %v5641 = vadd.f32 %v5552, %v5640
      %v5642 = vpop.f32.mrf.mxu0
      %v5643 = vadd.f32 %v5554, %v5642
      %5644 = vmatmul.bf16.gmra.mxu0 %v4344
      %v5645 = vpop.f32.mrf.mxu0
      %v5646 = vadd.f32 %v5557, %v5645
      %v5647 = vpop.f32.mrf.mxu0
      %v5648 = vadd.f32 %v5559, %v5647
      %5649 = vmatmul.bf16.gmra.mxu0 %v4353
      %v5650 = vpop.f32.mrf.mxu0
      %v5651 = vadd.f32 %v5562, %v5650
      %v5652 = vpop.f32.mrf.mxu0
      %v5653 = vadd.f32 %v5564, %v5652
      %5654 = vmatmul.bf16.gmra.mxu0 %v4362
      %v5655 = vpop.f32.mrf.mxu0
      %v5656 = vadd.f32 %v5567, %v5655
      %v5657 = vpop.f32.mrf.mxu0
      %v5658 = vadd.f32 %v5569, %v5657
      %5659 = vmatmul.bf16.gmra.mxu0 %v4371
      %v5660 = vpop.f32.mrf.mxu0
      %v5661 = vadd.f32 %v5572, %v5660
      %v5662 = vpop.f32.mrf.mxu0
      %v5663 = vadd.f32 %v5574, %v5662
      %5664 = vmatmul.bf16.gmra.mxu0 %v4380
      %v5665 = vpop.f32.mrf.mxu0
      %v5666 = vadd.f32 %v5577, %v5665
      %v5667 = vpop.f32.mrf.mxu0
      %v5668 = vadd.f32 %v5579, %v5667
      %5669 = vdwg.mxu0
      %5670 = vmatpush.bf16.msra.mxu0 %v4885
      %5671 = vmatpush.bf16.msra.mxu0 %v4884
      %5672 = vmatpush.bf16.msra.mxu0 %v4883
      %5673 = vmatpush.bf16.msra.mxu0 %v4882
      %5674 = vmatpush.bf16.msra.mxu0 %v4881
      %5675 = vmatpush.bf16.msra.mxu0 %v4880
      %5676 = vmatpush.bf16.msra.mxu0 %v4879
      %5677 = vmatpush.bf16.msra.mxu0 %v4878
      %5678 = vmatmul.bf16.gmra.mxu0 %v4246
      %v5679 = vpop.f32.mrf.mxu0
      %v5680 = vadd.f32 %v5591, %v5679
      %v5681 = vpop.f32.mrf.mxu0
      %v5682 = vadd.f32 %v5593, %v5681
      %5683 = vmatmul.bf16.gmra.mxu0 %v4255
      %v5684 = vpop.f32.mrf.mxu0
      %v5685 = vadd.f32 %v5596, %v5684
      %v5686 = vpop.f32.mrf.mxu0
      %v5687 = vadd.f32 %v5598, %v5686
      %5688 = vmatmul.bf16.gmra.mxu0 %v4264
      %v5689 = vpop.f32.mrf.mxu0
      %v5690 = vadd.f32 %v5601, %v5689
      %v5691 = vpop.f32.mrf.mxu0
      %v5692 = vadd.f32 %v5603, %v5691
      %5693 = vmatmul.bf16.gmra.mxu0 %v4273
      %v5694 = vpop.f32.mrf.mxu0
      %v5695 = vadd.f32 %v5606, %v5694
      %v5696 = vpop.f32.mrf.mxu0
      %v5697 = vadd.f32 %v5608, %v5696
      %5698 = vmatmul.bf16.gmra.mxu0 %v4282
      %v5699 = vpop.f32.mrf.mxu0
      %v5700 = vadd.f32 %v5611, %v5699
      %v5701 = vpop.f32.mrf.mxu0
      %v5702 = vadd.f32 %v5613, %v5701
      %5703 = vmatmul.bf16.gmra.mxu0 %v4291
      %v5704 = vpop.f32.mrf.mxu0
      %v5705 = vadd.f32 %v5616, %v5704
      %v5706 = vpop.f32.mrf.mxu0
      %v5707 = vadd.f32 %v5618, %v5706
      %5708 = vmatmul.bf16.gmra.mxu0 %v4300
      %v5709 = vpop.f32.mrf.mxu0
      %v5710 = vadd.f32 %v5621, %v5709
      %v5711 = vpop.f32.mrf.mxu0
      %v5712 = vadd.f32 %v5623, %v5711
      %5713 = vmatmul.bf16.gmra.mxu0 %v4309
      %v5714 = vpop.f32.mrf.mxu0
      %v5715 = vadd.f32 %v5626, %v5714
      %v5716 = vpop.f32.mrf.mxu0
      %v5717 = vadd.f32 %v5628, %v5716
      %5718 = vmatmul.bf16.gmra.mxu0 %v4318
      %v5719 = vpop.f32.mrf.mxu0
      %v5720 = vadd.f32 %v5631, %v5719
      %v5721 = vpop.f32.mrf.mxu0
      %v5722 = vadd.f32 %v5633, %v5721
      %5723 = vmatmul.bf16.gmra.mxu0 %v4327
      %v5724 = vpop.f32.mrf.mxu0
      %v5725 = vadd.f32 %v5636, %v5724
      %v5726 = vpop.f32.mrf.mxu0
      %v5727 = vadd.f32 %v5638, %v5726
      %5728 = vmatmul.bf16.gmra.mxu0 %v4336
      %v5729 = vpop.f32.mrf.mxu0
      %v5730 = vadd.f32 %v5641, %v5729
      %v5731 = vpop.f32.mrf.mxu0
      %v5732 = vadd.f32 %v5643, %v5731
      %5733 = vmatmul.bf16.gmra.mxu0 %v4345
      %v5734 = vpop.f32.mrf.mxu0
      %v5735 = vadd.f32 %v5646, %v5734
      %v5736 = vpop.f32.mrf.mxu0
      %v5737 = vadd.f32 %v5648, %v5736
      %5738 = vmatmul.bf16.gmra.mxu0 %v4354
      %v5739 = vpop.f32.mrf.mxu0
      %v5740 = vadd.f32 %v5651, %v5739
      %v5741 = vpop.f32.mrf.mxu0
      %v5742 = vadd.f32 %v5653, %v5741
      %5743 = vmatmul.bf16.gmra.mxu0 %v4363
      %v5744 = vpop.f32.mrf.mxu0
      %v5745 = vadd.f32 %v5656, %v5744
      %v5746 = vpop.f32.mrf.mxu0
      %v5747 = vadd.f32 %v5658, %v5746
      %5748 = vmatmul.bf16.gmra.mxu0 %v4372
      %v5749 = vpop.f32.mrf.mxu0
      %v5750 = vadd.f32 %v5661, %v5749
      %v5751 = vpop.f32.mrf.mxu0
      %v5752 = vadd.f32 %v5663, %v5751
      %5753 = vmatmul.bf16.gmra.mxu0 %v4381
      %v5754 = vpop.f32.mrf.mxu0
      %v5755 = vadd.f32 %v5666, %v5754
      %v5756 = vpop.f32.mrf.mxu0
      %v5757 = vadd.f32 %v5668, %v5756
      %5758 = vdwg.mxu0
      %5759 = vst [vmem:[%s262] sm:$0xff] %v5680
      %5760 = vst [vmem:[%s262 + $0x8] sm:$0xff] %v5682
      %5761 = vst [vmem:[%s262 + $0x10] sm:$0xff] %v5685
      %5762 = vst [vmem:[%s262 + $0x18] sm:$0xff] %v5687
      %5763 = vst [vmem:[%s262 + $0x20] sm:$0xff] %v5690
      %5764 = vst [vmem:[%s262 + $0x28] sm:$0xff] %v5692
      %5765 = vst [vmem:[%s262 + $0x30] sm:$0xff] %v5695
      %5766 = vst [vmem:[%s262 + $0x38] sm:$0xff] %v5697
      %5767 = vst [vmem:[%s262 + $0x40] sm:$0xff] %v5700
      %5768 = vst [vmem:[%s262 + $0x48] sm:$0xff] %v5702
      %5769 = vst [vmem:[%s262 + $0x50] sm:$0xff] %v5705
      %5770 = vst [vmem:[%s262 + $0x58] sm:$0xff] %v5707
      %5771 = vst [vmem:[%s262 + $0x60] sm:$0xff] %v5710
      %5772 = vst [vmem:[%s262 + $0x68] sm:$0xff] %v5712
      %5773 = vst [vmem:[%s262 + $0x70] sm:$0xff] %v5715
      %5774 = vst [vmem:[%s262 + $0x78] sm:$0xff] %v5717
      %5775 = vst [vmem:[%s262 + $0x80] sm:$0xff] %v5720
      %5776 = vst [vmem:[%s262 + $0x88] sm:$0xff] %v5722
      %5777 = vst [vmem:[%s262 + $0x90] sm:$0xff] %v5725
      %5778 = vst [vmem:[%s262 + $0x98] sm:$0xff] %v5727
      %5779 = vst [vmem:[%s262 + $0xa0] sm:$0xff] %v5730
      %5780 = vst [vmem:[%s262 + $0xa8] sm:$0xff] %v5732
      %5781 = vst [vmem:[%s262 + $0xb0] sm:$0xff] %v5735
      %5782 = vst [vmem:[%s262 + $0xb8] sm:$0xff] %v5737
      %5783 = vst [vmem:[%s262 + $0xc0] sm:$0xff] %v5740
      %5784 = vst [vmem:[%s262 + $0xc8] sm:$0xff] %v5742
      %5785 = vst [vmem:[%s262 + $0xd0] sm:$0xff] %v5745
      %5786 = vst [vmem:[%s262 + $0xd8] sm:$0xff] %v5747
      %5787 = vst [vmem:[%s262 + $0xe0] sm:$0xff] %v5750
      %5788 = vst [vmem:[%s262 + $0xe8] sm:$0xff] %v5752
      %5789 = vst [vmem:[%s262 + $0xf0] sm:$0xff] %v5755
      %5790 = vst [vmem:[%s262 + $0xf8] sm:$0xff] %v5757
      %v5791 = vadd.f32 %v5680, %v5682
      %v5792 = vadd.f32 %v5791, %v5685
      %v5793 = vadd.f32 %v5792, %v5687
      %v5794 = vadd.f32 %v5793, %v5690
      %v5795 = vadd.f32 %v5794, %v5692
      %v5796 = vadd.f32 %v5795, %v5695
      %v5797 = vadd.f32 %v5796, %v5697
      %v5798 = vadd.f32 %v5797, %v5700
      %v5799 = vadd.f32 %v5798, %v5702
      %v5800 = vadd.f32 %v5799, %v5705
      %v5801 = vadd.f32 %v5800, %v5707
      %v5802 = vadd.f32 %v5801, %v5710
      %v5803 = vadd.f32 %v5802, %v5712
      %v5804 = vadd.f32 %v5803, %v5715
      %v5805 = vadd.f32 %v5804, %v5717
      %v5806 = vadd.f32 %v5805, %v5720
      %v5807 = vadd.f32 %v5806, %v5722
      %v5808 = vadd.f32 %v5807, %v5725
      %v5809 = vadd.f32 %v5808, %v5727
      %v5810 = vadd.f32 %v5809, %v5730
      %v5811 = vadd.f32 %v5810, %v5732
      %v5812 = vadd.f32 %v5811, %v5735
      %v5813 = vadd.f32 %v5812, %v5737
      %v5814 = vadd.f32 %v5813, %v5740
      %v5815 = vadd.f32 %v5814, %v5742
      %v5816 = vadd.f32 %v5815, %v5745
      %v5817 = vadd.f32 %v5816, %v5747
      %v5818 = vadd.f32 %v5817, %v5750
      %v5819 = vadd.f32 %v5818, %v5752
      %v5820 = vadd.f32 %v5819, %v5755
      %v5821 = vadd.f32 %v5820, %v5757
      %v5822 = vrot.slane %v5821, 4
      %v5823 = vadd.f32 %v5821, %v5822
      %v5824 = vrot.slane %v5823, 2
      %v5825 = vadd.f32 %v5823, %v5824
      %v5826 = vrot.slane %v5825, 1
      %v5827 = vadd.f32 %v5825, %v5826
      %5828 = vst [vmem:[%s265] sm:$0x1] %v5827
      %v5829 = vmul.f32 %v5680, %v5680
      %v5830 = vmul.f32 %v5682, %v5682
      %v5831 = vmul.f32 %v5685, %v5685
      %v5832 = vmul.f32 %v5687, %v5687
      %v5833 = vmul.f32 %v5690, %v5690
      %v5834 = vmul.f32 %v5692, %v5692
      %v5835 = vmul.f32 %v5695, %v5695
      %v5836 = vmul.f32 %v5697, %v5697
      %v5837 = vmul.f32 %v5700, %v5700
      %v5838 = vmul.f32 %v5702, %v5702
      %v5839 = vmul.f32 %v5705, %v5705
      %v5840 = vmul.f32 %v5707, %v5707
      %v5841 = vmul.f32 %v5710, %v5710
      %v5842 = vmul.f32 %v5712, %v5712
      %v5843 = vmul.f32 %v5715, %v5715
      %v5844 = vmul.f32 %v5717, %v5717
      %v5845 = vmul.f32 %v5720, %v5720
      %v5846 = vmul.f32 %v5722, %v5722
      %v5847 = vmul.f32 %v5725, %v5725
      %v5848 = vmul.f32 %v5727, %v5727
      %v5849 = vmul.f32 %v5730, %v5730
      %v5850 = vmul.f32 %v5732, %v5732
      %v5851 = vmul.f32 %v5735, %v5735
      %v5852 = vmul.f32 %v5737, %v5737
      %v5853 = vmul.f32 %v5740, %v5740
      %v5854 = vmul.f32 %v5742, %v5742
      %v5855 = vmul.f32 %v5745, %v5745
      %v5856 = vmul.f32 %v5747, %v5747
      %v5857 = vmul.f32 %v5750, %v5750
      %v5858 = vmul.f32 %v5752, %v5752
      %v5859 = vmul.f32 %v5755, %v5755
      %v5860 = vmul.f32 %v5757, %v5757
      %v5861 = vadd.f32 %v5829, %v5830
      %v5862 = vadd.f32 %v5861, %v5831
      %v5863 = vadd.f32 %v5862, %v5832
      %v5864 = vadd.f32 %v5863, %v5833
      %v5865 = vadd.f32 %v5864, %v5834
      %v5866 = vadd.f32 %v5865, %v5835
      %v5867 = vadd.f32 %v5866, %v5836
      %v5868 = vadd.f32 %v5867, %v5837
      %v5869 = vadd.f32 %v5868, %v5838
      %v5870 = vadd.f32 %v5869, %v5839
      %v5871 = vadd.f32 %v5870, %v5840
      %v5872 = vadd.f32 %v5871, %v5841
      %v5873 = vadd.f32 %v5872, %v5842
      %v5874 = vadd.f32 %v5873, %v5843
      %v5875 = vadd.f32 %v5874, %v5844
      %v5876 = vadd.f32 %v5875, %v5845
      %v5877 = vadd.f32 %v5876, %v5846
      %v5878 = vadd.f32 %v5877, %v5847
      %v5879 = vadd.f32 %v5878, %v5848
      %v5880 = vadd.f32 %v5879, %v5849
      %v5881 = vadd.f32 %v5880, %v5850
      %v5882 = vadd.f32 %v5881, %v5851
      %v5883 = vadd.f32 %v5882, %v5852
      %v5884 = vadd.f32 %v5883, %v5853
      %v5885 = vadd.f32 %v5884, %v5854
      %v5886 = vadd.f32 %v5885, %v5855
      %v5887 = vadd.f32 %v5886, %v5856
      %v5888 = vadd.f32 %v5887, %v5857
      %v5889 = vadd.f32 %v5888, %v5858
      %v5890 = vadd.f32 %v5889, %v5859
      %v5891 = vadd.f32 %v5890, %v5860
      %v5892 = vrot.slane %v5891, 4
      %v5893 = vadd.f32 %v5891, %v5892
      %v5894 = vrot.slane %v5893, 2
      %v5895 = vadd.f32 %v5893, %v5894
      %v5896 = vrot.slane %v5895, 1
      %v5897 = vadd.f32 %v5895, %v5896
      %5898 = vst [vmem:[%s268] sm:$0x1] %v5897
      %p5899 = scmp.lt.s32.totalorder %s18, 1
      %s5900 = scalar_select %p5899, %s18, 1
      %s5901 = smul.addr %s5900, 32
      %s5902 = smul.addr %s5901, 8
      %s5903 = scalar_lea.vmem %s4, %s5902
      %p5904 = scmp.lt.s32.totalorder %s18, 1
      %s5905 = scalar_select %p5904, %s18, 1
      %s5906 = scalar_lea.vmem %s5, %s5905
      %p5907 = scmp.lt.s32.totalorder %s18, 1
      %s5908 = scalar_select %p5907, %s18, 1
      %s5909 = scalar_lea.vmem %s6, %s5908
      // Predicated region
      $region37: #{basic_block_pallas.4} parent=35 // pred_check
        %p5910 = pneg %p125
      $region38: #{basic_block_pallas.4} parent=35 // pred_check_branch
        %5912 = sbr.rel (%p5910) target = $region40
      $region39: #{basic_block_pallas.4} parent=35 // pred_region
        _
      $region40: #{basic_block_pallas.4} parent=35 // pred_fallthru
        _
      // Predicated region
      $region41: #{basic_block_pallas.4} parent=35 // pred_check
        %p5913 = pneg %p151
      $region42: #{basic_block_pallas.4} parent=35 // pred_check_branch
        %5915 = sbr.rel (%p5913) target = $region44
      $region43: #{basic_block_pallas.4} parent=35 // pred_region
        _
      $region44: #{basic_block_pallas.4} parent=35 // pred_fallthru
        _
      // Predicated region
      $region45: #{basic_block_pallas.4} parent=35 // pred_check
        %p5916 = pneg %p177
      $region46: #{basic_block_pallas.4} parent=35 // pred_check_branch
        %5918 = sbr.rel (%p5916) target = $region48
      $region47: #{basic_block_pallas.4} parent=35 // pred_region
        _
      $region48: #{basic_block_pallas.4} parent=35 // pred_fallthru
        _
    $region36: #{basic_block_pallas.4} parent=5 // pred_fallthru
      _
    %p5919 = scmp.le.s32.totalorder 2, %s13
    // Predicated region
    $region49: #{basic_block_pallas.4} parent=5 // pred_check
      %p5920 = pneg %p5919
    $region50: #{basic_block_pallas.4} parent=5 // pred_check_branch
      %5922 = sbr.rel (%p5920) target = $region52
    $region51: #{basic_block_pallas.4} parent=5 // pred_region
      %s5923 = ssub.s32 %s13, 2
      // Predicated region
      $region53: #{basic_block_pallas.4} parent=51 // pred_check
        %p5924 = pneg %p131
      $region54: #{basic_block_pallas.4} parent=51 // pred_check_branch
        %5926 = sbr.rel (%p5924) target = $region56
      $region55: #{basic_block_pallas.4} parent=51 // pred_region
        %p5927 = scmp.lt.s32.totalorder %s19, 1
        %s5928 = scalar_select %p5927, %s19, 1
        %s5929 = smul.addr %s5928, 32
        %s5930 = smul.addr %s5929, 8
        %s5931 = scalar_lea.vmem %s4, %s5930
      $region56: #{basic_block_pallas.4} parent=51 // pred_fallthru
        _
      // Predicated region
      $region57: #{basic_block_pallas.4} parent=51 // pred_check
        %p5932 = pneg %p157
      $region58: #{basic_block_pallas.4} parent=51 // pred_check_branch
        %5934 = sbr.rel (%p5932) target = $region60
      $region59: #{basic_block_pallas.4} parent=51 // pred_region
        %p5935 = scmp.lt.s32.totalorder %s19, 1
        %s5936 = scalar_select %p5935, %s19, 1
        %s5937 = scalar_lea.vmem %s5, %s5936
      $region60: #{basic_block_pallas.4} parent=51 // pred_fallthru
        _
      // Predicated region
      $region61: #{basic_block_pallas.4} parent=51 // pred_check
        %p5938 = pneg %p183
      $region62: #{basic_block_pallas.4} parent=51 // pred_check_branch
        %5940 = sbr.rel (%p5938) target = $region64
      $region63: #{basic_block_pallas.4} parent=51 // pred_region
        %p5941 = scmp.lt.s32.totalorder %s19, 1
        %s5942 = scalar_select %p5941, %s19, 1
        %s5943 = scalar_lea.vmem %s6, %s5942
      $region64: #{basic_block_pallas.4} parent=51 // pred_fallthru
        _
    $region52: #{basic_block_pallas.4} parent=5 // pred_fallthru
      _
  $region6: #{basic_block_pallas.4} parent=0 // loop_footer
    %s17 = sadd.s32 1, %s13
  $region7: #{basic_block_pallas.4} parent=0 // loop_footer_branch
    %12 = sbr.rel target = $region3
  $region8: #{basic_block_pallas.4} parent=0 // loop_exit
    _

</llo_original>
